<compile_context>
chip_gen: v7x
topology: tpu7x:2x2x1
jax: 0.10.0
libtpu: 0.0.40
codegen_flags: <defaults>
</compile_context>

<pallas_src>
import math
import functools

import numpy as np
import jax
import jax.numpy as jnp
from jax import lax
from jax.experimental import pallas as pl
from jax.experimental.pallas import tpu as pltpu


# ----------------------------------------------------------------------------
# Helpers
# ----------------------------------------------------------------------------
def _round_up(x, m):
    return ((x + m - 1) // m) * m


def _choose_tile_n(n, max_tile=128):
    # >=2 grid steps once n >= 16 (feeds both v7x TCs / megacore), tile a
    # multiple of 8 (sublane constraint), capped so VMEM stays modest.
    # TODO(synk): re-derive max_tile / set vmem_limit_bytes for v7x (64 MiB
    # physical VMEM) if T grows much beyond a few dozen steps.
    half = (n + 1) // 2
    return max(8, min(max_tile, _round_up(half, 8)))


def _pad_gates(w, H, G):
    """(..., 3H) -> (..., 3G): each GRU gate moved to its own G(=128)-lane slot,
    zero padded, so in-kernel gate slices start on vreg boundaries."""
    if H == G:
        return w
    pads = [(0, 0)] * (w.ndim - 1)
    parts = [jnp.pad(w[..., g * H:(g + 1) * H], pads + [(0, G - H)])
             for g in range(3)]
    return jnp.concatenate(parts, axis=-1)


def _time_loop(T, body, carry, unroll_limit=32):
    """Fully unrolled static loop for small T (LLO scheduler visibility),
    fori_loop fallback for long sequences."""
    if T <= unroll_limit:
        for t in range(T):
            carry = body(t, carry)
        return carry
    return lax.fori_loop(0, T, body, carry)


def _sigmoid(x):
    # exp + reciprocal both run on the EUP slot.
    return pl.reciprocal(1.0 + jnp.exp(-x), approx=False)


# ----------------------------------------------------------------------------
# Kernel 1: bidirectional token GRU over a tile of BN sequences
#   x_ref:   (T, BN, E)      lens_ref: (BN, 1) int32 (0 => fully masked pad row)
#   wi_ref:  (E, 6G)  fwd gates in [:3G], bwd gates in [3G:]   bi_ref: (1, 6G)
#   whf/whb: (H, 3G)  bhf/bhb: (1, 3G)      (G = per-gate 128-lane slot)
#   outputs: out (T, BN, 2H)  [fwd | bwd],   hn (BN, 2H) [fwd | bwd]
# ----------------------------------------------------------------------------
def token_bigru_kernel(x_ref, lens_ref, wi_ref, bi_ref,
                       whf_ref, bhf_ref, whb_ref, bhb_ref,
                       out_ref, hn_ref,
                       gif_scr, gib_scr, fscr, bscr):
    T, BN, _ = x_ref.shape
    H = whf_ref.shape[0]
    G = whf_ref.shape[1] // 3

    wi = wi_ref[...]
    bi = bi_ref[...]
    whf = whf_ref[...]; bhf = bhf_ref[...]
    whb = whb_ref[...]; bhb = bhb_ref[...]
    lens = lens_ref[...]                                   # (BN, 1) int32

    # ---- hoisted input projection (both directions), off the serial chain ----
    def proj(t, _):
        g = jnp.dot(x_ref[t], wi, preferred_element_type=jnp.float32) + bi
        gif_scr[t] = g[:, :3 * G]
        gib_scr[t] = g[:, 3 * G:]
        return 0
    _time_loop(T, proj, 0)

    # ---- recurrence: per-step work is only h @ W_hh + gate math -------------
    def cell(gi_t, h, wh, bh):
        gh = jnp.dot(h, wh, preferred_element_type=jnp.float32) + bh  # (BN, 3G)
        r = _sigmoid(gi_t[:, 0:H] + gh[:, 0:H])
        z = _sigmoid(gi_t[:, G:G + H] + gh[:, G:G + H])
        n = jnp.tanh(gi_t[:, 2 * G:2 * G + H] + r * gh[:, 2 * G:2 * G + H])
        return n + z * (h - n)                             # == (1-z)*n + z*h

    def body(i, carry):
        h_f, h_b = carry
        tb = T - 1 - i
        hf_new = cell(gif_scr[i], h_f, whf, bhf)           # two independent
        hb_new = cell(gib_scr[tb], h_b, whb, bhb)          # chains -> 2x ILP
        mf = (i < lens).astype(jnp.float32)                # (BN, 1)
        mb = (tb < lens).astype(jnp.float32)
        h_f = h_f + mf * (hf_new - h_f)                    # freeze past length
        h_b = h_b + mb * (hb_new - h_b)
        fscr[i] = h_f * mf                                 # zero past length
        bscr[tb] = h_b * mb
        return h_f, h_b

    h0 = jnp.zeros((BN, H), jnp.float32)
    h_f, h_b = _time_loop(T, body, (h0, h0))

    # bulk, lane-dense (2H = 64+) stores to HBM-backed outputs
    out_ref[...] = jnp.concatenate([fscr[...], bscr[...]], axis=-1)
    hn_ref[...] = jnp.concatenate([h_f, h_b], axis=-1)


# ----------------------------------------------------------------------------
# Kernel 2: unidirectional dialog GRU
#   x_ref: (U, B, I)   lens_ref: (B, 1) int32
#   wi: (I, 3G)  wh: (H, 3G)  bi/bh: (1, 3G)
#   outputs: out (U, B, H), hn (B, H)
# ----------------------------------------------------------------------------
def dlg_gru_kernel(x_ref, lens_ref, wi_ref, bi_ref, wh_ref, bh_ref,
                   out_ref, hn_ref, gi_scr, oscr):
    U, B, _ = x_ref.shape
    H = wh_ref.shape[0]
    G = wh_ref.shape[1] // 3

    wi = wi_ref[...]; bi = bi_ref[...]
    wh = wh_ref[...]; bh = bh_ref[...]
    lens = lens_ref[...]

    def proj(t, _):
        gi_scr[t] = jnp.dot(x_ref[t], wi,
                            preferred_element_type=jnp.float32) + bi
        return 0
    _time_loop(U, proj, 0)

    def body(t, h):
        gi_t = gi_scr[t]
        gh = jnp.dot(h, wh, preferred_element_type=jnp.float32) + bh
        r = _sigmoid(gi_t[:, 0:H] + gh[:, 0:H])
        z = _sigmoid(gi_t[:, G:G + H] + gh[:, G:G + H])
        n = jnp.tanh(gi_t[:, 2 * G:2 * G + H] + r * gh[:, 2 * G:2 * G + H])
        h_new = n + z * (h - n)
        m = (t < lens).astype(jnp.float32)
        h = h + m * (h_new - h)
        oscr[t] = h * m
        return h

    hn_ref[...] = _time_loop(U, body, jnp.zeros((B, H), jnp.float32))
    out_ref[...] = oscr[...]


# ----------------------------------------------------------------------------
# Wrappers
# ----------------------------------------------------------------------------
def _rep_spec(shape):
    nd = len(shape)
    return pl.BlockSpec(shape, lambda i, _nd=nd: (0,) * _nd)


def token_bigru(x, lens, p, max_tile_n=128):
    # x: (N, T, E) batch-first; returns out (N, T, 2H), hn (N, 2H)
    N, T, E = x.shape
    H = p['wh_f'].shape[0]
    G = _round_up(H, 128)

    tile_n = _choose_tile_n(N, max_tile_n)
    n_tiles = -(-N // tile_n)
    N_pad = n_tiles * tile_n

    xt = jnp.transpose(x, (1, 0, 2)).astype(jnp.float32)   # (T, N, E) time-major
    lens_i = lens.reshape(-1).astype(jnp.int32)
    if N_pad != N:                                          # pad tail; len=0 rows
        xt = jnp.pad(xt, ((0, 0), (0, N_pad - N), (0, 0)))  # are fully masked
        lens_i = jnp.pad(lens_i, (0, N_pad - N))
    lens2 = lens_i.reshape(N_pad, 1)

    # gate-slot padded weights (each gate in its own 128-lane slot)
    wi_cat = jnp.concatenate([_pad_gates(p['wi_f'], H, G),
                              _pad_gates(p['wi_b'], H, G)], axis=-1)  # (E, 6G)
    bi_cat = jnp.concatenate([_pad_gates(p['bi_f'], H, G),
                              _pad_gates(p['bi_b'], H, G)], axis=-1)  # (1, 6G)
    whf = _pad_gates(p['wh_f'], H, G); bhf = _pad_gates(p['bh_f'], H, G)
    whb = _pad_gates(p['wh_b'], H, G); bhb = _pad_gates(p['bh_b'], H, G)

    out, hn = pl.pallas_call(
        token_bigru_kernel,
        out_shape=(
            jax.ShapeDtypeStruct((T, N_pad, 2 * H), jnp.float32),
            jax.ShapeDtypeStruct((N_pad, 2 * H), jnp.float32),
        ),
        grid=(n_tiles,),
        in_specs=[
            pl.BlockSpec((T, tile_n, E), lambda i: (0, i, 0)),
            pl.BlockSpec((tile_n, 1), lambda i: (i, 0)),
            _rep_spec((E, 6 * G)), _rep_spec((1, 6 * G)),
            _rep_spec((H, 3 * G)), _rep_spec((1, 3 * G)),
            _rep_spec((H, 3 * G)), _rep_spec((1, 3 * G)),
        ],
        out_specs=(
            pl.BlockSpec((T, tile_n, 2 * H), lambda i: (0, i, 0)),
            pl.BlockSpec((tile_n, 2 * H), lambda i: (i, 0)),
        ),
        scratch_shapes=[
            pltpu.VMEM((T, tile_n, 3 * G), jnp.float32),   # fwd input gates
            pltpu.VMEM((T, tile_n, 3 * G), jnp.float32),   # bwd input gates
            pltpu.VMEM((T, tile_n, H), jnp.float32),       # fwd outputs
            pltpu.VMEM((T, tile_n, H), jnp.float32),       # bwd outputs
        ],
        compiler_params=pltpu.CompilerParams(
            dimension_semantics=("parallel",)),
    )(xt, lens2, wi_cat, bi_cat, whf, bhf, whb, bhb)

    out = jnp.transpose(out, (1, 0, 2))[:N]                 # (N, T, 2H)
    return out, hn[:N]


def dlg_gru(x, lens, p):
    # x: (B, U, I) batch-first; returns out (B, U, H), hn (B, H)
    B, U, I = x.shape
    H = p['wh'].shape[0]
    G = _round_up(H, 128)
    B_pad = _round_up(B, 8)

    xt = jnp.transpose(x, (1, 0, 2)).astype(jnp.float32)    # (U, B, I)
    lens_i = lens.reshape(-1).astype(jnp.int32)
    if B_pad != B:
        xt = jnp.pad(xt, ((0, 0), (0, B_pad - B), (0, 0)))
        lens_i = jnp.pad(lens_i, (0, B_pad - B))
    lens2 = lens_i.reshape(B_pad, 1)

    wi = _pad_gates(p['wi'], H, G); bi = _pad_gates(p['bi'], H, G)
    wh = _pad_gates(p['wh'], H, G); bh = _pad_gates(p['bh'], H, G)

    # TODO(synk): fusing this (small) dialog GRU into the tail of the token
    # kernel would need a cross-tile dependency on all hn's; kept separate.
    out, hn = pl.pallas_call(
        dlg_gru_kernel,
        out_shape=(
            jax.ShapeDtypeStruct((U, B_pad, H), jnp.float32),
            jax.ShapeDtypeStruct((B_pad, H), jnp.float32),
        ),
        grid=(1,),
        in_specs=[
            pl.BlockSpec((U, B_pad, I), lambda i: (0, 0, 0)),
            pl.BlockSpec((B_pad, 1), lambda i: (0, 0)),
            _rep_spec((I, 3 * G)), _rep_spec((1, 3 * G)),
            _rep_spec((H, 3 * G)), _rep_spec((1, 3 * G)),
        ],
        out_specs=(
            pl.BlockSpec((U, B_pad, H), lambda i: (0, 0, 0)),
            pl.BlockSpec((B_pad, H), lambda i: (0, 0)),
        ),
        scratch_shapes=[
            pltpu.VMEM((U, B_pad, 3 * G), jnp.float32),
            pltpu.VMEM((U, B_pad, H), jnp.float32),
        ],
    )(xt, lens2, wi, bi, wh, bh)

    return jnp.transpose(out, (1, 0, 2))[:B], hn[:B]


def hierarchical_encoder_forward(params, token_features, token_lens, dlg_lens,
                                 dlg_pos_features=None):
    B, U, T, E = token_features.shape
    H = params['token']['wh_f'].shape[0]

    # _compute_per_utterance_features
    x = token_features.reshape(B * U, T, E)
    lens = token_lens.reshape(B * U)
    ctx_tok, hn = token_bigru(x, lens, params['token'])     # (BU,T,2H), (BU,2H)
    ctx_token_features = ctx_tok.reshape(B, U, T, 2 * H)

    # utt_features = cat(hn_fwd, hn_bwd, dim=2): hn already fused as [fwd|bwd]
    utt_features = hn.reshape(B, U, 2 * H)

    if dlg_pos_features is None:
        tfeats = utt_features
    else:
        # params['dlg'] must be sized for input dim 2H + pos_emb_size
        tfeats = jnp.concatenate([utt_features, dlg_pos_features], axis=2)

    # _compute_per_dialog_features
    ctx_utt_features, agg = dlg_gru(tfeats, dlg_lens, params['dlg'])
    return ctx_token_features, utt_features, ctx_utt_features, agg


# ----------------------------------------------------------------------------
# Deterministic parameter init (uniform(-1/sqrt(H), 1/sqrt(H)) like nn.GRU)
# ----------------------------------------------------------------------------
def init_params(key, emb_size, enc_hid_size):
    H = enc_hid_size
    Hd = 2 * H
    kt = 1.0 / math.sqrt(H)
    kd = 1.0 / math.sqrt(Hd)
    keys = jax.random.split(key, 12)

    def u(kk, shape, bound):
        return jax.random.uniform(kk, shape, jnp.float32, -bound, bound)

    token = {
        'wi_f': u(keys[0], (emb_size, 3 * H), kt),
        'wh_f': u(keys[1], (H, 3 * H), kt),
        'bi_f': u(keys[2], (1, 3 * H), kt),
        'bh_f': u(keys[3], (1, 3 * H), kt),
        'wi_b': u(keys[4], (emb_size, 3 * H), kt),
        'wh_b': u(keys[5], (H, 3 * H), kt),
        'bi_b': u(keys[6], (1, 3 * H), kt),
        'bh_b': u(keys[7], (1, 3 * H), kt),
    }
    dlg = {
        'wi': u(keys[8], (2 * H, 3 * Hd), kd),
        'wh': u(keys[9], (Hd, 3 * Hd), kd),
        'bi': u(keys[10], (1, 3 * Hd), kd),
        'bh': u(keys[11], (1, 3 * Hd), kd),
    }
    return {'token': token, 'dlg': dlg}


# ----------------------------------------------------------------------------
# Pure-JAX reference (same packed-GRU semantics) for verification
# ----------------------------------------------------------------------------
def _gru_ref(x, lens, wi, wh, bi, bh, reverse=False):
    N, T, _ = x.shape
    H = wh.shape[0]

    def step(h, t):
        x_t = x[:, t, :]
        gi = x_t @ wi + bi
        gh = h @ wh + bh
        r = jax.nn.sigmoid(gi[:, :H] + gh[:, :H])
        z = jax.nn.sigmoid(gi[:, H:2 * H] + gh[:, H:2 * H])
        n = jnp.tanh(gi[:, 2 * H:] + r * gh[:, 2 * H:])
        h_new = (1.0 - z) * n + z * h
        mask = (t < lens)[:, None].astype(jnp.float32)
        h = mask * h_new + (1.0 - mask) * h
        return h, h * mask

    ts = jnp.arange(T - 1, -1, -1) if reverse else jnp.arange(T)
    hN, outs = lax.scan(step, jnp.zeros((N, H), jnp.float32), ts)
    if reverse:
        outs = outs[::-1]
    return jnp.transpose(outs, (1, 0, 2)), hN


def reference_forward(params, token_features, token_lens, dlg_lens):
    B, U, T, E = token_features.shape
    H = params['token']['wh_f'].shape[0]
    x = token_features.reshape(B * U, T, E)
    lens = token_lens.reshape(B * U)
    p = params['token']
    of, hf = _gru_ref(x, lens, p['wi_f'], p['wh_f'], p['bi_f'], p['bh_f'])
    ob, hb = _gru_ref(x, lens, p['wi_b'], p['wh_b'], p['bi_b'], p['bh_b'],
                      reverse=True)
    ctx_tok = jnp.concatenate([of, ob], axis=-1).reshape(B, U, T, 2 * H)
    utt = jnp.concatenate([hf.reshape(B, U, H), hb.reshape(B, U, H)], axis=2)
    d = params['dlg']
    ctx_utt, hn = _gru_ref(utt, dlg_lens, d['wi'], d['wh'], d['bi'], d['bh'])
    return ctx_tok, utt, ctx_utt, hn


# ----------------------------------------------------------------------------
if __name__ == "__main__":
    B, U, T, E, H = 2, 4, 8, 16, 32
    key = jax.random.PRNGKey(0)
    kp, kx = jax.random.split(key)

    params = init_params(kp, E, H)
    token_features = jax.random.normal(kx, (B, U, T, E), jnp.float32)
    # max token len == T and max dlg len == U (matches the .view() assumptions
    # of the PyTorch module); all lengths > 0 as pack_padded_sequence requires.
    token_lens = jnp.array([[8, 5, 3, 6], [7, 8, 4, 2]], jnp.int32)
    dlg_lens = jnp.array([4, 3], jnp.int32)

    fwd = jax.jit(functools.partial(hierarchical_encoder_forward, params))
    outs = fwd(token_features, token_lens, dlg_lens)
    outs = jax.block_until_ready(outs)

    ref = reference_forward(params, token_features, token_lens, dlg_lens)
    for got, exp in zip(outs, ref):
        np.testing.assert_allclose(np.asarray(got), np.asarray(exp),
                                   rtol=2e-3, atol=2e-3)

    print("KERNEL_OK")
</pallas_src>

<mosaic_0001>
module attributes {stable_mosaic.version = 11 : i64} {
  func.func @dlg_gru_kernel(%arg0: i32, %arg1: memref<4x8x64xf32, #tpu.memory_space<vmem>>, %arg2: memref<8x1xi32, #tpu.memory_space<vmem>>, %arg3: memref<64x384xf32, #tpu.memory_space<vmem>>, %arg4: memref<1x384xf32, #tpu.memory_space<vmem>>, %arg5: memref<64x384xf32, #tpu.memory_space<vmem>>, %arg6: memref<1x384xf32, #tpu.memory_space<vmem>>, %arg7: memref<4x8x64xf32, #tpu.memory_space<vmem>>, %arg8: memref<8x64xf32, #tpu.memory_space<vmem>>, %arg9: memref<4x8x384xf32, #tpu.memory_space<vmem>>, %arg10: memref<4x8x64xf32, #tpu.memory_space<vmem>>) attributes {dimension_semantics = [#tpu.dimension_semantics<arbitrary>], iteration_bounds = array<i64: 1>, scalar_prefetch = 0 : i64, scratch_operands = 2 : i64, tpu.core_type = #tpu.core_type<tc>, window_params = [{pipeline_mode = #tpu.pipeline_mode<synchronous>, transform_indices = @transform_0, window_bounds = array<i64: 4, 8, 64>}, {pipeline_mode = #tpu.pipeline_mode<synchronous>, transform_indices = @transform_1, window_bounds = array<i64: 8, 1>}, {pipeline_mode = #tpu.pipeline_mode<synchronous>, transform_indices = @transform_2, window_bounds = array<i64: 64, 384>}, {pipeline_mode = #tpu.pipeline_mode<synchronous>, transform_indices = @transform_3, window_bounds = array<i64: 1, 384>}, {pipeline_mode = #tpu.pipeline_mode<synchronous>, transform_indices = @transform_4, window_bounds = array<i64: 64, 384>}, {pipeline_mode = #tpu.pipeline_mode<synchronous>, transform_indices = @transform_5, window_bounds = array<i64: 1, 384>}, {pipeline_mode = #tpu.pipeline_mode<synchronous>, transform_indices = @transform_6, window_bounds = array<i64: 4, 8, 64>}, {pipeline_mode = #tpu.pipeline_mode<synchronous>, transform_indices = @transform_7, window_bounds = array<i64: 8, 64>}]} {
    %c0 = arith.constant 0 : index
    %c0_0 = arith.constant 0 : index
    %0 = vector.load %arg3[%c0, %c0_0] : memref<64x384xf32, #tpu.memory_space<vmem>>, vector<64x384xf32>
    %c0_1 = arith.constant 0 : index
    %c0_2 = arith.constant 0 : index
    %1 = vector.load %arg4[%c0_1, %c0_2] : memref<1x384xf32, #tpu.memory_space<vmem>>, vector<1x384xf32>
    %c0_3 = arith.constant 0 : index
    %c0_4 = arith.constant 0 : index
    %2 = vector.load %arg5[%c0_3, %c0_4] : memref<64x384xf32, #tpu.memory_space<vmem>>, vector<64x384xf32>
    %c0_5 = arith.constant 0 : index
    %c0_6 = arith.constant 0 : index
    %3 = vector.load %arg6[%c0_5, %c0_6] : memref<1x384xf32, #tpu.memory_space<vmem>>, vector<1x384xf32>
    %c0_7 = arith.constant 0 : index
    %c0_8 = arith.constant 0 : index
    %4 = vector.load %arg2[%c0_7, %c0_8] : memref<8x1xi32, #tpu.memory_space<vmem>>, vector<8x1xi32>
    %c0_9 = arith.constant 0 : index
    %c0_10 = arith.constant 0 : index
    %c0_11 = arith.constant 0 : index
    %5 = vector.load %arg1[%c0_9, %c0_10, %c0_11] : memref<4x8x64xf32, #tpu.memory_space<vmem>>, vector<1x8x64xf32>
    %6 = vector.shape_cast %5 : vector<1x8x64xf32> to vector<8x64xf32>
    %cst = arith.constant dense<0.000000e+00> : vector<8x384xf32>
    %7 = tpu.matmul %6, %0, %cst {dimension_numbers = #tpu.dot_dimension_numbers<[1], [0], [0], [1], [0, 0, 1, 1], [], []>} : vector<8x64xf32>, vector<64x384xf32>, vector<8x384xf32> -> vector<8x384xf32>
    %8 = vector.broadcast %1 : vector<1x384xf32> to vector<8x384xf32>
    %9 = arith.addf %7, %8 : vector<8x384xf32>
    %c0_12 = arith.constant 0 : index
    %c0_13 = arith.constant 0 : index
    %c0_14 = arith.constant 0 : index
    %10 = vector.load %arg9[%c0_12, %c0_13, %c0_14] : memref<4x8x384xf32, #tpu.memory_space<vmem>>, vector<1x8x384xf32>
    %11 = vector.shape_cast %10 : vector<1x8x384xf32> to vector<8x384xf32>
    %12 = vector.shape_cast %9 : vector<8x384xf32> to vector<1x8x384xf32>
    tpu.vector_store %arg9[%c0_12, %c0_13, %c0_14], %12 {strides = array<i32>} : memref<4x8x384xf32, #tpu.memory_space<vmem>>, vector<1x8x384xf32>,
    %c1 = arith.constant 1 : index
    %c0_15 = arith.constant 0 : index
    %c0_16 = arith.constant 0 : index
    %13 = vector.load %arg1[%c1, %c0_15, %c0_16] : memref<4x8x64xf32, #tpu.memory_space<vmem>>, vector<1x8x64xf32>
    %14 = vector.shape_cast %13 : vector<1x8x64xf32> to vector<8x64xf32>
    %cst_17 = arith.constant dense<0.000000e+00> : vector<8x384xf32>
    %15 = tpu.matmul %14, %0, %cst_17 {dimension_numbers = #tpu.dot_dimension_numbers<[1], [0], [0], [1], [0, 0, 1, 1], [], []>} : vector<8x64xf32>, vector<64x384xf32>, vector<8x384xf32> -> vector<8x384xf32>
    %16 = vector.broadcast %1 : vector<1x384xf32> to vector<8x384xf32>
    %17 = arith.addf %15, %16 : vector<8x384xf32>
    %c1_18 = arith.constant 1 : index
    %c0_19 = arith.constant 0 : index
    %c0_20 = arith.constant 0 : index
    %18 = vector.load %arg9[%c1_18, %c0_19, %c0_20] : memref<4x8x384xf32, #tpu.memory_space<vmem>>, vector<1x8x384xf32>
    %19 = vector.shape_cast %18 : vector<1x8x384xf32> to vector<8x384xf32>
    %20 = vector.shape_cast %17 : vector<8x384xf32> to vector<1x8x384xf32>
    tpu.vector_store %arg9[%c1_18, %c0_19, %c0_20], %20 {strides = array<i32>} : memref<4x8x384xf32, #tpu.memory_space<vmem>>, vector<1x8x384xf32>,
    %c2 = arith.constant 2 : index
    %c0_21 = arith.constant 0 : index
    %c0_22 = arith.constant 0 : index
    %21 = vector.load %arg1[%c2, %c0_21, %c0_22] : memref<4x8x64xf32, #tpu.memory_space<vmem>>, vector<1x8x64xf32>
    %22 = vector.shape_cast %21 : vector<1x8x64xf32> to vector<8x64xf32>
    %cst_23 = arith.constant dense<0.000000e+00> : vector<8x384xf32>
    %23 = tpu.matmul %22, %0, %cst_23 {dimension_numbers = #tpu.dot_dimension_numbers<[1], [0], [0], [1], [0, 0, 1, 1], [], []>} : vector<8x64xf32>, vector<64x384xf32>, vector<8x384xf32> -> vector<8x384xf32>
    %24 = vector.broadcast %1 : vector<1x384xf32> to vector<8x384xf32>
    %25 = arith.addf %23, %24 : vector<8x384xf32>
    %c2_24 = arith.constant 2 : index
    %c0_25 = arith.constant 0 : index
    %c0_26 = arith.constant 0 : index
    %26 = vector.load %arg9[%c2_24, %c0_25, %c0_26] : memref<4x8x384xf32, #tpu.memory_space<vmem>>, vector<1x8x384xf32>
    %27 = vector.shape_cast %26 : vector<1x8x384xf32> to vector<8x384xf32>
    %28 = vector.shape_cast %25 : vector<8x384xf32> to vector<1x8x384xf32>
    tpu.vector_store %arg9[%c2_24, %c0_25, %c0_26], %28 {strides = array<i32>} : memref<4x8x384xf32, #tpu.memory_space<vmem>>, vector<1x8x384xf32>,
    %c3 = arith.constant 3 : index
    %c0_27 = arith.constant 0 : index
    %c0_28 = arith.constant 0 : index
    %29 = vector.load %arg1[%c3, %c0_27, %c0_28] : memref<4x8x64xf32, #tpu.memory_space<vmem>>, vector<1x8x64xf32>
    %30 = vector.shape_cast %29 : vector<1x8x64xf32> to vector<8x64xf32>
    %cst_29 = arith.constant dense<0.000000e+00> : vector<8x384xf32>
    %31 = tpu.matmul %30, %0, %cst_29 {dimension_numbers = #tpu.dot_dimension_numbers<[1], [0], [0], [1], [0, 0, 1, 1], [], []>} : vector<8x64xf32>, vector<64x384xf32>, vector<8x384xf32> -> vector<8x384xf32>
    %32 = vector.broadcast %1 : vector<1x384xf32> to vector<8x384xf32>
    %33 = arith.addf %31, %32 : vector<8x384xf32>
    %c3_30 = arith.constant 3 : index
    %c0_31 = arith.constant 0 : index
    %c0_32 = arith.constant 0 : index
    %34 = vector.load %arg9[%c3_30, %c0_31, %c0_32] : memref<4x8x384xf32, #tpu.memory_space<vmem>>, vector<1x8x384xf32>
    %35 = vector.shape_cast %34 : vector<1x8x384xf32> to vector<8x384xf32>
    %36 = vector.shape_cast %33 : vector<8x384xf32> to vector<1x8x384xf32>
    tpu.vector_store %arg9[%c3_30, %c0_31, %c0_32], %36 {strides = array<i32>} : memref<4x8x384xf32, #tpu.memory_space<vmem>>, vector<1x8x384xf32>,
    %cst_33 = arith.constant 0.000000e+00 : f32
    %37 = vector.broadcast %cst_33 : f32 to vector<8x64xf32>
    %c0_34 = arith.constant 0 : index
    %c0_35 = arith.constant 0 : index
    %c0_36 = arith.constant 0 : index
    %38 = vector.load %arg9[%c0_34, %c0_35, %c0_36] : memref<4x8x384xf32, #tpu.memory_space<vmem>>, vector<1x8x384xf32>
    %39 = vector.shape_cast %38 : vector<1x8x384xf32> to vector<8x384xf32>
    %cst_37 = arith.constant dense<0.000000e+00> : vector<8x384xf32>
    %40 = tpu.matmul %37, %2, %cst_37 {dimension_numbers = #tpu.dot_dimension_numbers<[1], [0], [0], [1], [0, 0, 1, 1], [], []>} : vector<8x64xf32>, vector<64x384xf32>, vector<8x384xf32> -> vector<8x384xf32>
    %41 = vector.broadcast %3 : vector<1x384xf32> to vector<8x384xf32>
    %42 = arith.addf %40, %41 : vector<8x384xf32>
    %43 = vector.extract_strided_slice %39 {offsets = [0, 0], sizes = [8, 64], strides = [1, 1]} : vector<8x384xf32> to vector<8x64xf32>
    %44 = vector.extract_strided_slice %42 {offsets = [0, 0], sizes = [8, 64], strides = [1, 1]} : vector<8x384xf32> to vector<8x64xf32>
    %45 = arith.addf %43, %44 : vector<8x64xf32>
    %cst_38 = arith.constant 0.000000e+00 : f32
    %46 = vector.broadcast %cst_38 : f32 to vector<8x64xf32>
    %47 = arith.subf %46, %45 : vector<8x64xf32>
    %48 = math.exp %47 : vector<8x64xf32>
    %cst_39 = arith.constant 1.000000e+00 : f32
    %49 = vector.broadcast %cst_39 : f32 to vector<8x64xf32>
    %50 = arith.addf %49, %48 : vector<8x64xf32>
    %51 = tpu.reciprocal %50 : vector<8x64xf32> -> vector<8x64xf32>
    %52 = vector.extract_strided_slice %39 {offsets = [0, 128], sizes = [8, 64], strides = [1, 1]} : vector<8x384xf32> to vector<8x64xf32>
    %53 = vector.extract_strided_slice %42 {offsets = [0, 128], sizes = [8, 64], strides = [1, 1]} : vector<8x384xf32> to vector<8x64xf32>
    %54 = arith.addf %52, %53 : vector<8x64xf32>
    %cst_40 = arith.constant 0.000000e+00 : f32
    %55 = vector.broadcast %cst_40 : f32 to vector<8x64xf32>
    %56 = arith.subf %55, %54 : vector<8x64xf32>
    %57 = math.exp %56 : vector<8x64xf32>
    %cst_41 = arith.constant 1.000000e+00 : f32
    %58 = vector.broadcast %cst_41 : f32 to vector<8x64xf32>
    %59 = arith.addf %58, %57 : vector<8x64xf32>
    %60 = tpu.reciprocal %59 : vector<8x64xf32> -> vector<8x64xf32>
    %61 = vector.extract_strided_slice %39 {offsets = [0, 256], sizes = [8, 64], strides = [1, 1]} : vector<8x384xf32> to vector<8x64xf32>
    %62 = vector.extract_strided_slice %42 {offsets = [0, 256], sizes = [8, 64], strides = [1, 1]} : vector<8x384xf32> to vector<8x64xf32>
    %63 = arith.mulf %51, %62 : vector<8x64xf32>
    %64 = arith.addf %61, %63 : vector<8x64xf32>
    %65 = math.tanh %64 : vector<8x64xf32>
    %66 = arith.subf %37, %65 : vector<8x64xf32>
    %67 = arith.mulf %60, %66 : vector<8x64xf32>
    %68 = arith.addf %65, %67 : vector<8x64xf32>
    %c0_i32 = arith.constant 0 : i32
    %69 = vector.broadcast %c0_i32 : i32 to vector<8x1xi32>
    %70 = arith.cmpi sgt, %4, %69 : vector<8x1xi32>
    %71 = arith.extui %70 : vector<8x1xi1> to vector<8x1xi32>
    %72 = arith.sitofp %71 : vector<8x1xi32> to vector<8x1xf32>
    %73 = arith.subf %68, %37 : vector<8x64xf32>
    %74 = vector.broadcast %72 : vector<8x1xf32> to vector<8x64xf32>
    %75 = arith.mulf %74, %73 : vector<8x64xf32>
    %76 = arith.addf %37, %75 : vector<8x64xf32>
    %77 = vector.broadcast %72 : vector<8x1xf32> to vector<8x64xf32>
    %78 = arith.mulf %76, %77 : vector<8x64xf32>
    %c0_42 = arith.constant 0 : index
    %c0_43 = arith.constant 0 : index
    %c0_44 = arith.constant 0 : index
    %79 = vector.load %arg10[%c0_42, %c0_43, %c0_44] : memref<4x8x64xf32, #tpu.memory_space<vmem>>, vector<1x8x64xf32>
    %80 = vector.shape_cast %79 : vector<1x8x64xf32> to vector<8x64xf32>
    %81 = vector.shape_cast %78 : vector<8x64xf32> to vector<1x8x64xf32>
    tpu.vector_store %arg10[%c0_42, %c0_43, %c0_44], %81 {strides = array<i32>} : memref<4x8x64xf32, #tpu.memory_space<vmem>>, vector<1x8x64xf32>,
    %c1_45 = arith.constant 1 : index
    %c0_46 = arith.constant 0 : index
    %c0_47 = arith.constant 0 : index
    %82 = vector.load %arg9[%c1_45, %c0_46, %c0_47] : memref<4x8x384xf32, #tpu.memory_space<vmem>>, vector<1x8x384xf32>
    %83 = vector.shape_cast %82 : vector<1x8x384xf32> to vector<8x384xf32>
    %cst_48 = arith.constant dense<0.000000e+00> : vector<8x384xf32>
    %84 = tpu.matmul %76, %2, %cst_48 {dimension_numbers = #tpu.dot_dimension_numbers<[1], [0], [0], [1], [0, 0, 1, 1], [], []>} : vector<8x64xf32>, vector<64x384xf32>, vector<8x384xf32> -> vector<8x384xf32>
    %85 = vector.broadcast %3 : vector<1x384xf32> to vector<8x384xf32>
    %86 = arith.addf %84, %85 : vector<8x384xf32>
    %87 = vector.extract_strided_slice %83 {offsets = [0, 0], sizes = [8, 64], strides = [1, 1]} : vector<8x384xf32> to vector<8x64xf32>
    %88 = vector.extract_strided_slice %86 {offsets = [0, 0], sizes = [8, 64], strides = [1, 1]} : vector<8x384xf32> to vector<8x64xf32>
    %89 = arith.addf %87, %88 : vector<8x64xf32>
    %cst_49 = arith.constant 0.000000e+00 : f32
    %90 = vector.broadcast %cst_49 : f32 to vector<8x64xf32>
    %91 = arith.subf %90, %89 : vector<8x64xf32>
    %92 = math.exp %91 : vector<8x64xf32>
    %cst_50 = arith.constant 1.000000e+00 : f32
    %93 = vector.broadcast %cst_50 : f32 to vector<8x64xf32>
    %94 = arith.addf %93, %92 : vector<8x64xf32>
    %95 = tpu.reciprocal %94 : vector<8x64xf32> -> vector<8x64xf32>
    %96 = vector.extract_strided_slice %83 {offsets = [0, 128], sizes = [8, 64], strides = [1, 1]} : vector<8x384xf32> to vector<8x64xf32>
    %97 = vector.extract_strided_slice %86 {offsets = [0, 128], sizes = [8, 64], strides = [1, 1]} : vector<8x384xf32> to vector<8x64xf32>
    %98 = arith.addf %96, %97 : vector<8x64xf32>
    %cst_51 = arith.constant 0.000000e+00 : f32
    %99 = vector.broadcast %cst_51 : f32 to vector<8x64xf32>
    %100 = arith.subf %99, %98 : vector<8x64xf32>
    %101 = math.exp %100 : vector<8x64xf32>
    %cst_52 = arith.constant 1.000000e+00 : f32
    %102 = vector.broadcast %cst_52 : f32 to vector<8x64xf32>
    %103 = arith.addf %102, %101 : vector<8x64xf32>
    %104 = tpu.reciprocal %103 : vector<8x64xf32> -> vector<8x64xf32>
    %105 = vector.extract_strided_slice %83 {offsets = [0, 256], sizes = [8, 64], strides = [1, 1]} : vector<8x384xf32> to vector<8x64xf32>
    %106 = vector.extract_strided_slice %86 {offsets = [0, 256], sizes = [8, 64], strides = [1, 1]} : vector<8x384xf32> to vector<8x64xf32>
    %107 = arith.mulf %95, %106 : vector<8x64xf32>
    %108 = arith.addf %105, %107 : vector<8x64xf32>
    %109 = math.tanh %108 : vector<8x64xf32>
    %110 = arith.subf %76, %109 : vector<8x64xf32>
    %111 = arith.mulf %104, %110 : vector<8x64xf32>
    %112 = arith.addf %109, %111 : vector<8x64xf32>
    %c1_i32 = arith.constant 1 : i32
    %113 = vector.broadcast %c1_i32 : i32 to vector<8x1xi32>
    %114 = arith.cmpi sgt, %4, %113 : vector<8x1xi32>
    %115 = arith.extui %114 : vector<8x1xi1> to vector<8x1xi32>
    %116 = arith.sitofp %115 : vector<8x1xi32> to vector<8x1xf32>
    %117 = arith.subf %112, %76 : vector<8x64xf32>
    %118 = vector.broadcast %116 : vector<8x1xf32> to vector<8x64xf32>
    %119 = arith.mulf %118, %117 : vector<8x64xf32>
    %120 = arith.addf %76, %119 : vector<8x64xf32>
    %121 = vector.broadcast %116 : vector<8x1xf32> to vector<8x64xf32>
    %122 = arith.mulf %120, %121 : vector<8x64xf32>
    %c1_53 = arith.constant 1 : index
    %c0_54 = arith.constant 0 : index
    %c0_55 = arith.constant 0 : index
    %123 = vector.load %arg10[%c1_53, %c0_54, %c0_55] : memref<4x8x64xf32, #tpu.memory_space<vmem>>, vector<1x8x64xf32>
    %124 = vector.shape_cast %123 : vector<1x8x64xf32> to vector<8x64xf32>
    %125 = vector.shape_cast %122 : vector<8x64xf32> to vector<1x8x64xf32>
    tpu.vector_store %arg10[%c1_53, %c0_54, %c0_55], %125 {strides = array<i32>} : memref<4x8x64xf32, #tpu.memory_space<vmem>>, vector<1x8x64xf32>,
    %c2_56 = arith.constant 2 : index
    %c0_57 = arith.constant 0 : index
    %c0_58 = arith.constant 0 : index
    %126 = vector.load %arg9[%c2_56, %c0_57, %c0_58] : memref<4x8x384xf32, #tpu.memory_space<vmem>>, vector<1x8x384xf32>
    %127 = vector.shape_cast %126 : vector<1x8x384xf32> to vector<8x384xf32>
    %cst_59 = arith.constant dense<0.000000e+00> : vector<8x384xf32>
    %128 = tpu.matmul %120, %2, %cst_59 {dimension_numbers = #tpu.dot_dimension_numbers<[1], [0], [0], [1], [0, 0, 1, 1], [], []>} : vector<8x64xf32>, vector<64x384xf32>, vector<8x384xf32> -> vector<8x384xf32>
    %129 = vector.broadcast %3 : vector<1x384xf32> to vector<8x384xf32>
    %130 = arith.addf %128, %129 : vector<8x384xf32>
    %131 = vector.extract_strided_slice %127 {offsets = [0, 0], sizes = [8, 64], strides = [1, 1]} : vector<8x384xf32> to vector<8x64xf32>
    %132 = vector.extract_strided_slice %130 {offsets = [0, 0], sizes = [8, 64], strides = [1, 1]} : vector<8x384xf32> to vector<8x64xf32>
    %133 = arith.addf %131, %132 : vector<8x64xf32>
    %cst_60 = arith.constant 0.000000e+00 : f32
    %134 = vector.broadcast %cst_60 : f32 to vector<8x64xf32>
    %135 = arith.subf %134, %133 : vector<8x64xf32>
    %136 = math.exp %135 : vector<8x64xf32>
    %cst_61 = arith.constant 1.000000e+00 : f32
    %137 = vector.broadcast %cst_61 : f32 to vector<8x64xf32>
    %138 = arith.addf %137, %136 : vector<8x64xf32>
    %139 = tpu.reciprocal %138 : vector<8x64xf32> -> vector<8x64xf32>
    %140 = vector.extract_strided_slice %127 {offsets = [0, 128], sizes = [8, 64], strides = [1, 1]} : vector<8x384xf32> to vector<8x64xf32>
    %141 = vector.extract_strided_slice %130 {offsets = [0, 128], sizes = [8, 64], strides = [1, 1]} : vector<8x384xf32> to vector<8x64xf32>
    %142 = arith.addf %140, %141 : vector<8x64xf32>
    %cst_62 = arith.constant 0.000000e+00 : f32
    %143 = vector.broadcast %cst_62 : f32 to vector<8x64xf32>
    %144 = arith.subf %143, %142 : vector<8x64xf32>
    %145 = math.exp %144 : vector<8x64xf32>
    %cst_63 = arith.constant 1.000000e+00 : f32
    %146 = vector.broadcast %cst_63 : f32 to vector<8x64xf32>
    %147 = arith.addf %146, %145 : vector<8x64xf32>
    %148 = tpu.reciprocal %147 : vector<8x64xf32> -> vector<8x64xf32>
    %149 = vector.extract_strided_slice %127 {offsets = [0, 256], sizes = [8, 64], strides = [1, 1]} : vector<8x384xf32> to vector<8x64xf32>
    %150 = vector.extract_strided_slice %130 {offsets = [0, 256], sizes = [8, 64], strides = [1, 1]} : vector<8x384xf32> to vector<8x64xf32>
    %151 = arith.mulf %139, %150 : vector<8x64xf32>
    %152 = arith.addf %149, %151 : vector<8x64xf32>
    %153 = math.tanh %152 : vector<8x64xf32>
    %154 = arith.subf %120, %153 : vector<8x64xf32>
    %155 = arith.mulf %148, %154 : vector<8x64xf32>
    %156 = arith.addf %153, %155 : vector<8x64xf32>
    %c2_i32 = arith.constant 2 : i32
    %157 = vector.broadcast %c2_i32 : i32 to vector<8x1xi32>
    %158 = arith.cmpi sgt, %4, %157 : vector<8x1xi32>
    %159 = arith.extui %158 : vector<8x1xi1> to vector<8x1xi32>
    %160 = arith.sitofp %159 : vector<8x1xi32> to vector<8x1xf32>
    %161 = arith.subf %156, %120 : vector<8x64xf32>
    %162 = vector.broadcast %160 : vector<8x1xf32> to vector<8x64xf32>
    %163 = arith.mulf %162, %161 : vector<8x64xf32>
    %164 = arith.addf %120, %163 : vector<8x64xf32>
    %165 = vector.broadcast %160 : vector<8x1xf32> to vector<8x64xf32>
    %166 = arith.mulf %164, %165 : vector<8x64xf32>
    %c2_64 = arith.constant 2 : index
    %c0_65 = arith.constant 0 : index
    %c0_66 = arith.constant 0 : index
    %167 = vector.load %arg10[%c2_64, %c0_65, %c0_66] : memref<4x8x64xf32, #tpu.memory_space<vmem>>, vector<1x8x64xf32>
    %168 = vector.shape_cast %167 : vector<1x8x64xf32> to vector<8x64xf32>
    %169 = vector.shape_cast %166 : vector<8x64xf32> to vector<1x8x64xf32>
    tpu.vector_store %arg10[%c2_64, %c0_65, %c0_66], %169 {strides = array<i32>} : memref<4x8x64xf32, #tpu.memory_space<vmem>>, vector<1x8x64xf32>,
    %c3_67 = arith.constant 3 : index
    %c0_68 = arith.constant 0 : index
    %c0_69 = arith.constant 0 : index
    %170 = vector.load %arg9[%c3_67, %c0_68, %c0_69] : memref<4x8x384xf32, #tpu.memory_space<vmem>>, vector<1x8x384xf32>
    %171 = vector.shape_cast %170 : vector<1x8x384xf32> to vector<8x384xf32>
    %cst_70 = arith.constant dense<0.000000e+00> : vector<8x384xf32>
    %172 = tpu.matmul %164, %2, %cst_70 {dimension_numbers = #tpu.dot_dimension_numbers<[1], [0], [0], [1], [0, 0, 1, 1], [], []>} : vector<8x64xf32>, vector<64x384xf32>, vector<8x384xf32> -> vector<8x384xf32>
    %173 = vector.broadcast %3 : vector<1x384xf32> to vector<8x384xf32>
    %174 = arith.addf %172, %173 : vector<8x384xf32>
    %175 = vector.extract_strided_slice %171 {offsets = [0, 0], sizes = [8, 64], strides = [1, 1]} : vector<8x384xf32> to vector<8x64xf32>
    %176 = vector.extract_strided_slice %174 {offsets = [0, 0], sizes = [8, 64], strides = [1, 1]} : vector<8x384xf32> to vector<8x64xf32>
    %177 = arith.addf %175, %176 : vector<8x64xf32>
    %cst_71 = arith.constant 0.000000e+00 : f32
    %178 = vector.broadcast %cst_71 : f32 to vector<8x64xf32>
    %179 = arith.subf %178, %177 : vector<8x64xf32>
    %180 = math.exp %179 : vector<8x64xf32>
    %cst_72 = arith.constant 1.000000e+00 : f32
    %181 = vector.broadcast %cst_72 : f32 to vector<8x64xf32>
    %182 = arith.addf %181, %180 : vector<8x64xf32>
    %183 = tpu.reciprocal %182 : vector<8x64xf32> -> vector<8x64xf32>
    %184 = vector.extract_strided_slice %171 {offsets = [0, 128], sizes = [8, 64], strides = [1, 1]} : vector<8x384xf32> to vector<8x64xf32>
    %185 = vector.extract_strided_slice %174 {offsets = [0, 128], sizes = [8, 64], strides = [1, 1]} : vector<8x384xf32> to vector<8x64xf32>
    %186 = arith.addf %184, %185 : vector<8x64xf32>
    %cst_73 = arith.constant 0.000000e+00 : f32
    %187 = vector.broadcast %cst_73 : f32 to vector<8x64xf32>
    %188 = arith.subf %187, %186 : vector<8x64xf32>
    %189 = math.exp %188 : vector<8x64xf32>
    %cst_74 = arith.constant 1.000000e+00 : f32
    %190 = vector.broadcast %cst_74 : f32 to vector<8x64xf32>
    %191 = arith.addf %190, %189 : vector<8x64xf32>
    %192 = tpu.reciprocal %191 : vector<8x64xf32> -> vector<8x64xf32>
    %193 = vector.extract_strided_slice %171 {offsets = [0, 256], sizes = [8, 64], strides = [1, 1]} : vector<8x384xf32> to vector<8x64xf32>
    %194 = vector.extract_strided_slice %174 {offsets = [0, 256], sizes = [8, 64], strides = [1, 1]} : vector<8x384xf32> to vector<8x64xf32>
    %195 = arith.mulf %183, %194 : vector<8x64xf32>
    %196 = arith.addf %193, %195 : vector<8x64xf32>
    %197 = math.tanh %196 : vector<8x64xf32>
    %198 = arith.subf %164, %197 : vector<8x64xf32>
    %199 = arith.mulf %192, %198 : vector<8x64xf32>
    %200 = arith.addf %197, %199 : vector<8x64xf32>
    %c3_i32 = arith.constant 3 : i32
    %201 = vector.broadcast %c3_i32 : i32 to vector<8x1xi32>
    %202 = arith.cmpi sgt, %4, %201 : vector<8x1xi32>
    %203 = arith.extui %202 : vector<8x1xi1> to vector<8x1xi32>
    %204 = arith.sitofp %203 : vector<8x1xi32> to vector<8x1xf32>
    %205 = arith.subf %200, %164 : vector<8x64xf32>
    %206 = vector.broadcast %204 : vector<8x1xf32> to vector<8x64xf32>
    %207 = arith.mulf %206, %205 : vector<8x64xf32>
    %208 = arith.addf %164, %207 : vector<8x64xf32>
    %209 = vector.broadcast %204 : vector<8x1xf32> to vector<8x64xf32>
    %210 = arith.mulf %208, %209 : vector<8x64xf32>
    %c3_75 = arith.constant 3 : index
    %c0_76 = arith.constant 0 : index
    %c0_77 = arith.constant 0 : index
    %211 = vector.load %arg10[%c3_75, %c0_76, %c0_77] : memref<4x8x64xf32, #tpu.memory_space<vmem>>, vector<1x8x64xf32>
    %212 = vector.shape_cast %211 : vector<1x8x64xf32> to vector<8x64xf32>
    %213 = vector.shape_cast %210 : vector<8x64xf32> to vector<1x8x64xf32>
    tpu.vector_store %arg10[%c3_75, %c0_76, %c0_77], %213 {strides = array<i32>} : memref<4x8x64xf32, #tpu.memory_space<vmem>>, vector<1x8x64xf32>,
    %c0_78 = arith.constant 0 : index
    %c0_79 = arith.constant 0 : index
    %214 = vector.load %arg8[%c0_78, %c0_79] : memref<8x64xf32, #tpu.memory_space<vmem>>, vector<8x64xf32>
    tpu.vector_store %arg8[%c0_78, %c0_79], %208 {strides = array<i32>} : memref<8x64xf32, #tpu.memory_space<vmem>>, vector<8x64xf32>,
    %c0_80 = arith.constant 0 : index
    %c0_81 = arith.constant 0 : index
    %c0_82 = arith.constant 0 : index
    %215 = vector.load %arg10[%c0_80, %c0_81, %c0_82] : memref<4x8x64xf32, #tpu.memory_space<vmem>>, vector<4x8x64xf32>
    %c0_83 = arith.constant 0 : index
    %c0_84 = arith.constant 0 : index
    %c0_85 = arith.constant 0 : index
    %216 = vector.load %arg7[%c0_83, %c0_84, %c0_85] : memref<4x8x64xf32, #tpu.memory_space<vmem>>, vector<4x8x64xf32>
    tpu.vector_store %arg7[%c0_83, %c0_84, %c0_85], %215 {strides = array<i32>} : memref<4x8x64xf32, #tpu.memory_space<vmem>>, vector<4x8x64xf32>,
    return
  }
  func.func @transform_0(%arg0: i32) -> (i32, i32, i32) {
    %c0_i32 = arith.constant 0 : i32
    %c0_i32_0 = arith.constant 0 : i32
    %c0_i32_1 = arith.constant 0 : i32
    %c0_i32_2 = arith.constant 0 : i32
    return %c0_i32, %c0_i32_0, %c0_i32_1 : i32, i32, i32
  }
  func.func @transform_1(%arg0: i32) -> (i32, i32) {
    %c0_i32 = arith.constant 0 : i32
    %c0_i32_0 = arith.constant 0 : i32
    %c0_i32_1 = arith.constant 0 : i32
    return %c0_i32, %c0_i32_0 : i32, i32
  }
  func.func @transform_2(%arg0: i32) -> (i32, i32) {
    %c0_i32 = arith.constant 0 : i32
    %c0_i32_0 = arith.constant 0 : i32
    %c0_i32_1 = arith.constant 0 : i32
    return %c0_i32, %c0_i32_0 : i32, i32
  }
  func.func @transform_3(%arg0: i32) -> (i32, i32) {
    %c0_i32 = arith.constant 0 : i32
    %c0_i32_0 = arith.constant 0 : i32
    %c0_i32_1 = arith.constant 0 : i32
    return %c0_i32, %c0_i32_0 : i32, i32
  }
  func.func @transform_4(%arg0: i32) -> (i32, i32) {
    %c0_i32 = arith.constant 0 : i32
    %c0_i32_0 = arith.constant 0 : i32
    %c0_i32_1 = arith.constant 0 : i32
    return %c0_i32, %c0_i32_0 : i32, i32
  }
  func.func @transform_5(%arg0: i32) -> (i32, i32) {
    %c0_i32 = arith.constant 0 : i32
    %c0_i32_0 = arith.constant 0 : i32
    %c0_i32_1 = arith.constant 0 : i32
    return %c0_i32, %c0_i32_0 : i32, i32
  }
  func.func @transform_6(%arg0: i32) -> (i32, i32, i32) {
    %c0_i32 = arith.constant 0 : i32
    %c0_i32_0 = arith.constant 0 : i32
    %c0_i32_1 = arith.constant 0 : i32
    %c0_i32_2 = arith.constant 0 : i32
    return %c0_i32, %c0_i32_0, %c0_i32_1 : i32, i32, i32
  }
  func.func @transform_7(%arg0: i32) -> (i32, i32) {
    %c0_i32 = arith.constant 0 : i32
    %c0_i32_0 = arith.constant 0 : i32
    %c0_i32_1 = arith.constant 0 : i32
    return %c0_i32, %c0_i32_0 : i32, i32
  }
}

module attributes {stable_mosaic.version = 11 : i64} {
  func.func @token_bigru_kernel(%arg0: i32, %arg1: memref<8x8x16xf32, #tpu.memory_space<vmem>>, %arg2: memref<8x1xi32, #tpu.memory_space<vmem>>, %arg3: memref<16x768xf32, #tpu.memory_space<vmem>>, %arg4: memref<1x768xf32, #tpu.memory_space<vmem>>, %arg5: memref<32x384xf32, #tpu.memory_space<vmem>>, %arg6: memref<1x384xf32, #tpu.memory_space<vmem>>, %arg7: memref<32x384xf32, #tpu.memory_space<vmem>>, %arg8: memref<1x384xf32, #tpu.memory_space<vmem>>, %arg9: memref<8x8x64xf32, #tpu.memory_space<vmem>>, %arg10: memref<8x64xf32, #tpu.memory_space<vmem>>, %arg11: memref<8x8x384xf32, #tpu.memory_space<vmem>>, %arg12: memref<8x8x384xf32, #tpu.memory_space<vmem>>, %arg13: memref<8x8x32xf32, #tpu.memory_space<vmem>>, %arg14: memref<8x8x32xf32, #tpu.memory_space<vmem>>) attributes {dimension_semantics = [#tpu.dimension_semantics<parallel>], iteration_bounds = array<i64: 1>, scalar_prefetch = 0 : i64, scratch_operands = 4 : i64, tpu.core_type = #tpu.core_type<tc>, window_params = [{transform_indices = @transform_0, window_bounds = array<i64: 8, 8, 16>}, {transform_indices = @transform_1, window_bounds = array<i64: 8, 1>}, {pipeline_mode = #tpu.pipeline_mode<synchronous>, transform_indices = @transform_2, window_bounds = array<i64: 16, 768>}, {pipeline_mode = #tpu.pipeline_mode<synchronous>, transform_indices = @transform_3, window_bounds = array<i64: 1, 768>}, {pipeline_mode = #tpu.pipeline_mode<synchronous>, transform_indices = @transform_4, window_bounds = array<i64: 32, 384>}, {pipeline_mode = #tpu.pipeline_mode<synchronous>, transform_indices = @transform_5, window_bounds = array<i64: 1, 384>}, {pipeline_mode = #tpu.pipeline_mode<synchronous>, transform_indices = @transform_6, window_bounds = array<i64: 32, 384>}, {pipeline_mode = #tpu.pipeline_mode<synchronous>, transform_indices = @transform_7, window_bounds = array<i64: 1, 384>}, {transform_indices = @transform_8, window_bounds = array<i64: 8, 8, 64>}, {transform_indices = @transform_9, window_bounds = array<i64: 8, 64>}]} {
    %c0 = arith.constant 0 : index
    %c0_0 = arith.constant 0 : index
    %0 = vector.load %arg3[%c0, %c0_0] : memref<16x768xf32, #tpu.memory_space<vmem>>, vector<16x768xf32>
    %c0_1 = arith.constant 0 : index
    %c0_2 = arith.constant 0 : index
    %1 = vector.load %arg4[%c0_1, %c0_2] : memref<1x768xf32, #tpu.memory_space<vmem>>, vector<1x768xf32>
    %c0_3 = arith.constant 0 : index
    %c0_4 = arith.constant 0 : index
    %2 = vector.load %arg5[%c0_3, %c0_4] : memref<32x384xf32, #tpu.memory_space<vmem>>, vector<32x384xf32>
    %c0_5 = arith.constant 0 : index
    %c0_6 = arith.constant 0 : index
    %3 = vector.load %arg6[%c0_5, %c0_6] : memref<1x384xf32, #tpu.memory_space<vmem>>, vector<1x384xf32>
    %c0_7 = arith.constant 0 : index
    %c0_8 = arith.constant 0 : index
    %4 = vector.load %arg7[%c0_7, %c0_8] : memref<32x384xf32, #tpu.memory_space<vmem>>, vector<32x384xf32>
    %c0_9 = arith.constant 0 : index
    %c0_10 = arith.constant 0 : index
    %5 = vector.load %arg8[%c0_9, %c0_10] : memref<1x384xf32, #tpu.memory_space<vmem>>, vector<1x384xf32>
    %c0_11 = arith.constant 0 : index
    %c0_12 = arith.constant 0 : index
    %6 = vector.load %arg2[%c0_11, %c0_12] : memref<8x1xi32, #tpu.memory_space<vmem>>, vector<8x1xi32>
    %c0_13 = arith.constant 0 : index
    %c0_14 = arith.constant 0 : index
    %c0_15 = arith.constant 0 : index
    %7 = vector.load %arg1[%c0_13, %c0_14, %c0_15] : memref<8x8x16xf32, #tpu.memory_space<vmem>>, vector<1x8x16xf32>
    %8 = vector.shape_cast %7 : vector<1x8x16xf32> to vector<8x16xf32>
    %cst = arith.constant dense<0.000000e+00> : vector<8x768xf32>
    %9 = tpu.matmul %8, %0, %cst {dimension_numbers = #tpu.dot_dimension_numbers<[1], [0], [0], [1], [0, 0, 1, 1], [], []>} : vector<8x16xf32>, vector<16x768xf32>, vector<8x768xf32> -> vector<8x768xf32>
    %10 = vector.broadcast %1 : vector<1x768xf32> to vector<8x768xf32>
    %11 = arith.addf %9, %10 : vector<8x768xf32>
    %12 = vector.extract_strided_slice %11 {offsets = [0, 0], sizes = [8, 384], strides = [1, 1]} : vector<8x768xf32> to vector<8x384xf32>
    %c0_16 = arith.constant 0 : index
    %c0_17 = arith.constant 0 : index
    %c0_18 = arith.constant 0 : index
    %13 = vector.load %arg11[%c0_16, %c0_17, %c0_18] : memref<8x8x384xf32, #tpu.memory_space<vmem>>, vector<1x8x384xf32>
    %14 = vector.shape_cast %13 : vector<1x8x384xf32> to vector<8x384xf32>
    %15 = vector.shape_cast %12 : vector<8x384xf32> to vector<1x8x384xf32>
    tpu.vector_store %arg11[%c0_16, %c0_17, %c0_18], %15 {strides = array<i32>} : memref<8x8x384xf32, #tpu.memory_space<vmem>>, vector<1x8x384xf32>,
    %16 = vector.extract_strided_slice %11 {offsets = [0, 384], sizes = [8, 384], strides = [1, 1]} : vector<8x768xf32> to vector<8x384xf32>
    %c0_19 = arith.constant 0 : index
    %c0_20 = arith.constant 0 : index
    %c0_21 = arith.constant 0 : index
    %17 = vector.load %arg12[%c0_19, %c0_20, %c0_21] : memref<8x8x384xf32, #tpu.memory_space<vmem>>, vector<1x8x384xf32>
    %18 = vector.shape_cast %17 : vector<1x8x384xf32> to vector<8x384xf32>
    %19 = vector.shape_cast %16 : vector<8x384xf32> to vector<1x8x384xf32>
    tpu.vector_store %arg12[%c0_19, %c0_20, %c0_21], %19 {strides = array<i32>} : memref<8x8x384xf32, #tpu.memory_space<vmem>>, vector<1x8x384xf32>,
    %c1 = arith.constant 1 : index
    %c0_22 = arith.constant 0 : index
    %c0_23 = arith.constant 0 : index
    %20 = vector.load %arg1[%c1, %c0_22, %c0_23] : memref<8x8x16xf32, #tpu.memory_space<vmem>>, vector<1x8x16xf32>
    %21 = vector.shape_cast %20 : vector<1x8x16xf32> to vector<8x16xf32>
    %cst_24 = arith.constant dense<0.000000e+00> : vector<8x768xf32>
    %22 = tpu.matmul %21, %0, %cst_24 {dimension_numbers = #tpu.dot_dimension_numbers<[1], [0], [0], [1], [0, 0, 1, 1], [], []>} : vector<8x16xf32>, vector<16x768xf32>, vector<8x768xf32> -> vector<8x768xf32>
    %23 = vector.broadcast %1 : vector<1x768xf32> to vector<8x768xf32>
    %24 = arith.addf %22, %23 : vector<8x768xf32>
    %25 = vector.extract_strided_slice %24 {offsets = [0, 0], sizes = [8, 384], strides = [1, 1]} : vector<8x768xf32> to vector<8x384xf32>
    %c1_25 = arith.constant 1 : index
    %c0_26 = arith.constant 0 : index
    %c0_27 = arith.constant 0 : index
    %26 = vector.load %arg11[%c1_25, %c0_26, %c0_27] : memref<8x8x384xf32, #tpu.memory_space<vmem>>, vector<1x8x384xf32>
    %27 = vector.shape_cast %26 : vector<1x8x384xf32> to vector<8x384xf32>
    %28 = vector.shape_cast %25 : vector<8x384xf32> to vector<1x8x384xf32>
    tpu.vector_store %arg11[%c1_25, %c0_26, %c0_27], %28 {strides = array<i32>} : memref<8x8x384xf32, #tpu.memory_space<vmem>>, vector<1x8x384xf32>,
    %29 = vector.extract_strided_slice %24 {offsets = [0, 384], sizes = [8, 384], strides = [1, 1]} : vector<8x768xf32> to vector<8x384xf32>
    %c1_28 = arith.constant 1 : index
    %c0_29 = arith.constant 0 : index
    %c0_30 = arith.constant 0 : index
    %30 = vector.load %arg12[%c1_28, %c0_29, %c0_30] : memref<8x8x384xf32, #tpu.memory_space<vmem>>, vector<1x8x384xf32>
    %31 = vector.shape_cast %30 : vector<1x8x384xf32> to vector<8x384xf32>
    %32 = vector.shape_cast %29 : vector<8x384xf32> to vector<1x8x384xf32>
    tpu.vector_store %arg12[%c1_28, %c0_29, %c0_30], %32 {strides = array<i32>} : memref<8x8x384xf32, #tpu.memory_space<vmem>>, vector<1x8x384xf32>,
    %c2 = arith.constant 2 : index
    %c0_31 = arith.constant 0 : index
    %c0_32 = arith.constant 0 : index
    %33 = vector.load %arg1[%c2, %c0_31, %c0_32] : memref<8x8x16xf32, #tpu.memory_space<vmem>>, vector<1x8x16xf32>
    %34 = vector.shape_cast %33 : vector<1x8x16xf32> to vector<8x16xf32>
    %cst_33 = arith.constant dense<0.000000e+00> : vector<8x768xf32>
    %35 = tpu.matmul %34, %0, %cst_33 {dimension_numbers = #tpu.dot_dimension_numbers<[1], [0], [0], [1], [0, 0, 1, 1], [], []>} : vector<8x16xf32>, vector<16x768xf32>, vector<8x768xf32> -> vector<8x768xf32>
    %36 = vector.broadcast %1 : vector<1x768xf32> to vector<8x768xf32>
    %37 = arith.addf %35, %36 : vector<8x768xf32>
    %38 = vector.extract_strided_slice %37 {offsets = [0, 0], sizes = [8, 384], strides = [1, 1]} : vector<8x768xf32> to vector<8x384xf32>
    %c2_34 = arith.constant 2 : index
    %c0_35 = arith.constant 0 : index
    %c0_36 = arith.constant 0 : index
    %39 = vector.load %arg11[%c2_34, %c0_35, %c0_36] : memref<8x8x384xf32, #tpu.memory_space<vmem>>, vector<1x8x384xf32>
    %40 = vector.shape_cast %39 : vector<1x8x384xf32> to vector<8x384xf32>
    %41 = vector.shape_cast %38 : vector<8x384xf32> to vector<1x8x384xf32>
    tpu.vector_store %arg11[%c2_34, %c0_35, %c0_36], %41 {strides = array<i32>} : memref<8x8x384xf32, #tpu.memory_space<vmem>>, vector<1x8x384xf32>,
    %42 = vector.extract_strided_slice %37 {offsets = [0, 384], sizes = [8, 384], strides = [1, 1]} : vector<8x768xf32> to vector<8x384xf32>
    %c2_37 = arith.constant 2 : index
    %c0_38 = arith.constant 0 : index
    %c0_39 = arith.constant 0 : index
    %43 = vector.load %arg12[%c2_37, %c0_38, %c0_39] : memref<8x8x384xf32, #tpu.memory_space<vmem>>, vector<1x8x384xf32>
    %44 = vector.shape_cast %43 : vector<1x8x384xf32> to vector<8x384xf32>
    %45 = vector.shape_cast %42 : vector<8x384xf32> to vector<1x8x384xf32>
    tpu.vector_store %arg12[%c2_37, %c0_38, %c0_39], %45 {strides = array<i32>} : memref<8x8x384xf32, #tpu.memory_space<vmem>>, vector<1x8x384xf32>,
    %c3 = arith.constant 3 : index
    %c0_40 = arith.constant 0 : index
    %c0_41 = arith.constant 0 : index
    %46 = vector.load %arg1[%c3, %c0_40, %c0_41] : memref<8x8x16xf32, #tpu.memory_space<vmem>>, vector<1x8x16xf32>
    %47 = vector.shape_cast %46 : vector<1x8x16xf32> to vector<8x16xf32>
    %cst_42 = arith.constant dense<0.000000e+00> : vector<8x768xf32>
    %48 = tpu.matmul %47, %0, %cst_42 {dimension_numbers = #tpu.dot_dimension_numbers<[1], [0], [0], [1], [0, 0, 1, 1], [], []>} : vector<8x16xf32>, vector<16x768xf32>, vector<8x768xf32> -> vector<8x768xf32>
    %49 = vector.broadcast %1 : vector<1x768xf32> to vector<8x768xf32>
    %50 = arith.addf %48, %49 : vector<8x768xf32>
    %51 = vector.extract_strided_slice %50 {offsets = [0, 0], sizes = [8, 384], strides = [1, 1]} : vector<8x768xf32> to vector<8x384xf32>
    %c3_43 = arith.constant 3 : index
    %c0_44 = arith.constant 0 : index
    %c0_45 = arith.constant 0 : index
    %52 = vector.load %arg11[%c3_43, %c0_44, %c0_45] : memref<8x8x384xf32, #tpu.memory_space<vmem>>, vector<1x8x384xf32>
    %53 = vector.shape_cast %52 : vector<1x8x384xf32> to vector<8x384xf32>
    %54 = vector.shape_cast %51 : vector<8x384xf32> to vector<1x8x384xf32>
    tpu.vector_store %arg11[%c3_43, %c0_44, %c0_45], %54 {strides = array<i32>} : memref<8x8x384xf32, #tpu.memory_space<vmem>>, vector<1x8x384xf32>,
    %55 = vector.extract_strided_slice %50 {offsets = [0, 384], sizes = [8, 384], strides = [1, 1]} : vector<8x768xf32> to vector<8x384xf32>
    %c3_46 = arith.constant 3 : index
    %c0_47 = arith.constant 0 : index
    %c0_48 = arith.constant 0 : index
    %56 = vector.load %arg12[%c3_46, %c0_47, %c0_48] : memref<8x8x384xf32, #tpu.memory_space<vmem>>, vector<1x8x384xf32>
    %57 = vector.shape_cast %56 : vector<1x8x384xf32> to vector<8x384xf32>
    %58 = vector.shape_cast %55 : vector<8x384xf32> to vector<1x8x384xf32>
    tpu.vector_store %arg12[%c3_46, %c0_47, %c0_48], %58 {strides = array<i32>} : memref<8x8x384xf32, #tpu.memory_space<vmem>>, vector<1x8x384xf32>,
    %c4 = arith.constant 4 : index
    %c0_49 = arith.constant 0 : index
    %c0_50 = arith.constant 0 : index
    %59 = vector.load %arg1[%c4, %c0_49, %c0_50] : memref<8x8x16xf32, #tpu.memory_space<vmem>>, vector<1x8x16xf32>
    %60 = vector.shape_cast %59 : vector<1x8x16xf32> to vector<8x16xf32>
    %cst_51 = arith.constant dense<0.000000e+00> : vector<8x768xf32>
    %61 = tpu.matmul %60, %0, %cst_51 {dimension_numbers = #tpu.dot_dimension_numbers<[1], [0], [0], [1], [0, 0, 1, 1], [], []>} : vector<8x16xf32>, vector<16x768xf32>, vector<8x768xf32> -> vector<8x768xf32>
    %62 = vector.broadcast %1 : vector<1x768xf32> to vector<8x768xf32>
    %63 = arith.addf %61, %62 : vector<8x768xf32>
    %64 = vector.extract_strided_slice %63 {offsets = [0, 0], sizes = [8, 384], strides = [1, 1]} : vector<8x768xf32> to vector<8x384xf32>
    %c4_52 = arith.constant 4 : index
    %c0_53 = arith.constant 0 : index
    %c0_54 = arith.constant 0 : index
    %65 = vector.load %arg11[%c4_52, %c0_53, %c0_54] : memref<8x8x384xf32, #tpu.memory_space<vmem>>, vector<1x8x384xf32>
    %66 = vector.shape_cast %65 : vector<1x8x384xf32> to vector<8x384xf32>
    %67 = vector.shape_cast %64 : vector<8x384xf32> to vector<1x8x384xf32>
    tpu.vector_store %arg11[%c4_52, %c0_53, %c0_54], %67 {strides = array<i32>} : memref<8x8x384xf32, #tpu.memory_space<vmem>>, vector<1x8x384xf32>,
    %68 = vector.extract_strided_slice %63 {offsets = [0, 384], sizes = [8, 384], strides = [1, 1]} : vector<8x768xf32> to vector<8x384xf32>
    %c4_55 = arith.constant 4 : index
    %c0_56 = arith.constant 0 : index
    %c0_57 = arith.constant 0 : index
    %69 = vector.load %arg12[%c4_55, %c0_56, %c0_57] : memref<8x8x384xf32, #tpu.memory_space<vmem>>, vector<1x8x384xf32>
    %70 = vector.shape_cast %69 : vector<1x8x384xf32> to vector<8x384xf32>
    %71 = vector.shape_cast %68 : vector<8x384xf32> to vector<1x8x384xf32>
    tpu.vector_store %arg12[%c4_55, %c0_56, %c0_57], %71 {strides = array<i32>} : memref<8x8x384xf32, #tpu.memory_space<vmem>>, vector<1x8x384xf32>,
    %c5 = arith.constant 5 : index
    %c0_58 = arith.constant 0 : index
    %c0_59 = arith.constant 0 : index
    %72 = vector.load %arg1[%c5, %c0_58, %c0_59] : memref<8x8x16xf32, #tpu.memory_space<vmem>>, vector<1x8x16xf32>
    %73 = vector.shape_cast %72 : vector<1x8x16xf32> to vector<8x16xf32>
    %cst_60 = arith.constant dense<0.000000e+00> : vector<8x768xf32>
    %74 = tpu.matmul %73, %0, %cst_60 {dimension_numbers = #tpu.dot_dimension_numbers<[1], [0], [0], [1], [0, 0, 1, 1], [], []>} : vector<8x16xf32>, vector<16x768xf32>, vector<8x768xf32> -> vector<8x768xf32>
    %75 = vector.broadcast %1 : vector<1x768xf32> to vector<8x768xf32>
    %76 = arith.addf %74, %75 : vector<8x768xf32>
    %77 = vector.extract_strided_slice %76 {offsets = [0, 0], sizes = [8, 384], strides = [1, 1]} : vector<8x768xf32> to vector<8x384xf32>
    %c5_61 = arith.constant 5 : index
    %c0_62 = arith.constant 0 : index
    %c0_63 = arith.constant 0 : index
    %78 = vector.load %arg11[%c5_61, %c0_62, %c0_63] : memref<8x8x384xf32, #tpu.memory_space<vmem>>, vector<1x8x384xf32>
    %79 = vector.shape_cast %78 : vector<1x8x384xf32> to vector<8x384xf32>
    %80 = vector.shape_cast %77 : vector<8x384xf32> to vector<1x8x384xf32>
    tpu.vector_store %arg11[%c5_61, %c0_62, %c0_63], %80 {strides = array<i32>} : memref<8x8x384xf32, #tpu.memory_space<vmem>>, vector<1x8x384xf32>,
    %81 = vector.extract_strided_slice %76 {offsets = [0, 384], sizes = [8, 384], strides = [1, 1]} : vector<8x768xf32> to vector<8x384xf32>
    %c5_64 = arith.constant 5 : index
    %c0_65 = arith.constant 0 : index
    %c0_66 = arith.constant 0 : index
    %82 = vector.load %arg12[%c5_64, %c0_65, %c0_66] : memref<8x8x384xf32, #tpu.memory_space<vmem>>, vector<1x8x384xf32>
    %83 = vector.shape_cast %82 : vector<1x8x384xf32> to vector<8x384xf32>
    %84 = vector.shape_cast %81 : vector<8x384xf32> to vector<1x8x384xf32>
    tpu.vector_store %arg12[%c5_64, %c0_65, %c0_66], %84 {strides = array<i32>} : memref<8x8x384xf32, #tpu.memory_space<vmem>>, vector<1x8x384xf32>,
    %c6 = arith.constant 6 : index
    %c0_67 = arith.constant 0 : index
    %c0_68 = arith.constant 0 : index
    %85 = vector.load %arg1[%c6, %c0_67, %c0_68] : memref<8x8x16xf32, #tpu.memory_space<vmem>>, vector<1x8x16xf32>
    %86 = vector.shape_cast %85 : vector<1x8x16xf32> to vector<8x16xf32>
    %cst_69 = arith.constant dense<0.000000e+00> : vector<8x768xf32>
    %87 = tpu.matmul %86, %0, %cst_69 {dimension_numbers = #tpu.dot_dimension_numbers<[1], [0], [0], [1], [0, 0, 1, 1], [], []>} : vector<8x16xf32>, vector<16x768xf32>, vector<8x768xf32> -> vector<8x768xf32>
    %88 = vector.broadcast %1 : vector<1x768xf32> to vector<8x768xf32>
    %89 = arith.addf %87, %88 : vector<8x768xf32>
    %90 = vector.extract_strided_slice %89 {offsets = [0, 0], sizes = [8, 384], strides = [1, 1]} : vector<8x768xf32> to vector<8x384xf32>
    %c6_70 = arith.constant 6 : index
    %c0_71 = arith.constant 0 : index
    %c0_72 = arith.constant 0 : index
    %91 = vector.load %arg11[%c6_70, %c0_71, %c0_72] : memref<8x8x384xf32, #tpu.memory_space<vmem>>, vector<1x8x384xf32>
    %92 = vector.shape_cast %91 : vector<1x8x384xf32> to vector<8x384xf32>
    %93 = vector.shape_cast %90 : vector<8x384xf32> to vector<1x8x384xf32>
    tpu.vector_store %arg11[%c6_70, %c0_71, %c0_72], %93 {strides = array<i32>} : memref<8x8x384xf32, #tpu.memory_space<vmem>>, vector<1x8x384xf32>,
    %94 = vector.extract_strided_slice %89 {offsets = [0, 384], sizes = [8, 384], strides = [1, 1]} : vector<8x768xf32> to vector<8x384xf32>
    %c6_73 = arith.constant 6 : index
    %c0_74 = arith.constant 0 : index
    %c0_75 = arith.constant 0 : index
    %95 = vector.load %arg12[%c6_73, %c0_74, %c0_75] : memref<8x8x384xf32, #tpu.memory_space<vmem>>, vector<1x8x384xf32>
    %96 = vector.shape_cast %95 : vector<1x8x384xf32> to vector<8x384xf32>
    %97 = vector.shape_cast %94 : vector<8x384xf32> to vector<1x8x384xf32>
    tpu.vector_store %arg12[%c6_73, %c0_74, %c0_75], %97 {strides = array<i32>} : memref<8x8x384xf32, #tpu.memory_space<vmem>>, vector<1x8x384xf32>,
    %c7 = arith.constant 7 : index
    %c0_76 = arith.constant 0 : index
    %c0_77 = arith.constant 0 : index
    %98 = vector.load %arg1[%c7, %c0_76, %c0_77] : memref<8x8x16xf32, #tpu.memory_space<vmem>>, vector<1x8x16xf32>
    %99 = vector.shape_cast %98 : vector<1x8x16xf32> to vector<8x16xf32>
    %cst_78 = arith.constant dense<0.000000e+00> : vector<8x768xf32>
    %100 = tpu.matmul %99, %0, %cst_78 {dimension_numbers = #tpu.dot_dimension_numbers<[1], [0], [0], [1], [0, 0, 1, 1], [], []>} : vector<8x16xf32>, vector<16x768xf32>, vector<8x768xf32> -> vector<8x768xf32>
    %101 = vector.broadcast %1 : vector<1x768xf32> to vector<8x768xf32>
    %102 = arith.addf %100, %101 : vector<8x768xf32>
    %103 = vector.extract_strided_slice %102 {offsets = [0, 0], sizes = [8, 384], strides = [1, 1]} : vector<8x768xf32> to vector<8x384xf32>
    %c7_79 = arith.constant 7 : index
    %c0_80 = arith.constant 0 : index
    %c0_81 = arith.constant 0 : index
    %104 = vector.load %arg11[%c7_79, %c0_80, %c0_81] : memref<8x8x384xf32, #tpu.memory_space<vmem>>, vector<1x8x384xf32>
    %105 = vector.shape_cast %104 : vector<1x8x384xf32> to vector<8x384xf32>
    %106 = vector.shape_cast %103 : vector<8x384xf32> to vector<1x8x384xf32>
    tpu.vector_store %arg11[%c7_79, %c0_80, %c0_81], %106 {strides = array<i32>} : memref<8x8x384xf32, #tpu.memory_space<vmem>>, vector<1x8x384xf32>,
    %107 = vector.extract_strided_slice %102 {offsets = [0, 384], sizes = [8, 384], strides = [1, 1]} : vector<8x768xf32> to vector<8x384xf32>
    %c7_82 = arith.constant 7 : index
    %c0_83 = arith.constant 0 : index
    %c0_84 = arith.constant 0 : index
    %108 = vector.load %arg12[%c7_82, %c0_83, %c0_84] : memref<8x8x384xf32, #tpu.memory_space<vmem>>, vector<1x8x384xf32>
    %109 = vector.shape_cast %108 : vector<1x8x384xf32> to vector<8x384xf32>
    %110 = vector.shape_cast %107 : vector<8x384xf32> to vector<1x8x384xf32>
    tpu.vector_store %arg12[%c7_82, %c0_83, %c0_84], %110 {strides = array<i32>} : memref<8x8x384xf32, #tpu.memory_space<vmem>>, vector<1x8x384xf32>,
    %cst_85 = arith.constant 0.000000e+00 : f32
    %111 = vector.broadcast %cst_85 : f32 to vector<8x32xf32>
    %c0_86 = arith.constant 0 : index
    %c0_87 = arith.constant 0 : index
    %c0_88 = arith.constant 0 : index
    %112 = vector.load %arg11[%c0_86, %c0_87, %c0_88] : memref<8x8x384xf32, #tpu.memory_space<vmem>>, vector<1x8x384xf32>
    %113 = vector.shape_cast %112 : vector<1x8x384xf32> to vector<8x384xf32>
    %cst_89 = arith.constant dense<0.000000e+00> : vector<8x384xf32>
    %114 = tpu.matmul %111, %2, %cst_89 {dimension_numbers = #tpu.dot_dimension_numbers<[1], [0], [0], [1], [0, 0, 1, 1], [], []>} : vector<8x32xf32>, vector<32x384xf32>, vector<8x384xf32> -> vector<8x384xf32>
    %115 = vector.broadcast %3 : vector<1x384xf32> to vector<8x384xf32>
    %116 = arith.addf %114, %115 : vector<8x384xf32>
    %117 = vector.extract_strided_slice %113 {offsets = [0, 0], sizes = [8, 32], strides = [1, 1]} : vector<8x384xf32> to vector<8x32xf32>
    %118 = vector.extract_strided_slice %116 {offsets = [0, 0], sizes = [8, 32], strides = [1, 1]} : vector<8x384xf32> to vector<8x32xf32>
    %119 = arith.addf %117, %118 : vector<8x32xf32>
    %cst_90 = arith.constant 0.000000e+00 : f32
    %120 = vector.broadcast %cst_90 : f32 to vector<8x32xf32>
    %121 = arith.subf %120, %119 : vector<8x32xf32>
    %122 = math.exp %121 : vector<8x32xf32>
    %cst_91 = arith.constant 1.000000e+00 : f32
    %123 = vector.broadcast %cst_91 : f32 to vector<8x32xf32>
    %124 = arith.addf %123, %122 : vector<8x32xf32>
    %125 = tpu.reciprocal %124 : vector<8x32xf32> -> vector<8x32xf32>
    %126 = vector.extract_strided_slice %113 {offsets = [0, 128], sizes = [8, 32], strides = [1, 1]} : vector<8x384xf32> to vector<8x32xf32>
    %127 = vector.extract_strided_slice %116 {offsets = [0, 128], sizes = [8, 32], strides = [1, 1]} : vector<8x384xf32> to vector<8x32xf32>
    %128 = arith.addf %126, %127 : vector<8x32xf32>
    %cst_92 = arith.constant 0.000000e+00 : f32
    %129 = vector.broadcast %cst_92 : f32 to vector<8x32xf32>
    %130 = arith.subf %129, %128 : vector<8x32xf32>
    %131 = math.exp %130 : vector<8x32xf32>
    %cst_93 = arith.constant 1.000000e+00 : f32
    %132 = vector.broadcast %cst_93 : f32 to vector<8x32xf32>
    %133 = arith.addf %132, %131 : vector<8x32xf32>
    %134 = tpu.reciprocal %133 : vector<8x32xf32> -> vector<8x32xf32>
    %135 = vector.extract_strided_slice %113 {offsets = [0, 256], sizes = [8, 32], strides = [1, 1]} : vector<8x384xf32> to vector<8x32xf32>
    %136 = vector.extract_strided_slice %116 {offsets = [0, 256], sizes = [8, 32], strides = [1, 1]} : vector<8x384xf32> to vector<8x32xf32>
    %137 = arith.mulf %125, %136 : vector<8x32xf32>
    %138 = arith.addf %135, %137 : vector<8x32xf32>
    %139 = math.tanh %138 : vector<8x32xf32>
    %140 = arith.subf %111, %139 : vector<8x32xf32>
    %141 = arith.mulf %134, %140 : vector<8x32xf32>
    %142 = arith.addf %139, %141 : vector<8x32xf32>
    %c7_94 = arith.constant 7 : index
    %c0_95 = arith.constant 0 : index
    %c0_96 = arith.constant 0 : index
    %143 = vector.load %arg12[%c7_94, %c0_95, %c0_96] : memref<8x8x384xf32, #tpu.memory_space<vmem>>, vector<1x8x384xf32>
    %144 = vector.shape_cast %143 : vector<1x8x384xf32> to vector<8x384xf32>
    %cst_97 = arith.constant dense<0.000000e+00> : vector<8x384xf32>
    %145 = tpu.matmul %111, %4, %cst_97 {dimension_numbers = #tpu.dot_dimension_numbers<[1], [0], [0], [1], [0, 0, 1, 1], [], []>} : vector<8x32xf32>, vector<32x384xf32>, vector<8x384xf32> -> vector<8x384xf32>
    %146 = vector.broadcast %5 : vector<1x384xf32> to vector<8x384xf32>
    %147 = arith.addf %145, %146 : vector<8x384xf32>
    %148 = vector.extract_strided_slice %144 {offsets = [0, 0], sizes = [8, 32], strides = [1, 1]} : vector<8x384xf32> to vector<8x32xf32>
    %149 = vector.extract_strided_slice %147 {offsets = [0, 0], sizes = [8, 32], strides = [1, 1]} : vector<8x384xf32> to vector<8x32xf32>
    %150 = arith.addf %148, %149 : vector<8x32xf32>
    %cst_98 = arith.constant 0.000000e+00 : f32
    %151 = vector.broadcast %cst_98 : f32 to vector<8x32xf32>
    %152 = arith.subf %151, %150 : vector<8x32xf32>
    %153 = math.exp %152 : vector<8x32xf32>
    %cst_99 = arith.constant 1.000000e+00 : f32
    %154 = vector.broadcast %cst_99 : f32 to vector<8x32xf32>
    %155 = arith.addf %154, %153 : vector<8x32xf32>
    %156 = tpu.reciprocal %155 : vector<8x32xf32> -> vector<8x32xf32>
    %157 = vector.extract_strided_slice %144 {offsets = [0, 128], sizes = [8, 32], strides = [1, 1]} : vector<8x384xf32> to vector<8x32xf32>
    %158 = vector.extract_strided_slice %147 {offsets = [0, 128], sizes = [8, 32], strides = [1, 1]} : vector<8x384xf32> to vector<8x32xf32>
    %159 = arith.addf %157, %158 : vector<8x32xf32>
    %cst_100 = arith.constant 0.000000e+00 : f32
    %160 = vector.broadcast %cst_100 : f32 to vector<8x32xf32>
    %161 = arith.subf %160, %159 : vector<8x32xf32>
    %162 = math.exp %161 : vector<8x32xf32>
    %cst_101 = arith.constant 1.000000e+00 : f32
    %163 = vector.broadcast %cst_101 : f32 to vector<8x32xf32>
    %164 = arith.addf %163, %162 : vector<8x32xf32>
    %165 = tpu.reciprocal %164 : vector<8x32xf32> -> vector<8x32xf32>
    %166 = vector.extract_strided_slice %144 {offsets = [0, 256], sizes = [8, 32], strides = [1, 1]} : vector<8x384xf32> to vector<8x32xf32>
    %167 = vector.extract_strided_slice %147 {offsets = [0, 256], sizes = [8, 32], strides = [1, 1]} : vector<8x384xf32> to vector<8x32xf32>
    %168 = arith.mulf %156, %167 : vector<8x32xf32>
    %169 = arith.addf %166, %168 : vector<8x32xf32>
    %170 = math.tanh %169 : vector<8x32xf32>
    %171 = arith.subf %111, %170 : vector<8x32xf32>
    %172 = arith.mulf %165, %171 : vector<8x32xf32>
    %173 = arith.addf %170, %172 : vector<8x32xf32>
    %c0_i32 = arith.constant 0 : i32
    %174 = vector.broadcast %c0_i32 : i32 to vector<8x1xi32>
    %175 = arith.cmpi sgt, %6, %174 : vector<8x1xi32>
    %176 = arith.extui %175 : vector<8x1xi1> to vector<8x1xi32>
    %177 = arith.sitofp %176 : vector<8x1xi32> to vector<8x1xf32>
    %c7_i32 = arith.constant 7 : i32
    %178 = vector.broadcast %c7_i32 : i32 to vector<8x1xi32>
    %179 = arith.cmpi sgt, %6, %178 : vector<8x1xi32>
    %180 = arith.extui %179 : vector<8x1xi1> to vector<8x1xi32>
    %181 = arith.sitofp %180 : vector<8x1xi32> to vector<8x1xf32>
    %182 = arith.subf %142, %111 : vector<8x32xf32>
    %183 = vector.broadcast %177 : vector<8x1xf32> to vector<8x32xf32>
    %184 = arith.mulf %183, %182 : vector<8x32xf32>
    %185 = arith.addf %111, %184 : vector<8x32xf32>
    %186 = arith.subf %173, %111 : vector<8x32xf32>
    %187 = vector.broadcast %181 : vector<8x1xf32> to vector<8x32xf32>
    %188 = arith.mulf %187, %186 : vector<8x32xf32>
    %189 = arith.addf %111, %188 : vector<8x32xf32>
    %190 = vector.broadcast %177 : vector<8x1xf32> to vector<8x32xf32>
    %191 = arith.mulf %185, %190 : vector<8x32xf32>
    %c0_102 = arith.constant 0 : index
    %c0_103 = arith.constant 0 : index
    %c0_104 = arith.constant 0 : index
    %192 = vector.load %arg13[%c0_102, %c0_103, %c0_104] : memref<8x8x32xf32, #tpu.memory_space<vmem>>, vector<1x8x32xf32>
    %193 = vector.shape_cast %192 : vector<1x8x32xf32> to vector<8x32xf32>
    %194 = vector.shape_cast %191 : vector<8x32xf32> to vector<1x8x32xf32>
    tpu.vector_store %arg13[%c0_102, %c0_103, %c0_104], %194 {strides = array<i32>} : memref<8x8x32xf32, #tpu.memory_space<vmem>>, vector<1x8x32xf32>,
    %195 = vector.broadcast %181 : vector<8x1xf32> to vector<8x32xf32>
    %196 = arith.mulf %189, %195 : vector<8x32xf32>
    %c7_105 = arith.constant 7 : index
    %c0_106 = arith.constant 0 : index
    %c0_107 = arith.constant 0 : index
    %197 = vector.load %arg14[%c7_105, %c0_106, %c0_107] : memref<8x8x32xf32, #tpu.memory_space<vmem>>, vector<1x8x32xf32>
    %198 = vector.shape_cast %197 : vector<1x8x32xf32> to vector<8x32xf32>
    %199 = vector.shape_cast %196 : vector<8x32xf32> to vector<1x8x32xf32>
    tpu.vector_store %arg14[%c7_105, %c0_106, %c0_107], %199 {strides = array<i32>} : memref<8x8x32xf32, #tpu.memory_space<vmem>>, vector<1x8x32xf32>,
    %c1_108 = arith.constant 1 : index
    %c0_109 = arith.constant 0 : index
    %c0_110 = arith.constant 0 : index
    %200 = vector.load %arg11[%c1_108, %c0_109, %c0_110] : memref<8x8x384xf32, #tpu.memory_space<vmem>>, vector<1x8x384xf32>
    %201 = vector.shape_cast %200 : vector<1x8x384xf32> to vector<8x384xf32>
    %cst_111 = arith.constant dense<0.000000e+00> : vector<8x384xf32>
    %202 = tpu.matmul %185, %2, %cst_111 {dimension_numbers = #tpu.dot_dimension_numbers<[1], [0], [0], [1], [0, 0, 1, 1], [], []>} : vector<8x32xf32>, vector<32x384xf32>, vector<8x384xf32> -> vector<8x384xf32>
    %203 = vector.broadcast %3 : vector<1x384xf32> to vector<8x384xf32>
    %204 = arith.addf %202, %203 : vector<8x384xf32>
    %205 = vector.extract_strided_slice %201 {offsets = [0, 0], sizes = [8, 32], strides = [1, 1]} : vector<8x384xf32> to vector<8x32xf32>
    %206 = vector.extract_strided_slice %204 {offsets = [0, 0], sizes = [8, 32], strides = [1, 1]} : vector<8x384xf32> to vector<8x32xf32>
    %207 = arith.addf %205, %206 : vector<8x32xf32>
    %cst_112 = arith.constant 0.000000e+00 : f32
    %208 = vector.broadcast %cst_112 : f32 to vector<8x32xf32>
    %209 = arith.subf %208, %207 : vector<8x32xf32>
    %210 = math.exp %209 : vector<8x32xf32>
    %cst_113 = arith.constant 1.000000e+00 : f32
    %211 = vector.broadcast %cst_113 : f32 to vector<8x32xf32>
    %212 = arith.addf %211, %210 : vector<8x32xf32>
    %213 = tpu.reciprocal %212 : vector<8x32xf32> -> vector<8x32xf32>
    %214 = vector.extract_strided_slice %201 {offsets = [0, 128], sizes = [8, 32], strides = [1, 1]} : vector<8x384xf32> to vector<8x32xf32>
    %215 = vector.extract_strided_slice %204 {offsets = [0, 128], sizes = [8, 32], strides = [1, 1]} : vector<8x384xf32> to vector<8x32xf32>
    %216 = arith.addf %214, %215 : vector<8x32xf32>
    %cst_114 = arith.constant 0.000000e+00 : f32
    %217 = vector.broadcast %cst_114 : f32 to vector<8x32xf32>
    %218 = arith.subf %217, %216 : vector<8x32xf32>
    %219 = math.exp %218 : vector<8x32xf32>
    %cst_115 = arith.constant 1.000000e+00 : f32
    %220 = vector.broadcast %cst_115 : f32 to vector<8x32xf32>
    %221 = arith.addf %220, %219 : vector<8x32xf32>
    %222 = tpu.reciprocal %221 : vector<8x32xf32> -> vector<8x32xf32>
    %223 = vector.extract_strided_slice %201 {offsets = [0, 256], sizes = [8, 32], strides = [1, 1]} : vector<8x384xf32> to vector<8x32xf32>
    %224 = vector.extract_strided_slice %204 {offsets = [0, 256], sizes = [8, 32], strides = [1, 1]} : vector<8x384xf32> to vector<8x32xf32>
    %225 = arith.mulf %213, %224 : vector<8x32xf32>
    %226 = arith.addf %223, %225 : vector<8x32xf32>
    %227 = math.tanh %226 : vector<8x32xf32>
    %228 = arith.subf %185, %227 : vector<8x32xf32>
    %229 = arith.mulf %222, %228 : vector<8x32xf32>
    %230 = arith.addf %227, %229 : vector<8x32xf32>
    %c6_116 = arith.constant 6 : index
    %c0_117 = arith.constant 0 : index
    %c0_118 = arith.constant 0 : index
    %231 = vector.load %arg12[%c6_116, %c0_117, %c0_118] : memref<8x8x384xf32, #tpu.memory_space<vmem>>, vector<1x8x384xf32>
    %232 = vector.shape_cast %231 : vector<1x8x384xf32> to vector<8x384xf32>
    %cst_119 = arith.constant dense<0.000000e+00> : vector<8x384xf32>
    %233 = tpu.matmul %189, %4, %cst_119 {dimension_numbers = #tpu.dot_dimension_numbers<[1], [0], [0], [1], [0, 0, 1, 1], [], []>} : vector<8x32xf32>, vector<32x384xf32>, vector<8x384xf32> -> vector<8x384xf32>
    %234 = vector.broadcast %5 : vector<1x384xf32> to vector<8x384xf32>
    %235 = arith.addf %233, %234 : vector<8x384xf32>
    %236 = vector.extract_strided_slice %232 {offsets = [0, 0], sizes = [8, 32], strides = [1, 1]} : vector<8x384xf32> to vector<8x32xf32>
    %237 = vector.extract_strided_slice %235 {offsets = [0, 0], sizes = [8, 32], strides = [1, 1]} : vector<8x384xf32> to vector<8x32xf32>
    %238 = arith.addf %236, %237 : vector<8x32xf32>
    %cst_120 = arith.constant 0.000000e+00 : f32
    %239 = vector.broadcast %cst_120 : f32 to vector<8x32xf32>
    %240 = arith.subf %239, %238 : vector<8x32xf32>
    %241 = math.exp %240 : vector<8x32xf32>
    %cst_121 = arith.constant 1.000000e+00 : f32
    %242 = vector.broadcast %cst_121 : f32 to vector<8x32xf32>
    %243 = arith.addf %242, %241 : vector<8x32xf32>
    %244 = tpu.reciprocal %243 : vector<8x32xf32> -> vector<8x32xf32>
    %245 = vector.extract_strided_slice %232 {offsets = [0, 128], sizes = [8, 32], strides = [1, 1]} : vector<8x384xf32> to vector<8x32xf32>
    %246 = vector.extract_strided_slice %235 {offsets = [0, 128], sizes = [8, 32], strides = [1, 1]} : vector<8x384xf32> to vector<8x32xf32>
    %247 = arith.addf %245, %246 : vector<8x32xf32>
    %cst_122 = arith.constant 0.000000e+00 : f32
    %248 = vector.broadcast %cst_122 : f32 to vector<8x32xf32>
    %249 = arith.subf %248, %247 : vector<8x32xf32>
    %250 = math.exp %249 : vector<8x32xf32>
    %cst_123 = arith.constant 1.000000e+00 : f32
    %251 = vector.broadcast %cst_123 : f32 to vector<8x32xf32>
    %252 = arith.addf %251, %250 : vector<8x32xf32>
    %253 = tpu.reciprocal %252 : vector<8x32xf32> -> vector<8x32xf32>
    %254 = vector.extract_strided_slice %232 {offsets = [0, 256], sizes = [8, 32], strides = [1, 1]} : vector<8x384xf32> to vector<8x32xf32>
    %255 = vector.extract_strided_slice %235 {offsets = [0, 256], sizes = [8, 32], strides = [1, 1]} : vector<8x384xf32> to vector<8x32xf32>
    %256 = arith.mulf %244, %255 : vector<8x32xf32>
    %257 = arith.addf %254, %256 : vector<8x32xf32>
    %258 = math.tanh %257 : vector<8x32xf32>
    %259 = arith.subf %189, %258 : vector<8x32xf32>
    %260 = arith.mulf %253, %259 : vector<8x32xf32>
    %261 = arith.addf %258, %260 : vector<8x32xf32>
    %c1_i32 = arith.constant 1 : i32
    %262 = vector.broadcast %c1_i32 : i32 to vector<8x1xi32>
    %263 = arith.cmpi sgt, %6, %262 : vector<8x1xi32>
    %264 = arith.extui %263 : vector<8x1xi1> to vector<8x1xi32>
    %265 = arith.sitofp %264 : vector<8x1xi32> to vector<8x1xf32>
    %c6_i32 = arith.constant 6 : i32
    %266 = vector.broadcast %c6_i32 : i32 to vector<8x1xi32>
    %267 = arith.cmpi sgt, %6, %266 : vector<8x1xi32>
    %268 = arith.extui %267 : vector<8x1xi1> to vector<8x1xi32>
    %269 = arith.sitofp %268 : vector<8x1xi32> to vector<8x1xf32>
    %270 = arith.subf %230, %185 : vector<8x32xf32>
    %271 = vector.broadcast %265 : vector<8x1xf32> to vector<8x32xf32>
    %272 = arith.mulf %271, %270 : vector<8x32xf32>
    %273 = arith.addf %185, %272 : vector<8x32xf32>
    %274 = arith.subf %261, %189 : vector<8x32xf32>
    %275 = vector.broadcast %269 : vector<8x1xf32> to vector<8x32xf32>
    %276 = arith.mulf %275, %274 : vector<8x32xf32>
    %277 = arith.addf %189, %276 : vector<8x32xf32>
    %278 = vector.broadcast %265 : vector<8x1xf32> to vector<8x32xf32>
    %279 = arith.mulf %273, %278 : vector<8x32xf32>
    %c1_124 = arith.constant 1 : index
    %c0_125 = arith.constant 0 : index
    %c0_126 = arith.constant 0 : index
    %280 = vector.load %arg13[%c1_124, %c0_125, %c0_126] : memref<8x8x32xf32, #tpu.memory_space<vmem>>, vector<1x8x32xf32>
    %281 = vector.shape_cast %280 : vector<1x8x32xf32> to vector<8x32xf32>
    %282 = vector.shape_cast %279 : vector<8x32xf32> to vector<1x8x32xf32>
    tpu.vector_store %arg13[%c1_124, %c0_125, %c0_126], %282 {strides = array<i32>} : memref<8x8x32xf32, #tpu.memory_space<vmem>>, vector<1x8x32xf32>,
    %283 = vector.broadcast %269 : vector<8x1xf32> to vector<8x32xf32>
    %284 = arith.mulf %277, %283 : vector<8x32xf32>
    %c6_127 = arith.constant 6 : index
    %c0_128 = arith.constant 0 : index
    %c0_129 = arith.constant 0 : index
    %285 = vector.load %arg14[%c6_127, %c0_128, %c0_129] : memref<8x8x32xf32, #tpu.memory_space<vmem>>, vector<1x8x32xf32>
    %286 = vector.shape_cast %285 : vector<1x8x32xf32> to vector<8x32xf32>
    %287 = vector.shape_cast %284 : vector<8x32xf32> to vector<1x8x32xf32>
    tpu.vector_store %arg14[%c6_127, %c0_128, %c0_129], %287 {strides = array<i32>} : memref<8x8x32xf32, #tpu.memory_space<vmem>>, vector<1x8x32xf32>,
    %c2_130 = arith.constant 2 : index
    %c0_131 = arith.constant 0 : index
    %c0_132 = arith.constant 0 : index
    %288 = vector.load %arg11[%c2_130, %c0_131, %c0_132] : memref<8x8x384xf32, #tpu.memory_space<vmem>>, vector<1x8x384xf32>
    %289 = vector.shape_cast %288 : vector<1x8x384xf32> to vector<8x384xf32>
    %cst_133 = arith.constant dense<0.000000e+00> : vector<8x384xf32>
    %290 = tpu.matmul %273, %2, %cst_133 {dimension_numbers = #tpu.dot_dimension_numbers<[1], [0], [0], [1], [0, 0, 1, 1], [], []>} : vector<8x32xf32>, vector<32x384xf32>, vector<8x384xf32> -> vector<8x384xf32>
    %291 = vector.broadcast %3 : vector<1x384xf32> to vector<8x384xf32>
    %292 = arith.addf %290, %291 : vector<8x384xf32>
    %293 = vector.extract_strided_slice %289 {offsets = [0, 0], sizes = [8, 32], strides = [1, 1]} : vector<8x384xf32> to vector<8x32xf32>
    %294 = vector.extract_strided_slice %292 {offsets = [0, 0], sizes = [8, 32], strides = [1, 1]} : vector<8x384xf32> to vector<8x32xf32>
    %295 = arith.addf %293, %294 : vector<8x32xf32>
    %cst_134 = arith.constant 0.000000e+00 : f32
    %296 = vector.broadcast %cst_134 : f32 to vector<8x32xf32>
    %297 = arith.subf %296, %295 : vector<8x32xf32>
    %298 = math.exp %297 : vector<8x32xf32>
    %cst_135 = arith.constant 1.000000e+00 : f32
    %299 = vector.broadcast %cst_135 : f32 to vector<8x32xf32>
    %300 = arith.addf %299, %298 : vector<8x32xf32>
    %301 = tpu.reciprocal %300 : vector<8x32xf32> -> vector<8x32xf32>
    %302 = vector.extract_strided_slice %289 {offsets = [0, 128], sizes = [8, 32], strides = [1, 1]} : vector<8x384xf32> to vector<8x32xf32>
    %303 = vector.extract_strided_slice %292 {offsets = [0, 128], sizes = [8, 32], strides = [1, 1]} : vector<8x384xf32> to vector<8x32xf32>
    %304 = arith.addf %302, %303 : vector<8x32xf32>
    %cst_136 = arith.constant 0.000000e+00 : f32
    %305 = vector.broadcast %cst_136 : f32 to vector<8x32xf32>
    %306 = arith.subf %305, %304 : vector<8x32xf32>
    %307 = math.exp %306 : vector<8x32xf32>
    %cst_137 = arith.constant 1.000000e+00 : f32
    %308 = vector.broadcast %cst_137 : f32 to vector<8x32xf32>
    %309 = arith.addf %308, %307 : vector<8x32xf32>
    %310 = tpu.reciprocal %309 : vector<8x32xf32> -> vector<8x32xf32>
    %311 = vector.extract_strided_slice %289 {offsets = [0, 256], sizes = [8, 32], strides = [1, 1]} : vector<8x384xf32> to vector<8x32xf32>
    %312 = vector.extract_strided_slice %292 {offsets = [0, 256], sizes = [8, 32], strides = [1, 1]} : vector<8x384xf32> to vector<8x32xf32>
    %313 = arith.mulf %301, %312 : vector<8x32xf32>
    %314 = arith.addf %311, %313 : vector<8x32xf32>
    %315 = math.tanh %314 : vector<8x32xf32>
    %316 = arith.subf %273, %315 : vector<8x32xf32>
    %317 = arith.mulf %310, %316 : vector<8x32xf32>
    %318 = arith.addf %315, %317 : vector<8x32xf32>
    %c5_138 = arith.constant 5 : index
    %c0_139 = arith.constant 0 : index
    %c0_140 = arith.constant 0 : index
    %319 = vector.load %arg12[%c5_138, %c0_139, %c0_140] : memref<8x8x384xf32, #tpu.memory_space<vmem>>, vector<1x8x384xf32>
    %320 = vector.shape_cast %319 : vector<1x8x384xf32> to vector<8x384xf32>
    %cst_141 = arith.constant dense<0.000000e+00> : vector<8x384xf32>
    %321 = tpu.matmul %277, %4, %cst_141 {dimension_numbers = #tpu.dot_dimension_numbers<[1], [0], [0], [1], [0, 0, 1, 1], [], []>} : vector<8x32xf32>, vector<32x384xf32>, vector<8x384xf32> -> vector<8x384xf32>
    %322 = vector.broadcast %5 : vector<1x384xf32> to vector<8x384xf32>
    %323 = arith.addf %321, %322 : vector<8x384xf32>
    %324 = vector.extract_strided_slice %320 {offsets = [0, 0], sizes = [8, 32], strides = [1, 1]} : vector<8x384xf32> to vector<8x32xf32>
    %325 = vector.extract_strided_slice %323 {offsets = [0, 0], sizes = [8, 32], strides = [1, 1]} : vector<8x384xf32> to vector<8x32xf32>
    %326 = arith.addf %324, %325 : vector<8x32xf32>
    %cst_142 = arith.constant 0.000000e+00 : f32
    %327 = vector.broadcast %cst_142 : f32 to vector<8x32xf32>
    %328 = arith.subf %327, %326 : vector<8x32xf32>
    %329 = math.exp %328 : vector<8x32xf32>
    %cst_143 = arith.constant 1.000000e+00 : f32
    %330 = vector.broadcast %cst_143 : f32 to vector<8x32xf32>
    %331 = arith.addf %330, %329 : vector<8x32xf32>
    %332 = tpu.reciprocal %331 : vector<8x32xf32> -> vector<8x32xf32>
    %333 = vector.extract_strided_slice %320 {offsets = [0, 128], sizes = [8, 32], strides = [1, 1]} : vector<8x384xf32> to vector<8x32xf32>
    %334 = vector.extract_strided_slice %323 {offsets = [0, 128], sizes = [8, 32], strides = [1, 1]} : vector<8x384xf32> to vector<8x32xf32>
    %335 = arith.addf %333, %334 : vector<8x32xf32>
    %cst_144 = arith.constant 0.000000e+00 : f32
    %336 = vector.broadcast %cst_144 : f32 to vector<8x32xf32>
    %337 = arith.subf %336, %335 : vector<8x32xf32>
    %338 = math.exp %337 : vector<8x32xf32>
    %cst_145 = arith.constant 1.000000e+00 : f32
    %339 = vector.broadcast %cst_145 : f32 to vector<8x32xf32>
    %340 = arith.addf %339, %338 : vector<8x32xf32>
    %341 = tpu.reciprocal %340 : vector<8x32xf32> -> vector<8x32xf32>
    %342 = vector.extract_strided_slice %320 {offsets = [0, 256], sizes = [8, 32], strides = [1, 1]} : vector<8x384xf32> to vector<8x32xf32>
    %343 = vector.extract_strided_slice %323 {offsets = [0, 256], sizes = [8, 32], strides = [1, 1]} : vector<8x384xf32> to vector<8x32xf32>
    %344 = arith.mulf %332, %343 : vector<8x32xf32>
    %345 = arith.addf %342, %344 : vector<8x32xf32>
    %346 = math.tanh %345 : vector<8x32xf32>
    %347 = arith.subf %277, %346 : vector<8x32xf32>
    %348 = arith.mulf %341, %347 : vector<8x32xf32>
    %349 = arith.addf %346, %348 : vector<8x32xf32>
    %c2_i32 = arith.constant 2 : i32
    %350 = vector.broadcast %c2_i32 : i32 to vector<8x1xi32>
    %351 = arith.cmpi sgt, %6, %350 : vector<8x1xi32>
    %352 = arith.extui %351 : vector<8x1xi1> to vector<8x1xi32>
    %353 = arith.sitofp %352 : vector<8x1xi32> to vector<8x1xf32>
    %c5_i32 = arith.constant 5 : i32
    %354 = vector.broadcast %c5_i32 : i32 to vector<8x1xi32>
    %355 = arith.cmpi sgt, %6, %354 : vector<8x1xi32>
    %356 = arith.extui %355 : vector<8x1xi1> to vector<8x1xi32>
    %357 = arith.sitofp %356 : vector<8x1xi32> to vector<8x1xf32>
    %358 = arith.subf %318, %273 : vector<8x32xf32>
    %359 = vector.broadcast %353 : vector<8x1xf32> to vector<8x32xf32>
    %360 = arith.mulf %359, %358 : vector<8x32xf32>
    %361 = arith.addf %273, %360 : vector<8x32xf32>
    %362 = arith.subf %349, %277 : vector<8x32xf32>
    %363 = vector.broadcast %357 : vector<8x1xf32> to vector<8x32xf32>
    %364 = arith.mulf %363, %362 : vector<8x32xf32>
    %365 = arith.addf %277, %364 : vector<8x32xf32>
    %366 = vector.broadcast %353 : vector<8x1xf32> to vector<8x32xf32>
    %367 = arith.mulf %361, %366 : vector<8x32xf32>
    %c2_146 = arith.constant 2 : index
    %c0_147 = arith.constant 0 : index
    %c0_148 = arith.constant 0 : index
    %368 = vector.load %arg13[%c2_146, %c0_147, %c0_148] : memref<8x8x32xf32, #tpu.memory_space<vmem>>, vector<1x8x32xf32>
    %369 = vector.shape_cast %368 : vector<1x8x32xf32> to vector<8x32xf32>
    %370 = vector.shape_cast %367 : vector<8x32xf32> to vector<1x8x32xf32>
    tpu.vector_store %arg13[%c2_146, %c0_147, %c0_148], %370 {strides = array<i32>} : memref<8x8x32xf32, #tpu.memory_space<vmem>>, vector<1x8x32xf32>,
    %371 = vector.broadcast %357 : vector<8x1xf32> to vector<8x32xf32>
    %372 = arith.mulf %365, %371 : vector<8x32xf32>
    %c5_149 = arith.constant 5 : index
    %c0_150 = arith.constant 0 : index
    %c0_151 = arith.constant 0 : index
    %373 = vector.load %arg14[%c5_149, %c0_150, %c0_151] : memref<8x8x32xf32, #tpu.memory_space<vmem>>, vector<1x8x32xf32>
    %374 = vector.shape_cast %373 : vector<1x8x32xf32> to vector<8x32xf32>
    %375 = vector.shape_cast %372 : vector<8x32xf32> to vector<1x8x32xf32>
    tpu.vector_store %arg14[%c5_149, %c0_150, %c0_151], %375 {strides = array<i32>} : memref<8x8x32xf32, #tpu.memory_space<vmem>>, vector<1x8x32xf32>,
    %c3_152 = arith.constant 3 : index
    %c0_153 = arith.constant 0 : index
    %c0_154 = arith.constant 0 : index
    %376 = vector.load %arg11[%c3_152, %c0_153, %c0_154] : memref<8x8x384xf32, #tpu.memory_space<vmem>>, vector<1x8x384xf32>
    %377 = vector.shape_cast %376 : vector<1x8x384xf32> to vector<8x384xf32>
    %cst_155 = arith.constant dense<0.000000e+00> : vector<8x384xf32>
    %378 = tpu.matmul %361, %2, %cst_155 {dimension_numbers = #tpu.dot_dimension_numbers<[1], [0], [0], [1], [0, 0, 1, 1], [], []>} : vector<8x32xf32>, vector<32x384xf32>, vector<8x384xf32> -> vector<8x384xf32>
    %379 = vector.broadcast %3 : vector<1x384xf32> to vector<8x384xf32>
    %380 = arith.addf %378, %379 : vector<8x384xf32>
    %381 = vector.extract_strided_slice %377 {offsets = [0, 0], sizes = [8, 32], strides = [1, 1]} : vector<8x384xf32> to vector<8x32xf32>
    %382 = vector.extract_strided_slice %380 {offsets = [0, 0], sizes = [8, 32], strides = [1, 1]} : vector<8x384xf32> to vector<8x32xf32>
    %383 = arith.addf %381, %382 : vector<8x32xf32>
    %cst_156 = arith.constant 0.000000e+00 : f32
    %384 = vector.broadcast %cst_156 : f32 to vector<8x32xf32>
    %385 = arith.subf %384, %383 : vector<8x32xf32>
    %386 = math.exp %385 : vector<8x32xf32>
    %cst_157 = arith.constant 1.000000e+00 : f32
    %387 = vector.broadcast %cst_157 : f32 to vector<8x32xf32>
    %388 = arith.addf %387, %386 : vector<8x32xf32>
    %389 = tpu.reciprocal %388 : vector<8x32xf32> -> vector<8x32xf32>
    %390 = vector.extract_strided_slice %377 {offsets = [0, 128], sizes = [8, 32], strides = [1, 1]} : vector<8x384xf32> to vector<8x32xf32>
    %391 = vector.extract_strided_slice %380 {offsets = [0, 128], sizes = [8, 32], strides = [1, 1]} : vector<8x384xf32> to vector<8x32xf32>
    %392 = arith.addf %390, %391 : vector<8x32xf32>
    %cst_158 = arith.constant 0.000000e+00 : f32
    %393 = vector.broadcast %cst_158 : f32 to vector<8x32xf32>
    %394 = arith.subf %393, %392 : vector<8x32xf32>
    %395 = math.exp %394 : vector<8x32xf32>
    %cst_159 = arith.constant 1.000000e+00 : f32
    %396 = vector.broadcast %cst_159 : f32 to vector<8x32xf32>
    %397 = arith.addf %396, %395 : vector<8x32xf32>
    %398 = tpu.reciprocal %397 : vector<8x32xf32> -> vector<8x32xf32>
    %399 = vector.extract_strided_slice %377 {offsets = [0, 256], sizes = [8, 32], strides = [1, 1]} : vector<8x384xf32> to vector<8x32xf32>
    %400 = vector.extract_strided_slice %380 {offsets = [0, 256], sizes = [8, 32], strides = [1, 1]} : vector<8x384xf32> to vector<8x32xf32>
    %401 = arith.mulf %389, %400 : vector<8x32xf32>
    %402 = arith.addf %399, %401 : vector<8x32xf32>
    %403 = math.tanh %402 : vector<8x32xf32>
    %404 = arith.subf %361, %403 : vector<8x32xf32>
    %405 = arith.mulf %398, %404 : vector<8x32xf32>
    %406 = arith.addf %403, %405 : vector<8x32xf32>
    %c4_160 = arith.constant 4 : index
    %c0_161 = arith.constant 0 : index
    %c0_162 = arith.constant 0 : index
    %407 = vector.load %arg12[%c4_160, %c0_161, %c0_162] : memref<8x8x384xf32, #tpu.memory_space<vmem>>, vector<1x8x384xf32>
    %408 = vector.shape_cast %407 : vector<1x8x384xf32> to vector<8x384xf32>
    %cst_163 = arith.constant dense<0.000000e+00> : vector<8x384xf32>
    %409 = tpu.matmul %365, %4, %cst_163 {dimension_numbers = #tpu.dot_dimension_numbers<[1], [0], [0], [1], [0, 0, 1, 1], [], []>} : vector<8x32xf32>, vector<32x384xf32>, vector<8x384xf32> -> vector<8x384xf32>
    %410 = vector.broadcast %5 : vector<1x384xf32> to vector<8x384xf32>
    %411 = arith.addf %409, %410 : vector<8x384xf32>
    %412 = vector.extract_strided_slice %408 {offsets = [0, 0], sizes = [8, 32], strides = [1, 1]} : vector<8x384xf32> to vector<8x32xf32>
    %413 = vector.extract_strided_slice %411 {offsets = [0, 0], sizes = [8, 32], strides = [1, 1]} : vector<8x384xf32> to vector<8x32xf32>
    %414 = arith.addf %412, %413 : vector<8x32xf32>
    %cst_164 = arith.constant 0.000000e+00 : f32
    %415 = vector.broadcast %cst_164 : f32 to vector<8x32xf32>
    %416 = arith.subf %415, %414 : vector<8x32xf32>
    %417 = math.exp %416 : vector<8x32xf32>
    %cst_165 = arith.constant 1.000000e+00 : f32
    %418 = vector.broadcast %cst_165 : f32 to vector<8x32xf32>
    %419 = arith.addf %418, %417 : vector<8x32xf32>
    %420 = tpu.reciprocal %419 : vector<8x32xf32> -> vector<8x32xf32>
    %421 = vector.extract_strided_slice %408 {offsets = [0, 128], sizes = [8, 32], strides = [1, 1]} : vector<8x384xf32> to vector<8x32xf32>
    %422 = vector.extract_strided_slice %411 {offsets = [0, 128], sizes = [8, 32], strides = [1, 1]} : vector<8x384xf32> to vector<8x32xf32>
    %423 = arith.addf %421, %422 : vector<8x32xf32>
    %cst_166 = arith.constant 0.000000e+00 : f32
    %424 = vector.broadcast %cst_166 : f32 to vector<8x32xf32>
    %425 = arith.subf %424, %423 : vector<8x32xf32>
    %426 = math.exp %425 : vector<8x32xf32>
    %cst_167 = arith.constant 1.000000e+00 : f32
    %427 = vector.broadcast %cst_167 : f32 to vector<8x32xf32>
    %428 = arith.addf %427, %426 : vector<8x32xf32>
    %429 = tpu.reciprocal %428 : vector<8x32xf32> -> vector<8x32xf32>
    %430 = vector.extract_strided_slice %408 {offsets = [0, 256], sizes = [8, 32], strides = [1, 1]} : vector<8x384xf32> to vector<8x32xf32>
    %431 = vector.extract_strided_slice %411 {offsets = [0, 256], sizes = [8, 32], strides = [1, 1]} : vector<8x384xf32> to vector<8x32xf32>
    %432 = arith.mulf %420, %431 : vector<8x32xf32>
    %433 = arith.addf %430, %432 : vector<8x32xf32>
    %434 = math.tanh %433 : vector<8x32xf32>
    %435 = arith.subf %365, %434 : vector<8x32xf32>
    %436 = arith.mulf %429, %435 : vector<8x32xf32>
    %437 = arith.addf %434, %436 : vector<8x32xf32>
    %c3_i32 = arith.constant 3 : i32
    %438 = vector.broadcast %c3_i32 : i32 to vector<8x1xi32>
    %439 = arith.cmpi sgt, %6, %438 : vector<8x1xi32>
    %440 = arith.extui %439 : vector<8x1xi1> to vector<8x1xi32>
    %441 = arith.sitofp %440 : vector<8x1xi32> to vector<8x1xf32>
    %c4_i32 = arith.constant 4 : i32
    %442 = vector.broadcast %c4_i32 : i32 to vector<8x1xi32>
    %443 = arith.cmpi sgt, %6, %442 : vector<8x1xi32>
    %444 = arith.extui %443 : vector<8x1xi1> to vector<8x1xi32>
    %445 = arith.sitofp %444 : vector<8x1xi32> to vector<8x1xf32>
    %446 = arith.subf %406, %361 : vector<8x32xf32>
    %447 = vector.broadcast %441 : vector<8x1xf32> to vector<8x32xf32>
    %448 = arith.mulf %447, %446 : vector<8x32xf32>
    %449 = arith.addf %361, %448 : vector<8x32xf32>
    %450 = arith.subf %437, %365 : vector<8x32xf32>
    %451 = vector.broadcast %445 : vector<8x1xf32> to vector<8x32xf32>
    %452 = arith.mulf %451, %450 : vector<8x32xf32>
    %453 = arith.addf %365, %452 : vector<8x32xf32>
    %454 = vector.broadcast %441 : vector<8x1xf32> to vector<8x32xf32>
    %455 = arith.mulf %449, %454 : vector<8x32xf32>
    %c3_168 = arith.constant 3 : index
    %c0_169 = arith.constant 0 : index
    %c0_170 = arith.constant 0 : index
    %456 = vector.load %arg13[%c3_168, %c0_169, %c0_170] : memref<8x8x32xf32, #tpu.memory_space<vmem>>, vector<1x8x32xf32>
    %457 = vector.shape_cast %456 : vector<1x8x32xf32> to vector<8x32xf32>
    %458 = vector.shape_cast %455 : vector<8x32xf32> to vector<1x8x32xf32>
    tpu.vector_store %arg13[%c3_168, %c0_169, %c0_170], %458 {strides = array<i32>} : memref<8x8x32xf32, #tpu.memory_space<vmem>>, vector<1x8x32xf32>,
    %459 = vector.broadcast %445 : vector<8x1xf32> to vector<8x32xf32>
    %460 = arith.mulf %453, %459 : vector<8x32xf32>
    %c4_171 = arith.constant 4 : index
    %c0_172 = arith.constant 0 : index
    %c0_173 = arith.constant 0 : index
    %461 = vector.load %arg14[%c4_171, %c0_172, %c0_173] : memref<8x8x32xf32, #tpu.memory_space<vmem>>, vector<1x8x32xf32>
    %462 = vector.shape_cast %461 : vector<1x8x32xf32> to vector<8x32xf32>
    %463 = vector.shape_cast %460 : vector<8x32xf32> to vector<1x8x32xf32>
    tpu.vector_store %arg14[%c4_171, %c0_172, %c0_173], %463 {strides = array<i32>} : memref<8x8x32xf32, #tpu.memory_space<vmem>>, vector<1x8x32xf32>,
    %c4_174 = arith.constant 4 : index
    %c0_175 = arith.constant 0 : index
    %c0_176 = arith.constant 0 : index
    %464 = vector.load %arg11[%c4_174, %c0_175, %c0_176] : memref<8x8x384xf32, #tpu.memory_space<vmem>>, vector<1x8x384xf32>
    %465 = vector.shape_cast %464 : vector<1x8x384xf32> to vector<8x384xf32>
    %cst_177 = arith.constant dense<0.000000e+00> : vector<8x384xf32>
    %466 = tpu.matmul %449, %2, %cst_177 {dimension_numbers = #tpu.dot_dimension_numbers<[1], [0], [0], [1], [0, 0, 1, 1], [], []>} : vector<8x32xf32>, vector<32x384xf32>, vector<8x384xf32> -> vector<8x384xf32>
    %467 = vector.broadcast %3 : vector<1x384xf32> to vector<8x384xf32>
    %468 = arith.addf %466, %467 : vector<8x384xf32>
    %469 = vector.extract_strided_slice %465 {offsets = [0, 0], sizes = [8, 32], strides = [1, 1]} : vector<8x384xf32> to vector<8x32xf32>
    %470 = vector.extract_strided_slice %468 {offsets = [0, 0], sizes = [8, 32], strides = [1, 1]} : vector<8x384xf32> to vector<8x32xf32>
    %471 = arith.addf %469, %470 : vector<8x32xf32>
    %cst_178 = arith.constant 0.000000e+00 : f32
    %472 = vector.broadcast %cst_178 : f32 to vector<8x32xf32>
    %473 = arith.subf %472, %471 : vector<8x32xf32>
    %474 = math.exp %473 : vector<8x32xf32>
    %cst_179 = arith.constant 1.000000e+00 : f32
    %475 = vector.broadcast %cst_179 : f32 to vector<8x32xf32>
    %476 = arith.addf %475, %474 : vector<8x32xf32>
    %477 = tpu.reciprocal %476 : vector<8x32xf32> -> vector<8x32xf32>
    %478 = vector.extract_strided_slice %465 {offsets = [0, 128], sizes = [8, 32], strides = [1, 1]} : vector<8x384xf32> to vector<8x32xf32>
    %479 = vector.extract_strided_slice %468 {offsets = [0, 128], sizes = [8, 32], strides = [1, 1]} : vector<8x384xf32> to vector<8x32xf32>
    %480 = arith.addf %478, %479 : vector<8x32xf32>
    %cst_180 = arith.constant 0.000000e+00 : f32
    %481 = vector.broadcast %cst_180 : f32 to vector<8x32xf32>
    %482 = arith.subf %481, %480 : vector<8x32xf32>
    %483 = math.exp %482 : vector<8x32xf32>
    %cst_181 = arith.constant 1.000000e+00 : f32
    %484 = vector.broadcast %cst_181 : f32 to vector<8x32xf32>
    %485 = arith.addf %484, %483 : vector<8x32xf32>
    %486 = tpu.reciprocal %485 : vector<8x32xf32> -> vector<8x32xf32>
    %487 = vector.extract_strided_slice %465 {offsets = [0, 256], sizes = [8, 32], strides = [1, 1]} : vector<8x384xf32> to vector<8x32xf32>
    %488 = vector.extract_strided_slice %468 {offsets = [0, 256], sizes = [8, 32], strides = [1, 1]} : vector<8x384xf32> to vector<8x32xf32>
    %489 = arith.mulf %477, %488 : vector<8x32xf32>
    %490 = arith.addf %487, %489 : vector<8x32xf32>
    %491 = math.tanh %490 : vector<8x32xf32>
    %492 = arith.subf %449, %491 : vector<8x32xf32>
    %493 = arith.mulf %486, %492 : vector<8x32xf32>
    %494 = arith.addf %491, %493 : vector<8x32xf32>
    %c3_182 = arith.constant 3 : index
    %c0_183 = arith.constant 0 : index
    %c0_184 = arith.constant 0 : index
    %495 = vector.load %arg12[%c3_182, %c0_183, %c0_184] : memref<8x8x384xf32, #tpu.memory_space<vmem>>, vector<1x8x384xf32>
    %496 = vector.shape_cast %495 : vector<1x8x384xf32> to vector<8x384xf32>
    %cst_185 = arith.constant dense<0.000000e+00> : vector<8x384xf32>
    %497 = tpu.matmul %453, %4, %cst_185 {dimension_numbers = #tpu.dot_dimension_numbers<[1], [0], [0], [1], [0, 0, 1, 1], [], []>} : vector<8x32xf32>, vector<32x384xf32>, vector<8x384xf32> -> vector<8x384xf32>
    %498 = vector.broadcast %5 : vector<1x384xf32> to vector<8x384xf32>
    %499 = arith.addf %497, %498 : vector<8x384xf32>
    %500 = vector.extract_strided_slice %496 {offsets = [0, 0], sizes = [8, 32], strides = [1, 1]} : vector<8x384xf32> to vector<8x32xf32>
    %501 = vector.extract_strided_slice %499 {offsets = [0, 0], sizes = [8, 32], strides = [1, 1]} : vector<8x384xf32> to vector<8x32xf32>
    %502 = arith.addf %500, %501 : vector<8x32xf32>
    %cst_186 = arith.constant 0.000000e+00 : f32
    %503 = vector.broadcast %cst_186 : f32 to vector<8x32xf32>
    %504 = arith.subf %503, %502 : vector<8x32xf32>
    %505 = math.exp %504 : vector<8x32xf32>
    %cst_187 = arith.constant 1.000000e+00 : f32
    %506 = vector.broadcast %cst_187 : f32 to vector<8x32xf32>
    %507 = arith.addf %506, %505 : vector<8x32xf32>
    %508 = tpu.reciprocal %507 : vector<8x32xf32> -> vector<8x32xf32>
    %509 = vector.extract_strided_slice %496 {offsets = [0, 128], sizes = [8, 32], strides = [1, 1]} : vector<8x384xf32> to vector<8x32xf32>
    %510 = vector.extract_strided_slice %499 {offsets = [0, 128], sizes = [8, 32], strides = [1, 1]} : vector<8x384xf32> to vector<8x32xf32>
    %511 = arith.addf %509, %510 : vector<8x32xf32>
    %cst_188 = arith.constant 0.000000e+00 : f32
    %512 = vector.broadcast %cst_188 : f32 to vector<8x32xf32>
    %513 = arith.subf %512, %511 : vector<8x32xf32>
    %514 = math.exp %513 : vector<8x32xf32>
    %cst_189 = arith.constant 1.000000e+00 : f32
    %515 = vector.broadcast %cst_189 : f32 to vector<8x32xf32>
    %516 = arith.addf %515, %514 : vector<8x32xf32>
    %517 = tpu.reciprocal %516 : vector<8x32xf32> -> vector<8x32xf32>
    %518 = vector.extract_strided_slice %496 {offsets = [0, 256], sizes = [8, 32], strides = [1, 1]} : vector<8x384xf32> to vector<8x32xf32>
    %519 = vector.extract_strided_slice %499 {offsets = [0, 256], sizes = [8, 32], strides = [1, 1]} : vector<8x384xf32> to vector<8x32xf32>
    %520 = arith.mulf %508, %519 : vector<8x32xf32>
    %521 = arith.addf %518, %520 : vector<8x32xf32>
    %522 = math.tanh %521 : vector<8x32xf32>
    %523 = arith.subf %453, %522 : vector<8x32xf32>
    %524 = arith.mulf %517, %523 : vector<8x32xf32>
    %525 = arith.addf %522, %524 : vector<8x32xf32>
    %c4_i32_190 = arith.constant 4 : i32
    %526 = vector.broadcast %c4_i32_190 : i32 to vector<8x1xi32>
    %527 = arith.cmpi sgt, %6, %526 : vector<8x1xi32>
    %528 = arith.extui %527 : vector<8x1xi1> to vector<8x1xi32>
    %529 = arith.sitofp %528 : vector<8x1xi32> to vector<8x1xf32>
    %c3_i32_191 = arith.constant 3 : i32
    %530 = vector.broadcast %c3_i32_191 : i32 to vector<8x1xi32>
    %531 = arith.cmpi sgt, %6, %530 : vector<8x1xi32>
    %532 = arith.extui %531 : vector<8x1xi1> to vector<8x1xi32>
    %533 = arith.sitofp %532 : vector<8x1xi32> to vector<8x1xf32>
    %534 = arith.subf %494, %449 : vector<8x32xf32>
    %535 = vector.broadcast %529 : vector<8x1xf32> to vector<8x32xf32>
    %536 = arith.mulf %535, %534 : vector<8x32xf32>
    %537 = arith.addf %449, %536 : vector<8x32xf32>
    %538 = arith.subf %525, %453 : vector<8x32xf32>
    %539 = vector.broadcast %533 : vector<8x1xf32> to vector<8x32xf32>
    %540 = arith.mulf %539, %538 : vector<8x32xf32>
    %541 = arith.addf %453, %540 : vector<8x32xf32>
    %542 = vector.broadcast %529 : vector<8x1xf32> to vector<8x32xf32>
    %543 = arith.mulf %537, %542 : vector<8x32xf32>
    %c4_192 = arith.constant 4 : index
    %c0_193 = arith.constant 0 : index
    %c0_194 = arith.constant 0 : index
    %544 = vector.load %arg13[%c4_192, %c0_193, %c0_194] : memref<8x8x32xf32, #tpu.memory_space<vmem>>, vector<1x8x32xf32>
    %545 = vector.shape_cast %544 : vector<1x8x32xf32> to vector<8x32xf32>
    %546 = vector.shape_cast %543 : vector<8x32xf32> to vector<1x8x32xf32>
    tpu.vector_store %arg13[%c4_192, %c0_193, %c0_194], %546 {strides = array<i32>} : memref<8x8x32xf32, #tpu.memory_space<vmem>>, vector<1x8x32xf32>,
    %547 = vector.broadcast %533 : vector<8x1xf32> to vector<8x32xf32>
    %548 = arith.mulf %541, %547 : vector<8x32xf32>
    %c3_195 = arith.constant 3 : index
    %c0_196 = arith.constant 0 : index
    %c0_197 = arith.constant 0 : index
    %549 = vector.load %arg14[%c3_195, %c0_196, %c0_197] : memref<8x8x32xf32, #tpu.memory_space<vmem>>, vector<1x8x32xf32>
    %550 = vector.shape_cast %549 : vector<1x8x32xf32> to vector<8x32xf32>
    %551 = vector.shape_cast %548 : vector<8x32xf32> to vector<1x8x32xf32>
    tpu.vector_store %arg14[%c3_195, %c0_196, %c0_197], %551 {strides = array<i32>} : memref<8x8x32xf32, #tpu.memory_space<vmem>>, vector<1x8x32xf32>,
    %c5_198 = arith.constant 5 : index
    %c0_199 = arith.constant 0 : index
    %c0_200 = arith.constant 0 : index
    %552 = vector.load %arg11[%c5_198, %c0_199, %c0_200] : memref<8x8x384xf32, #tpu.memory_space<vmem>>, vector<1x8x384xf32>
    %553 = vector.shape_cast %552 : vector<1x8x384xf32> to vector<8x384xf32>
    %cst_201 = arith.constant dense<0.000000e+00> : vector<8x384xf32>
    %554 = tpu.matmul %537, %2, %cst_201 {dimension_numbers = #tpu.dot_dimension_numbers<[1], [0], [0], [1], [0, 0, 1, 1], [], []>} : vector<8x32xf32>, vector<32x384xf32>, vector<8x384xf32> -> vector<8x384xf32>
    %555 = vector.broadcast %3 : vector<1x384xf32> to vector<8x384xf32>
    %556 = arith.addf %554, %555 : vector<8x384xf32>
    %557 = vector.extract_strided_slice %553 {offsets = [0, 0], sizes = [8, 32], strides = [1, 1]} : vector<8x384xf32> to vector<8x32xf32>
    %558 = vector.extract_strided_slice %556 {offsets = [0, 0], sizes = [8, 32], strides = [1, 1]} : vector<8x384xf32> to vector<8x32xf32>
    %559 = arith.addf %557, %558 : vector<8x32xf32>
    %cst_202 = arith.constant 0.000000e+00 : f32
    %560 = vector.broadcast %cst_202 : f32 to vector<8x32xf32>
    %561 = arith.subf %560, %559 : vector<8x32xf32>
    %562 = math.exp %561 : vector<8x32xf32>
    %cst_203 = arith.constant 1.000000e+00 : f32
    %563 = vector.broadcast %cst_203 : f32 to vector<8x32xf32>
    %564 = arith.addf %563, %562 : vector<8x32xf32>
    %565 = tpu.reciprocal %564 : vector<8x32xf32> -> vector<8x32xf32>
    %566 = vector.extract_strided_slice %553 {offsets = [0, 128], sizes = [8, 32], strides = [1, 1]} : vector<8x384xf32> to vector<8x32xf32>
    %567 = vector.extract_strided_slice %556 {offsets = [0, 128], sizes = [8, 32], strides = [1, 1]} : vector<8x384xf32> to vector<8x32xf32>
    %568 = arith.addf %566, %567 : vector<8x32xf32>
    %cst_204 = arith.constant 0.000000e+00 : f32
    %569 = vector.broadcast %cst_204 : f32 to vector<8x32xf32>
    %570 = arith.subf %569, %568 : vector<8x32xf32>
    %571 = math.exp %570 : vector<8x32xf32>
    %cst_205 = arith.constant 1.000000e+00 : f32
    %572 = vector.broadcast %cst_205 : f32 to vector<8x32xf32>
    %573 = arith.addf %572, %571 : vector<8x32xf32>
    %574 = tpu.reciprocal %573 : vector<8x32xf32> -> vector<8x32xf32>
    %575 = vector.extract_strided_slice %553 {offsets = [0, 256], sizes = [8, 32], strides = [1, 1]} : vector<8x384xf32> to vector<8x32xf32>
    %576 = vector.extract_strided_slice %556 {offsets = [0, 256], sizes = [8, 32], strides = [1, 1]} : vector<8x384xf32> to vector<8x32xf32>
    %577 = arith.mulf %565, %576 : vector<8x32xf32>
    %578 = arith.addf %575, %577 : vector<8x32xf32>
    %579 = math.tanh %578 : vector<8x32xf32>
    %580 = arith.subf %537, %579 : vector<8x32xf32>
    %581 = arith.mulf %574, %580 : vector<8x32xf32>
    %582 = arith.addf %579, %581 : vector<8x32xf32>
    %c2_206 = arith.constant 2 : index
    %c0_207 = arith.constant 0 : index
    %c0_208 = arith.constant 0 : index
    %583 = vector.load %arg12[%c2_206, %c0_207, %c0_208] : memref<8x8x384xf32, #tpu.memory_space<vmem>>, vector<1x8x384xf32>
    %584 = vector.shape_cast %583 : vector<1x8x384xf32> to vector<8x384xf32>
    %cst_209 = arith.constant dense<0.000000e+00> : vector<8x384xf32>
    %585 = tpu.matmul %541, %4, %cst_209 {dimension_numbers = #tpu.dot_dimension_numbers<[1], [0], [0], [1], [0, 0, 1, 1], [], []>} : vector<8x32xf32>, vector<32x384xf32>, vector<8x384xf32> -> vector<8x384xf32>
    %586 = vector.broadcast %5 : vector<1x384xf32> to vector<8x384xf32>
    %587 = arith.addf %585, %586 : vector<8x384xf32>
    %588 = vector.extract_strided_slice %584 {offsets = [0, 0], sizes = [8, 32], strides = [1, 1]} : vector<8x384xf32> to vector<8x32xf32>
    %589 = vector.extract_strided_slice %587 {offsets = [0, 0], sizes = [8, 32], strides = [1, 1]} : vector<8x384xf32> to vector<8x32xf32>
    %590 = arith.addf %588, %589 : vector<8x32xf32>
    %cst_210 = arith.constant 0.000000e+00 : f32
    %591 = vector.broadcast %cst_210 : f32 to vector<8x32xf32>
    %592 = arith.subf %591, %590 : vector<8x32xf32>
    %593 = math.exp %592 : vector<8x32xf32>
    %cst_211 = arith.constant 1.000000e+00 : f32
    %594 = vector.broadcast %cst_211 : f32 to vector<8x32xf32>
    %595 = arith.addf %594, %593 : vector<8x32xf32>
    %596 = tpu.reciprocal %595 : vector<8x32xf32> -> vector<8x32xf32>
    %597 = vector.extract_strided_slice %584 {offsets = [0, 128], sizes = [8, 32], strides = [1, 1]} : vector<8x384xf32> to vector<8x32xf32>
    %598 = vector.extract_strided_slice %587 {offsets = [0, 128], sizes = [8, 32], strides = [1, 1]} : vector<8x384xf32> to vector<8x32xf32>
    %599 = arith.addf %597, %598 : vector<8x32xf32>
    %cst_212 = arith.constant 0.000000e+00 : f32
    %600 = vector.broadcast %cst_212 : f32 to vector<8x32xf32>
    %601 = arith.subf %600, %599 : vector<8x32xf32>
    %602 = math.exp %601 : vector<8x32xf32>
    %cst_213 = arith.constant 1.000000e+00 : f32
    %603 = vector.broadcast %cst_213 : f32 to vector<8x32xf32>
    %604 = arith.addf %603, %602 : vector<8x32xf32>
    %605 = tpu.reciprocal %604 : vector<8x32xf32> -> vector<8x32xf32>
    %606 = vector.extract_strided_slice %584 {offsets = [0, 256], sizes = [8, 32], strides = [1, 1]} : vector<8x384xf32> to vector<8x32xf32>
    %607 = vector.extract_strided_slice %587 {offsets = [0, 256], sizes = [8, 32], strides = [1, 1]} : vector<8x384xf32> to vector<8x32xf32>
    %608 = arith.mulf %596, %607 : vector<8x32xf32>
    %609 = arith.addf %606, %608 : vector<8x32xf32>
    %610 = math.tanh %609 : vector<8x32xf32>
    %611 = arith.subf %541, %610 : vector<8x32xf32>
    %612 = arith.mulf %605, %611 : vector<8x32xf32>
    %613 = arith.addf %610, %612 : vector<8x32xf32>
    %c5_i32_214 = arith.constant 5 : i32
    %614 = vector.broadcast %c5_i32_214 : i32 to vector<8x1xi32>
    %615 = arith.cmpi sgt, %6, %614 : vector<8x1xi32>
    %616 = arith.extui %615 : vector<8x1xi1> to vector<8x1xi32>
    %617 = arith.sitofp %616 : vector<8x1xi32> to vector<8x1xf32>
    %c2_i32_215 = arith.constant 2 : i32
    %618 = vector.broadcast %c2_i32_215 : i32 to vector<8x1xi32>
    %619 = arith.cmpi sgt, %6, %618 : vector<8x1xi32>
    %620 = arith.extui %619 : vector<8x1xi1> to vector<8x1xi32>
    %621 = arith.sitofp %620 : vector<8x1xi32> to vector<8x1xf32>
    %622 = arith.subf %582, %537 : vector<8x32xf32>
    %623 = vector.broadcast %617 : vector<8x1xf32> to vector<8x32xf32>
    %624 = arith.mulf %623, %622 : vector<8x32xf32>
    %625 = arith.addf %537, %624 : vector<8x32xf32>
    %626 = arith.subf %613, %541 : vector<8x32xf32>
    %627 = vector.broadcast %621 : vector<8x1xf32> to vector<8x32xf32>
    %628 = arith.mulf %627, %626 : vector<8x32xf32>
    %629 = arith.addf %541, %628 : vector<8x32xf32>
    %630 = vector.broadcast %617 : vector<8x1xf32> to vector<8x32xf32>
    %631 = arith.mulf %625, %630 : vector<8x32xf32>
    %c5_216 = arith.constant 5 : index
    %c0_217 = arith.constant 0 : index
    %c0_218 = arith.constant 0 : index
    %632 = vector.load %arg13[%c5_216, %c0_217, %c0_218] : memref<8x8x32xf32, #tpu.memory_space<vmem>>, vector<1x8x32xf32>
    %633 = vector.shape_cast %632 : vector<1x8x32xf32> to vector<8x32xf32>
    %634 = vector.shape_cast %631 : vector<8x32xf32> to vector<1x8x32xf32>
    tpu.vector_store %arg13[%c5_216, %c0_217, %c0_218], %634 {strides = array<i32>} : memref<8x8x32xf32, #tpu.memory_space<vmem>>, vector<1x8x32xf32>,
    %635 = vector.broadcast %621 : vector<8x1xf32> to vector<8x32xf32>
    %636 = arith.mulf %629, %635 : vector<8x32xf32>
    %c2_219 = arith.constant 2 : index
    %c0_220 = arith.constant 0 : index
    %c0_221 = arith.constant 0 : index
    %637 = vector.load %arg14[%c2_219, %c0_220, %c0_221] : memref<8x8x32xf32, #tpu.memory_space<vmem>>, vector<1x8x32xf32>
    %638 = vector.shape_cast %637 : vector<1x8x32xf32> to vector<8x32xf32>
    %639 = vector.shape_cast %636 : vector<8x32xf32> to vector<1x8x32xf32>
    tpu.vector_store %arg14[%c2_219, %c0_220, %c0_221], %639 {strides = array<i32>} : memref<8x8x32xf32, #tpu.memory_space<vmem>>, vector<1x8x32xf32>,
    %c6_222 = arith.constant 6 : index
    %c0_223 = arith.constant 0 : index
    %c0_224 = arith.constant 0 : index
    %640 = vector.load %arg11[%c6_222, %c0_223, %c0_224] : memref<8x8x384xf32, #tpu.memory_space<vmem>>, vector<1x8x384xf32>
    %641 = vector.shape_cast %640 : vector<1x8x384xf32> to vector<8x384xf32>
    %cst_225 = arith.constant dense<0.000000e+00> : vector<8x384xf32>
    %642 = tpu.matmul %625, %2, %cst_225 {dimension_numbers = #tpu.dot_dimension_numbers<[1], [0], [0], [1], [0, 0, 1, 1], [], []>} : vector<8x32xf32>, vector<32x384xf32>, vector<8x384xf32> -> vector<8x384xf32>
    %643 = vector.broadcast %3 : vector<1x384xf32> to vector<8x384xf32>
    %644 = arith.addf %642, %643 : vector<8x384xf32>
    %645 = vector.extract_strided_slice %641 {offsets = [0, 0], sizes = [8, 32], strides = [1, 1]} : vector<8x384xf32> to vector<8x32xf32>
    %646 = vector.extract_strided_slice %644 {offsets = [0, 0], sizes = [8, 32], strides = [1, 1]} : vector<8x384xf32> to vector<8x32xf32>
    %647 = arith.addf %645, %646 : vector<8x32xf32>
    %cst_226 = arith.constant 0.000000e+00 : f32
    %648 = vector.broadcast %cst_226 : f32 to vector<8x32xf32>
    %649 = arith.subf %648, %647 : vector<8x32xf32>
    %650 = math.exp %649 : vector<8x32xf32>
    %cst_227 = arith.constant 1.000000e+00 : f32
    %651 = vector.broadcast %cst_227 : f32 to vector<8x32xf32>
    %652 = arith.addf %651, %650 : vector<8x32xf32>
    %653 = tpu.reciprocal %652 : vector<8x32xf32> -> vector<8x32xf32>
    %654 = vector.extract_strided_slice %641 {offsets = [0, 128], sizes = [8, 32], strides = [1, 1]} : vector<8x384xf32> to vector<8x32xf32>
    %655 = vector.extract_strided_slice %644 {offsets = [0, 128], sizes = [8, 32], strides = [1, 1]} : vector<8x384xf32> to vector<8x32xf32>
    %656 = arith.addf %654, %655 : vector<8x32xf32>
    %cst_228 = arith.constant 0.000000e+00 : f32
    %657 = vector.broadcast %cst_228 : f32 to vector<8x32xf32>
    %658 = arith.subf %657, %656 : vector<8x32xf32>
    %659 = math.exp %658 : vector<8x32xf32>
    %cst_229 = arith.constant 1.000000e+00 : f32
    %660 = vector.broadcast %cst_229 : f32 to vector<8x32xf32>
    %661 = arith.addf %660, %659 : vector<8x32xf32>
    %662 = tpu.reciprocal %661 : vector<8x32xf32> -> vector<8x32xf32>
    %663 = vector.extract_strided_slice %641 {offsets = [0, 256], sizes = [8, 32], strides = [1, 1]} : vector<8x384xf32> to vector<8x32xf32>
    %664 = vector.extract_strided_slice %644 {offsets = [0, 256], sizes = [8, 32], strides = [1, 1]} : vector<8x384xf32> to vector<8x32xf32>
    %665 = arith.mulf %653, %664 : vector<8x32xf32>
    %666 = arith.addf %663, %665 : vector<8x32xf32>
    %667 = math.tanh %666 : vector<8x32xf32>
    %668 = arith.subf %625, %667 : vector<8x32xf32>
    %669 = arith.mulf %662, %668 : vector<8x32xf32>
    %670 = arith.addf %667, %669 : vector<8x32xf32>
    %c1_230 = arith.constant 1 : index
    %c0_231 = arith.constant 0 : index
    %c0_232 = arith.constant 0 : index
    %671 = vector.load %arg12[%c1_230, %c0_231, %c0_232] : memref<8x8x384xf32, #tpu.memory_space<vmem>>, vector<1x8x384xf32>
    %672 = vector.shape_cast %671 : vector<1x8x384xf32> to vector<8x384xf32>
    %cst_233 = arith.constant dense<0.000000e+00> : vector<8x384xf32>
    %673 = tpu.matmul %629, %4, %cst_233 {dimension_numbers = #tpu.dot_dimension_numbers<[1], [0], [0], [1], [0, 0, 1, 1], [], []>} : vector<8x32xf32>, vector<32x384xf32>, vector<8x384xf32> -> vector<8x384xf32>
    %674 = vector.broadcast %5 : vector<1x384xf32> to vector<8x384xf32>
    %675 = arith.addf %673, %674 : vector<8x384xf32>
    %676 = vector.extract_strided_slice %672 {offsets = [0, 0], sizes = [8, 32], strides = [1, 1]} : vector<8x384xf32> to vector<8x32xf32>
    %677 = vector.extract_strided_slice %675 {offsets = [0, 0], sizes = [8, 32], strides = [1, 1]} : vector<8x384xf32> to vector<8x32xf32>
    %678 = arith.addf %676, %677 : vector<8x32xf32>
    %cst_234 = arith.constant 0.000000e+00 : f32
    %679 = vector.broadcast %cst_234 : f32 to vector<8x32xf32>
    %680 = arith.subf %679, %678 : vector<8x32xf32>
    %681 = math.exp %680 : vector<8x32xf32>
    %cst_235 = arith.constant 1.000000e+00 : f32
    %682 = vector.broadcast %cst_235 : f32 to vector<8x32xf32>
    %683 = arith.addf %682, %681 : vector<8x32xf32>
    %684 = tpu.reciprocal %683 : vector<8x32xf32> -> vector<8x32xf32>
    %685 = vector.extract_strided_slice %672 {offsets = [0, 128], sizes = [8, 32], strides = [1, 1]} : vector<8x384xf32> to vector<8x32xf32>
    %686 = vector.extract_strided_slice %675 {offsets = [0, 128], sizes = [8, 32], strides = [1, 1]} : vector<8x384xf32> to vector<8x32xf32>
    %687 = arith.addf %685, %686 : vector<8x32xf32>
    %cst_236 = arith.constant 0.000000e+00 : f32
    %688 = vector.broadcast %cst_236 : f32 to vector<8x32xf32>
    %689 = arith.subf %688, %687 : vector<8x32xf32>
    %690 = math.exp %689 : vector<8x32xf32>
    %cst_237 = arith.constant 1.000000e+00 : f32
    %691 = vector.broadcast %cst_237 : f32 to vector<8x32xf32>
    %692 = arith.addf %691, %690 : vector<8x32xf32>
    %693 = tpu.reciprocal %692 : vector<8x32xf32> -> vector<8x32xf32>
    %694 = vector.extract_strided_slice %672 {offsets = [0, 256], sizes = [8, 32], strides = [1, 1]} : vector<8x384xf32> to vector<8x32xf32>
    %695 = vector.extract_strided_slice %675 {offsets = [0, 256], sizes = [8, 32], strides = [1, 1]} : vector<8x384xf32> to vector<8x32xf32>
    %696 = arith.mulf %684, %695 : vector<8x32xf32>
    %697 = arith.addf %694, %696 : vector<8x32xf32>
    %698 = math.tanh %697 : vector<8x32xf32>
    %699 = arith.subf %629, %698 : vector<8x32xf32>
    %700 = arith.mulf %693, %699 : vector<8x32xf32>
    %701 = arith.addf %698, %700 : vector<8x32xf32>
    %c6_i32_238 = arith.constant 6 : i32
    %702 = vector.broadcast %c6_i32_238 : i32 to vector<8x1xi32>
    %703 = arith.cmpi sgt, %6, %702 : vector<8x1xi32>
    %704 = arith.extui %703 : vector<8x1xi1> to vector<8x1xi32>
    %705 = arith.sitofp %704 : vector<8x1xi32> to vector<8x1xf32>
    %c1_i32_239 = arith.constant 1 : i32
    %706 = vector.broadcast %c1_i32_239 : i32 to vector<8x1xi32>
    %707 = arith.cmpi sgt, %6, %706 : vector<8x1xi32>
    %708 = arith.extui %707 : vector<8x1xi1> to vector<8x1xi32>
    %709 = arith.sitofp %708 : vector<8x1xi32> to vector<8x1xf32>
    %710 = arith.subf %670, %625 : vector<8x32xf32>
    %711 = vector.broadcast %705 : vector<8x1xf32> to vector<8x32xf32>
    %712 = arith.mulf %711, %710 : vector<8x32xf32>
    %713 = arith.addf %625, %712 : vector<8x32xf32>
    %714 = arith.subf %701, %629 : vector<8x32xf32>
    %715 = vector.broadcast %709 : vector<8x1xf32> to vector<8x32xf32>
    %716 = arith.mulf %715, %714 : vector<8x32xf32>
    %717 = arith.addf %629, %716 : vector<8x32xf32>
    %718 = vector.broadcast %705 : vector<8x1xf32> to vector<8x32xf32>
    %719 = arith.mulf %713, %718 : vector<8x32xf32>
    %c6_240 = arith.constant 6 : index
    %c0_241 = arith.constant 0 : index
    %c0_242 = arith.constant 0 : index
    %720 = vector.load %arg13[%c6_240, %c0_241, %c0_242] : memref<8x8x32xf32, #tpu.memory_space<vmem>>, vector<1x8x32xf32>
    %721 = vector.shape_cast %720 : vector<1x8x32xf32> to vector<8x32xf32>
    %722 = vector.shape_cast %719 : vector<8x32xf32> to vector<1x8x32xf32>
    tpu.vector_store %arg13[%c6_240, %c0_241, %c0_242], %722 {strides = array<i32>} : memref<8x8x32xf32, #tpu.memory_space<vmem>>, vector<1x8x32xf32>,
    %723 = vector.broadcast %709 : vector<8x1xf32> to vector<8x32xf32>
    %724 = arith.mulf %717, %723 : vector<8x32xf32>
    %c1_243 = arith.constant 1 : index
    %c0_244 = arith.constant 0 : index
    %c0_245 = arith.constant 0 : index
    %725 = vector.load %arg14[%c1_243, %c0_244, %c0_245] : memref<8x8x32xf32, #tpu.memory_space<vmem>>, vector<1x8x32xf32>
    %726 = vector.shape_cast %725 : vector<1x8x32xf32> to vector<8x32xf32>
    %727 = vector.shape_cast %724 : vector<8x32xf32> to vector<1x8x32xf32>
    tpu.vector_store %arg14[%c1_243, %c0_244, %c0_245], %727 {strides = array<i32>} : memref<8x8x32xf32, #tpu.memory_space<vmem>>, vector<1x8x32xf32>,
    %c7_246 = arith.constant 7 : index
    %c0_247 = arith.constant 0 : index
    %c0_248 = arith.constant 0 : index
    %728 = vector.load %arg11[%c7_246, %c0_247, %c0_248] : memref<8x8x384xf32, #tpu.memory_space<vmem>>, vector<1x8x384xf32>
    %729 = vector.shape_cast %728 : vector<1x8x384xf32> to vector<8x384xf32>
    %cst_249 = arith.constant dense<0.000000e+00> : vector<8x384xf32>
    %730 = tpu.matmul %713, %2, %cst_249 {dimension_numbers = #tpu.dot_dimension_numbers<[1], [0], [0], [1], [0, 0, 1, 1], [], []>} : vector<8x32xf32>, vector<32x384xf32>, vector<8x384xf32> -> vector<8x384xf32>
    %731 = vector.broadcast %3 : vector<1x384xf32> to vector<8x384xf32>
    %732 = arith.addf %730, %731 : vector<8x384xf32>
    %733 = vector.extract_strided_slice %729 {offsets = [0, 0], sizes = [8, 32], strides = [1, 1]} : vector<8x384xf32> to vector<8x32xf32>
    %734 = vector.extract_strided_slice %732 {offsets = [0, 0], sizes = [8, 32], strides = [1, 1]} : vector<8x384xf32> to vector<8x32xf32>
    %735 = arith.addf %733, %734 : vector<8x32xf32>
    %cst_250 = arith.constant 0.000000e+00 : f32
    %736 = vector.broadcast %cst_250 : f32 to vector<8x32xf32>
    %737 = arith.subf %736, %735 : vector<8x32xf32>
    %738 = math.exp %737 : vector<8x32xf32>
    %cst_251 = arith.constant 1.000000e+00 : f32
    %739 = vector.broadcast %cst_251 : f32 to vector<8x32xf32>
    %740 = arith.addf %739, %738 : vector<8x32xf32>
    %741 = tpu.reciprocal %740 : vector<8x32xf32> -> vector<8x32xf32>
    %742 = vector.extract_strided_slice %729 {offsets = [0, 128], sizes = [8, 32], strides = [1, 1]} : vector<8x384xf32> to vector<8x32xf32>
    %743 = vector.extract_strided_slice %732 {offsets = [0, 128], sizes = [8, 32], strides = [1, 1]} : vector<8x384xf32> to vector<8x32xf32>
    %744 = arith.addf %742, %743 : vector<8x32xf32>
    %cst_252 = arith.constant 0.000000e+00 : f32
    %745 = vector.broadcast %cst_252 : f32 to vector<8x32xf32>
    %746 = arith.subf %745, %744 : vector<8x32xf32>
    %747 = math.exp %746 : vector<8x32xf32>
    %cst_253 = arith.constant 1.000000e+00 : f32
    %748 = vector.broadcast %cst_253 : f32 to vector<8x32xf32>
    %749 = arith.addf %748, %747 : vector<8x32xf32>
    %750 = tpu.reciprocal %749 : vector<8x32xf32> -> vector<8x32xf32>
    %751 = vector.extract_strided_slice %729 {offsets = [0, 256], sizes = [8, 32], strides = [1, 1]} : vector<8x384xf32> to vector<8x32xf32>
    %752 = vector.extract_strided_slice %732 {offsets = [0, 256], sizes = [8, 32], strides = [1, 1]} : vector<8x384xf32> to vector<8x32xf32>
    %753 = arith.mulf %741, %752 : vector<8x32xf32>
    %754 = arith.addf %751, %753 : vector<8x32xf32>
    %755 = math.tanh %754 : vector<8x32xf32>
    %756 = arith.subf %713, %755 : vector<8x32xf32>
    %757 = arith.mulf %750, %756 : vector<8x32xf32>
    %758 = arith.addf %755, %757 : vector<8x32xf32>
    %c0_254 = arith.constant 0 : index
    %c0_255 = arith.constant 0 : index
    %c0_256 = arith.constant 0 : index
    %759 = vector.load %arg12[%c0_254, %c0_255, %c0_256] : memref<8x8x384xf32, #tpu.memory_space<vmem>>, vector<1x8x384xf32>
    %760 = vector.shape_cast %759 : vector<1x8x384xf32> to vector<8x384xf32>
    %cst_257 = arith.constant dense<0.000000e+00> : vector<8x384xf32>
    %761 = tpu.matmul %717, %4, %cst_257 {dimension_numbers = #tpu.dot_dimension_numbers<[1], [0], [0], [1], [0, 0, 1, 1], [], []>} : vector<8x32xf32>, vector<32x384xf32>, vector<8x384xf32> -> vector<8x384xf32>
    %762 = vector.broadcast %5 : vector<1x384xf32> to vector<8x384xf32>
    %763 = arith.addf %761, %762 : vector<8x384xf32>
    %764 = vector.extract_strided_slice %760 {offsets = [0, 0], sizes = [8, 32], strides = [1, 1]} : vector<8x384xf32> to vector<8x32xf32>
    %765 = vector.extract_strided_slice %763 {offsets = [0, 0], sizes = [8, 32], strides = [1, 1]} : vector<8x384xf32> to vector<8x32xf32>
    %766 = arith.addf %764, %765 : vector<8x32xf32>
    %cst_258 = arith.constant 0.000000e+00 : f32
    %767 = vector.broadcast %cst_258 : f32 to vector<8x32xf32>
    %768 = arith.subf %767, %766 : vector<8x32xf32>
    %769 = math.exp %768 : vector<8x32xf32>
    %cst_259 = arith.constant 1.000000e+00 : f32
    %770 = vector.broadcast %cst_259 : f32 to vector<8x32xf32>
    %771 = arith.addf %770, %769 : vector<8x32xf32>
    %772 = tpu.reciprocal %771 : vector<8x32xf32> -> vector<8x32xf32>
    %773 = vector.extract_strided_slice %760 {offsets = [0, 128], sizes = [8, 32], strides = [1, 1]} : vector<8x384xf32> to vector<8x32xf32>
    %774 = vector.extract_strided_slice %763 {offsets = [0, 128], sizes = [8, 32], strides = [1, 1]} : vector<8x384xf32> to vector<8x32xf32>
    %775 = arith.addf %773, %774 : vector<8x32xf32>
    %cst_260 = arith.constant 0.000000e+00 : f32
    %776 = vector.broadcast %cst_260 : f32 to vector<8x32xf32>
    %777 = arith.subf %776, %775 : vector<8x32xf32>
    %778 = math.exp %777 : vector<8x32xf32>
    %cst_261 = arith.constant 1.000000e+00 : f32
    %779 = vector.broadcast %cst_261 : f32 to vector<8x32xf32>
    %780 = arith.addf %779, %778 : vector<8x32xf32>
    %781 = tpu.reciprocal %780 : vector<8x32xf32> -> vector<8x32xf32>
    %782 = vector.extract_strided_slice %760 {offsets = [0, 256], sizes = [8, 32], strides = [1, 1]} : vector<8x384xf32> to vector<8x32xf32>
    %783 = vector.extract_strided_slice %763 {offsets = [0, 256], sizes = [8, 32], strides = [1, 1]} : vector<8x384xf32> to vector<8x32xf32>
    %784 = arith.mulf %772, %783 : vector<8x32xf32>
    %785 = arith.addf %782, %784 : vector<8x32xf32>
    %786 = math.tanh %785 : vector<8x32xf32>
    %787 = arith.subf %717, %786 : vector<8x32xf32>
    %788 = arith.mulf %781, %787 : vector<8x32xf32>
    %789 = arith.addf %786, %788 : vector<8x32xf32>
    %c7_i32_262 = arith.constant 7 : i32
    %790 = vector.broadcast %c7_i32_262 : i32 to vector<8x1xi32>
    %791 = arith.cmpi sgt, %6, %790 : vector<8x1xi32>
    %792 = arith.extui %791 : vector<8x1xi1> to vector<8x1xi32>
    %793 = arith.sitofp %792 : vector<8x1xi32> to vector<8x1xf32>
    %c0_i32_263 = arith.constant 0 : i32
    %794 = vector.broadcast %c0_i32_263 : i32 to vector<8x1xi32>
    %795 = arith.cmpi sgt, %6, %794 : vector<8x1xi32>
    %796 = arith.extui %795 : vector<8x1xi1> to vector<8x1xi32>
    %797 = arith.sitofp %796 : vector<8x1xi32> to vector<8x1xf32>
    %798 = arith.subf %758, %713 : vector<8x32xf32>
    %799 = vector.broadcast %793 : vector<8x1xf32> to vector<8x32xf32>
    %800 = arith.mulf %799, %798 : vector<8x32xf32>
    %801 = arith.addf %713, %800 : vector<8x32xf32>
    %802 = arith.subf %789, %717 : vector<8x32xf32>
    %803 = vector.broadcast %797 : vector<8x1xf32> to vector<8x32xf32>
    %804 = arith.mulf %803, %802 : vector<8x32xf32>
    %805 = arith.addf %717, %804 : vector<8x32xf32>
    %806 = vector.broadcast %793 : vector<8x1xf32> to vector<8x32xf32>
    %807 = arith.mulf %801, %806 : vector<8x32xf32>
    %c7_264 = arith.constant 7 : index
    %c0_265 = arith.constant 0 : index
    %c0_266 = arith.constant 0 : index
    %808 = vector.load %arg13[%c7_264, %c0_265, %c0_266] : memref<8x8x32xf32, #tpu.memory_space<vmem>>, vector<1x8x32xf32>
    %809 = vector.shape_cast %808 : vector<1x8x32xf32> to vector<8x32xf32>
    %810 = vector.shape_cast %807 : vector<8x32xf32> to vector<1x8x32xf32>
    tpu.vector_store %arg13[%c7_264, %c0_265, %c0_266], %810 {strides = array<i32>} : memref<8x8x32xf32, #tpu.memory_space<vmem>>, vector<1x8x32xf32>,
    %811 = vector.broadcast %797 : vector<8x1xf32> to vector<8x32xf32>
    %812 = arith.mulf %805, %811 : vector<8x32xf32>
    %c0_267 = arith.constant 0 : index
    %c0_268 = arith.constant 0 : index
    %c0_269 = arith.constant 0 : index
    %813 = vector.load %arg14[%c0_267, %c0_268, %c0_269] : memref<8x8x32xf32, #tpu.memory_space<vmem>>, vector<1x8x32xf32>
    %814 = vector.shape_cast %813 : vector<1x8x32xf32> to vector<8x32xf32>
    %815 = vector.shape_cast %812 : vector<8x32xf32> to vector<1x8x32xf32>
    tpu.vector_store %arg14[%c0_267, %c0_268, %c0_269], %815 {strides = array<i32>} : memref<8x8x32xf32, #tpu.memory_space<vmem>>, vector<1x8x32xf32>,
    %c0_270 = arith.constant 0 : index
    %c0_271 = arith.constant 0 : index
    %c0_272 = arith.constant 0 : index
    %816 = vector.load %arg13[%c0_270, %c0_271, %c0_272] : memref<8x8x32xf32, #tpu.memory_space<vmem>>, vector<8x8x32xf32>
    %c0_273 = arith.constant 0 : index
    %c0_274 = arith.constant 0 : index
    %c0_275 = arith.constant 0 : index
    %817 = vector.load %arg14[%c0_273, %c0_274, %c0_275] : memref<8x8x32xf32, #tpu.memory_space<vmem>>, vector<8x8x32xf32>
    %818 = tpu.concatenate %816, %817 in 2 : vector<8x8x32xf32>, vector<8x8x32xf32> -> vector<8x8x64xf32>
    %c0_276 = arith.constant 0 : index
    %c0_277 = arith.constant 0 : index
    %c0_278 = arith.constant 0 : index
    %819 = vector.load %arg9[%c0_276, %c0_277, %c0_278] : memref<8x8x64xf32, #tpu.memory_space<vmem>>, vector<8x8x64xf32>
    tpu.vector_store %arg9[%c0_276, %c0_277, %c0_278], %818 {strides = array<i32>} : memref<8x8x64xf32, #tpu.memory_space<vmem>>, vector<8x8x64xf32>,
    %820 = tpu.concatenate %801, %805 in 1 : vector<8x32xf32>, vector<8x32xf32> -> vector<8x64xf32>
    %c0_279 = arith.constant 0 : index
    %c0_280 = arith.constant 0 : index
    %821 = vector.load %arg10[%c0_279, %c0_280] : memref<8x64xf32, #tpu.memory_space<vmem>>, vector<8x64xf32>
    tpu.vector_store %arg10[%c0_279, %c0_280], %820 {strides = array<i32>} : memref<8x64xf32, #tpu.memory_space<vmem>>, vector<8x64xf32>,
    return
  }
  func.func @transform_0(%arg0: i32) -> (i32, i32, i32) {
    %c0_i32 = arith.constant 0 : i32
    %c0_i32_0 = arith.constant 0 : i32
    %c0_i32_1 = arith.constant 0 : i32
    return %c0_i32, %arg0, %c0_i32_0 : i32, i32, i32
  }
  func.func @transform_1(%arg0: i32) -> (i32, i32) {
    %c0_i32 = arith.constant 0 : i32
    %c0_i32_0 = arith.constant 0 : i32
    return %arg0, %c0_i32 : i32, i32
  }
  func.func @transform_2(%arg0: i32) -> (i32, i32) {
    %c0_i32 = arith.constant 0 : i32
    %c0_i32_0 = arith.constant 0 : i32
    %c0_i32_1 = arith.constant 0 : i32
    return %c0_i32, %c0_i32_0 : i32, i32
  }
  func.func @transform_3(%arg0: i32) -> (i32, i32) {
    %c0_i32 = arith.constant 0 : i32
    %c0_i32_0 = arith.constant 0 : i32
    %c0_i32_1 = arith.constant 0 : i32
    return %c0_i32, %c0_i32_0 : i32, i32
  }
  func.func @transform_4(%arg0: i32) -> (i32, i32) {
    %c0_i32 = arith.constant 0 : i32
    %c0_i32_0 = arith.constant 0 : i32
    %c0_i32_1 = arith.constant 0 : i32
    return %c0_i32, %c0_i32_0 : i32, i32
  }
  func.func @transform_5(%arg0: i32) -> (i32, i32) {
    %c0_i32 = arith.constant 0 : i32
    %c0_i32_0 = arith.constant 0 : i32
    %c0_i32_1 = arith.constant 0 : i32
    return %c0_i32, %c0_i32_0 : i32, i32
  }
  func.func @transform_6(%arg0: i32) -> (i32, i32) {
    %c0_i32 = arith.constant 0 : i32
    %c0_i32_0 = arith.constant 0 : i32
    %c0_i32_1 = arith.constant 0 : i32
    return %c0_i32, %c0_i32_0 : i32, i32
  }
  func.func @transform_7(%arg0: i32) -> (i32, i32) {
    %c0_i32 = arith.constant 0 : i32
    %c0_i32_0 = arith.constant 0 : i32
    %c0_i32_1 = arith.constant 0 : i32
    return %c0_i32, %c0_i32_0 : i32, i32
  }
  func.func @transform_8(%arg0: i32) -> (i32, i32, i32) {
    %c0_i32 = arith.constant 0 : i32
    %c0_i32_0 = arith.constant 0 : i32
    %c0_i32_1 = arith.constant 0 : i32
    return %c0_i32, %arg0, %c0_i32_0 : i32, i32, i32
  }
  func.func @transform_9(%arg0: i32) -> (i32, i32) {
    %c0_i32 = arith.constant 0 : i32
    %c0_i32_0 = arith.constant 0 : i32
    return %arg0, %c0_i32 : i32, i32
  }
}

</mosaic_0001>

<llo_original>
// kernel: hierarchical_encoder_forward.3
$region0: #{hierarchical_encoder_forward.3}
  #allocation0 [shape = 'u32[]', space=smem, size = 0x4, offset = 0x4, fixed_abs, tag = 'smem constant byte address 0x4 - core index']
  #allocation1 [shape = 'u32[144,128]{1,0:T(1,128)}', space=vmem, size = 0x12000, scoped, tag = 'internal scratch']
  #allocation2 [shape = 'f32[4,8,384]{2,1,0:T(8,128)}', space=vmem, size = 0xc000, scoped, tag = 'scratch operand']
  #allocation3 [shape = 'f32[4,8,64]{2,1,0:T(8,128)}', space=vmem, size = 0x4000, scoped, tag = 'scratch operand']
  %s0 = inlined_call_operand.vmem [shape: f32[4,8,64], index: 0, kind: input, shape index: {}]
  %s1 = inlined_call_operand.vmem [shape: s32[8,1], index: 1, kind: input, shape index: {}]
  %s2 = inlined_call_operand.vmem [shape: f32[64,384], index: 2, kind: input, shape index: {}]
  %s3 = inlined_call_operand.vmem [shape: f32[1,384], index: 3, kind: input, shape index: {}]
  %s4 = inlined_call_operand.vmem [shape: f32[64,384], index: 4, kind: input, shape index: {}]
  %s5 = inlined_call_operand.vmem [shape: f32[1,384], index: 5, kind: input, shape index: {}]
  %s6 = inlined_call_operand.vmem [shape: f32[4,8,64], index: 6, kind: output, shape index: {0}]
  %s7 = inlined_call_operand.vmem [shape: f32[8,64], index: 7, kind: output, shape index: {1}]
  %8 = xla_tuple %s6, %s7
  %s9 = sld [smem:[#allocation0]]
  $region42: #{hierarchical_encoder_forward.3} parent=0
    _
  %s11 = ssub.s32 1, %s9
  %s12 = scalar_select 0, %s11, %s9
  // Predicated region
  $region2: #{hierarchical_encoder_forward.3} parent=0 // pred_check
    _
  $region3: #{hierarchical_encoder_forward.3} parent=0 // pred_check_branch
    %14 = sbr.rel (0) target = $region5
  $region4: #{hierarchical_encoder_forward.3} parent=0 // pred_region
    _
  $region5: #{hierarchical_encoder_forward.3} parent=0 // pred_fallthru
    _
  // Predicated region
  $region6: #{hierarchical_encoder_forward.3} parent=0 // pred_check
    _
  $region7: #{hierarchical_encoder_forward.3} parent=0 // pred_check_branch
    %16 = sbr.rel (0) target = $region9
  $region8: #{hierarchical_encoder_forward.3} parent=0 // pred_region
    _
  $region9: #{hierarchical_encoder_forward.3} parent=0 // pred_fallthru
    _
  // Predicated region
  $region10: #{hierarchical_encoder_forward.3} parent=0 // pred_check
    _
  $region11: #{hierarchical_encoder_forward.3} parent=0 // pred_check_branch
    %18 = sbr.rel (0) target = $region13
  $region12: #{hierarchical_encoder_forward.3} parent=0 // pred_region
    _
  $region13: #{hierarchical_encoder_forward.3} parent=0 // pred_fallthru
    _
  // Predicated region
  $region14: #{hierarchical_encoder_forward.3} parent=0 // pred_check
    _
  $region15: #{hierarchical_encoder_forward.3} parent=0 // pred_check_branch
    %20 = sbr.rel (0) target = $region17
  $region16: #{hierarchical_encoder_forward.3} parent=0 // pred_region
    _
  $region17: #{hierarchical_encoder_forward.3} parent=0 // pred_fallthru
    _
  // Predicated region
  $region18: #{hierarchical_encoder_forward.3} parent=0 // pred_check
    _
  $region19: #{hierarchical_encoder_forward.3} parent=0 // pred_check_branch
    %22 = sbr.rel (0) target = $region21
  $region20: #{hierarchical_encoder_forward.3} parent=0 // pred_region
    _
  $region21: #{hierarchical_encoder_forward.3} parent=0 // pred_fallthru
    _
  // Predicated region
  $region22: #{hierarchical_encoder_forward.3} parent=0 // pred_check
    _
  $region23: #{hierarchical_encoder_forward.3} parent=0 // pred_check_branch
    %24 = sbr.rel (0) target = $region25
  $region24: #{hierarchical_encoder_forward.3} parent=0 // pred_region
    _
  $region25: #{hierarchical_encoder_forward.3} parent=0 // pred_fallthru
    _
  %v25 = vld [vmem:[%s2] sm:$0xff]
  %v26 = vld [vmem:[%s2 + $0x8] sm:$0xff]
  %v27 = vld [vmem:[%s2 + $0x10] sm:$0xff]
  %v28 = vld [vmem:[%s2 + $0x18] sm:$0xff]
  %v29 = vld [vmem:[%s2 + $0x20] sm:$0xff]
  %v30 = vld [vmem:[%s2 + $0x28] sm:$0xff]
  %v31 = vld [vmem:[%s2 + $0x30] sm:$0xff]
  %v32 = vld [vmem:[%s2 + $0x38] sm:$0xff]
  %v33 = vld [vmem:[%s2 + $0x40] sm:$0xff]
  %v34 = vld [vmem:[%s2 + $0x48] sm:$0xff]
  %v35 = vld [vmem:[%s2 + $0x50] sm:$0xff]
  %v36 = vld [vmem:[%s2 + $0x58] sm:$0xff]
  %v37 = vld [vmem:[%s2 + $0x60] sm:$0xff]
  %v38 = vld [vmem:[%s2 + $0x68] sm:$0xff]
  %v39 = vld [vmem:[%s2 + $0x70] sm:$0xff]
  %v40 = vld [vmem:[%s2 + $0x78] sm:$0xff]
  %v41 = vld [vmem:[%s2 + $0x80] sm:$0xff]
  %v42 = vld [vmem:[%s2 + $0x88] sm:$0xff]
  %v43 = vld [vmem:[%s2 + $0x90] sm:$0xff]
  %v44 = vld [vmem:[%s2 + $0x98] sm:$0xff]
  %v45 = vld [vmem:[%s2 + $0xa0] sm:$0xff]
  %v46 = vld [vmem:[%s2 + $0xa8] sm:$0xff]
  %v47 = vld [vmem:[%s2 + $0xb0] sm:$0xff]
  %v48 = vld [vmem:[%s2 + $0xb8] sm:$0xff]
  %v49 = vld [vmem:[%s3] sm:$0x7]
  %v50 = vld [vmem:[%s4] sm:$0xff]
  %v51 = vld [vmem:[%s4 + $0x8] sm:$0xff]
  %v52 = vld [vmem:[%s4 + $0x10] sm:$0xff]
  %v53 = vld [vmem:[%s4 + $0x18] sm:$0xff]
  %v54 = vld [vmem:[%s4 + $0x20] sm:$0xff]
  %v55 = vld [vmem:[%s4 + $0x28] sm:$0xff]
  %v56 = vld [vmem:[%s4 + $0x30] sm:$0xff]
  %v57 = vld [vmem:[%s4 + $0x38] sm:$0xff]
  %v58 = vld [vmem:[%s4 + $0x40] sm:$0xff]
  %v59 = vld [vmem:[%s4 + $0x48] sm:$0xff]
  %v60 = vld [vmem:[%s4 + $0x50] sm:$0xff]
  %v61 = vld [vmem:[%s4 + $0x58] sm:$0xff]
  %v62 = vld [vmem:[%s4 + $0x60] sm:$0xff]
  %v63 = vld [vmem:[%s4 + $0x68] sm:$0xff]
  %v64 = vld [vmem:[%s4 + $0x70] sm:$0xff]
  %v65 = vld [vmem:[%s4 + $0x78] sm:$0xff]
  %v66 = vld [vmem:[%s4 + $0x80] sm:$0xff]
  %v67 = vld [vmem:[%s4 + $0x88] sm:$0xff]
  %v68 = vld [vmem:[%s4 + $0x90] sm:$0xff]
  %v69 = vld [vmem:[%s4 + $0x98] sm:$0xff]
  %v70 = vld [vmem:[%s4 + $0xa0] sm:$0xff]
  %v71 = vld [vmem:[%s4 + $0xa8] sm:$0xff]
  %v72 = vld [vmem:[%s4 + $0xb0] sm:$0xff]
  %v73 = vld [vmem:[%s4 + $0xb8] sm:$0xff]
  %v74 = vld [vmem:[%s5] sm:$0x7]
  %v75 = vld [vmem:[%s1] sm:$0xff]
  %v76 = vld [vmem:[%s0] sm:$0xff]
  %v78 = vlaneseq
  %v79 = vshrl.u32 %v78, 7
  %v80 = vsub.s32 0, %v79
  %v81 = vrot.slane %v49, %v80
  %v82 = vlaneseq
  %v83 = vshrl.u32 %v82, 7
  %v84 = vsub.s32 1, %v83
  %v85 = vrot.slane %v49, %v84
  %v86 = vlaneseq
  %v87 = vshrl.u32 %v86, 7
  %v88 = vsub.s32 2, %v87
  %v89 = vrot.slane %v49, %v88
  %vm93 = vcmask 523264
  %v95 = vsel %vm93, %v76, 0
  %97 = vmatprep.subr.mxu0 %v26
  %98 = vmatpush1.msra.mxu0 %v25
  %99 = vmatprep.subr.mxu0 %v29
  %100 = vmatpush1.msra.mxu0 %v28
  %101 = vmatprep.subr.mxu0 %v32
  %102 = vmatpush1.msra.mxu0 %v31
  %103 = vmatprep.subr.mxu0 %v35
  %104 = vmatpush1.msra.mxu0 %v34
  %105 = vmatprep.subr.mxu0 %v38
  %106 = vmatpush1.msra.mxu0 %v37
  %107 = vmatprep.subr.mxu0 %v41
  %108 = vmatpush1.msra.mxu0 %v40
  %109 = vmatprep.subr.mxu0 %v44
  %110 = vmatpush1.msra.mxu0 %v43
  %111 = vmatprep.subr.mxu0 %v47
  %112 = vmatpush1.msra.mxu0 %v46
  %113 = vmatprep.subr.mxu0 0.0
  %114 = vmatpush1.msra.mxu0 0.0
  %115 = vmatprep.subr.mxu0 0.0
  %116 = vmatpush1.msra.mxu0 0.0
  %117 = vmatprep.subr.mxu0 0.0
  %118 = vmatpush1.msra.mxu0 0.0
  %119 = vmatprep.subr.mxu0 0.0
  %120 = vmatpush1.msra.mxu0 0.0
  %121 = vmatprep.subr.mxu0 0.0
  %122 = vmatpush1.msra.mxu0 0.0
  %123 = vmatprep.subr.mxu0 0.0
  %124 = vmatpush1.msra.mxu0 0.0
  %125 = vmatprep.subr.mxu0 0.0
  %126 = vmatpush1.msra.mxu0 0.0
  %127 = vmatprep.subr.mxu0 0.0
  %128 = vmatpush1.msra.mxu0 0.0
  %129 = vmatprep.subr.mxu0 0.0
  %130 = vmatpush1.msra.mxu0 0.0
  %131 = vmatprep.subr.mxu0 0.0
  %132 = vmatpush1.msra.mxu0 0.0
  %133 = vmatprep.subr.mxu0 0.0
  %134 = vmatpush1.msra.mxu0 0.0
  %135 = vmatprep.subr.mxu0 0.0
  %136 = vmatpush1.msra.mxu0 0.0
  %137 = vmatprep.subr.mxu0 0.0
  %138 = vmatpush1.msra.mxu0 0.0
  %139 = vmatprep.subr.mxu0 0.0
  %140 = vmatpush1.msra.mxu0 0.0
  %141 = vmatprep.subr.mxu0 0.0
  %142 = vmatpush1.msra.mxu0 0.0
  %143 = vmatprep.subr.mxu0 0.0
  %144 = vmatpush1.msra.mxu0 0.0
  %145 = vmatprep.subr.mxu0 0.0
  %146 = vmatpush1.msra.mxu0 0.0
  %147 = vmatprep.subr.mxu0 0.0
  %148 = vmatpush1.msra.mxu0 0.0
  %149 = vmatprep.subr.mxu0 0.0
  %150 = vmatpush1.msra.mxu0 0.0
  %151 = vmatprep.subr.mxu0 0.0
  %152 = vmatpush1.msra.mxu0 0.0
  %153 = vmatprep.subr.mxu0 0.0
  %154 = vmatpush1.msra.mxu0 0.0
  %155 = vmatprep.subr.mxu0 0.0
  %156 = vmatpush1.msra.mxu0 0.0
  %157 = vmatprep.subr.mxu0 0.0
  %158 = vmatpush1.msra.mxu0 0.0
  %159 = vmatprep.subr.mxu0 0.0
  %160 = vmatpush1.msra.mxu0 0.0
  %161 = vmatprep.mubr.f32.mxu0 0.0
  %162 = vmatmul.mubr.f32.gmra.mrb[0].mxu0 %v95
  %v163 = vpop.f32.mrb[0].mxu0
  %v164 = vadd.f32 %v81, %v163
  %v165 = vpop.f32.mrb[0].mxu0
  %v166 = vadd.f32 %v85, %v165
  %167 = vdwg.mxu0
  %168 = vmatprep.subr.mxu0 0.0
  %169 = vmatpush1.msra.mxu0 %v27
  %170 = vmatprep.subr.mxu0 0.0
  %171 = vmatpush1.msra.mxu0 %v30
  %172 = vmatprep.subr.mxu0 0.0
  %173 = vmatpush1.msra.mxu0 %v33
  %174 = vmatprep.subr.mxu0 0.0
  %175 = vmatpush1.msra.mxu0 %v36
  %176 = vmatprep.subr.mxu0 0.0
  %177 = vmatpush1.msra.mxu0 %v39
  %178 = vmatprep.subr.mxu0 0.0
  %179 = vmatpush1.msra.mxu0 %v42
  %180 = vmatprep.subr.mxu0 0.0
  %181 = vmatpush1.msra.mxu0 %v45
  %182 = vmatprep.subr.mxu0 0.0
  %183 = vmatpush1.msra.mxu0 %v48
  %184 = vmatprep.subr.mxu0 0.0
  %185 = vmatpush1.msra.mxu0 0.0
  %186 = vmatprep.subr.mxu0 0.0
  %187 = vmatpush1.msra.mxu0 0.0
  %188 = vmatprep.subr.mxu0 0.0
  %189 = vmatpush1.msra.mxu0 0.0
  %190 = vmatprep.subr.mxu0 0.0
  %191 = vmatpush1.msra.mxu0 0.0
  %192 = vmatprep.subr.mxu0 0.0
  %193 = vmatpush1.msra.mxu0 0.0
  %194 = vmatprep.subr.mxu0 0.0
  %195 = vmatpush1.msra.mxu0 0.0
  %196 = vmatprep.subr.mxu0 0.0
  %197 = vmatpush1.msra.mxu0 0.0
  %198 = vmatprep.subr.mxu0 0.0
  %199 = vmatpush1.msra.mxu0 0.0
  %200 = vmatprep.subr.mxu0 0.0
  %201 = vmatpush1.msra.mxu0 0.0
  %202 = vmatprep.subr.mxu0 0.0
  %203 = vmatpush1.msra.mxu0 0.0
  %204 = vmatprep.subr.mxu0 0.0
  %205 = vmatpush1.msra.mxu0 0.0
  %206 = vmatprep.subr.mxu0 0.0
  %207 = vmatpush1.msra.mxu0 0.0
  %208 = vmatprep.subr.mxu0 0.0
  %209 = vmatpush1.msra.mxu0 0.0
  %210 = vmatprep.subr.mxu0 0.0
  %211 = vmatpush1.msra.mxu0 0.0
  %212 = vmatprep.subr.mxu0 0.0
  %213 = vmatpush1.msra.mxu0 0.0
  %214 = vmatprep.subr.mxu0 0.0
  %215 = vmatpush1.msra.mxu0 0.0
  %216 = vmatprep.subr.mxu0 0.0
  %217 = vmatpush1.msra.mxu0 0.0
  %218 = vmatprep.subr.mxu0 0.0
  %219 = vmatpush1.msra.mxu0 0.0
  %220 = vmatprep.subr.mxu0 0.0
  %221 = vmatpush1.msra.mxu0 0.0
  %222 = vmatprep.subr.mxu0 0.0
  %223 = vmatpush1.msra.mxu0 0.0
  %224 = vmatprep.subr.mxu0 0.0
  %225 = vmatpush1.msra.mxu0 0.0
  %226 = vmatprep.subr.mxu0 0.0
  %227 = vmatpush1.msra.mxu0 0.0
  %228 = vmatprep.subr.mxu0 0.0
  %229 = vmatpush1.msra.mxu0 0.0
  %230 = vmatprep.subr.mxu0 0.0
  %231 = vmatpush1.msra.mxu0 0.0
  %232 = vmatprep.mubr.f32.mxu0 0.0
  %233 = vmatmul.mubr.f32.gmra.mrb[0].mxu0 %v95
  %v234 = vpop.f32.mrb[0].mxu0
  %v235 = vadd.f32 %v89, %v234
  %v236 = vpop.f32.mrb[0].mxu0
  %237 = vdwg.mxu0
  %238 = vst [vmem:[#allocation2] sm:$0xff] %v164
  %239 = vst [vmem:[#allocation2 + $0x8] sm:$0xff] %v166
  %240 = vst [vmem:[#allocation2 + $0x10] sm:$0xff] %v235
  %s241 = scalar_lea.vmem %s0, 8
  %v242 = vld [vmem:[%s241] sm:$0xff]
  %v244 = vsel %vm93, %v242, 0
  %246 = vmatprep.subr.mxu0 %v26
  %247 = vmatpush1.msra.mxu0 %v25
  %248 = vmatprep.subr.mxu0 %v29
  %249 = vmatpush1.msra.mxu0 %v28
  %250 = vmatprep.subr.mxu0 %v32
  %251 = vmatpush1.msra.mxu0 %v31
  %252 = vmatprep.subr.mxu0 %v35
  %253 = vmatpush1.msra.mxu0 %v34
  %254 = vmatprep.subr.mxu0 %v38
  %255 = vmatpush1.msra.mxu0 %v37
  %256 = vmatprep.subr.mxu0 %v41
  %257 = vmatpush1.msra.mxu0 %v40
  %258 = vmatprep.subr.mxu0 %v44
  %259 = vmatpush1.msra.mxu0 %v43
  %260 = vmatprep.subr.mxu0 %v47
  %261 = vmatpush1.msra.mxu0 %v46
  %262 = vmatprep.subr.mxu0 0.0
  %263 = vmatpush1.msra.mxu0 0.0
  %264 = vmatprep.subr.mxu0 0.0
  %265 = vmatpush1.msra.mxu0 0.0
  %266 = vmatprep.subr.mxu0 0.0
  %267 = vmatpush1.msra.mxu0 0.0
  %268 = vmatprep.subr.mxu0 0.0
  %269 = vmatpush1.msra.mxu0 0.0
  %270 = vmatprep.subr.mxu0 0.0
  %271 = vmatpush1.msra.mxu0 0.0
  %272 = vmatprep.subr.mxu0 0.0
  %273 = vmatpush1.msra.mxu0 0.0
  %274 = vmatprep.subr.mxu0 0.0
  %275 = vmatpush1.msra.mxu0 0.0
  %276 = vmatprep.subr.mxu0 0.0
  %277 = vmatpush1.msra.mxu0 0.0
  %278 = vmatprep.subr.mxu0 0.0
  %279 = vmatpush1.msra.mxu0 0.0
  %280 = vmatprep.subr.mxu0 0.0
  %281 = vmatpush1.msra.mxu0 0.0
  %282 = vmatprep.subr.mxu0 0.0
  %283 = vmatpush1.msra.mxu0 0.0
  %284 = vmatprep.subr.mxu0 0.0
  %285 = vmatpush1.msra.mxu0 0.0
  %286 = vmatprep.subr.mxu0 0.0
  %287 = vmatpush1.msra.mxu0 0.0
  %288 = vmatprep.subr.mxu0 0.0
  %289 = vmatpush1.msra.mxu0 0.0
  %290 = vmatprep.subr.mxu0 0.0
  %291 = vmatpush1.msra.mxu0 0.0
  %292 = vmatprep.subr.mxu0 0.0
  %293 = vmatpush1.msra.mxu0 0.0
  %294 = vmatprep.subr.mxu0 0.0
  %295 = vmatpush1.msra.mxu0 0.0
  %296 = vmatprep.subr.mxu0 0.0
  %297 = vmatpush1.msra.mxu0 0.0
  %298 = vmatprep.subr.mxu0 0.0
  %299 = vmatpush1.msra.mxu0 0.0
  %300 = vmatprep.subr.mxu0 0.0
  %301 = vmatpush1.msra.mxu0 0.0
  %302 = vmatprep.subr.mxu0 0.0
  %303 = vmatpush1.msra.mxu0 0.0
  %304 = vmatprep.subr.mxu0 0.0
  %305 = vmatpush1.msra.mxu0 0.0
  %306 = vmatprep.subr.mxu0 0.0
  %307 = vmatpush1.msra.mxu0 0.0
  %308 = vmatprep.subr.mxu0 0.0
  %309 = vmatpush1.msra.mxu0 0.0
  %310 = vmatprep.mubr.f32.mxu0 0.0
  %311 = vmatmul.mubr.f32.gmra.mrb[0].mxu0 %v244
  %v312 = vpop.f32.mrb[0].mxu0
  %v313 = vadd.f32 %v81, %v312
  %v314 = vpop.f32.mrb[0].mxu0
  %v315 = vadd.f32 %v85, %v314
  %316 = vdwg.mxu0
  %317 = vmatprep.subr.mxu0 0.0
  %318 = vmatpush1.msra.mxu0 %v27
  %319 = vmatprep.subr.mxu0 0.0
  %320 = vmatpush1.msra.mxu0 %v30
  %321 = vmatprep.subr.mxu0 0.0
  %322 = vmatpush1.msra.mxu0 %v33
  %323 = vmatprep.subr.mxu0 0.0
  %324 = vmatpush1.msra.mxu0 %v36
  %325 = vmatprep.subr.mxu0 0.0
  %326 = vmatpush1.msra.mxu0 %v39
  %327 = vmatprep.subr.mxu0 0.0
  %328 = vmatpush1.msra.mxu0 %v42
  %329 = vmatprep.subr.mxu0 0.0
  %330 = vmatpush1.msra.mxu0 %v45
  %331 = vmatprep.subr.mxu0 0.0
  %332 = vmatpush1.msra.mxu0 %v48
  %333 = vmatprep.subr.mxu0 0.0
  %334 = vmatpush1.msra.mxu0 0.0
  %335 = vmatprep.subr.mxu0 0.0
  %336 = vmatpush1.msra.mxu0 0.0
  %337 = vmatprep.subr.mxu0 0.0
  %338 = vmatpush1.msra.mxu0 0.0
  %339 = vmatprep.subr.mxu0 0.0
  %340 = vmatpush1.msra.mxu0 0.0
  %341 = vmatprep.subr.mxu0 0.0
  %342 = vmatpush1.msra.mxu0 0.0
  %343 = vmatprep.subr.mxu0 0.0
  %344 = vmatpush1.msra.mxu0 0.0
  %345 = vmatprep.subr.mxu0 0.0
  %346 = vmatpush1.msra.mxu0 0.0
  %347 = vmatprep.subr.mxu0 0.0
  %348 = vmatpush1.msra.mxu0 0.0
  %349 = vmatprep.subr.mxu0 0.0
  %350 = vmatpush1.msra.mxu0 0.0
  %351 = vmatprep.subr.mxu0 0.0
  %352 = vmatpush1.msra.mxu0 0.0
  %353 = vmatprep.subr.mxu0 0.0
  %354 = vmatpush1.msra.mxu0 0.0
  %355 = vmatprep.subr.mxu0 0.0
  %356 = vmatpush1.msra.mxu0 0.0
  %357 = vmatprep.subr.mxu0 0.0
  %358 = vmatpush1.msra.mxu0 0.0
  %359 = vmatprep.subr.mxu0 0.0
  %360 = vmatpush1.msra.mxu0 0.0
  %361 = vmatprep.subr.mxu0 0.0
  %362 = vmatpush1.msra.mxu0 0.0
  %363 = vmatprep.subr.mxu0 0.0
  %364 = vmatpush1.msra.mxu0 0.0
  %365 = vmatprep.subr.mxu0 0.0
  %366 = vmatpush1.msra.mxu0 0.0
  %367 = vmatprep.subr.mxu0 0.0
  %368 = vmatpush1.msra.mxu0 0.0
  %369 = vmatprep.subr.mxu0 0.0
  %370 = vmatpush1.msra.mxu0 0.0
  %371 = vmatprep.subr.mxu0 0.0
  %372 = vmatpush1.msra.mxu0 0.0
  %373 = vmatprep.subr.mxu0 0.0
  %374 = vmatpush1.msra.mxu0 0.0
  %375 = vmatprep.subr.mxu0 0.0
  %376 = vmatpush1.msra.mxu0 0.0
  %377 = vmatprep.subr.mxu0 0.0
  %378 = vmatpush1.msra.mxu0 0.0
  %379 = vmatprep.subr.mxu0 0.0
  %380 = vmatpush1.msra.mxu0 0.0
  %381 = vmatprep.mubr.f32.mxu0 0.0
  %382 = vmatmul.mubr.f32.gmra.mrb[0].mxu0 %v244
  %v383 = vpop.f32.mrb[0].mxu0
  %v384 = vadd.f32 %v89, %v383
  %v385 = vpop.f32.mrb[0].mxu0
  %386 = vdwg.mxu0
  %s387 = scalar_lea.vmem [#allocation2], 24
  %388 = vst [vmem:[%s387] sm:$0xff] %v313
  %389 = vst [vmem:[%s387 + $0x8] sm:$0xff] %v315
  %390 = vst [vmem:[%s387 + $0x10] sm:$0xff] %v384
  %s391 = scalar_lea.vmem %s0, 16
  %v392 = vld [vmem:[%s391] sm:$0xff]
  %v394 = vsel %vm93, %v392, 0
  %396 = vmatprep.subr.mxu0 %v26
  %397 = vmatpush1.msra.mxu0 %v25
  %398 = vmatprep.subr.mxu0 %v29
  %399 = vmatpush1.msra.mxu0 %v28
  %400 = vmatprep.subr.mxu0 %v32
  %401 = vmatpush1.msra.mxu0 %v31
  %402 = vmatprep.subr.mxu0 %v35
  %403 = vmatpush1.msra.mxu0 %v34
  %404 = vmatprep.subr.mxu0 %v38
  %405 = vmatpush1.msra.mxu0 %v37
  %406 = vmatprep.subr.mxu0 %v41
  %407 = vmatpush1.msra.mxu0 %v40
  %408 = vmatprep.subr.mxu0 %v44
  %409 = vmatpush1.msra.mxu0 %v43
  %410 = vmatprep.subr.mxu0 %v47
  %411 = vmatpush1.msra.mxu0 %v46
  %412 = vmatprep.subr.mxu0 0.0
  %413 = vmatpush1.msra.mxu0 0.0
  %414 = vmatprep.subr.mxu0 0.0
  %415 = vmatpush1.msra.mxu0 0.0
  %416 = vmatprep.subr.mxu0 0.0
  %417 = vmatpush1.msra.mxu0 0.0
  %418 = vmatprep.subr.mxu0 0.0
  %419 = vmatpush1.msra.mxu0 0.0
  %420 = vmatprep.subr.mxu0 0.0
  %421 = vmatpush1.msra.mxu0 0.0
  %422 = vmatprep.subr.mxu0 0.0
  %423 = vmatpush1.msra.mxu0 0.0
  %424 = vmatprep.subr.mxu0 0.0
  %425 = vmatpush1.msra.mxu0 0.0
  %426 = vmatprep.subr.mxu0 0.0
  %427 = vmatpush1.msra.mxu0 0.0
  %428 = vmatprep.subr.mxu0 0.0
  %429 = vmatpush1.msra.mxu0 0.0
  %430 = vmatprep.subr.mxu0 0.0
  %431 = vmatpush1.msra.mxu0 0.0
  %432 = vmatprep.subr.mxu0 0.0
  %433 = vmatpush1.msra.mxu0 0.0
  %434 = vmatprep.subr.mxu0 0.0
  %435 = vmatpush1.msra.mxu0 0.0
  %436 = vmatprep.subr.mxu0 0.0
  %437 = vmatpush1.msra.mxu0 0.0
  %438 = vmatprep.subr.mxu0 0.0
  %439 = vmatpush1.msra.mxu0 0.0
  %440 = vmatprep.subr.mxu0 0.0
  %441 = vmatpush1.msra.mxu0 0.0
  %442 = vmatprep.subr.mxu0 0.0
  %443 = vmatpush1.msra.mxu0 0.0
  %444 = vmatprep.subr.mxu0 0.0
  %445 = vmatpush1.msra.mxu0 0.0
  %446 = vmatprep.subr.mxu0 0.0
  %447 = vmatpush1.msra.mxu0 0.0
  %448 = vmatprep.subr.mxu0 0.0
  %449 = vmatpush1.msra.mxu0 0.0
  %450 = vmatprep.subr.mxu0 0.0
  %451 = vmatpush1.msra.mxu0 0.0
  %452 = vmatprep.subr.mxu0 0.0
  %453 = vmatpush1.msra.mxu0 0.0
  %454 = vmatprep.subr.mxu0 0.0
  %455 = vmatpush1.msra.mxu0 0.0
  %456 = vmatprep.subr.mxu0 0.0
  %457 = vmatpush1.msra.mxu0 0.0
  %458 = vmatprep.subr.mxu0 0.0
  %459 = vmatpush1.msra.mxu0 0.0
  %460 = vmatprep.mubr.f32.mxu0 0.0
  %461 = vmatmul.mubr.f32.gmra.mrb[0].mxu0 %v394
  %v462 = vpop.f32.mrb[0].mxu0
  %v463 = vadd.f32 %v81, %v462
  %v464 = vpop.f32.mrb[0].mxu0
  %v465 = vadd.f32 %v85, %v464
  %466 = vdwg.mxu0
  %467 = vmatprep.subr.mxu0 0.0
  %468 = vmatpush1.msra.mxu0 %v27
  %469 = vmatprep.subr.mxu0 0.0
  %470 = vmatpush1.msra.mxu0 %v30
  %471 = vmatprep.subr.mxu0 0.0
  %472 = vmatpush1.msra.mxu0 %v33
  %473 = vmatprep.subr.mxu0 0.0
  %474 = vmatpush1.msra.mxu0 %v36
  %475 = vmatprep.subr.mxu0 0.0
  %476 = vmatpush1.msra.mxu0 %v39
  %477 = vmatprep.subr.mxu0 0.0
  %478 = vmatpush1.msra.mxu0 %v42
  %479 = vmatprep.subr.mxu0 0.0
  %480 = vmatpush1.msra.mxu0 %v45
  %481 = vmatprep.subr.mxu0 0.0
  %482 = vmatpush1.msra.mxu0 %v48
  %483 = vmatprep.subr.mxu0 0.0
  %484 = vmatpush1.msra.mxu0 0.0
  %485 = vmatprep.subr.mxu0 0.0
  %486 = vmatpush1.msra.mxu0 0.0
  %487 = vmatprep.subr.mxu0 0.0
  %488 = vmatpush1.msra.mxu0 0.0
  %489 = vmatprep.subr.mxu0 0.0
  %490 = vmatpush1.msra.mxu0 0.0
  %491 = vmatprep.subr.mxu0 0.0
  %492 = vmatpush1.msra.mxu0 0.0
  %493 = vmatprep.subr.mxu0 0.0
  %494 = vmatpush1.msra.mxu0 0.0
  %495 = vmatprep.subr.mxu0 0.0
  %496 = vmatpush1.msra.mxu0 0.0
  %497 = vmatprep.subr.mxu0 0.0
  %498 = vmatpush1.msra.mxu0 0.0
  %499 = vmatprep.subr.mxu0 0.0
  %500 = vmatpush1.msra.mxu0 0.0
  %501 = vmatprep.subr.mxu0 0.0
  %502 = vmatpush1.msra.mxu0 0.0
  %503 = vmatprep.subr.mxu0 0.0
  %504 = vmatpush1.msra.mxu0 0.0
  %505 = vmatprep.subr.mxu0 0.0
  %506 = vmatpush1.msra.mxu0 0.0
  %507 = vmatprep.subr.mxu0 0.0
  %508 = vmatpush1.msra.mxu0 0.0
  %509 = vmatprep.subr.mxu0 0.0
  %510 = vmatpush1.msra.mxu0 0.0
  %511 = vmatprep.subr.mxu0 0.0
  %512 = vmatpush1.msra.mxu0 0.0
  %513 = vmatprep.subr.mxu0 0.0
  %514 = vmatpush1.msra.mxu0 0.0
  %515 = vmatprep.subr.mxu0 0.0
  %516 = vmatpush1.msra.mxu0 0.0
  %517 = vmatprep.subr.mxu0 0.0
  %518 = vmatpush1.msra.mxu0 0.0
  %519 = vmatprep.subr.mxu0 0.0
  %520 = vmatpush1.msra.mxu0 0.0
  %521 = vmatprep.subr.mxu0 0.0
  %522 = vmatpush1.msra.mxu0 0.0
  %523 = vmatprep.subr.mxu0 0.0
  %524 = vmatpush1.msra.mxu0 0.0
  %525 = vmatprep.subr.mxu0 0.0
  %526 = vmatpush1.msra.mxu0 0.0
  %527 = vmatprep.subr.mxu0 0.0
  %528 = vmatpush1.msra.mxu0 0.0
  %529 = vmatprep.subr.mxu0 0.0
  %530 = vmatpush1.msra.mxu0 0.0
  %531 = vmatprep.mubr.f32.mxu0 0.0
  %532 = vmatmul.mubr.f32.gmra.mrb[0].mxu0 %v394
  %v533 = vpop.f32.mrb[0].mxu0
  %v534 = vadd.f32 %v89, %v533
  %v535 = vpop.f32.mrb[0].mxu0
  %536 = vdwg.mxu0
  %s537 = scalar_lea.vmem [#allocation2], 48
  %538 = vst [vmem:[%s537] sm:$0xff] %v463
  %539 = vst [vmem:[%s537 + $0x8] sm:$0xff] %v465
  %540 = vst [vmem:[%s537 + $0x10] sm:$0xff] %v534
  %s541 = scalar_lea.vmem %s0, 24
  %v542 = vld [vmem:[%s541] sm:$0xff]
  %v544 = vsel %vm93, %v542, 0
  %546 = vmatprep.subr.mxu0 %v26
  %547 = vmatpush1.msra.mxu0 %v25
  %548 = vmatprep.subr.mxu0 %v29
  %549 = vmatpush1.msra.mxu0 %v28
  %550 = vmatprep.subr.mxu0 %v32
  %551 = vmatpush1.msra.mxu0 %v31
  %552 = vmatprep.subr.mxu0 %v35
  %553 = vmatpush1.msra.mxu0 %v34
  %554 = vmatprep.subr.mxu0 %v38
  %555 = vmatpush1.msra.mxu0 %v37
  %556 = vmatprep.subr.mxu0 %v41
  %557 = vmatpush1.msra.mxu0 %v40
  %558 = vmatprep.subr.mxu0 %v44
  %559 = vmatpush1.msra.mxu0 %v43
  %560 = vmatprep.subr.mxu0 %v47
  %561 = vmatpush1.msra.mxu0 %v46
  %562 = vmatprep.subr.mxu0 0.0
  %563 = vmatpush1.msra.mxu0 0.0
  %564 = vmatprep.subr.mxu0 0.0
  %565 = vmatpush1.msra.mxu0 0.0
  %566 = vmatprep.subr.mxu0 0.0
  %567 = vmatpush1.msra.mxu0 0.0
  %568 = vmatprep.subr.mxu0 0.0
  %569 = vmatpush1.msra.mxu0 0.0
  %570 = vmatprep.subr.mxu0 0.0
  %571 = vmatpush1.msra.mxu0 0.0
  %572 = vmatprep.subr.mxu0 0.0
  %573 = vmatpush1.msra.mxu0 0.0
  %574 = vmatprep.subr.mxu0 0.0
  %575 = vmatpush1.msra.mxu0 0.0
  %576 = vmatprep.subr.mxu0 0.0
  %577 = vmatpush1.msra.mxu0 0.0
  %578 = vmatprep.subr.mxu0 0.0
  %579 = vmatpush1.msra.mxu0 0.0
  %580 = vmatprep.subr.mxu0 0.0
  %581 = vmatpush1.msra.mxu0 0.0
  %582 = vmatprep.subr.mxu0 0.0
  %583 = vmatpush1.msra.mxu0 0.0
  %584 = vmatprep.subr.mxu0 0.0
  %585 = vmatpush1.msra.mxu0 0.0
  %586 = vmatprep.subr.mxu0 0.0
  %587 = vmatpush1.msra.mxu0 0.0
  %588 = vmatprep.subr.mxu0 0.0
  %589 = vmatpush1.msra.mxu0 0.0
  %590 = vmatprep.subr.mxu0 0.0
  %591 = vmatpush1.msra.mxu0 0.0
  %592 = vmatprep.subr.mxu0 0.0
  %593 = vmatpush1.msra.mxu0 0.0
  %594 = vmatprep.subr.mxu0 0.0
  %595 = vmatpush1.msra.mxu0 0.0
  %596 = vmatprep.subr.mxu0 0.0
  %597 = vmatpush1.msra.mxu0 0.0
  %598 = vmatprep.subr.mxu0 0.0
  %599 = vmatpush1.msra.mxu0 0.0
  %600 = vmatprep.subr.mxu0 0.0
  %601 = vmatpush1.msra.mxu0 0.0
  %602 = vmatprep.subr.mxu0 0.0
  %603 = vmatpush1.msra.mxu0 0.0
  %604 = vmatprep.subr.mxu0 0.0
  %605 = vmatpush1.msra.mxu0 0.0
  %606 = vmatprep.subr.mxu0 0.0
  %607 = vmatpush1.msra.mxu0 0.0
  %608 = vmatprep.subr.mxu0 0.0
  %609 = vmatpush1.msra.mxu0 0.0
  %610 = vmatprep.mubr.f32.mxu0 0.0
  %611 = vmatmul.mubr.f32.gmra.mrb[0].mxu0 %v544
  %v612 = vpop.f32.mrb[0].mxu0
  %v613 = vadd.f32 %v81, %v612
  %v614 = vpop.f32.mrb[0].mxu0
  %v615 = vadd.f32 %v85, %v614
  %616 = vdwg.mxu0
  %617 = vmatprep.subr.mxu0 0.0
  %618 = vmatpush1.msra.mxu0 %v27
  %619 = vmatprep.subr.mxu0 0.0
  %620 = vmatpush1.msra.mxu0 %v30
  %621 = vmatprep.subr.mxu0 0.0
  %622 = vmatpush1.msra.mxu0 %v33
  %623 = vmatprep.subr.mxu0 0.0
  %624 = vmatpush1.msra.mxu0 %v36
  %625 = vmatprep.subr.mxu0 0.0
  %626 = vmatpush1.msra.mxu0 %v39
  %627 = vmatprep.subr.mxu0 0.0
  %628 = vmatpush1.msra.mxu0 %v42
  %629 = vmatprep.subr.mxu0 0.0
  %630 = vmatpush1.msra.mxu0 %v45
  %631 = vmatprep.subr.mxu0 0.0
  %632 = vmatpush1.msra.mxu0 %v48
  %633 = vmatprep.subr.mxu0 0.0
  %634 = vmatpush1.msra.mxu0 0.0
  %635 = vmatprep.subr.mxu0 0.0
  %636 = vmatpush1.msra.mxu0 0.0
  %637 = vmatprep.subr.mxu0 0.0
  %638 = vmatpush1.msra.mxu0 0.0
  %639 = vmatprep.subr.mxu0 0.0
  %640 = vmatpush1.msra.mxu0 0.0
  %641 = vmatprep.subr.mxu0 0.0
  %642 = vmatpush1.msra.mxu0 0.0
  %643 = vmatprep.subr.mxu0 0.0
  %644 = vmatpush1.msra.mxu0 0.0
  %645 = vmatprep.subr.mxu0 0.0
  %646 = vmatpush1.msra.mxu0 0.0
  %647 = vmatprep.subr.mxu0 0.0
  %648 = vmatpush1.msra.mxu0 0.0
  %649 = vmatprep.subr.mxu0 0.0
  %650 = vmatpush1.msra.mxu0 0.0
  %651 = vmatprep.subr.mxu0 0.0
  %652 = vmatpush1.msra.mxu0 0.0
  %653 = vmatprep.subr.mxu0 0.0
  %654 = vmatpush1.msra.mxu0 0.0
  %655 = vmatprep.subr.mxu0 0.0
  %656 = vmatpush1.msra.mxu0 0.0
  %657 = vmatprep.subr.mxu0 0.0
  %658 = vmatpush1.msra.mxu0 0.0
  %659 = vmatprep.subr.mxu0 0.0
  %660 = vmatpush1.msra.mxu0 0.0
  %661 = vmatprep.subr.mxu0 0.0
  %662 = vmatpush1.msra.mxu0 0.0
  %663 = vmatprep.subr.mxu0 0.0
  %664 = vmatpush1.msra.mxu0 0.0
  %665 = vmatprep.subr.mxu0 0.0
  %666 = vmatpush1.msra.mxu0 0.0
  %667 = vmatprep.subr.mxu0 0.0
  %668 = vmatpush1.msra.mxu0 0.0
  %669 = vmatprep.subr.mxu0 0.0
  %670 = vmatpush1.msra.mxu0 0.0
  %671 = vmatprep.subr.mxu0 0.0
  %672 = vmatpush1.msra.mxu0 0.0
  %673 = vmatprep.subr.mxu0 0.0
  %674 = vmatpush1.msra.mxu0 0.0
  %675 = vmatprep.subr.mxu0 0.0
  %676 = vmatpush1.msra.mxu0 0.0
  %677 = vmatprep.subr.mxu0 0.0
  %678 = vmatpush1.msra.mxu0 0.0
  %679 = vmatprep.subr.mxu0 0.0
  %680 = vmatpush1.msra.mxu0 0.0
  %681 = vmatprep.mubr.f32.mxu0 0.0
  %682 = vmatmul.mubr.f32.gmra.mrb[0].mxu0 %v544
  %v683 = vpop.f32.mrb[0].mxu0
  %v684 = vadd.f32 %v89, %v683
  %v685 = vpop.f32.mrb[0].mxu0
  %686 = vdwg.mxu0
  %s687 = scalar_lea.vmem [#allocation2], 72
  %688 = vst [vmem:[%s687] sm:$0xff] %v613
  %689 = vst [vmem:[%s687 + $0x8] sm:$0xff] %v615
  %690 = vst [vmem:[%s687 + $0x10] sm:$0xff] %v684
  %v691 = vld [vmem:[#allocation2] sm:$0xff]
  %v692 = vld [vmem:[#allocation2 + $0x8] sm:$0xff]
  %v693 = vld [vmem:[#allocation2 + $0x10] sm:$0xff]
  %v695 = vlaneseq
  %v696 = vshrl.u32 %v695, 7
  %v697 = vsub.s32 0, %v696
  %v698 = vrot.slane %v74, %v697
  %v699 = vlaneseq
  %v700 = vshrl.u32 %v699, 7
  %v701 = vsub.s32 1, %v700
  %v702 = vrot.slane %v74, %v701
  %v703 = vlaneseq
  %v704 = vshrl.u32 %v703, 7
  %v705 = vsub.s32 2, %v704
  %v706 = vrot.slane %v74, %v705
  %v711 = vsel %vm93, 0.0, 0
  %713 = vmatprep.subr.mxu0 %v51
  %714 = vmatpush1.msra.mxu0 %v50
  %715 = vmatprep.subr.mxu0 %v54
  %716 = vmatpush1.msra.mxu0 %v53
  %717 = vmatprep.subr.mxu0 %v57
  %718 = vmatpush1.msra.mxu0 %v56
  %719 = vmatprep.subr.mxu0 %v60
  %720 = vmatpush1.msra.mxu0 %v59
  %721 = vmatprep.subr.mxu0 %v63
  %722 = vmatpush1.msra.mxu0 %v62
  %723 = vmatprep.subr.mxu0 %v66
  %724 = vmatpush1.msra.mxu0 %v65
  %725 = vmatprep.subr.mxu0 %v69
  %726 = vmatpush1.msra.mxu0 %v68
  %727 = vmatprep.subr.mxu0 %v72
  %728 = vmatpush1.msra.mxu0 %v71
  %729 = vmatprep.subr.mxu0 0.0
  %730 = vmatpush1.msra.mxu0 0.0
  %731 = vmatprep.subr.mxu0 0.0
  %732 = vmatpush1.msra.mxu0 0.0
  %733 = vmatprep.subr.mxu0 0.0
  %734 = vmatpush1.msra.mxu0 0.0
  %735 = vmatprep.subr.mxu0 0.0
  %736 = vmatpush1.msra.mxu0 0.0
  %737 = vmatprep.subr.mxu0 0.0
  %738 = vmatpush1.msra.mxu0 0.0
  %739 = vmatprep.subr.mxu0 0.0
  %740 = vmatpush1.msra.mxu0 0.0
  %741 = vmatprep.subr.mxu0 0.0
  %742 = vmatpush1.msra.mxu0 0.0
  %743 = vmatprep.subr.mxu0 0.0
  %744 = vmatpush1.msra.mxu0 0.0
  %745 = vmatprep.subr.mxu0 0.0
  %746 = vmatpush1.msra.mxu0 0.0
  %747 = vmatprep.subr.mxu0 0.0
  %748 = vmatpush1.msra.mxu0 0.0
  %749 = vmatprep.subr.mxu0 0.0
  %750 = vmatpush1.msra.mxu0 0.0
  %751 = vmatprep.subr.mxu0 0.0
  %752 = vmatpush1.msra.mxu0 0.0
  %753 = vmatprep.subr.mxu0 0.0
  %754 = vmatpush1.msra.mxu0 0.0
  %755 = vmatprep.subr.mxu0 0.0
  %756 = vmatpush1.msra.mxu0 0.0
  %757 = vmatprep.subr.mxu0 0.0
  %758 = vmatpush1.msra.mxu0 0.0
  %759 = vmatprep.subr.mxu0 0.0
  %760 = vmatpush1.msra.mxu0 0.0
  %761 = vmatprep.subr.mxu0 0.0
  %762 = vmatpush1.msra.mxu0 0.0
  %763 = vmatprep.subr.mxu0 0.0
  %764 = vmatpush1.msra.mxu0 0.0
  %765 = vmatprep.subr.mxu0 0.0
  %766 = vmatpush1.msra.mxu0 0.0
  %767 = vmatprep.subr.mxu0 0.0
  %768 = vmatpush1.msra.mxu0 0.0
  %769 = vmatprep.subr.mxu0 0.0
  %770 = vmatpush1.msra.mxu0 0.0
  %771 = vmatprep.subr.mxu0 0.0
  %772 = vmatpush1.msra.mxu0 0.0
  %773 = vmatprep.subr.mxu0 0.0
  %774 = vmatpush1.msra.mxu0 0.0
  %775 = vmatprep.subr.mxu0 0.0
  %776 = vmatpush1.msra.mxu0 0.0
  %777 = vmatprep.mubr.f32.mxu0 0.0
  %778 = vmatmul.mubr.f32.gmra.mrb[0].mxu0 %v711
  %v779 = vpop.f32.mrb[0].mxu0
  %v780 = vadd.f32 %v698, %v779
  %v781 = vpop.f32.mrb[0].mxu0
  %v782 = vadd.f32 %v702, %v781
  %783 = vdwg.mxu0
  %784 = vmatprep.subr.mxu0 0.0
  %785 = vmatpush1.msra.mxu0 %v52
  %786 = vmatprep.subr.mxu0 0.0
  %787 = vmatpush1.msra.mxu0 %v55
  %788 = vmatprep.subr.mxu0 0.0
  %789 = vmatpush1.msra.mxu0 %v58
  %790 = vmatprep.subr.mxu0 0.0
  %791 = vmatpush1.msra.mxu0 %v61
  %792 = vmatprep.subr.mxu0 0.0
  %793 = vmatpush1.msra.mxu0 %v64
  %794 = vmatprep.subr.mxu0 0.0
  %795 = vmatpush1.msra.mxu0 %v67
  %796 = vmatprep.subr.mxu0 0.0
  %797 = vmatpush1.msra.mxu0 %v70
  %798 = vmatprep.subr.mxu0 0.0
  %799 = vmatpush1.msra.mxu0 %v73
  %800 = vmatprep.subr.mxu0 0.0
  %801 = vmatpush1.msra.mxu0 0.0
  %802 = vmatprep.subr.mxu0 0.0
  %803 = vmatpush1.msra.mxu0 0.0
  %804 = vmatprep.subr.mxu0 0.0
  %805 = vmatpush1.msra.mxu0 0.0
  %806 = vmatprep.subr.mxu0 0.0
  %807 = vmatpush1.msra.mxu0 0.0
  %808 = vmatprep.subr.mxu0 0.0
  %809 = vmatpush1.msra.mxu0 0.0
  %810 = vmatprep.subr.mxu0 0.0
  %811 = vmatpush1.msra.mxu0 0.0
  %812 = vmatprep.subr.mxu0 0.0
  %813 = vmatpush1.msra.mxu0 0.0
  %814 = vmatprep.subr.mxu0 0.0
  %815 = vmatpush1.msra.mxu0 0.0
  %816 = vmatprep.subr.mxu0 0.0
  %817 = vmatpush1.msra.mxu0 0.0
  %818 = vmatprep.subr.mxu0 0.0
  %819 = vmatpush1.msra.mxu0 0.0
  %820 = vmatprep.subr.mxu0 0.0
  %821 = vmatpush1.msra.mxu0 0.0
  %822 = vmatprep.subr.mxu0 0.0
  %823 = vmatpush1.msra.mxu0 0.0
  %824 = vmatprep.subr.mxu0 0.0
  %825 = vmatpush1.msra.mxu0 0.0
  %826 = vmatprep.subr.mxu0 0.0
  %827 = vmatpush1.msra.mxu0 0.0
  %828 = vmatprep.subr.mxu0 0.0
  %829 = vmatpush1.msra.mxu0 0.0
  %830 = vmatprep.subr.mxu0 0.0
  %831 = vmatpush1.msra.mxu0 0.0
  %832 = vmatprep.subr.mxu0 0.0
  %833 = vmatpush1.msra.mxu0 0.0
  %834 = vmatprep.subr.mxu0 0.0
  %835 = vmatpush1.msra.mxu0 0.0
  %836 = vmatprep.subr.mxu0 0.0
  %837 = vmatpush1.msra.mxu0 0.0
  %838 = vmatprep.subr.mxu0 0.0
  %839 = vmatpush1.msra.mxu0 0.0
  %840 = vmatprep.subr.mxu0 0.0
  %841 = vmatpush1.msra.mxu0 0.0
  %842 = vmatprep.subr.mxu0 0.0
  %843 = vmatpush1.msra.mxu0 0.0
  %844 = vmatprep.subr.mxu0 0.0
  %845 = vmatpush1.msra.mxu0 0.0
  %846 = vmatprep.subr.mxu0 0.0
  %847 = vmatpush1.msra.mxu0 0.0
  %848 = vmatprep.mubr.f32.mxu0 0.0
  %849 = vmatmul.mubr.f32.gmra.mrb[0].mxu0 %v711
  %v850 = vpop.f32.mrb[0].mxu0
  %v851 = vadd.f32 %v706, %v850
  %v852 = vpop.f32.mrb[0].mxu0
  %853 = vdwg.mxu0
  %v854 = vadd.f32 %v691, %v780
  %v855 = vsub.f32 0.0, %v854
  %v856 = vmul.f32 %v855, 1.442695
  %v857 = vpow.pop %v856
  %v858 = vadd.f32 %v857, 1.0
  %v859 = vrcp.pop %v858
  %v860 = vadd.f32 %v692, %v782
  %v861 = vsub.f32 0.0, %v860
  %v862 = vmul.f32 %v861, 1.442695
  %v863 = vpow.pop %v862
  %v864 = vadd.f32 %v863, 1.0
  %v865 = vrcp.pop %v864
  %v866 = vmul.f32 %v859, %v851
  %v867 = vadd.f32 %v693, %v866
  %v868 = vtanh.pop %v867
  %v869 = vsub.f32 0.0, %v868
  %v870 = vmul.f32 %v865, %v869
  %v871 = vadd.f32 %v868, %v870
  %vm872 = vcmp.gt.s32.totalorder %v75, 0
  %v873 = vsel %vm872, 1, 0
  %v874 = vcvt.s32.f32 %v873
  %876 = vset.pattern.permute.xlu0 0
  %877 = vperm.xlu0 %876, %v874
  %v878 = vpop.permute.xlu0 %877
  %v880 = vmul.f32 %v878, %v871
  %v881 = vadd.f32 %v880, 0.0
  %v882 = vmul.f32 %v881, %v878
  %883 = vst.msk [vmem:[#allocation3] sm:$0xff] %vm93, %v882
  %v884 = vld [vmem:[%s387] sm:$0xff]
  %v885 = vld [vmem:[%s387 + $0x8] sm:$0xff]
  %v886 = vld [vmem:[%s387 + $0x10] sm:$0xff]
  %v888 = vsel %vm93, %v881, 0
  %890 = vmatprep.subr.mxu0 %v51
  %891 = vmatpush1.msra.mxu0 %v50
  %892 = vmatprep.subr.mxu0 %v54
  %893 = vmatpush1.msra.mxu0 %v53
  %894 = vmatprep.subr.mxu0 %v57
  %895 = vmatpush1.msra.mxu0 %v56
  %896 = vmatprep.subr.mxu0 %v60
  %897 = vmatpush1.msra.mxu0 %v59
  %898 = vmatprep.subr.mxu0 %v63
  %899 = vmatpush1.msra.mxu0 %v62
  %900 = vmatprep.subr.mxu0 %v66
  %901 = vmatpush1.msra.mxu0 %v65
  %902 = vmatprep.subr.mxu0 %v69
  %903 = vmatpush1.msra.mxu0 %v68
  %904 = vmatprep.subr.mxu0 %v72
  %905 = vmatpush1.msra.mxu0 %v71
  %906 = vmatprep.subr.mxu0 0.0
  %907 = vmatpush1.msra.mxu0 0.0
  %908 = vmatprep.subr.mxu0 0.0
  %909 = vmatpush1.msra.mxu0 0.0
  %910 = vmatprep.subr.mxu0 0.0
  %911 = vmatpush1.msra.mxu0 0.0
  %912 = vmatprep.subr.mxu0 0.0
  %913 = vmatpush1.msra.mxu0 0.0
  %914 = vmatprep.subr.mxu0 0.0
  %915 = vmatpush1.msra.mxu0 0.0
  %916 = vmatprep.subr.mxu0 0.0
  %917 = vmatpush1.msra.mxu0 0.0
  %918 = vmatprep.subr.mxu0 0.0
  %919 = vmatpush1.msra.mxu0 0.0
  %920 = vmatprep.subr.mxu0 0.0
  %921 = vmatpush1.msra.mxu0 0.0
  %922 = vmatprep.subr.mxu0 0.0
  %923 = vmatpush1.msra.mxu0 0.0
  %924 = vmatprep.subr.mxu0 0.0
  %925 = vmatpush1.msra.mxu0 0.0
  %926 = vmatprep.subr.mxu0 0.0
  %927 = vmatpush1.msra.mxu0 0.0
  %928 = vmatprep.subr.mxu0 0.0
  %929 = vmatpush1.msra.mxu0 0.0
  %930 = vmatprep.subr.mxu0 0.0
  %931 = vmatpush1.msra.mxu0 0.0
  %932 = vmatprep.subr.mxu0 0.0
  %933 = vmatpush1.msra.mxu0 0.0
  %934 = vmatprep.subr.mxu0 0.0
  %935 = vmatpush1.msra.mxu0 0.0
  %936 = vmatprep.subr.mxu0 0.0
  %937 = vmatpush1.msra.mxu0 0.0
  %938 = vmatprep.subr.mxu0 0.0
  %939 = vmatpush1.msra.mxu0 0.0
  %940 = vmatprep.subr.mxu0 0.0
  %941 = vmatpush1.msra.mxu0 0.0
  %942 = vmatprep.subr.mxu0 0.0
  %943 = vmatpush1.msra.mxu0 0.0
  %944 = vmatprep.subr.mxu0 0.0
  %945 = vmatpush1.msra.mxu0 0.0
  %946 = vmatprep.subr.mxu0 0.0
  %947 = vmatpush1.msra.mxu0 0.0
  %948 = vmatprep.subr.mxu0 0.0
  %949 = vmatpush1.msra.mxu0 0.0
  %950 = vmatprep.subr.mxu0 0.0
  %951 = vmatpush1.msra.mxu0 0.0
  %952 = vmatprep.subr.mxu0 0.0
  %953 = vmatpush1.msra.mxu0 0.0
  %954 = vmatprep.mubr.f32.mxu0 0.0
  %955 = vmatmul.mubr.f32.gmra.mrb[0].mxu0 %v888
  %v956 = vpop.f32.mrb[0].mxu0
  %v957 = vadd.f32 %v698, %v956
  %v958 = vpop.f32.mrb[0].mxu0
  %v959 = vadd.f32 %v702, %v958
  %960 = vdwg.mxu0
  %961 = vmatprep.subr.mxu0 0.0
  %962 = vmatpush1.msra.mxu0 %v52
  %963 = vmatprep.subr.mxu0 0.0
  %964 = vmatpush1.msra.mxu0 %v55
  %965 = vmatprep.subr.mxu0 0.0
  %966 = vmatpush1.msra.mxu0 %v58
  %967 = vmatprep.subr.mxu0 0.0
  %968 = vmatpush1.msra.mxu0 %v61
  %969 = vmatprep.subr.mxu0 0.0
  %970 = vmatpush1.msra.mxu0 %v64
  %971 = vmatprep.subr.mxu0 0.0
  %972 = vmatpush1.msra.mxu0 %v67
  %973 = vmatprep.subr.mxu0 0.0
  %974 = vmatpush1.msra.mxu0 %v70
  %975 = vmatprep.subr.mxu0 0.0
  %976 = vmatpush1.msra.mxu0 %v73
  %977 = vmatprep.subr.mxu0 0.0
  %978 = vmatpush1.msra.mxu0 0.0
  %979 = vmatprep.subr.mxu0 0.0
  %980 = vmatpush1.msra.mxu0 0.0
  %981 = vmatprep.subr.mxu0 0.0
  %982 = vmatpush1.msra.mxu0 0.0
  %983 = vmatprep.subr.mxu0 0.0
  %984 = vmatpush1.msra.mxu0 0.0
  %985 = vmatprep.subr.mxu0 0.0
  %986 = vmatpush1.msra.mxu0 0.0
  %987 = vmatprep.subr.mxu0 0.0
  %988 = vmatpush1.msra.mxu0 0.0
  %989 = vmatprep.subr.mxu0 0.0
  %990 = vmatpush1.msra.mxu0 0.0
  %991 = vmatprep.subr.mxu0 0.0
  %992 = vmatpush1.msra.mxu0 0.0
  %993 = vmatprep.subr.mxu0 0.0
  %994 = vmatpush1.msra.mxu0 0.0
  %995 = vmatprep.subr.mxu0 0.0
  %996 = vmatpush1.msra.mxu0 0.0
  %997 = vmatprep.subr.mxu0 0.0
  %998 = vmatpush1.msra.mxu0 0.0
  %999 = vmatprep.subr.mxu0 0.0
  %1000 = vmatpush1.msra.mxu0 0.0
  %1001 = vmatprep.subr.mxu0 0.0
  %1002 = vmatpush1.msra.mxu0 0.0
  %1003 = vmatprep.subr.mxu0 0.0
  %1004 = vmatpush1.msra.mxu0 0.0
  %1005 = vmatprep.subr.mxu0 0.0
  %1006 = vmatpush1.msra.mxu0 0.0
  %1007 = vmatprep.subr.mxu0 0.0
  %1008 = vmatpush1.msra.mxu0 0.0
  %1009 = vmatprep.subr.mxu0 0.0
  %1010 = vmatpush1.msra.mxu0 0.0
  %1011 = vmatprep.subr.mxu0 0.0
  %1012 = vmatpush1.msra.mxu0 0.0
  %1013 = vmatprep.subr.mxu0 0.0
  %1014 = vmatpush1.msra.mxu0 0.0
  %1015 = vmatprep.subr.mxu0 0.0
  %1016 = vmatpush1.msra.mxu0 0.0
  %1017 = vmatprep.subr.mxu0 0.0
  %1018 = vmatpush1.msra.mxu0 0.0
  %1019 = vmatprep.subr.mxu0 0.0
  %1020 = vmatpush1.msra.mxu0 0.0
  %1021 = vmatprep.subr.mxu0 0.0
  %1022 = vmatpush1.msra.mxu0 0.0
  %1023 = vmatprep.subr.mxu0 0.0
  %1024 = vmatpush1.msra.mxu0 0.0
  %1025 = vmatprep.mubr.f32.mxu0 0.0
  %1026 = vmatmul.mubr.f32.gmra.mrb[0].mxu0 %v888
  %v1027 = vpop.f32.mrb[0].mxu0
  %v1028 = vadd.f32 %v706, %v1027
  %v1029 = vpop.f32.mrb[0].mxu0
  %1030 = vdwg.mxu0
  %v1031 = vadd.f32 %v884, %v957
  %v1032 = vsub.f32 0.0, %v1031
  %v1033 = vmul.f32 %v1032, 1.442695
  %v1034 = vpow.pop %v1033
  %v1035 = vadd.f32 %v1034, 1.0
  %v1036 = vrcp.pop %v1035
  %v1037 = vadd.f32 %v885, %v959
  %v1038 = vsub.f32 0.0, %v1037
  %v1039 = vmul.f32 %v1038, 1.442695
  %v1040 = vpow.pop %v1039
  %v1041 = vadd.f32 %v1040, 1.0
  %v1042 = vrcp.pop %v1041
  %v1043 = vmul.f32 %v1036, %v1028
  %v1044 = vadd.f32 %v886, %v1043
  %v1045 = vtanh.pop %v1044
  %v1046 = vsub.f32 %v881, %v1045
  %v1047 = vmul.f32 %v1042, %v1046
  %v1048 = vadd.f32 %v1045, %v1047
  %vm1049 = vcmp.gt.s32.totalorder %v75, 1
  %v1050 = vsel %vm1049, 1, 0
  %v1051 = vcvt.s32.f32 %v1050
  %v1052 = vsub.f32 %v1048, %v881
  %1054 = vset.pattern.permute.xlu0 0
  %1055 = vperm.xlu0 %1054, %v1051
  %v1056 = vpop.permute.xlu0 %1055
  %v1058 = vmul.f32 %v1056, %v1052
  %v1059 = vadd.f32 %v881, %v1058
  %v1060 = vmul.f32 %v1059, %v1056
  %s1061 = scalar_lea.vmem [#allocation3], 8
  %1062 = vst.msk [vmem:[%s1061] sm:$0xff] %vm93, %v1060
  %v1063 = vld [vmem:[%s537] sm:$0xff]
  %v1064 = vld [vmem:[%s537 + $0x8] sm:$0xff]
  %v1065 = vld [vmem:[%s537 + $0x10] sm:$0xff]
  %v1067 = vsel %vm93, %v1059, 0
  %1069 = vmatprep.subr.mxu0 %v51
  %1070 = vmatpush1.msra.mxu0 %v50
  %1071 = vmatprep.subr.mxu0 %v54
  %1072 = vmatpush1.msra.mxu0 %v53
  %1073 = vmatprep.subr.mxu0 %v57
  %1074 = vmatpush1.msra.mxu0 %v56
  %1075 = vmatprep.subr.mxu0 %v60
  %1076 = vmatpush1.msra.mxu0 %v59
  %1077 = vmatprep.subr.mxu0 %v63
  %1078 = vmatpush1.msra.mxu0 %v62
  %1079 = vmatprep.subr.mxu0 %v66
  %1080 = vmatpush1.msra.mxu0 %v65
  %1081 = vmatprep.subr.mxu0 %v69
  %1082 = vmatpush1.msra.mxu0 %v68
  %1083 = vmatprep.subr.mxu0 %v72
  %1084 = vmatpush1.msra.mxu0 %v71
  %1085 = vmatprep.subr.mxu0 0.0
  %1086 = vmatpush1.msra.mxu0 0.0
  %1087 = vmatprep.subr.mxu0 0.0
  %1088 = vmatpush1.msra.mxu0 0.0
  %1089 = vmatprep.subr.mxu0 0.0
  %1090 = vmatpush1.msra.mxu0 0.0
  %1091 = vmatprep.subr.mxu0 0.0
  %1092 = vmatpush1.msra.mxu0 0.0
  %1093 = vmatprep.subr.mxu0 0.0
  %1094 = vmatpush1.msra.mxu0 0.0
  %1095 = vmatprep.subr.mxu0 0.0
  %1096 = vmatpush1.msra.mxu0 0.0
  %1097 = vmatprep.subr.mxu0 0.0
  %1098 = vmatpush1.msra.mxu0 0.0
  %1099 = vmatprep.subr.mxu0 0.0
  %1100 = vmatpush1.msra.mxu0 0.0
  %1101 = vmatprep.subr.mxu0 0.0
  %1102 = vmatpush1.msra.mxu0 0.0
  %1103 = vmatprep.subr.mxu0 0.0
  %1104 = vmatpush1.msra.mxu0 0.0
  %1105 = vmatprep.subr.mxu0 0.0
  %1106 = vmatpush1.msra.mxu0 0.0
  %1107 = vmatprep.subr.mxu0 0.0
  %1108 = vmatpush1.msra.mxu0 0.0
  %1109 = vmatprep.subr.mxu0 0.0
  %1110 = vmatpush1.msra.mxu0 0.0
  %1111 = vmatprep.subr.mxu0 0.0
  %1112 = vmatpush1.msra.mxu0 0.0
  %1113 = vmatprep.subr.mxu0 0.0
  %1114 = vmatpush1.msra.mxu0 0.0
  %1115 = vmatprep.subr.mxu0 0.0
  %1116 = vmatpush1.msra.mxu0 0.0
  %1117 = vmatprep.subr.mxu0 0.0
  %1118 = vmatpush1.msra.mxu0 0.0
  %1119 = vmatprep.subr.mxu0 0.0
  %1120 = vmatpush1.msra.mxu0 0.0
  %1121 = vmatprep.subr.mxu0 0.0
  %1122 = vmatpush1.msra.mxu0 0.0
  %1123 = vmatprep.subr.mxu0 0.0
  %1124 = vmatpush1.msra.mxu0 0.0
  %1125 = vmatprep.subr.mxu0 0.0
  %1126 = vmatpush1.msra.mxu0 0.0
  %1127 = vmatprep.subr.mxu0 0.0
  %1128 = vmatpush1.msra.mxu0 0.0
  %1129 = vmatprep.subr.mxu0 0.0
  %1130 = vmatpush1.msra.mxu0 0.0
  %1131 = vmatprep.subr.mxu0 0.0
  %1132 = vmatpush1.msra.mxu0 0.0
  %1133 = vmatprep.mubr.f32.mxu0 0.0
  %1134 = vmatmul.mubr.f32.gmra.mrb[0].mxu0 %v1067
  %v1135 = vpop.f32.mrb[0].mxu0
  %v1136 = vadd.f32 %v698, %v1135
  %v1137 = vpop.f32.mrb[0].mxu0
  %v1138 = vadd.f32 %v702, %v1137
  %1139 = vdwg.mxu0
  %1140 = vmatprep.subr.mxu0 0.0
  %1141 = vmatpush1.msra.mxu0 %v52
  %1142 = vmatprep.subr.mxu0 0.0
  %1143 = vmatpush1.msra.mxu0 %v55
  %1144 = vmatprep.subr.mxu0 0.0
  %1145 = vmatpush1.msra.mxu0 %v58
  %1146 = vmatprep.subr.mxu0 0.0
  %1147 = vmatpush1.msra.mxu0 %v61
  %1148 = vmatprep.subr.mxu0 0.0
  %1149 = vmatpush1.msra.mxu0 %v64
  %1150 = vmatprep.subr.mxu0 0.0
  %1151 = vmatpush1.msra.mxu0 %v67
  %1152 = vmatprep.subr.mxu0 0.0
  %1153 = vmatpush1.msra.mxu0 %v70
  %1154 = vmatprep.subr.mxu0 0.0
  %1155 = vmatpush1.msra.mxu0 %v73
  %1156 = vmatprep.subr.mxu0 0.0
  %1157 = vmatpush1.msra.mxu0 0.0
  %1158 = vmatprep.subr.mxu0 0.0
  %1159 = vmatpush1.msra.mxu0 0.0
  %1160 = vmatprep.subr.mxu0 0.0
  %1161 = vmatpush1.msra.mxu0 0.0
  %1162 = vmatprep.subr.mxu0 0.0
  %1163 = vmatpush1.msra.mxu0 0.0
  %1164 = vmatprep.subr.mxu0 0.0
  %1165 = vmatpush1.msra.mxu0 0.0
  %1166 = vmatprep.subr.mxu0 0.0
  %1167 = vmatpush1.msra.mxu0 0.0
  %1168 = vmatprep.subr.mxu0 0.0
  %1169 = vmatpush1.msra.mxu0 0.0
  %1170 = vmatprep.subr.mxu0 0.0
  %1171 = vmatpush1.msra.mxu0 0.0
  %1172 = vmatprep.subr.mxu0 0.0
  %1173 = vmatpush1.msra.mxu0 0.0
  %1174 = vmatprep.subr.mxu0 0.0
  %1175 = vmatpush1.msra.mxu0 0.0
  %1176 = vmatprep.subr.mxu0 0.0
  %1177 = vmatpush1.msra.mxu0 0.0
  %1178 = vmatprep.subr.mxu0 0.0
  %1179 = vmatpush1.msra.mxu0 0.0
  %1180 = vmatprep.subr.mxu0 0.0
  %1181 = vmatpush1.msra.mxu0 0.0
  %1182 = vmatprep.subr.mxu0 0.0
  %1183 = vmatpush1.msra.mxu0 0.0
  %1184 = vmatprep.subr.mxu0 0.0
  %1185 = vmatpush1.msra.mxu0 0.0
  %1186 = vmatprep.subr.mxu0 0.0
  %1187 = vmatpush1.msra.mxu0 0.0
  %1188 = vmatprep.subr.mxu0 0.0
  %1189 = vmatpush1.msra.mxu0 0.0
  %1190 = vmatprep.subr.mxu0 0.0
  %1191 = vmatpush1.msra.mxu0 0.0
  %1192 = vmatprep.subr.mxu0 0.0
  %1193 = vmatpush1.msra.mxu0 0.0
  %1194 = vmatprep.subr.mxu0 0.0
  %1195 = vmatpush1.msra.mxu0 0.0
  %1196 = vmatprep.subr.mxu0 0.0
  %1197 = vmatpush1.msra.mxu0 0.0
  %1198 = vmatprep.subr.mxu0 0.0
  %1199 = vmatpush1.msra.mxu0 0.0
  %1200 = vmatprep.subr.mxu0 0.0
  %1201 = vmatpush1.msra.mxu0 0.0
  %1202 = vmatprep.subr.mxu0 0.0
  %1203 = vmatpush1.msra.mxu0 0.0
  %1204 = vmatprep.mubr.f32.mxu0 0.0
  %1205 = vmatmul.mubr.f32.gmra.mrb[0].mxu0 %v1067
  %v1206 = vpop.f32.mrb[0].mxu0
  %v1207 = vadd.f32 %v706, %v1206
  %v1208 = vpop.f32.mrb[0].mxu0
  %1209 = vdwg.mxu0
  %v1210 = vadd.f32 %v1063, %v1136
  %v1211 = vsub.f32 0.0, %v1210
  %v1212 = vmul.f32 %v1211, 1.442695
  %v1213 = vpow.pop %v1212
  %v1214 = vadd.f32 %v1213, 1.0
  %v1215 = vrcp.pop %v1214
  %v1216 = vadd.f32 %v1064, %v1138
  %v1217 = vsub.f32 0.0, %v1216
  %v1218 = vmul.f32 %v1217, 1.442695
  %v1219 = vpow.pop %v1218
  %v1220 = vadd.f32 %v1219, 1.0
  %v1221 = vrcp.pop %v1220
  %v1222 = vmul.f32 %v1215, %v1207
  %v1223 = vadd.f32 %v1065, %v1222
  %v1224 = vtanh.pop %v1223
  %v1225 = vsub.f32 %v1059, %v1224
  %v1226 = vmul.f32 %v1221, %v1225
  %v1227 = vadd.f32 %v1224, %v1226
  %vm1228 = vcmp.gt.s32.totalorder %v75, 2
  %v1229 = vsel %vm1228, 1, 0
  %v1230 = vcvt.s32.f32 %v1229
  %v1231 = vsub.f32 %v1227, %v1059
  %1233 = vset.pattern.permute.xlu0 0
  %1234 = vperm.xlu0 %1233, %v1230
  %v1235 = vpop.permute.xlu0 %1234
  %v1237 = vmul.f32 %v1235, %v1231
  %v1238 = vadd.f32 %v1059, %v1237
  %v1239 = vmul.f32 %v1238, %v1235
  %s1240 = scalar_lea.vmem [#allocation3], 16
  %1241 = vst.msk [vmem:[%s1240] sm:$0xff] %vm93, %v1239
  %v1242 = vld [vmem:[%s687] sm:$0xff]
  %v1243 = vld [vmem:[%s687 + $0x8] sm:$0xff]
  %v1244 = vld [vmem:[%s687 + $0x10] sm:$0xff]
  %v1246 = vsel %vm93, %v1238, 0
  %1248 = vmatprep.subr.mxu0 %v51
  %1249 = vmatpush1.msra.mxu0 %v50
  %1250 = vmatprep.subr.mxu0 %v54
  %1251 = vmatpush1.msra.mxu0 %v53
  %1252 = vmatprep.subr.mxu0 %v57
  %1253 = vmatpush1.msra.mxu0 %v56
  %1254 = vmatprep.subr.mxu0 %v60
  %1255 = vmatpush1.msra.mxu0 %v59
  %1256 = vmatprep.subr.mxu0 %v63
  %1257 = vmatpush1.msra.mxu0 %v62
  %1258 = vmatprep.subr.mxu0 %v66
  %1259 = vmatpush1.msra.mxu0 %v65
  %1260 = vmatprep.subr.mxu0 %v69
  %1261 = vmatpush1.msra.mxu0 %v68
  %1262 = vmatprep.subr.mxu0 %v72
  %1263 = vmatpush1.msra.mxu0 %v71
  %1264 = vmatprep.subr.mxu0 0.0
  %1265 = vmatpush1.msra.mxu0 0.0
  %1266 = vmatprep.subr.mxu0 0.0
  %1267 = vmatpush1.msra.mxu0 0.0
  %1268 = vmatprep.subr.mxu0 0.0
  %1269 = vmatpush1.msra.mxu0 0.0
  %1270 = vmatprep.subr.mxu0 0.0
  %1271 = vmatpush1.msra.mxu0 0.0
  %1272 = vmatprep.subr.mxu0 0.0
  %1273 = vmatpush1.msra.mxu0 0.0
  %1274 = vmatprep.subr.mxu0 0.0
  %1275 = vmatpush1.msra.mxu0 0.0
  %1276 = vmatprep.subr.mxu0 0.0
  %1277 = vmatpush1.msra.mxu0 0.0
  %1278 = vmatprep.subr.mxu0 0.0
  %1279 = vmatpush1.msra.mxu0 0.0
  %1280 = vmatprep.subr.mxu0 0.0
  %1281 = vmatpush1.msra.mxu0 0.0
  %1282 = vmatprep.subr.mxu0 0.0
  %1283 = vmatpush1.msra.mxu0 0.0
  %1284 = vmatprep.subr.mxu0 0.0
  %1285 = vmatpush1.msra.mxu0 0.0
  %1286 = vmatprep.subr.mxu0 0.0
  %1287 = vmatpush1.msra.mxu0 0.0
  %1288 = vmatprep.subr.mxu0 0.0
  %1289 = vmatpush1.msra.mxu0 0.0
  %1290 = vmatprep.subr.mxu0 0.0
  %1291 = vmatpush1.msra.mxu0 0.0
  %1292 = vmatprep.subr.mxu0 0.0
  %1293 = vmatpush1.msra.mxu0 0.0
  %1294 = vmatprep.subr.mxu0 0.0
  %1295 = vmatpush1.msra.mxu0 0.0
  %1296 = vmatprep.subr.mxu0 0.0
  %1297 = vmatpush1.msra.mxu0 0.0
  %1298 = vmatprep.subr.mxu0 0.0
  %1299 = vmatpush1.msra.mxu0 0.0
  %1300 = vmatprep.subr.mxu0 0.0
  %1301 = vmatpush1.msra.mxu0 0.0
  %1302 = vmatprep.subr.mxu0 0.0
  %1303 = vmatpush1.msra.mxu0 0.0
  %1304 = vmatprep.subr.mxu0 0.0
  %1305 = vmatpush1.msra.mxu0 0.0
  %1306 = vmatprep.subr.mxu0 0.0
  %1307 = vmatpush1.msra.mxu0 0.0
  %1308 = vmatprep.subr.mxu0 0.0
  %1309 = vmatpush1.msra.mxu0 0.0
  %1310 = vmatprep.subr.mxu0 0.0
  %1311 = vmatpush1.msra.mxu0 0.0
  %1312 = vmatprep.mubr.f32.mxu0 0.0
  %1313 = vmatmul.mubr.f32.gmra.mrb[0].mxu0 %v1246
  %v1314 = vpop.f32.mrb[0].mxu0
  %v1315 = vadd.f32 %v698, %v1314
  %v1316 = vpop.f32.mrb[0].mxu0
  %v1317 = vadd.f32 %v702, %v1316
  %1318 = vdwg.mxu0
  %1319 = vmatprep.subr.mxu0 0.0
  %1320 = vmatpush1.msra.mxu0 %v52
  %1321 = vmatprep.subr.mxu0 0.0
  %1322 = vmatpush1.msra.mxu0 %v55
  %1323 = vmatprep.subr.mxu0 0.0
  %1324 = vmatpush1.msra.mxu0 %v58
  %1325 = vmatprep.subr.mxu0 0.0
  %1326 = vmatpush1.msra.mxu0 %v61
  %1327 = vmatprep.subr.mxu0 0.0
  %1328 = vmatpush1.msra.mxu0 %v64
  %1329 = vmatprep.subr.mxu0 0.0
  %1330 = vmatpush1.msra.mxu0 %v67
  %1331 = vmatprep.subr.mxu0 0.0
  %1332 = vmatpush1.msra.mxu0 %v70
  %1333 = vmatprep.subr.mxu0 0.0
  %1334 = vmatpush1.msra.mxu0 %v73
  %1335 = vmatprep.subr.mxu0 0.0
  %1336 = vmatpush1.msra.mxu0 0.0
  %1337 = vmatprep.subr.mxu0 0.0
  %1338 = vmatpush1.msra.mxu0 0.0
  %1339 = vmatprep.subr.mxu0 0.0
  %1340 = vmatpush1.msra.mxu0 0.0
  %1341 = vmatprep.subr.mxu0 0.0
  %1342 = vmatpush1.msra.mxu0 0.0
  %1343 = vmatprep.subr.mxu0 0.0
  %1344 = vmatpush1.msra.mxu0 0.0
  %1345 = vmatprep.subr.mxu0 0.0
  %1346 = vmatpush1.msra.mxu0 0.0
  %1347 = vmatprep.subr.mxu0 0.0
  %1348 = vmatpush1.msra.mxu0 0.0
  %1349 = vmatprep.subr.mxu0 0.0
  %1350 = vmatpush1.msra.mxu0 0.0
  %1351 = vmatprep.subr.mxu0 0.0
  %1352 = vmatpush1.msra.mxu0 0.0
  %1353 = vmatprep.subr.mxu0 0.0
  %1354 = vmatpush1.msra.mxu0 0.0
  %1355 = vmatprep.subr.mxu0 0.0
  %1356 = vmatpush1.msra.mxu0 0.0
  %1357 = vmatprep.subr.mxu0 0.0
  %1358 = vmatpush1.msra.mxu0 0.0
  %1359 = vmatprep.subr.mxu0 0.0
  %1360 = vmatpush1.msra.mxu0 0.0
  %1361 = vmatprep.subr.mxu0 0.0
  %1362 = vmatpush1.msra.mxu0 0.0
  %1363 = vmatprep.subr.mxu0 0.0
  %1364 = vmatpush1.msra.mxu0 0.0
  %1365 = vmatprep.subr.mxu0 0.0
  %1366 = vmatpush1.msra.mxu0 0.0
  %1367 = vmatprep.subr.mxu0 0.0
  %1368 = vmatpush1.msra.mxu0 0.0
  %1369 = vmatprep.subr.mxu0 0.0
  %1370 = vmatpush1.msra.mxu0 0.0
  %1371 = vmatprep.subr.mxu0 0.0
  %1372 = vmatpush1.msra.mxu0 0.0
  %1373 = vmatprep.subr.mxu0 0.0
  %1374 = vmatpush1.msra.mxu0 0.0
  %1375 = vmatprep.subr.mxu0 0.0
  %1376 = vmatpush1.msra.mxu0 0.0
  %1377 = vmatprep.subr.mxu0 0.0
  %1378 = vmatpush1.msra.mxu0 0.0
  %1379 = vmatprep.subr.mxu0 0.0
  %1380 = vmatpush1.msra.mxu0 0.0
  %1381 = vmatprep.subr.mxu0 0.0
  %1382 = vmatpush1.msra.mxu0 0.0
  %1383 = vmatprep.mubr.f32.mxu0 0.0
  %1384 = vmatmul.mubr.f32.gmra.mrb[0].mxu0 %v1246
  %v1385 = vpop.f32.mrb[0].mxu0
  %v1386 = vadd.f32 %v706, %v1385
  %v1387 = vpop.f32.mrb[0].mxu0
  %1388 = vdwg.mxu0
  %v1389 = vadd.f32 %v1242, %v1315
  %v1390 = vsub.f32 0.0, %v1389
  %v1391 = vmul.f32 %v1390, 1.442695
  %v1392 = vpow.pop %v1391
  %v1393 = vadd.f32 %v1392, 1.0
  %v1394 = vrcp.pop %v1393
  %v1395 = vadd.f32 %v1243, %v1317
  %v1396 = vsub.f32 0.0, %v1395
  %v1397 = vmul.f32 %v1396, 1.442695
  %v1398 = vpow.pop %v1397
  %v1399 = vadd.f32 %v1398, 1.0
  %v1400 = vrcp.pop %v1399
  %v1401 = vmul.f32 %v1394, %v1386
  %v1402 = vadd.f32 %v1244, %v1401
  %v1403 = vtanh.pop %v1402
  %v1404 = vsub.f32 %v1238, %v1403
  %v1405 = vmul.f32 %v1400, %v1404
  %v1406 = vadd.f32 %v1403, %v1405
  %vm1407 = vcmp.gt.s32.totalorder %v75, 3
  %v1408 = vsel %vm1407, 1, 0
  %v1409 = vcvt.s32.f32 %v1408
  %v1410 = vsub.f32 %v1406, %v1238
  %1412 = vset.pattern.permute.xlu0 0
  %1413 = vperm.xlu0 %1412, %v1409
  %v1414 = vpop.permute.xlu0 %1413
  %v1416 = vmul.f32 %v1414, %v1410
  %v1417 = vadd.f32 %v1238, %v1416
  %v1418 = vmul.f32 %v1417, %v1414
  %s1419 = scalar_lea.vmem [#allocation3], 24
  %1420 = vst.msk [vmem:[%s1419] sm:$0xff] %vm93, %v1418
  %1421 = vst.msk [vmem:[%s7] sm:$0xff] %vm93, %v1417
  %v1422 = vld [vmem:[#allocation3] sm:$0xff]
  %v1423 = vld [vmem:[#allocation3 + $0x8] sm:$0xff]
  %v1424 = vld [vmem:[#allocation3 + $0x10] sm:$0xff]
  %v1425 = vld [vmem:[#allocation3 + $0x18] sm:$0xff]
  %1426 = vst.msk [vmem:[%s6] sm:$0xff] %vm93, %v1422
  %1427 = vst.msk [vmem:[%s6 + $0x8] sm:$0xff] %vm93, %v1423
  %1428 = vst.msk [vmem:[%s6 + $0x10] sm:$0xff] %vm93, %v1424
  %1429 = vst.msk [vmem:[%s6 + $0x18] sm:$0xff] %vm93, %v1425
  // Predicated region
  $region26: #{hierarchical_encoder_forward.3} parent=0 // pred_check
    _
  $region27: #{hierarchical_encoder_forward.3} parent=0 // pred_check_branch
    %1431 = sbr.rel (0) target = $region29
  $region28: #{hierarchical_encoder_forward.3} parent=0 // pred_region
    _
  $region29: #{hierarchical_encoder_forward.3} parent=0 // pred_fallthru
    _
  // Predicated region
  $region30: #{hierarchical_encoder_forward.3} parent=0 // pred_check
    _
  $region31: #{hierarchical_encoder_forward.3} parent=0 // pred_check_branch
    %1433 = sbr.rel (0) target = $region33
  $region32: #{hierarchical_encoder_forward.3} parent=0 // pred_region
    _
  $region33: #{hierarchical_encoder_forward.3} parent=0 // pred_fallthru
    _
  // Predicated region
  $region34: #{hierarchical_encoder_forward.3} parent=0 // pred_check
    _
  $region35: #{hierarchical_encoder_forward.3} parent=0 // pred_check_branch
    %1435 = sbr.rel (0) target = $region37
  $region36: #{hierarchical_encoder_forward.3} parent=0 // pred_region
    _
  $region37: #{hierarchical_encoder_forward.3} parent=0 // pred_fallthru
    _
  // Predicated region
  $region38: #{hierarchical_encoder_forward.3} parent=0 // pred_check
    _
  $region39: #{hierarchical_encoder_forward.3} parent=0 // pred_check_branch
    %1437 = sbr.rel (0) target = $region41
  $region40: #{hierarchical_encoder_forward.3} parent=0 // pred_region
    _
  $region41: #{hierarchical_encoder_forward.3} parent=0 // pred_fallthru
    _

// kernel: hierarchical_encoder_forward.2
$region0: #{hierarchical_encoder_forward.2}
  #allocation0 [shape = 'u32[]', space=smem, size = 0x4, offset = 0x4, fixed_abs, tag = 'smem constant byte address 0x4 - core index']
  #allocation1 [shape = 'u32[144,128]{1,0:T(1,128)}', space=vmem, size = 0x12000, scoped, tag = 'internal scratch']
  #allocation2 [shape = 'f32[8,8,384]{2,1,0:T(8,128)}', space=vmem, size = 0x18000, scoped, tag = 'scratch operand']
  #allocation3 [shape = 'f32[8,8,384]{2,1,0:T(8,128)}', space=vmem, size = 0x18000, scoped, tag = 'scratch operand']
  #allocation4 [shape = 'f32[8,8,32]{2,1,0:T(8,128)}', space=vmem, size = 0x8000, scoped, tag = 'scratch operand']
  #allocation5 [shape = 'f32[8,8,32]{2,1,0:T(8,128)}', space=vmem, size = 0x8000, scoped, tag = 'scratch operand']
  %s0 = inlined_call_operand.vmem [shape: f32[8,8,16], index: 0, kind: input, shape index: {}]
  %s1 = inlined_call_operand.vmem [shape: s32[8,1], index: 1, kind: input, shape index: {}]
  %s2 = inlined_call_operand.hbm [shape: f32[16,768], index: 2, kind: input, shape index: {}]
  %s3 = inlined_call_operand.hbm [shape: f32[1,768], index: 3, kind: input, shape index: {}]
  %s4 = inlined_call_operand.vmem [shape: f32[32,384], index: 4, kind: input, shape index: {}]
  %s5 = inlined_call_operand.hbm [shape: f32[1,384], index: 5, kind: input, shape index: {}]
  %s6 = inlined_call_operand.vmem [shape: f32[32,384], index: 6, kind: input, shape index: {}]
  %s7 = inlined_call_operand.vmem [shape: f32[1,384], index: 7, kind: input, shape index: {}]
  %s8 = inlined_call_operand.vmem [shape: f32[8,8,64], index: 8, kind: output, shape index: {0}]
  %s9 = inlined_call_operand.vmem [shape: f32[8,64], index: 9, kind: output, shape index: {1}]
  %10 = xla_tuple %s8, %s9
  %s11 = sld [smem:[#allocation0]]
  $region62: #{hierarchical_encoder_forward.2} parent=0
    _
  %s13 = ssub.s32 1, %s11
  %s14 = scalar_select 0, %s13, %s11
  $region1: #{hierarchical_encoder_forward.2} parent=0
    #allocation6 [shape = 'u8[49152]{0}', space=vmem, size = 0xc000, scoped, tag = 'input window, operand 2, single buffered']
    #allocation7 [shape = 's32[1]{0}', space=sflag, size = 0x4, scoped, tag = 'scoped memory for hierarchical_encoder_forward.2']
    #allocation8 [shape = 'u8[3072]{0}', space=vmem, size = 0xc00, scoped, tag = 'input window, operand 3, single buffered']
    #allocation9 [shape = 's32[1]{0}', space=sflag, size = 0x4, scoped, tag = 'scoped memory for hierarchical_encoder_forward.2']
    #allocation10 [shape = 'u8[1536]{0}', space=vmem, size = 0x800, scoped, tag = 'input window, operand 5, single buffered']
    %15 = vsyncpa [#allocation7], 0
    %16 = vsyncpa [#allocation9], 0
    // Predicated region
    $region2: #{hierarchical_encoder_forward.2} parent=1 // pred_check
      _
    $region3: #{hierarchical_encoder_forward.2} parent=1 // pred_check_branch
      %18 = sbr.rel (0) target = $region5
    $region4: #{hierarchical_encoder_forward.2} parent=1 // pred_region
      _
    $region5: #{hierarchical_encoder_forward.2} parent=1 // pred_fallthru
      _
    // Predicated region
    $region6: #{hierarchical_encoder_forward.2} parent=1 // pred_check
      _
    $region7: #{hierarchical_encoder_forward.2} parent=1 // pred_check_branch
      %20 = sbr.rel (0) target = $region9
    $region8: #{hierarchical_encoder_forward.2} parent=1 // pred_region
      _
    $region9: #{hierarchical_encoder_forward.2} parent=1 // pred_fallthru
      _
    // Predicated region
    $region10: #{hierarchical_encoder_forward.2} parent=1 // pred_check
      _
    $region11: #{hierarchical_encoder_forward.2} parent=1 // pred_check_branch
      %22 = sbr.rel (0) target = $region13
    $region12: #{hierarchical_encoder_forward.2} parent=1 // pred_region
      %s24 = ssub.s32 1536, 1536
      %25 = vsyncadd [#allocation7], %s24
      %s26 = sshll.u32 [#allocation6], 4
      %s27 = int_to_ptr.vmem [resolvable:$true] %s26
      %32 = dma.hbm_to_vmem [thread:$0]  %s2, 1536, %s27, [#allocation7], 768, 768, 48
    $region13: #{hierarchical_encoder_forward.2} parent=1 // pred_fallthru
      _
    // Predicated region
    $region14: #{hierarchical_encoder_forward.2} parent=1 // pred_check
      _
    $region15: #{hierarchical_encoder_forward.2} parent=1 // pred_check_branch
      %34 = sbr.rel (0) target = $region17
    $region16: #{hierarchical_encoder_forward.2} parent=1 // pred_region
      %s36 = ssub.s32 96, 96
      %37 = vsyncadd [#allocation9], %s36
      %s39 = sshll.u32 [#allocation8], 4
      %s40 = int_to_ptr.vmem [resolvable:$true] %s39
      %42 = dma.hbm_to_vmem [thread:$0]  %s3, 96, %s40, [#allocation9]
    $region17: #{hierarchical_encoder_forward.2} parent=1 // pred_fallthru
      _
    // Predicated region
    $region18: #{hierarchical_encoder_forward.2} parent=1 // pred_check
      _
    $region19: #{hierarchical_encoder_forward.2} parent=1 // pred_check_branch
      %44 = sbr.rel (0) target = $region21
    $region20: #{hierarchical_encoder_forward.2} parent=1 // pred_region
      _
    $region21: #{hierarchical_encoder_forward.2} parent=1 // pred_fallthru
      _
    // Predicated region
    $region22: #{hierarchical_encoder_forward.2} parent=1 // pred_check
      _
    $region23: #{hierarchical_encoder_forward.2} parent=1 // pred_check_branch
      %46 = sbr.rel (0) target = $region25
    $region24: #{hierarchical_encoder_forward.2} parent=1 // pred_region
      %s48 = ssub.s32 48, 48
      %49 = vsyncadd [#allocation9], %s48
      %s51 = sshll.u32 [#allocation10], 4
      %s52 = int_to_ptr.vmem [resolvable:$true] %s51
      %54 = dma.hbm_to_vmem [thread:$0]  %s5, 48, %s52, [#allocation9]
    $region25: #{hierarchical_encoder_forward.2} parent=1 // pred_fallthru
      _
    // Predicated region
    $region26: #{hierarchical_encoder_forward.2} parent=1 // pred_check
      _
    $region27: #{hierarchical_encoder_forward.2} parent=1 // pred_check_branch
      %56 = sbr.rel (0) target = $region29
    $region28: #{hierarchical_encoder_forward.2} parent=1 // pred_region
      _
    $region29: #{hierarchical_encoder_forward.2} parent=1 // pred_fallthru
      _
    // Predicated region
    $region30: #{hierarchical_encoder_forward.2} parent=1 // pred_check
      _
    $region31: #{hierarchical_encoder_forward.2} parent=1 // pred_check_branch
      %58 = sbr.rel (0) target = $region33
    $region32: #{hierarchical_encoder_forward.2} parent=1 // pred_region
      _
    $region33: #{hierarchical_encoder_forward.2} parent=1 // pred_fallthru
      _
    // Predicated region
    $region34: #{hierarchical_encoder_forward.2} parent=1 // pred_check
      _
    $region35: #{hierarchical_encoder_forward.2} parent=1 // pred_check_branch
      %60 = sbr.rel (0) target = $region37
    $region36: #{hierarchical_encoder_forward.2} parent=1 // pred_region
      %61 = dma.done [#allocation7], 1536
    $region37: #{hierarchical_encoder_forward.2} parent=1 // pred_fallthru
      _
    // Predicated region
    $region38: #{hierarchical_encoder_forward.2} parent=1 // pred_check
      _
    $region39: #{hierarchical_encoder_forward.2} parent=1 // pred_check_branch
      %63 = sbr.rel (0) target = $region41
    $region40: #{hierarchical_encoder_forward.2} parent=1 // pred_region
      %64 = dma.done [#allocation9], 96
    $region41: #{hierarchical_encoder_forward.2} parent=1 // pred_fallthru
      _
    // Predicated region
    $region42: #{hierarchical_encoder_forward.2} parent=1 // pred_check
      _
    $region43: #{hierarchical_encoder_forward.2} parent=1 // pred_check_branch
      %66 = sbr.rel (0) target = $region45
    $region44: #{hierarchical_encoder_forward.2} parent=1 // pred_region
      %67 = dma.done [#allocation9], 48
    $region45: #{hierarchical_encoder_forward.2} parent=1 // pred_fallthru
      _
    %v68 = vld [vmem:[#allocation6] sm:$0xff]
    %v69 = vld [vmem:[#allocation6 + $0x8] sm:$0xff]
    %v70 = vld [vmem:[#allocation6 + $0x10] sm:$0xff]
    %v71 = vld [vmem:[#allocation6 + $0x18] sm:$0xff]
    %v72 = vld [vmem:[#allocation6 + $0x20] sm:$0xff]
    %v73 = vld [vmem:[#allocation6 + $0x28] sm:$0xff]
    %v74 = vld [vmem:[#allocation6 + $0x30] sm:$0xff]
    %v75 = vld [vmem:[#allocation6 + $0x38] sm:$0xff]
    %v76 = vld [vmem:[#allocation6 + $0x40] sm:$0xff]
    %v77 = vld [vmem:[#allocation6 + $0x48] sm:$0xff]
    %v78 = vld [vmem:[#allocation6 + $0x50] sm:$0xff]
    %v79 = vld [vmem:[#allocation6 + $0x58] sm:$0xff]
    %v80 = vld [vmem:[#allocation8] sm:$0x3f]
    %v81 = vld [vmem:[%s4] sm:$0xff]
    %v82 = vld [vmem:[%s4 + $0x8] sm:$0xff]
    %v83 = vld [vmem:[%s4 + $0x10] sm:$0xff]
    %v84 = vld [vmem:[%s4 + $0x18] sm:$0xff]
    %v85 = vld [vmem:[%s4 + $0x20] sm:$0xff]
    %v86 = vld [vmem:[%s4 + $0x28] sm:$0xff]
    %v87 = vld [vmem:[%s4 + $0x30] sm:$0xff]
    %v88 = vld [vmem:[%s4 + $0x38] sm:$0xff]
    %v89 = vld [vmem:[%s4 + $0x40] sm:$0xff]
    %v90 = vld [vmem:[%s4 + $0x48] sm:$0xff]
    %v91 = vld [vmem:[%s4 + $0x50] sm:$0xff]
    %v92 = vld [vmem:[%s4 + $0x58] sm:$0xff]
    %v93 = vld [vmem:[#allocation10] sm:$0x7]
    %v94 = vld [vmem:[%s6] sm:$0xff]
    %v95 = vld [vmem:[%s6 + $0x8] sm:$0xff]
    %v96 = vld [vmem:[%s6 + $0x10] sm:$0xff]
    %v97 = vld [vmem:[%s6 + $0x18] sm:$0xff]
    %v98 = vld [vmem:[%s6 + $0x20] sm:$0xff]
    %v99 = vld [vmem:[%s6 + $0x28] sm:$0xff]
    %v100 = vld [vmem:[%s6 + $0x30] sm:$0xff]
    %v101 = vld [vmem:[%s6 + $0x38] sm:$0xff]
    %v102 = vld [vmem:[%s6 + $0x40] sm:$0xff]
    %v103 = vld [vmem:[%s6 + $0x48] sm:$0xff]
    %v104 = vld [vmem:[%s6 + $0x50] sm:$0xff]
    %v105 = vld [vmem:[%s6 + $0x58] sm:$0xff]
    %v106 = vld [vmem:[%s7] sm:$0x7]
    %v107 = vld [vmem:[%s1] sm:$0xff]
    %v108 = vld [vmem:[%s0] sm:$0xff]
    %v110 = vlaneseq
    %v111 = vshrl.u32 %v110, 7
    %v112 = vsub.s32 0, %v111
    %v113 = vrot.slane %v80, %v112
    %v114 = vlaneseq
    %v115 = vshrl.u32 %v114, 7
    %v116 = vsub.s32 1, %v115
    %v117 = vrot.slane %v80, %v116
    %v118 = vlaneseq
    %v119 = vshrl.u32 %v118, 7
    %v120 = vsub.s32 2, %v119
    %v121 = vrot.slane %v80, %v120
    %v122 = vlaneseq
    %v123 = vshrl.u32 %v122, 7
    %v124 = vsub.s32 3, %v123
    %v125 = vrot.slane %v80, %v124
    %v126 = vlaneseq
    %v127 = vshrl.u32 %v126, 7
    %v128 = vsub.s32 4, %v127
    %v129 = vrot.slane %v80, %v128
    %v130 = vlaneseq
    %v131 = vshrl.u32 %v130, 7
    %v132 = vsub.s32 5, %v131
    %v133 = vrot.slane %v80, %v132
    %vm140 = vcmask 130048
    %v142 = vsel %vm140, %v108, 0
    %144 = vmatprep.subr.mxu0 %v69
    %145 = vmatpush1.msra.mxu0 %v68
    %146 = vmatprep.subr.mxu0 %v75
    %147 = vmatpush1.msra.mxu0 %v74
    %148 = vmatprep.subr.mxu0 0.0
    %149 = vmatpush1.msra.mxu0 0.0
    %150 = vmatprep.subr.mxu0 0.0
    %151 = vmatpush1.msra.mxu0 0.0
    %152 = vmatprep.subr.mxu0 0.0
    %153 = vmatpush1.msra.mxu0 0.0
    %154 = vmatprep.subr.mxu0 0.0
    %155 = vmatpush1.msra.mxu0 0.0
    %156 = vmatprep.subr.mxu0 0.0
    %157 = vmatpush1.msra.mxu0 0.0
    %158 = vmatprep.subr.mxu0 0.0
    %159 = vmatpush1.msra.mxu0 0.0
    %160 = vmatprep.subr.mxu0 0.0
    %161 = vmatpush1.msra.mxu0 0.0
    %162 = vmatprep.subr.mxu0 0.0
    %163 = vmatpush1.msra.mxu0 0.0
    %164 = vmatprep.subr.mxu0 0.0
    %165 = vmatpush1.msra.mxu0 0.0
    %166 = vmatprep.subr.mxu0 0.0
    %167 = vmatpush1.msra.mxu0 0.0
    %168 = vmatprep.subr.mxu0 0.0
    %169 = vmatpush1.msra.mxu0 0.0
    %170 = vmatprep.subr.mxu0 0.0
    %171 = vmatpush1.msra.mxu0 0.0
    %172 = vmatprep.subr.mxu0 0.0
    %173 = vmatpush1.msra.mxu0 0.0
    %174 = vmatprep.subr.mxu0 0.0
    %175 = vmatpush1.msra.mxu0 0.0
    %176 = vmatprep.subr.mxu0 0.0
    %177 = vmatpush1.msra.mxu0 0.0
    %178 = vmatprep.subr.mxu0 0.0
    %179 = vmatpush1.msra.mxu0 0.0
    %180 = vmatprep.subr.mxu0 0.0
    %181 = vmatpush1.msra.mxu0 0.0
    %182 = vmatprep.subr.mxu0 0.0
    %183 = vmatpush1.msra.mxu0 0.0
    %184 = vmatprep.subr.mxu0 0.0
    %185 = vmatpush1.msra.mxu0 0.0
    %186 = vmatprep.subr.mxu0 0.0
    %187 = vmatpush1.msra.mxu0 0.0
    %188 = vmatprep.subr.mxu0 0.0
    %189 = vmatpush1.msra.mxu0 0.0
    %190 = vmatprep.subr.mxu0 0.0
    %191 = vmatpush1.msra.mxu0 0.0
    %192 = vmatprep.subr.mxu0 0.0
    %193 = vmatpush1.msra.mxu0 0.0
    %194 = vmatprep.subr.mxu0 0.0
    %195 = vmatpush1.msra.mxu0 0.0
    %196 = vmatprep.subr.mxu0 0.0
    %197 = vmatpush1.msra.mxu0 0.0
    %198 = vmatprep.subr.mxu0 0.0
    %199 = vmatpush1.msra.mxu0 0.0
    %200 = vmatprep.subr.mxu0 0.0
    %201 = vmatpush1.msra.mxu0 0.0
    %202 = vmatprep.subr.mxu0 0.0
    %203 = vmatpush1.msra.mxu0 0.0
    %204 = vmatprep.subr.mxu0 0.0
    %205 = vmatpush1.msra.mxu0 0.0
    %206 = vmatprep.subr.mxu0 0.0
    %207 = vmatpush1.msra.mxu0 0.0
    %208 = vmatprep.mubr.f32.mxu0 0.0
    %209 = vmatmul.mubr.f32.gmra.mrb[0].mxu0 %v142
    %v210 = vpop.f32.mrb[0].mxu0
    %v211 = vadd.f32 %v113, %v210
    %v212 = vpop.f32.mrb[0].mxu0
    %v213 = vadd.f32 %v117, %v212
    %214 = vdwg.mxu0
    %215 = vmatprep.subr.mxu0 %v71
    %216 = vmatpush1.msra.mxu0 %v70
    %217 = vmatprep.subr.mxu0 %v77
    %218 = vmatpush1.msra.mxu0 %v76
    %219 = vmatprep.subr.mxu0 0.0
    %220 = vmatpush1.msra.mxu0 0.0
    %221 = vmatprep.subr.mxu0 0.0
    %222 = vmatpush1.msra.mxu0 0.0
    %223 = vmatprep.subr.mxu0 0.0
    %224 = vmatpush1.msra.mxu0 0.0
    %225 = vmatprep.subr.mxu0 0.0
    %226 = vmatpush1.msra.mxu0 0.0
    %227 = vmatprep.subr.mxu0 0.0
    %228 = vmatpush1.msra.mxu0 0.0
    %229 = vmatprep.subr.mxu0 0.0
    %230 = vmatpush1.msra.mxu0 0.0
    %231 = vmatprep.subr.mxu0 0.0
    %232 = vmatpush1.msra.mxu0 0.0
    %233 = vmatprep.subr.mxu0 0.0
    %234 = vmatpush1.msra.mxu0 0.0
    %235 = vmatprep.subr.mxu0 0.0
    %236 = vmatpush1.msra.mxu0 0.0
    %237 = vmatprep.subr.mxu0 0.0
    %238 = vmatpush1.msra.mxu0 0.0
    %239 = vmatprep.subr.mxu0 0.0
    %240 = vmatpush1.msra.mxu0 0.0
    %241 = vmatprep.subr.mxu0 0.0
    %242 = vmatpush1.msra.mxu0 0.0
    %243 = vmatprep.subr.mxu0 0.0
    %244 = vmatpush1.msra.mxu0 0.0
    %245 = vmatprep.subr.mxu0 0.0
    %246 = vmatpush1.msra.mxu0 0.0
    %247 = vmatprep.subr.mxu0 0.0
    %248 = vmatpush1.msra.mxu0 0.0
    %249 = vmatprep.subr.mxu0 0.0
    %250 = vmatpush1.msra.mxu0 0.0
    %251 = vmatprep.subr.mxu0 0.0
    %252 = vmatpush1.msra.mxu0 0.0
    %253 = vmatprep.subr.mxu0 0.0
    %254 = vmatpush1.msra.mxu0 0.0
    %255 = vmatprep.subr.mxu0 0.0
    %256 = vmatpush1.msra.mxu0 0.0
    %257 = vmatprep.subr.mxu0 0.0
    %258 = vmatpush1.msra.mxu0 0.0
    %259 = vmatprep.subr.mxu0 0.0
    %260 = vmatpush1.msra.mxu0 0.0
    %261 = vmatprep.subr.mxu0 0.0
    %262 = vmatpush1.msra.mxu0 0.0
    %263 = vmatprep.subr.mxu0 0.0
    %264 = vmatpush1.msra.mxu0 0.0
    %265 = vmatprep.subr.mxu0 0.0
    %266 = vmatpush1.msra.mxu0 0.0
    %267 = vmatprep.subr.mxu0 0.0
    %268 = vmatpush1.msra.mxu0 0.0
    %269 = vmatprep.subr.mxu0 0.0
    %270 = vmatpush1.msra.mxu0 0.0
    %271 = vmatprep.subr.mxu0 0.0
    %272 = vmatpush1.msra.mxu0 0.0
    %273 = vmatprep.subr.mxu0 0.0
    %274 = vmatpush1.msra.mxu0 0.0
    %275 = vmatprep.subr.mxu0 0.0
    %276 = vmatpush1.msra.mxu0 0.0
    %277 = vmatprep.subr.mxu0 0.0
    %278 = vmatpush1.msra.mxu0 0.0
    %279 = vmatprep.mubr.f32.mxu0 0.0
    %280 = vmatmul.mubr.f32.gmra.mrb[0].mxu0 %v142
    %v281 = vpop.f32.mrb[0].mxu0
    %v282 = vadd.f32 %v121, %v281
    %v283 = vpop.f32.mrb[0].mxu0
    %v284 = vadd.f32 %v125, %v283
    %285 = vdwg.mxu0
    %286 = vmatprep.subr.mxu0 %v73
    %287 = vmatpush1.msra.mxu0 %v72
    %288 = vmatprep.subr.mxu0 %v79
    %289 = vmatpush1.msra.mxu0 %v78
    %290 = vmatprep.subr.mxu0 0.0
    %291 = vmatpush1.msra.mxu0 0.0
    %292 = vmatprep.subr.mxu0 0.0
    %293 = vmatpush1.msra.mxu0 0.0
    %294 = vmatprep.subr.mxu0 0.0
    %295 = vmatpush1.msra.mxu0 0.0
    %296 = vmatprep.subr.mxu0 0.0
    %297 = vmatpush1.msra.mxu0 0.0
    %298 = vmatprep.subr.mxu0 0.0
    %299 = vmatpush1.msra.mxu0 0.0
    %300 = vmatprep.subr.mxu0 0.0
    %301 = vmatpush1.msra.mxu0 0.0
    %302 = vmatprep.subr.mxu0 0.0
    %303 = vmatpush1.msra.mxu0 0.0
    %304 = vmatprep.subr.mxu0 0.0
    %305 = vmatpush1.msra.mxu0 0.0
    %306 = vmatprep.subr.mxu0 0.0
    %307 = vmatpush1.msra.mxu0 0.0
    %308 = vmatprep.subr.mxu0 0.0
    %309 = vmatpush1.msra.mxu0 0.0
    %310 = vmatprep.subr.mxu0 0.0
    %311 = vmatpush1.msra.mxu0 0.0
    %312 = vmatprep.subr.mxu0 0.0
    %313 = vmatpush1.msra.mxu0 0.0
    %314 = vmatprep.subr.mxu0 0.0
    %315 = vmatpush1.msra.mxu0 0.0
    %316 = vmatprep.subr.mxu0 0.0
    %317 = vmatpush1.msra.mxu0 0.0
    %318 = vmatprep.subr.mxu0 0.0
    %319 = vmatpush1.msra.mxu0 0.0
    %320 = vmatprep.subr.mxu0 0.0
    %321 = vmatpush1.msra.mxu0 0.0
    %322 = vmatprep.subr.mxu0 0.0
    %323 = vmatpush1.msra.mxu0 0.0
    %324 = vmatprep.subr.mxu0 0.0
    %325 = vmatpush1.msra.mxu0 0.0
    %326 = vmatprep.subr.mxu0 0.0
    %327 = vmatpush1.msra.mxu0 0.0
    %328 = vmatprep.subr.mxu0 0.0
    %329 = vmatpush1.msra.mxu0 0.0
    %330 = vmatprep.subr.mxu0 0.0
    %331 = vmatpush1.msra.mxu0 0.0
    %332 = vmatprep.subr.mxu0 0.0
    %333 = vmatpush1.msra.mxu0 0.0
    %334 = vmatprep.subr.mxu0 0.0
    %335 = vmatpush1.msra.mxu0 0.0
    %336 = vmatprep.subr.mxu0 0.0
    %337 = vmatpush1.msra.mxu0 0.0
    %338 = vmatprep.subr.mxu0 0.0
    %339 = vmatpush1.msra.mxu0 0.0
    %340 = vmatprep.subr.mxu0 0.0
    %341 = vmatpush1.msra.mxu0 0.0
    %342 = vmatprep.subr.mxu0 0.0
    %343 = vmatpush1.msra.mxu0 0.0
    %344 = vmatprep.subr.mxu0 0.0
    %345 = vmatpush1.msra.mxu0 0.0
    %346 = vmatprep.subr.mxu0 0.0
    %347 = vmatpush1.msra.mxu0 0.0
    %348 = vmatprep.subr.mxu0 0.0
    %349 = vmatpush1.msra.mxu0 0.0
    %350 = vmatprep.mubr.f32.mxu0 0.0
    %351 = vmatmul.mubr.f32.gmra.mrb[0].mxu0 %v142
    %v352 = vpop.f32.mrb[0].mxu0
    %v353 = vadd.f32 %v129, %v352
    %v354 = vpop.f32.mrb[0].mxu0
    %v355 = vadd.f32 %v133, %v354
    %356 = vdwg.mxu0
    %357 = vst [vmem:[#allocation2] sm:$0xff] %v211
    %358 = vst [vmem:[#allocation2 + $0x8] sm:$0xff] %v213
    %359 = vst [vmem:[#allocation2 + $0x10] sm:$0xff] %v282
    %360 = vst [vmem:[#allocation3] sm:$0xff] %v284
    %361 = vst [vmem:[#allocation3 + $0x8] sm:$0xff] %v353
    %362 = vst [vmem:[#allocation3 + $0x10] sm:$0xff] %v355
    %s363 = scalar_lea.vmem %s0, 8
    %v364 = vld [vmem:[%s363] sm:$0xff]
    %v366 = vsel %vm140, %v364, 0
    %368 = vmatprep.subr.mxu0 %v69
    %369 = vmatpush1.msra.mxu0 %v68
    %370 = vmatprep.subr.mxu0 %v75
    %371 = vmatpush1.msra.mxu0 %v74
    %372 = vmatprep.subr.mxu0 0.0
    %373 = vmatpush1.msra.mxu0 0.0
    %374 = vmatprep.subr.mxu0 0.0
    %375 = vmatpush1.msra.mxu0 0.0
    %376 = vmatprep.subr.mxu0 0.0
    %377 = vmatpush1.msra.mxu0 0.0
    %378 = vmatprep.subr.mxu0 0.0
    %379 = vmatpush1.msra.mxu0 0.0
    %380 = vmatprep.subr.mxu0 0.0
    %381 = vmatpush1.msra.mxu0 0.0
    %382 = vmatprep.subr.mxu0 0.0
    %383 = vmatpush1.msra.mxu0 0.0
    %384 = vmatprep.subr.mxu0 0.0
    %385 = vmatpush1.msra.mxu0 0.0
    %386 = vmatprep.subr.mxu0 0.0
    %387 = vmatpush1.msra.mxu0 0.0
    %388 = vmatprep.subr.mxu0 0.0
    %389 = vmatpush1.msra.mxu0 0.0
    %390 = vmatprep.subr.mxu0 0.0
    %391 = vmatpush1.msra.mxu0 0.0
    %392 = vmatprep.subr.mxu0 0.0
    %393 = vmatpush1.msra.mxu0 0.0
    %394 = vmatprep.subr.mxu0 0.0
    %395 = vmatpush1.msra.mxu0 0.0
    %396 = vmatprep.subr.mxu0 0.0
    %397 = vmatpush1.msra.mxu0 0.0
    %398 = vmatprep.subr.mxu0 0.0
    %399 = vmatpush1.msra.mxu0 0.0
    %400 = vmatprep.subr.mxu0 0.0
    %401 = vmatpush1.msra.mxu0 0.0
    %402 = vmatprep.subr.mxu0 0.0
    %403 = vmatpush1.msra.mxu0 0.0
    %404 = vmatprep.subr.mxu0 0.0
    %405 = vmatpush1.msra.mxu0 0.0
    %406 = vmatprep.subr.mxu0 0.0
    %407 = vmatpush1.msra.mxu0 0.0
    %408 = vmatprep.subr.mxu0 0.0
    %409 = vmatpush1.msra.mxu0 0.0
    %410 = vmatprep.subr.mxu0 0.0
    %411 = vmatpush1.msra.mxu0 0.0
    %412 = vmatprep.subr.mxu0 0.0
    %413 = vmatpush1.msra.mxu0 0.0
    %414 = vmatprep.subr.mxu0 0.0
    %415 = vmatpush1.msra.mxu0 0.0
    %416 = vmatprep.subr.mxu0 0.0
    %417 = vmatpush1.msra.mxu0 0.0
    %418 = vmatprep.subr.mxu0 0.0
    %419 = vmatpush1.msra.mxu0 0.0
    %420 = vmatprep.subr.mxu0 0.0
    %421 = vmatpush1.msra.mxu0 0.0
    %422 = vmatprep.subr.mxu0 0.0
    %423 = vmatpush1.msra.mxu0 0.0
    %424 = vmatprep.subr.mxu0 0.0
    %425 = vmatpush1.msra.mxu0 0.0
    %426 = vmatprep.subr.mxu0 0.0
    %427 = vmatpush1.msra.mxu0 0.0
    %428 = vmatprep.subr.mxu0 0.0
    %429 = vmatpush1.msra.mxu0 0.0
    %430 = vmatprep.subr.mxu0 0.0
    %431 = vmatpush1.msra.mxu0 0.0
    %432 = vmatprep.mubr.f32.mxu0 0.0
    %433 = vmatmul.mubr.f32.gmra.mrb[0].mxu0 %v366
    %v434 = vpop.f32.mrb[0].mxu0
    %v435 = vadd.f32 %v113, %v434
    %v436 = vpop.f32.mrb[0].mxu0
    %v437 = vadd.f32 %v117, %v436
    %438 = vdwg.mxu0
    %439 = vmatprep.subr.mxu0 %v71
    %440 = vmatpush1.msra.mxu0 %v70
    %441 = vmatprep.subr.mxu0 %v77
    %442 = vmatpush1.msra.mxu0 %v76
    %443 = vmatprep.subr.mxu0 0.0
    %444 = vmatpush1.msra.mxu0 0.0
    %445 = vmatprep.subr.mxu0 0.0
    %446 = vmatpush1.msra.mxu0 0.0
    %447 = vmatprep.subr.mxu0 0.0
    %448 = vmatpush1.msra.mxu0 0.0
    %449 = vmatprep.subr.mxu0 0.0
    %450 = vmatpush1.msra.mxu0 0.0
    %451 = vmatprep.subr.mxu0 0.0
    %452 = vmatpush1.msra.mxu0 0.0
    %453 = vmatprep.subr.mxu0 0.0
    %454 = vmatpush1.msra.mxu0 0.0
    %455 = vmatprep.subr.mxu0 0.0
    %456 = vmatpush1.msra.mxu0 0.0
    %457 = vmatprep.subr.mxu0 0.0
    %458 = vmatpush1.msra.mxu0 0.0
    %459 = vmatprep.subr.mxu0 0.0
    %460 = vmatpush1.msra.mxu0 0.0
    %461 = vmatprep.subr.mxu0 0.0
    %462 = vmatpush1.msra.mxu0 0.0
    %463 = vmatprep.subr.mxu0 0.0
    %464 = vmatpush1.msra.mxu0 0.0
    %465 = vmatprep.subr.mxu0 0.0
    %466 = vmatpush1.msra.mxu0 0.0
    %467 = vmatprep.subr.mxu0 0.0
    %468 = vmatpush1.msra.mxu0 0.0
    %469 = vmatprep.subr.mxu0 0.0
    %470 = vmatpush1.msra.mxu0 0.0
    %471 = vmatprep.subr.mxu0 0.0
    %472 = vmatpush1.msra.mxu0 0.0
    %473 = vmatprep.subr.mxu0 0.0
    %474 = vmatpush1.msra.mxu0 0.0
    %475 = vmatprep.subr.mxu0 0.0
    %476 = vmatpush1.msra.mxu0 0.0
    %477 = vmatprep.subr.mxu0 0.0
    %478 = vmatpush1.msra.mxu0 0.0
    %479 = vmatprep.subr.mxu0 0.0
    %480 = vmatpush1.msra.mxu0 0.0
    %481 = vmatprep.subr.mxu0 0.0
    %482 = vmatpush1.msra.mxu0 0.0
    %483 = vmatprep.subr.mxu0 0.0
    %484 = vmatpush1.msra.mxu0 0.0
    %485 = vmatprep.subr.mxu0 0.0
    %486 = vmatpush1.msra.mxu0 0.0
    %487 = vmatprep.subr.mxu0 0.0
    %488 = vmatpush1.msra.mxu0 0.0
    %489 = vmatprep.subr.mxu0 0.0
    %490 = vmatpush1.msra.mxu0 0.0
    %491 = vmatprep.subr.mxu0 0.0
    %492 = vmatpush1.msra.mxu0 0.0
    %493 = vmatprep.subr.mxu0 0.0
    %494 = vmatpush1.msra.mxu0 0.0
    %495 = vmatprep.subr.mxu0 0.0
    %496 = vmatpush1.msra.mxu0 0.0
    %497 = vmatprep.subr.mxu0 0.0
    %498 = vmatpush1.msra.mxu0 0.0
    %499 = vmatprep.subr.mxu0 0.0
    %500 = vmatpush1.msra.mxu0 0.0
    %501 = vmatprep.subr.mxu0 0.0
    %502 = vmatpush1.msra.mxu0 0.0
    %503 = vmatprep.mubr.f32.mxu0 0.0
    %504 = vmatmul.mubr.f32.gmra.mrb[0].mxu0 %v366
    %v505 = vpop.f32.mrb[0].mxu0
    %v506 = vadd.f32 %v121, %v505
    %v507 = vpop.f32.mrb[0].mxu0
    %v508 = vadd.f32 %v125, %v507
    %509 = vdwg.mxu0
    %510 = vmatprep.subr.mxu0 %v73
    %511 = vmatpush1.msra.mxu0 %v72
    %512 = vmatprep.subr.mxu0 %v79
    %513 = vmatpush1.msra.mxu0 %v78
    %514 = vmatprep.subr.mxu0 0.0
    %515 = vmatpush1.msra.mxu0 0.0
    %516 = vmatprep.subr.mxu0 0.0
    %517 = vmatpush1.msra.mxu0 0.0
    %518 = vmatprep.subr.mxu0 0.0
    %519 = vmatpush1.msra.mxu0 0.0
    %520 = vmatprep.subr.mxu0 0.0
    %521 = vmatpush1.msra.mxu0 0.0
    %522 = vmatprep.subr.mxu0 0.0
    %523 = vmatpush1.msra.mxu0 0.0
    %524 = vmatprep.subr.mxu0 0.0
    %525 = vmatpush1.msra.mxu0 0.0
    %526 = vmatprep.subr.mxu0 0.0
    %527 = vmatpush1.msra.mxu0 0.0
    %528 = vmatprep.subr.mxu0 0.0
    %529 = vmatpush1.msra.mxu0 0.0
    %530 = vmatprep.subr.mxu0 0.0
    %531 = vmatpush1.msra.mxu0 0.0
    %532 = vmatprep.subr.mxu0 0.0
    %533 = vmatpush1.msra.mxu0 0.0
    %534 = vmatprep.subr.mxu0 0.0
    %535 = vmatpush1.msra.mxu0 0.0
    %536 = vmatprep.subr.mxu0 0.0
    %537 = vmatpush1.msra.mxu0 0.0
    %538 = vmatprep.subr.mxu0 0.0
    %539 = vmatpush1.msra.mxu0 0.0
    %540 = vmatprep.subr.mxu0 0.0
    %541 = vmatpush1.msra.mxu0 0.0
    %542 = vmatprep.subr.mxu0 0.0
    %543 = vmatpush1.msra.mxu0 0.0
    %544 = vmatprep.subr.mxu0 0.0
    %545 = vmatpush1.msra.mxu0 0.0
    %546 = vmatprep.subr.mxu0 0.0
    %547 = vmatpush1.msra.mxu0 0.0
    %548 = vmatprep.subr.mxu0 0.0
    %549 = vmatpush1.msra.mxu0 0.0
    %550 = vmatprep.subr.mxu0 0.0
    %551 = vmatpush1.msra.mxu0 0.0
    %552 = vmatprep.subr.mxu0 0.0
    %553 = vmatpush1.msra.mxu0 0.0
    %554 = vmatprep.subr.mxu0 0.0
    %555 = vmatpush1.msra.mxu0 0.0
    %556 = vmatprep.subr.mxu0 0.0
    %557 = vmatpush1.msra.mxu0 0.0
    %558 = vmatprep.subr.mxu0 0.0
    %559 = vmatpush1.msra.mxu0 0.0
    %560 = vmatprep.subr.mxu0 0.0
    %561 = vmatpush1.msra.mxu0 0.0
    %562 = vmatprep.subr.mxu0 0.0
    %563 = vmatpush1.msra.mxu0 0.0
    %564 = vmatprep.subr.mxu0 0.0
    %565 = vmatpush1.msra.mxu0 0.0
    %566 = vmatprep.subr.mxu0 0.0
    %567 = vmatpush1.msra.mxu0 0.0
    %568 = vmatprep.subr.mxu0 0.0
    %569 = vmatpush1.msra.mxu0 0.0
    %570 = vmatprep.subr.mxu0 0.0
    %571 = vmatpush1.msra.mxu0 0.0
    %572 = vmatprep.subr.mxu0 0.0
    %573 = vmatpush1.msra.mxu0 0.0
    %574 = vmatprep.mubr.f32.mxu0 0.0
    %575 = vmatmul.mubr.f32.gmra.mrb[0].mxu0 %v366
    %v576 = vpop.f32.mrb[0].mxu0
    %v577 = vadd.f32 %v129, %v576
    %v578 = vpop.f32.mrb[0].mxu0
    %v579 = vadd.f32 %v133, %v578
    %580 = vdwg.mxu0
    %s581 = scalar_lea.vmem [#allocation2], 24
    %582 = vst [vmem:[%s581] sm:$0xff] %v435
    %583 = vst [vmem:[%s581 + $0x8] sm:$0xff] %v437
    %584 = vst [vmem:[%s581 + $0x10] sm:$0xff] %v506
    %s585 = scalar_lea.vmem [#allocation3], 24
    %586 = vst [vmem:[%s585] sm:$0xff] %v508
    %587 = vst [vmem:[%s585 + $0x8] sm:$0xff] %v577
    %588 = vst [vmem:[%s585 + $0x10] sm:$0xff] %v579
    %s589 = scalar_lea.vmem %s0, 16
    %v590 = vld [vmem:[%s589] sm:$0xff]
    %v592 = vsel %vm140, %v590, 0
    %594 = vmatprep.subr.mxu0 %v69
    %595 = vmatpush1.msra.mxu0 %v68
    %596 = vmatprep.subr.mxu0 %v75
    %597 = vmatpush1.msra.mxu0 %v74
    %598 = vmatprep.subr.mxu0 0.0
    %599 = vmatpush1.msra.mxu0 0.0
    %600 = vmatprep.subr.mxu0 0.0
    %601 = vmatpush1.msra.mxu0 0.0
    %602 = vmatprep.subr.mxu0 0.0
    %603 = vmatpush1.msra.mxu0 0.0
    %604 = vmatprep.subr.mxu0 0.0
    %605 = vmatpush1.msra.mxu0 0.0
    %606 = vmatprep.subr.mxu0 0.0
    %607 = vmatpush1.msra.mxu0 0.0
    %608 = vmatprep.subr.mxu0 0.0
    %609 = vmatpush1.msra.mxu0 0.0
    %610 = vmatprep.subr.mxu0 0.0
    %611 = vmatpush1.msra.mxu0 0.0
    %612 = vmatprep.subr.mxu0 0.0
    %613 = vmatpush1.msra.mxu0 0.0
    %614 = vmatprep.subr.mxu0 0.0
    %615 = vmatpush1.msra.mxu0 0.0
    %616 = vmatprep.subr.mxu0 0.0
    %617 = vmatpush1.msra.mxu0 0.0
    %618 = vmatprep.subr.mxu0 0.0
    %619 = vmatpush1.msra.mxu0 0.0
    %620 = vmatprep.subr.mxu0 0.0
    %621 = vmatpush1.msra.mxu0 0.0
    %622 = vmatprep.subr.mxu0 0.0
    %623 = vmatpush1.msra.mxu0 0.0
    %624 = vmatprep.subr.mxu0 0.0
    %625 = vmatpush1.msra.mxu0 0.0
    %626 = vmatprep.subr.mxu0 0.0
    %627 = vmatpush1.msra.mxu0 0.0
    %628 = vmatprep.subr.mxu0 0.0
    %629 = vmatpush1.msra.mxu0 0.0
    %630 = vmatprep.subr.mxu0 0.0
    %631 = vmatpush1.msra.mxu0 0.0
    %632 = vmatprep.subr.mxu0 0.0
    %633 = vmatpush1.msra.mxu0 0.0
    %634 = vmatprep.subr.mxu0 0.0
    %635 = vmatpush1.msra.mxu0 0.0
    %636 = vmatprep.subr.mxu0 0.0
    %637 = vmatpush1.msra.mxu0 0.0
    %638 = vmatprep.subr.mxu0 0.0
    %639 = vmatpush1.msra.mxu0 0.0
    %640 = vmatprep.subr.mxu0 0.0
    %641 = vmatpush1.msra.mxu0 0.0
    %642 = vmatprep.subr.mxu0 0.0
    %643 = vmatpush1.msra.mxu0 0.0
    %644 = vmatprep.subr.mxu0 0.0
    %645 = vmatpush1.msra.mxu0 0.0
    %646 = vmatprep.subr.mxu0 0.0
    %647 = vmatpush1.msra.mxu0 0.0
    %648 = vmatprep.subr.mxu0 0.0
    %649 = vmatpush1.msra.mxu0 0.0
    %650 = vmatprep.subr.mxu0 0.0
    %651 = vmatpush1.msra.mxu0 0.0
    %652 = vmatprep.subr.mxu0 0.0
    %653 = vmatpush1.msra.mxu0 0.0
    %654 = vmatprep.subr.mxu0 0.0
    %655 = vmatpush1.msra.mxu0 0.0
    %656 = vmatprep.subr.mxu0 0.0
    %657 = vmatpush1.msra.mxu0 0.0
    %658 = vmatprep.mubr.f32.mxu0 0.0
    %659 = vmatmul.mubr.f32.gmra.mrb[0].mxu0 %v592
    %v660 = vpop.f32.mrb[0].mxu0
    %v661 = vadd.f32 %v113, %v660
    %v662 = vpop.f32.mrb[0].mxu0
    %v663 = vadd.f32 %v117, %v662
    %664 = vdwg.mxu0
    %665 = vmatprep.subr.mxu0 %v71
    %666 = vmatpush1.msra.mxu0 %v70
    %667 = vmatprep.subr.mxu0 %v77
    %668 = vmatpush1.msra.mxu0 %v76
    %669 = vmatprep.subr.mxu0 0.0
    %670 = vmatpush1.msra.mxu0 0.0
    %671 = vmatprep.subr.mxu0 0.0
    %672 = vmatpush1.msra.mxu0 0.0
    %673 = vmatprep.subr.mxu0 0.0
    %674 = vmatpush1.msra.mxu0 0.0
    %675 = vmatprep.subr.mxu0 0.0
    %676 = vmatpush1.msra.mxu0 0.0
    %677 = vmatprep.subr.mxu0 0.0
    %678 = vmatpush1.msra.mxu0 0.0
    %679 = vmatprep.subr.mxu0 0.0
    %680 = vmatpush1.msra.mxu0 0.0
    %681 = vmatprep.subr.mxu0 0.0
    %682 = vmatpush1.msra.mxu0 0.0
    %683 = vmatprep.subr.mxu0 0.0
    %684 = vmatpush1.msra.mxu0 0.0
    %685 = vmatprep.subr.mxu0 0.0
    %686 = vmatpush1.msra.mxu0 0.0
    %687 = vmatprep.subr.mxu0 0.0
    %688 = vmatpush1.msra.mxu0 0.0
    %689 = vmatprep.subr.mxu0 0.0
    %690 = vmatpush1.msra.mxu0 0.0
    %691 = vmatprep.subr.mxu0 0.0
    %692 = vmatpush1.msra.mxu0 0.0
    %693 = vmatprep.subr.mxu0 0.0
    %694 = vmatpush1.msra.mxu0 0.0
    %695 = vmatprep.subr.mxu0 0.0
    %696 = vmatpush1.msra.mxu0 0.0
    %697 = vmatprep.subr.mxu0 0.0
    %698 = vmatpush1.msra.mxu0 0.0
    %699 = vmatprep.subr.mxu0 0.0
    %700 = vmatpush1.msra.mxu0 0.0
    %701 = vmatprep.subr.mxu0 0.0
    %702 = vmatpush1.msra.mxu0 0.0
    %703 = vmatprep.subr.mxu0 0.0
    %704 = vmatpush1.msra.mxu0 0.0
    %705 = vmatprep.subr.mxu0 0.0
    %706 = vmatpush1.msra.mxu0 0.0
    %707 = vmatprep.subr.mxu0 0.0
    %708 = vmatpush1.msra.mxu0 0.0
    %709 = vmatprep.subr.mxu0 0.0
    %710 = vmatpush1.msra.mxu0 0.0
    %711 = vmatprep.subr.mxu0 0.0
    %712 = vmatpush1.msra.mxu0 0.0
    %713 = vmatprep.subr.mxu0 0.0
    %714 = vmatpush1.msra.mxu0 0.0
    %715 = vmatprep.subr.mxu0 0.0
    %716 = vmatpush1.msra.mxu0 0.0
    %717 = vmatprep.subr.mxu0 0.0
    %718 = vmatpush1.msra.mxu0 0.0
    %719 = vmatprep.subr.mxu0 0.0
    %720 = vmatpush1.msra.mxu0 0.0
    %721 = vmatprep.subr.mxu0 0.0
    %722 = vmatpush1.msra.mxu0 0.0
    %723 = vmatprep.subr.mxu0 0.0
    %724 = vmatpush1.msra.mxu0 0.0
    %725 = vmatprep.subr.mxu0 0.0
    %726 = vmatpush1.msra.mxu0 0.0
    %727 = vmatprep.subr.mxu0 0.0
    %728 = vmatpush1.msra.mxu0 0.0
    %729 = vmatprep.mubr.f32.mxu0 0.0
    %730 = vmatmul.mubr.f32.gmra.mrb[0].mxu0 %v592
    %v731 = vpop.f32.mrb[0].mxu0
    %v732 = vadd.f32 %v121, %v731
    %v733 = vpop.f32.mrb[0].mxu0
    %v734 = vadd.f32 %v125, %v733
    %735 = vdwg.mxu0
    %736 = vmatprep.subr.mxu0 %v73
    %737 = vmatpush1.msra.mxu0 %v72
    %738 = vmatprep.subr.mxu0 %v79
    %739 = vmatpush1.msra.mxu0 %v78
    %740 = vmatprep.subr.mxu0 0.0
    %741 = vmatpush1.msra.mxu0 0.0
    %742 = vmatprep.subr.mxu0 0.0
    %743 = vmatpush1.msra.mxu0 0.0
    %744 = vmatprep.subr.mxu0 0.0
    %745 = vmatpush1.msra.mxu0 0.0
    %746 = vmatprep.subr.mxu0 0.0
    %747 = vmatpush1.msra.mxu0 0.0
    %748 = vmatprep.subr.mxu0 0.0
    %749 = vmatpush1.msra.mxu0 0.0
    %750 = vmatprep.subr.mxu0 0.0
    %751 = vmatpush1.msra.mxu0 0.0
    %752 = vmatprep.subr.mxu0 0.0
    %753 = vmatpush1.msra.mxu0 0.0
    %754 = vmatprep.subr.mxu0 0.0
    %755 = vmatpush1.msra.mxu0 0.0
    %756 = vmatprep.subr.mxu0 0.0
    %757 = vmatpush1.msra.mxu0 0.0
    %758 = vmatprep.subr.mxu0 0.0
    %759 = vmatpush1.msra.mxu0 0.0
    %760 = vmatprep.subr.mxu0 0.0
    %761 = vmatpush1.msra.mxu0 0.0
    %762 = vmatprep.subr.mxu0 0.0
    %763 = vmatpush1.msra.mxu0 0.0
    %764 = vmatprep.subr.mxu0 0.0
    %765 = vmatpush1.msra.mxu0 0.0
    %766 = vmatprep.subr.mxu0 0.0
    %767 = vmatpush1.msra.mxu0 0.0
    %768 = vmatprep.subr.mxu0 0.0
    %769 = vmatpush1.msra.mxu0 0.0
    %770 = vmatprep.subr.mxu0 0.0
    %771 = vmatpush1.msra.mxu0 0.0
    %772 = vmatprep.subr.mxu0 0.0
    %773 = vmatpush1.msra.mxu0 0.0
    %774 = vmatprep.subr.mxu0 0.0
    %775 = vmatpush1.msra.mxu0 0.0
    %776 = vmatprep.subr.mxu0 0.0
    %777 = vmatpush1.msra.mxu0 0.0
    %778 = vmatprep.subr.mxu0 0.0
    %779 = vmatpush1.msra.mxu0 0.0
    %780 = vmatprep.subr.mxu0 0.0
    %781 = vmatpush1.msra.mxu0 0.0
    %782 = vmatprep.subr.mxu0 0.0
    %783 = vmatpush1.msra.mxu0 0.0
    %784 = vmatprep.subr.mxu0 0.0
    %785 = vmatpush1.msra.mxu0 0.0
    %786 = vmatprep.subr.mxu0 0.0
    %787 = vmatpush1.msra.mxu0 0.0
    %788 = vmatprep.subr.mxu0 0.0
    %789 = vmatpush1.msra.mxu0 0.0
    %790 = vmatprep.subr.mxu0 0.0
    %791 = vmatpush1.msra.mxu0 0.0
    %792 = vmatprep.subr.mxu0 0.0
    %793 = vmatpush1.msra.mxu0 0.0
    %794 = vmatprep.subr.mxu0 0.0
    %795 = vmatpush1.msra.mxu0 0.0
    %796 = vmatprep.subr.mxu0 0.0
    %797 = vmatpush1.msra.mxu0 0.0
    %798 = vmatprep.subr.mxu0 0.0
    %799 = vmatpush1.msra.mxu0 0.0
    %800 = vmatprep.mubr.f32.mxu0 0.0
    %801 = vmatmul.mubr.f32.gmra.mrb[0].mxu0 %v592
    %v802 = vpop.f32.mrb[0].mxu0
    %v803 = vadd.f32 %v129, %v802
    %v804 = vpop.f32.mrb[0].mxu0
    %v805 = vadd.f32 %v133, %v804
    %806 = vdwg.mxu0
    %s807 = scalar_lea.vmem [#allocation2], 48
    %808 = vst [vmem:[%s807] sm:$0xff] %v661
    %809 = vst [vmem:[%s807 + $0x8] sm:$0xff] %v663
    %810 = vst [vmem:[%s807 + $0x10] sm:$0xff] %v732
    %s811 = scalar_lea.vmem [#allocation3], 48
    %812 = vst [vmem:[%s811] sm:$0xff] %v734
    %813 = vst [vmem:[%s811 + $0x8] sm:$0xff] %v803
    %814 = vst [vmem:[%s811 + $0x10] sm:$0xff] %v805
    %s815 = scalar_lea.vmem %s0, 24
    %v816 = vld [vmem:[%s815] sm:$0xff]
    %v818 = vsel %vm140, %v816, 0
    %820 = vmatprep.subr.mxu0 %v69
    %821 = vmatpush1.msra.mxu0 %v68
    %822 = vmatprep.subr.mxu0 %v75
    %823 = vmatpush1.msra.mxu0 %v74
    %824 = vmatprep.subr.mxu0 0.0
    %825 = vmatpush1.msra.mxu0 0.0
    %826 = vmatprep.subr.mxu0 0.0
    %827 = vmatpush1.msra.mxu0 0.0
    %828 = vmatprep.subr.mxu0 0.0
    %829 = vmatpush1.msra.mxu0 0.0
    %830 = vmatprep.subr.mxu0 0.0
    %831 = vmatpush1.msra.mxu0 0.0
    %832 = vmatprep.subr.mxu0 0.0
    %833 = vmatpush1.msra.mxu0 0.0
    %834 = vmatprep.subr.mxu0 0.0
    %835 = vmatpush1.msra.mxu0 0.0
    %836 = vmatprep.subr.mxu0 0.0
    %837 = vmatpush1.msra.mxu0 0.0
    %838 = vmatprep.subr.mxu0 0.0
    %839 = vmatpush1.msra.mxu0 0.0
    %840 = vmatprep.subr.mxu0 0.0
    %841 = vmatpush1.msra.mxu0 0.0
    %842 = vmatprep.subr.mxu0 0.0
    %843 = vmatpush1.msra.mxu0 0.0
    %844 = vmatprep.subr.mxu0 0.0
    %845 = vmatpush1.msra.mxu0 0.0
    %846 = vmatprep.subr.mxu0 0.0
    %847 = vmatpush1.msra.mxu0 0.0
    %848 = vmatprep.subr.mxu0 0.0
    %849 = vmatpush1.msra.mxu0 0.0
    %850 = vmatprep.subr.mxu0 0.0
    %851 = vmatpush1.msra.mxu0 0.0
    %852 = vmatprep.subr.mxu0 0.0
    %853 = vmatpush1.msra.mxu0 0.0
    %854 = vmatprep.subr.mxu0 0.0
    %855 = vmatpush1.msra.mxu0 0.0
    %856 = vmatprep.subr.mxu0 0.0
    %857 = vmatpush1.msra.mxu0 0.0
    %858 = vmatprep.subr.mxu0 0.0
    %859 = vmatpush1.msra.mxu0 0.0
    %860 = vmatprep.subr.mxu0 0.0
    %861 = vmatpush1.msra.mxu0 0.0
    %862 = vmatprep.subr.mxu0 0.0
    %863 = vmatpush1.msra.mxu0 0.0
    %864 = vmatprep.subr.mxu0 0.0
    %865 = vmatpush1.msra.mxu0 0.0
    %866 = vmatprep.subr.mxu0 0.0
    %867 = vmatpush1.msra.mxu0 0.0
    %868 = vmatprep.subr.mxu0 0.0
    %869 = vmatpush1.msra.mxu0 0.0
    %870 = vmatprep.subr.mxu0 0.0
    %871 = vmatpush1.msra.mxu0 0.0
    %872 = vmatprep.subr.mxu0 0.0
    %873 = vmatpush1.msra.mxu0 0.0
    %874 = vmatprep.subr.mxu0 0.0
    %875 = vmatpush1.msra.mxu0 0.0
    %876 = vmatprep.subr.mxu0 0.0
    %877 = vmatpush1.msra.mxu0 0.0
    %878 = vmatprep.subr.mxu0 0.0
    %879 = vmatpush1.msra.mxu0 0.0
    %880 = vmatprep.subr.mxu0 0.0
    %881 = vmatpush1.msra.mxu0 0.0
    %882 = vmatprep.subr.mxu0 0.0
    %883 = vmatpush1.msra.mxu0 0.0
    %884 = vmatprep.mubr.f32.mxu0 0.0
    %885 = vmatmul.mubr.f32.gmra.mrb[0].mxu0 %v818
    %v886 = vpop.f32.mrb[0].mxu0
    %v887 = vadd.f32 %v113, %v886
    %v888 = vpop.f32.mrb[0].mxu0
    %v889 = vadd.f32 %v117, %v888
    %890 = vdwg.mxu0
    %891 = vmatprep.subr.mxu0 %v71
    %892 = vmatpush1.msra.mxu0 %v70
    %893 = vmatprep.subr.mxu0 %v77
    %894 = vmatpush1.msra.mxu0 %v76
    %895 = vmatprep.subr.mxu0 0.0
    %896 = vmatpush1.msra.mxu0 0.0
    %897 = vmatprep.subr.mxu0 0.0
    %898 = vmatpush1.msra.mxu0 0.0
    %899 = vmatprep.subr.mxu0 0.0
    %900 = vmatpush1.msra.mxu0 0.0
    %901 = vmatprep.subr.mxu0 0.0
    %902 = vmatpush1.msra.mxu0 0.0
    %903 = vmatprep.subr.mxu0 0.0
    %904 = vmatpush1.msra.mxu0 0.0
    %905 = vmatprep.subr.mxu0 0.0
    %906 = vmatpush1.msra.mxu0 0.0
    %907 = vmatprep.subr.mxu0 0.0
    %908 = vmatpush1.msra.mxu0 0.0
    %909 = vmatprep.subr.mxu0 0.0
    %910 = vmatpush1.msra.mxu0 0.0
    %911 = vmatprep.subr.mxu0 0.0
    %912 = vmatpush1.msra.mxu0 0.0
    %913 = vmatprep.subr.mxu0 0.0
    %914 = vmatpush1.msra.mxu0 0.0
    %915 = vmatprep.subr.mxu0 0.0
    %916 = vmatpush1.msra.mxu0 0.0
    %917 = vmatprep.subr.mxu0 0.0
    %918 = vmatpush1.msra.mxu0 0.0
    %919 = vmatprep.subr.mxu0 0.0
    %920 = vmatpush1.msra.mxu0 0.0
    %921 = vmatprep.subr.mxu0 0.0
    %922 = vmatpush1.msra.mxu0 0.0
    %923 = vmatprep.subr.mxu0 0.0
    %924 = vmatpush1.msra.mxu0 0.0
    %925 = vmatprep.subr.mxu0 0.0
    %926 = vmatpush1.msra.mxu0 0.0
    %927 = vmatprep.subr.mxu0 0.0
    %928 = vmatpush1.msra.mxu0 0.0
    %929 = vmatprep.subr.mxu0 0.0
    %930 = vmatpush1.msra.mxu0 0.0
    %931 = vmatprep.subr.mxu0 0.0
    %932 = vmatpush1.msra.mxu0 0.0
    %933 = vmatprep.subr.mxu0 0.0
    %934 = vmatpush1.msra.mxu0 0.0
    %935 = vmatprep.subr.mxu0 0.0
    %936 = vmatpush1.msra.mxu0 0.0
    %937 = vmatprep.subr.mxu0 0.0
    %938 = vmatpush1.msra.mxu0 0.0
    %939 = vmatprep.subr.mxu0 0.0
    %940 = vmatpush1.msra.mxu0 0.0
    %941 = vmatprep.subr.mxu0 0.0
    %942 = vmatpush1.msra.mxu0 0.0
    %943 = vmatprep.subr.mxu0 0.0
    %944 = vmatpush1.msra.mxu0 0.0
    %945 = vmatprep.subr.mxu0 0.0
    %946 = vmatpush1.msra.mxu0 0.0
    %947 = vmatprep.subr.mxu0 0.0
    %948 = vmatpush1.msra.mxu0 0.0
    %949 = vmatprep.subr.mxu0 0.0
    %950 = vmatpush1.msra.mxu0 0.0
    %951 = vmatprep.subr.mxu0 0.0
    %952 = vmatpush1.msra.mxu0 0.0
    %953 = vmatprep.subr.mxu0 0.0
    %954 = vmatpush1.msra.mxu0 0.0
    %955 = vmatprep.mubr.f32.mxu0 0.0
    %956 = vmatmul.mubr.f32.gmra.mrb[0].mxu0 %v818
    %v957 = vpop.f32.mrb[0].mxu0
    %v958 = vadd.f32 %v121, %v957
    %v959 = vpop.f32.mrb[0].mxu0
    %v960 = vadd.f32 %v125, %v959
    %961 = vdwg.mxu0
    %962 = vmatprep.subr.mxu0 %v73
    %963 = vmatpush1.msra.mxu0 %v72
    %964 = vmatprep.subr.mxu0 %v79
    %965 = vmatpush1.msra.mxu0 %v78
    %966 = vmatprep.subr.mxu0 0.0
    %967 = vmatpush1.msra.mxu0 0.0
    %968 = vmatprep.subr.mxu0 0.0
    %969 = vmatpush1.msra.mxu0 0.0
    %970 = vmatprep.subr.mxu0 0.0
    %971 = vmatpush1.msra.mxu0 0.0
    %972 = vmatprep.subr.mxu0 0.0
    %973 = vmatpush1.msra.mxu0 0.0
    %974 = vmatprep.subr.mxu0 0.0
    %975 = vmatpush1.msra.mxu0 0.0
    %976 = vmatprep.subr.mxu0 0.0
    %977 = vmatpush1.msra.mxu0 0.0
    %978 = vmatprep.subr.mxu0 0.0
    %979 = vmatpush1.msra.mxu0 0.0
    %980 = vmatprep.subr.mxu0 0.0
    %981 = vmatpush1.msra.mxu0 0.0
    %982 = vmatprep.subr.mxu0 0.0
    %983 = vmatpush1.msra.mxu0 0.0
    %984 = vmatprep.subr.mxu0 0.0
    %985 = vmatpush1.msra.mxu0 0.0
    %986 = vmatprep.subr.mxu0 0.0
    %987 = vmatpush1.msra.mxu0 0.0
    %988 = vmatprep.subr.mxu0 0.0
    %989 = vmatpush1.msra.mxu0 0.0
    %990 = vmatprep.subr.mxu0 0.0
    %991 = vmatpush1.msra.mxu0 0.0
    %992 = vmatprep.subr.mxu0 0.0
    %993 = vmatpush1.msra.mxu0 0.0
    %994 = vmatprep.subr.mxu0 0.0
    %995 = vmatpush1.msra.mxu0 0.0
    %996 = vmatprep.subr.mxu0 0.0
    %997 = vmatpush1.msra.mxu0 0.0
    %998 = vmatprep.subr.mxu0 0.0
    %999 = vmatpush1.msra.mxu0 0.0
    %1000 = vmatprep.subr.mxu0 0.0
    %1001 = vmatpush1.msra.mxu0 0.0
    %1002 = vmatprep.subr.mxu0 0.0
    %1003 = vmatpush1.msra.mxu0 0.0
    %1004 = vmatprep.subr.mxu0 0.0
    %1005 = vmatpush1.msra.mxu0 0.0
    %1006 = vmatprep.subr.mxu0 0.0
    %1007 = vmatpush1.msra.mxu0 0.0
    %1008 = vmatprep.subr.mxu0 0.0
    %1009 = vmatpush1.msra.mxu0 0.0
    %1010 = vmatprep.subr.mxu0 0.0
    %1011 = vmatpush1.msra.mxu0 0.0
    %1012 = vmatprep.subr.mxu0 0.0
    %1013 = vmatpush1.msra.mxu0 0.0
    %1014 = vmatprep.subr.mxu0 0.0
    %1015 = vmatpush1.msra.mxu0 0.0
    %1016 = vmatprep.subr.mxu0 0.0
    %1017 = vmatpush1.msra.mxu0 0.0
    %1018 = vmatprep.subr.mxu0 0.0
    %1019 = vmatpush1.msra.mxu0 0.0
    %1020 = vmatprep.subr.mxu0 0.0
    %1021 = vmatpush1.msra.mxu0 0.0
    %1022 = vmatprep.subr.mxu0 0.0
    %1023 = vmatpush1.msra.mxu0 0.0
    %1024 = vmatprep.subr.mxu0 0.0
    %1025 = vmatpush1.msra.mxu0 0.0
    %1026 = vmatprep.mubr.f32.mxu0 0.0
    %1027 = vmatmul.mubr.f32.gmra.mrb[0].mxu0 %v818
    %v1028 = vpop.f32.mrb[0].mxu0
    %v1029 = vadd.f32 %v129, %v1028
    %v1030 = vpop.f32.mrb[0].mxu0
    %v1031 = vadd.f32 %v133, %v1030
    %1032 = vdwg.mxu0
    %s1033 = scalar_lea.vmem [#allocation2], 72
    %1034 = vst [vmem:[%s1033] sm:$0xff] %v887
    %1035 = vst [vmem:[%s1033 + $0x8] sm:$0xff] %v889
    %1036 = vst [vmem:[%s1033 + $0x10] sm:$0xff] %v958
    %s1037 = scalar_lea.vmem [#allocation3], 72
    %1038 = vst [vmem:[%s1037] sm:$0xff] %v960
    %1039 = vst [vmem:[%s1037 + $0x8] sm:$0xff] %v1029
    %1040 = vst [vmem:[%s1037 + $0x10] sm:$0xff] %v1031
    %s1041 = scalar_lea.vmem %s0, 32
    %v1042 = vld [vmem:[%s1041] sm:$0xff]
    %v1044 = vsel %vm140, %v1042, 0
    %1046 = vmatprep.subr.mxu0 %v69
    %1047 = vmatpush1.msra.mxu0 %v68
    %1048 = vmatprep.subr.mxu0 %v75
    %1049 = vmatpush1.msra.mxu0 %v74
    %1050 = vmatprep.subr.mxu0 0.0
    %1051 = vmatpush1.msra.mxu0 0.0
    %1052 = vmatprep.subr.mxu0 0.0
    %1053 = vmatpush1.msra.mxu0 0.0
    %1054 = vmatprep.subr.mxu0 0.0
    %1055 = vmatpush1.msra.mxu0 0.0
    %1056 = vmatprep.subr.mxu0 0.0
    %1057 = vmatpush1.msra.mxu0 0.0
    %1058 = vmatprep.subr.mxu0 0.0
    %1059 = vmatpush1.msra.mxu0 0.0
    %1060 = vmatprep.subr.mxu0 0.0
    %1061 = vmatpush1.msra.mxu0 0.0
    %1062 = vmatprep.subr.mxu0 0.0
    %1063 = vmatpush1.msra.mxu0 0.0
    %1064 = vmatprep.subr.mxu0 0.0
    %1065 = vmatpush1.msra.mxu0 0.0
    %1066 = vmatprep.subr.mxu0 0.0
    %1067 = vmatpush1.msra.mxu0 0.0
    %1068 = vmatprep.subr.mxu0 0.0
    %1069 = vmatpush1.msra.mxu0 0.0
    %1070 = vmatprep.subr.mxu0 0.0
    %1071 = vmatpush1.msra.mxu0 0.0
    %1072 = vmatprep.subr.mxu0 0.0
    %1073 = vmatpush1.msra.mxu0 0.0
    %1074 = vmatprep.subr.mxu0 0.0
    %1075 = vmatpush1.msra.mxu0 0.0
    %1076 = vmatprep.subr.mxu0 0.0
    %1077 = vmatpush1.msra.mxu0 0.0
    %1078 = vmatprep.subr.mxu0 0.0
    %1079 = vmatpush1.msra.mxu0 0.0
    %1080 = vmatprep.subr.mxu0 0.0
    %1081 = vmatpush1.msra.mxu0 0.0
    %1082 = vmatprep.subr.mxu0 0.0
    %1083 = vmatpush1.msra.mxu0 0.0
    %1084 = vmatprep.subr.mxu0 0.0
    %1085 = vmatpush1.msra.mxu0 0.0
    %1086 = vmatprep.subr.mxu0 0.0
    %1087 = vmatpush1.msra.mxu0 0.0
    %1088 = vmatprep.subr.mxu0 0.0
    %1089 = vmatpush1.msra.mxu0 0.0
    %1090 = vmatprep.subr.mxu0 0.0
    %1091 = vmatpush1.msra.mxu0 0.0
    %1092 = vmatprep.subr.mxu0 0.0
    %1093 = vmatpush1.msra.mxu0 0.0
    %1094 = vmatprep.subr.mxu0 0.0
    %1095 = vmatpush1.msra.mxu0 0.0
    %1096 = vmatprep.subr.mxu0 0.0
    %1097 = vmatpush1.msra.mxu0 0.0
    %1098 = vmatprep.subr.mxu0 0.0
    %1099 = vmatpush1.msra.mxu0 0.0
    %1100 = vmatprep.subr.mxu0 0.0
    %1101 = vmatpush1.msra.mxu0 0.0
    %1102 = vmatprep.subr.mxu0 0.0
    %1103 = vmatpush1.msra.mxu0 0.0
    %1104 = vmatprep.subr.mxu0 0.0
    %1105 = vmatpush1.msra.mxu0 0.0
    %1106 = vmatprep.subr.mxu0 0.0
    %1107 = vmatpush1.msra.mxu0 0.0
    %1108 = vmatprep.subr.mxu0 0.0
    %1109 = vmatpush1.msra.mxu0 0.0
    %1110 = vmatprep.mubr.f32.mxu0 0.0
    %1111 = vmatmul.mubr.f32.gmra.mrb[0].mxu0 %v1044
    %v1112 = vpop.f32.mrb[0].mxu0
    %v1113 = vadd.f32 %v113, %v1112
    %v1114 = vpop.f32.mrb[0].mxu0
    %v1115 = vadd.f32 %v117, %v1114
    %1116 = vdwg.mxu0
    %1117 = vmatprep.subr.mxu0 %v71
    %1118 = vmatpush1.msra.mxu0 %v70
    %1119 = vmatprep.subr.mxu0 %v77
    %1120 = vmatpush1.msra.mxu0 %v76
    %1121 = vmatprep.subr.mxu0 0.0
    %1122 = vmatpush1.msra.mxu0 0.0
    %1123 = vmatprep.subr.mxu0 0.0
    %1124 = vmatpush1.msra.mxu0 0.0
    %1125 = vmatprep.subr.mxu0 0.0
    %1126 = vmatpush1.msra.mxu0 0.0
    %1127 = vmatprep.subr.mxu0 0.0
    %1128 = vmatpush1.msra.mxu0 0.0
    %1129 = vmatprep.subr.mxu0 0.0
    %1130 = vmatpush1.msra.mxu0 0.0
    %1131 = vmatprep.subr.mxu0 0.0
    %1132 = vmatpush1.msra.mxu0 0.0
    %1133 = vmatprep.subr.mxu0 0.0
    %1134 = vmatpush1.msra.mxu0 0.0
    %1135 = vmatprep.subr.mxu0 0.0
    %1136 = vmatpush1.msra.mxu0 0.0
    %1137 = vmatprep.subr.mxu0 0.0
    %1138 = vmatpush1.msra.mxu0 0.0
    %1139 = vmatprep.subr.mxu0 0.0
    %1140 = vmatpush1.msra.mxu0 0.0
    %1141 = vmatprep.subr.mxu0 0.0
    %1142 = vmatpush1.msra.mxu0 0.0
    %1143 = vmatprep.subr.mxu0 0.0
    %1144 = vmatpush1.msra.mxu0 0.0
    %1145 = vmatprep.subr.mxu0 0.0
    %1146 = vmatpush1.msra.mxu0 0.0
    %1147 = vmatprep.subr.mxu0 0.0
    %1148 = vmatpush1.msra.mxu0 0.0
    %1149 = vmatprep.subr.mxu0 0.0
    %1150 = vmatpush1.msra.mxu0 0.0
    %1151 = vmatprep.subr.mxu0 0.0
    %1152 = vmatpush1.msra.mxu0 0.0
    %1153 = vmatprep.subr.mxu0 0.0
    %1154 = vmatpush1.msra.mxu0 0.0
    %1155 = vmatprep.subr.mxu0 0.0
    %1156 = vmatpush1.msra.mxu0 0.0
    %1157 = vmatprep.subr.mxu0 0.0
    %1158 = vmatpush1.msra.mxu0 0.0
    %1159 = vmatprep.subr.mxu0 0.0
    %1160 = vmatpush1.msra.mxu0 0.0
    %1161 = vmatprep.subr.mxu0 0.0
    %1162 = vmatpush1.msra.mxu0 0.0
    %1163 = vmatprep.subr.mxu0 0.0
    %1164 = vmatpush1.msra.mxu0 0.0
    %1165 = vmatprep.subr.mxu0 0.0
    %1166 = vmatpush1.msra.mxu0 0.0
    %1167 = vmatprep.subr.mxu0 0.0
    %1168 = vmatpush1.msra.mxu0 0.0
    %1169 = vmatprep.subr.mxu0 0.0
    %1170 = vmatpush1.msra.mxu0 0.0
    %1171 = vmatprep.subr.mxu0 0.0
    %1172 = vmatpush1.msra.mxu0 0.0
    %1173 = vmatprep.subr.mxu0 0.0
    %1174 = vmatpush1.msra.mxu0 0.0
    %1175 = vmatprep.subr.mxu0 0.0
    %1176 = vmatpush1.msra.mxu0 0.0
    %1177 = vmatprep.subr.mxu0 0.0
    %1178 = vmatpush1.msra.mxu0 0.0
    %1179 = vmatprep.subr.mxu0 0.0
    %1180 = vmatpush1.msra.mxu0 0.0
    %1181 = vmatprep.mubr.f32.mxu0 0.0
    %1182 = vmatmul.mubr.f32.gmra.mrb[0].mxu0 %v1044
    %v1183 = vpop.f32.mrb[0].mxu0
    %v1184 = vadd.f32 %v121, %v1183
    %v1185 = vpop.f32.mrb[0].mxu0
    %v1186 = vadd.f32 %v125, %v1185
    %1187 = vdwg.mxu0
    %1188 = vmatprep.subr.mxu0 %v73
    %1189 = vmatpush1.msra.mxu0 %v72
    %1190 = vmatprep.subr.mxu0 %v79
    %1191 = vmatpush1.msra.mxu0 %v78
    %1192 = vmatprep.subr.mxu0 0.0
    %1193 = vmatpush1.msra.mxu0 0.0
    %1194 = vmatprep.subr.mxu0 0.0
    %1195 = vmatpush1.msra.mxu0 0.0
    %1196 = vmatprep.subr.mxu0 0.0
    %1197 = vmatpush1.msra.mxu0 0.0
    %1198 = vmatprep.subr.mxu0 0.0
    %1199 = vmatpush1.msra.mxu0 0.0
    %1200 = vmatprep.subr.mxu0 0.0
    %1201 = vmatpush1.msra.mxu0 0.0
    %1202 = vmatprep.subr.mxu0 0.0
    %1203 = vmatpush1.msra.mxu0 0.0
    %1204 = vmatprep.subr.mxu0 0.0
    %1205 = vmatpush1.msra.mxu0 0.0
    %1206 = vmatprep.subr.mxu0 0.0
    %1207 = vmatpush1.msra.mxu0 0.0
    %1208 = vmatprep.subr.mxu0 0.0
    %1209 = vmatpush1.msra.mxu0 0.0
    %1210 = vmatprep.subr.mxu0 0.0
    %1211 = vmatpush1.msra.mxu0 0.0
    %1212 = vmatprep.subr.mxu0 0.0
    %1213 = vmatpush1.msra.mxu0 0.0
    %1214 = vmatprep.subr.mxu0 0.0
    %1215 = vmatpush1.msra.mxu0 0.0
    %1216 = vmatprep.subr.mxu0 0.0
    %1217 = vmatpush1.msra.mxu0 0.0
    %1218 = vmatprep.subr.mxu0 0.0
    %1219 = vmatpush1.msra.mxu0 0.0
    %1220 = vmatprep.subr.mxu0 0.0
    %1221 = vmatpush1.msra.mxu0 0.0
    %1222 = vmatprep.subr.mxu0 0.0
    %1223 = vmatpush1.msra.mxu0 0.0
    %1224 = vmatprep.subr.mxu0 0.0
    %1225 = vmatpush1.msra.mxu0 0.0
    %1226 = vmatprep.subr.mxu0 0.0
    %1227 = vmatpush1.msra.mxu0 0.0
    %1228 = vmatprep.subr.mxu0 0.0
    %1229 = vmatpush1.msra.mxu0 0.0
    %1230 = vmatprep.subr.mxu0 0.0
    %1231 = vmatpush1.msra.mxu0 0.0
    %1232 = vmatprep.subr.mxu0 0.0
    %1233 = vmatpush1.msra.mxu0 0.0
    %1234 = vmatprep.subr.mxu0 0.0
    %1235 = vmatpush1.msra.mxu0 0.0
    %1236 = vmatprep.subr.mxu0 0.0
    %1237 = vmatpush1.msra.mxu0 0.0
    %1238 = vmatprep.subr.mxu0 0.0
    %1239 = vmatpush1.msra.mxu0 0.0
    %1240 = vmatprep.subr.mxu0 0.0
    %1241 = vmatpush1.msra.mxu0 0.0
    %1242 = vmatprep.subr.mxu0 0.0
    %1243 = vmatpush1.msra.mxu0 0.0
    %1244 = vmatprep.subr.mxu0 0.0
    %1245 = vmatpush1.msra.mxu0 0.0
    %1246 = vmatprep.subr.mxu0 0.0
    %1247 = vmatpush1.msra.mxu0 0.0
    %1248 = vmatprep.subr.mxu0 0.0
    %1249 = vmatpush1.msra.mxu0 0.0
    %1250 = vmatprep.subr.mxu0 0.0
    %1251 = vmatpush1.msra.mxu0 0.0
    %1252 = vmatprep.mubr.f32.mxu0 0.0
    %1253 = vmatmul.mubr.f32.gmra.mrb[0].mxu0 %v1044
    %v1254 = vpop.f32.mrb[0].mxu0
    %v1255 = vadd.f32 %v129, %v1254
    %v1256 = vpop.f32.mrb[0].mxu0
    %v1257 = vadd.f32 %v133, %v1256
    %1258 = vdwg.mxu0
    %s1259 = scalar_lea.vmem [#allocation2], 96
    %1260 = vst [vmem:[%s1259] sm:$0xff] %v1113
    %1261 = vst [vmem:[%s1259 + $0x8] sm:$0xff] %v1115
    %1262 = vst [vmem:[%s1259 + $0x10] sm:$0xff] %v1184
    %s1263 = scalar_lea.vmem [#allocation3], 96
    %1264 = vst [vmem:[%s1263] sm:$0xff] %v1186
    %1265 = vst [vmem:[%s1263 + $0x8] sm:$0xff] %v1255
    %1266 = vst [vmem:[%s1263 + $0x10] sm:$0xff] %v1257
    %s1267 = scalar_lea.vmem %s0, 40
    %v1268 = vld [vmem:[%s1267] sm:$0xff]
    %v1270 = vsel %vm140, %v1268, 0
    %1272 = vmatprep.subr.mxu0 %v69
    %1273 = vmatpush1.msra.mxu0 %v68
    %1274 = vmatprep.subr.mxu0 %v75
    %1275 = vmatpush1.msra.mxu0 %v74
    %1276 = vmatprep.subr.mxu0 0.0
    %1277 = vmatpush1.msra.mxu0 0.0
    %1278 = vmatprep.subr.mxu0 0.0
    %1279 = vmatpush1.msra.mxu0 0.0
    %1280 = vmatprep.subr.mxu0 0.0
    %1281 = vmatpush1.msra.mxu0 0.0
    %1282 = vmatprep.subr.mxu0 0.0
    %1283 = vmatpush1.msra.mxu0 0.0
    %1284 = vmatprep.subr.mxu0 0.0
    %1285 = vmatpush1.msra.mxu0 0.0
    %1286 = vmatprep.subr.mxu0 0.0
    %1287 = vmatpush1.msra.mxu0 0.0
    %1288 = vmatprep.subr.mxu0 0.0
    %1289 = vmatpush1.msra.mxu0 0.0
    %1290 = vmatprep.subr.mxu0 0.0
    %1291 = vmatpush1.msra.mxu0 0.0
    %1292 = vmatprep.subr.mxu0 0.0
    %1293 = vmatpush1.msra.mxu0 0.0
    %1294 = vmatprep.subr.mxu0 0.0
    %1295 = vmatpush1.msra.mxu0 0.0
    %1296 = vmatprep.subr.mxu0 0.0
    %1297 = vmatpush1.msra.mxu0 0.0
    %1298 = vmatprep.subr.mxu0 0.0
    %1299 = vmatpush1.msra.mxu0 0.0
    %1300 = vmatprep.subr.mxu0 0.0
    %1301 = vmatpush1.msra.mxu0 0.0
    %1302 = vmatprep.subr.mxu0 0.0
    %1303 = vmatpush1.msra.mxu0 0.0
    %1304 = vmatprep.subr.mxu0 0.0
    %1305 = vmatpush1.msra.mxu0 0.0
    %1306 = vmatprep.subr.mxu0 0.0
    %1307 = vmatpush1.msra.mxu0 0.0
    %1308 = vmatprep.subr.mxu0 0.0
    %1309 = vmatpush1.msra.mxu0 0.0
    %1310 = vmatprep.subr.mxu0 0.0
    %1311 = vmatpush1.msra.mxu0 0.0
    %1312 = vmatprep.subr.mxu0 0.0
    %1313 = vmatpush1.msra.mxu0 0.0
    %1314 = vmatprep.subr.mxu0 0.0
    %1315 = vmatpush1.msra.mxu0 0.0
    %1316 = vmatprep.subr.mxu0 0.0
    %1317 = vmatpush1.msra.mxu0 0.0
    %1318 = vmatprep.subr.mxu0 0.0
    %1319 = vmatpush1.msra.mxu0 0.0
    %1320 = vmatprep.subr.mxu0 0.0
    %1321 = vmatpush1.msra.mxu0 0.0
    %1322 = vmatprep.subr.mxu0 0.0
    %1323 = vmatpush1.msra.mxu0 0.0
    %1324 = vmatprep.subr.mxu0 0.0
    %1325 = vmatpush1.msra.mxu0 0.0
    %1326 = vmatprep.subr.mxu0 0.0
    %1327 = vmatpush1.msra.mxu0 0.0
    %1328 = vmatprep.subr.mxu0 0.0
    %1329 = vmatpush1.msra.mxu0 0.0
    %1330 = vmatprep.subr.mxu0 0.0
    %1331 = vmatpush1.msra.mxu0 0.0
    %1332 = vmatprep.subr.mxu0 0.0
    %1333 = vmatpush1.msra.mxu0 0.0
    %1334 = vmatprep.subr.mxu0 0.0
    %1335 = vmatpush1.msra.mxu0 0.0
    %1336 = vmatprep.mubr.f32.mxu0 0.0
    %1337 = vmatmul.mubr.f32.gmra.mrb[0].mxu0 %v1270
    %v1338 = vpop.f32.mrb[0].mxu0
    %v1339 = vadd.f32 %v113, %v1338
    %v1340 = vpop.f32.mrb[0].mxu0
    %v1341 = vadd.f32 %v117, %v1340
    %1342 = vdwg.mxu0
    %1343 = vmatprep.subr.mxu0 %v71
    %1344 = vmatpush1.msra.mxu0 %v70
    %1345 = vmatprep.subr.mxu0 %v77
    %1346 = vmatpush1.msra.mxu0 %v76
    %1347 = vmatprep.subr.mxu0 0.0
    %1348 = vmatpush1.msra.mxu0 0.0
    %1349 = vmatprep.subr.mxu0 0.0
    %1350 = vmatpush1.msra.mxu0 0.0
    %1351 = vmatprep.subr.mxu0 0.0
    %1352 = vmatpush1.msra.mxu0 0.0
    %1353 = vmatprep.subr.mxu0 0.0
    %1354 = vmatpush1.msra.mxu0 0.0
    %1355 = vmatprep.subr.mxu0 0.0
    %1356 = vmatpush1.msra.mxu0 0.0
    %1357 = vmatprep.subr.mxu0 0.0
    %1358 = vmatpush1.msra.mxu0 0.0
    %1359 = vmatprep.subr.mxu0 0.0
    %1360 = vmatpush1.msra.mxu0 0.0
    %1361 = vmatprep.subr.mxu0 0.0
    %1362 = vmatpush1.msra.mxu0 0.0
    %1363 = vmatprep.subr.mxu0 0.0
    %1364 = vmatpush1.msra.mxu0 0.0
    %1365 = vmatprep.subr.mxu0 0.0
    %1366 = vmatpush1.msra.mxu0 0.0
    %1367 = vmatprep.subr.mxu0 0.0
    %1368 = vmatpush1.msra.mxu0 0.0
    %1369 = vmatprep.subr.mxu0 0.0
    %1370 = vmatpush1.msra.mxu0 0.0
    %1371 = vmatprep.subr.mxu0 0.0
    %1372 = vmatpush1.msra.mxu0 0.0
    %1373 = vmatprep.subr.mxu0 0.0
    %1374 = vmatpush1.msra.mxu0 0.0
    %1375 = vmatprep.subr.mxu0 0.0
    %1376 = vmatpush1.msra.mxu0 0.0
    %1377 = vmatprep.subr.mxu0 0.0
    %1378 = vmatpush1.msra.mxu0 0.0
    %1379 = vmatprep.subr.mxu0 0.0
    %1380 = vmatpush1.msra.mxu0 0.0
    %1381 = vmatprep.subr.mxu0 0.0
    %1382 = vmatpush1.msra.mxu0 0.0
    %1383 = vmatprep.subr.mxu0 0.0
    %1384 = vmatpush1.msra.mxu0 0.0
    %1385 = vmatprep.subr.mxu0 0.0
    %1386 = vmatpush1.msra.mxu0 0.0
    %1387 = vmatprep.subr.mxu0 0.0
    %1388 = vmatpush1.msra.mxu0 0.0
    %1389 = vmatprep.subr.mxu0 0.0
    %1390 = vmatpush1.msra.mxu0 0.0
    %1391 = vmatprep.subr.mxu0 0.0
    %1392 = vmatpush1.msra.mxu0 0.0
    %1393 = vmatprep.subr.mxu0 0.0
    %1394 = vmatpush1.msra.mxu0 0.0
    %1395 = vmatprep.subr.mxu0 0.0
    %1396 = vmatpush1.msra.mxu0 0.0
    %1397 = vmatprep.subr.mxu0 0.0
    %1398 = vmatpush1.msra.mxu0 0.0
    %1399 = vmatprep.subr.mxu0 0.0
    %1400 = vmatpush1.msra.mxu0 0.0
    %1401 = vmatprep.subr.mxu0 0.0
    %1402 = vmatpush1.msra.mxu0 0.0
    %1403 = vmatprep.subr.mxu0 0.0
    %1404 = vmatpush1.msra.mxu0 0.0
    %1405 = vmatprep.subr.mxu0 0.0
    %1406 = vmatpush1.msra.mxu0 0.0
    %1407 = vmatprep.mubr.f32.mxu0 0.0
    %1408 = vmatmul.mubr.f32.gmra.mrb[0].mxu0 %v1270
    %v1409 = vpop.f32.mrb[0].mxu0
    %v1410 = vadd.f32 %v121, %v1409
    %v1411 = vpop.f32.mrb[0].mxu0
    %v1412 = vadd.f32 %v125, %v1411
    %1413 = vdwg.mxu0
    %1414 = vmatprep.subr.mxu0 %v73
    %1415 = vmatpush1.msra.mxu0 %v72
    %1416 = vmatprep.subr.mxu0 %v79
    %1417 = vmatpush1.msra.mxu0 %v78
    %1418 = vmatprep.subr.mxu0 0.0
    %1419 = vmatpush1.msra.mxu0 0.0
    %1420 = vmatprep.subr.mxu0 0.0
    %1421 = vmatpush1.msra.mxu0 0.0
    %1422 = vmatprep.subr.mxu0 0.0
    %1423 = vmatpush1.msra.mxu0 0.0
    %1424 = vmatprep.subr.mxu0 0.0
    %1425 = vmatpush1.msra.mxu0 0.0
    %1426 = vmatprep.subr.mxu0 0.0
    %1427 = vmatpush1.msra.mxu0 0.0
    %1428 = vmatprep.subr.mxu0 0.0
    %1429 = vmatpush1.msra.mxu0 0.0
    %1430 = vmatprep.subr.mxu0 0.0
    %1431 = vmatpush1.msra.mxu0 0.0
    %1432 = vmatprep.subr.mxu0 0.0
    %1433 = vmatpush1.msra.mxu0 0.0
    %1434 = vmatprep.subr.mxu0 0.0
    %1435 = vmatpush1.msra.mxu0 0.0
    %1436 = vmatprep.subr.mxu0 0.0
    %1437 = vmatpush1.msra.mxu0 0.0
    %1438 = vmatprep.subr.mxu0 0.0
    %1439 = vmatpush1.msra.mxu0 0.0
    %1440 = vmatprep.subr.mxu0 0.0
    %1441 = vmatpush1.msra.mxu0 0.0
    %1442 = vmatprep.subr.mxu0 0.0
    %1443 = vmatpush1.msra.mxu0 0.0
    %1444 = vmatprep.subr.mxu0 0.0
    %1445 = vmatpush1.msra.mxu0 0.0
    %1446 = vmatprep.subr.mxu0 0.0
    %1447 = vmatpush1.msra.mxu0 0.0
    %1448 = vmatprep.subr.mxu0 0.0
    %1449 = vmatpush1.msra.mxu0 0.0
    %1450 = vmatprep.subr.mxu0 0.0
    %1451 = vmatpush1.msra.mxu0 0.0
    %1452 = vmatprep.subr.mxu0 0.0
    %1453 = vmatpush1.msra.mxu0 0.0
    %1454 = vmatprep.subr.mxu0 0.0
    %1455 = vmatpush1.msra.mxu0 0.0
    %1456 = vmatprep.subr.mxu0 0.0
    %1457 = vmatpush1.msra.mxu0 0.0
    %1458 = vmatprep.subr.mxu0 0.0
    %1459 = vmatpush1.msra.mxu0 0.0
    %1460 = vmatprep.subr.mxu0 0.0
    %1461 = vmatpush1.msra.mxu0 0.0
    %1462 = vmatprep.subr.mxu0 0.0
    %1463 = vmatpush1.msra.mxu0 0.0
    %1464 = vmatprep.subr.mxu0 0.0
    %1465 = vmatpush1.msra.mxu0 0.0
    %1466 = vmatprep.subr.mxu0 0.0
    %1467 = vmatpush1.msra.mxu0 0.0
    %1468 = vmatprep.subr.mxu0 0.0
    %1469 = vmatpush1.msra.mxu0 0.0
    %1470 = vmatprep.subr.mxu0 0.0
    %1471 = vmatpush1.msra.mxu0 0.0
    %1472 = vmatprep.subr.mxu0 0.0
    %1473 = vmatpush1.msra.mxu0 0.0
    %1474 = vmatprep.subr.mxu0 0.0
    %1475 = vmatpush1.msra.mxu0 0.0
    %1476 = vmatprep.subr.mxu0 0.0
    %1477 = vmatpush1.msra.mxu0 0.0
    %1478 = vmatprep.mubr.f32.mxu0 0.0
    %1479 = vmatmul.mubr.f32.gmra.mrb[0].mxu0 %v1270
    %v1480 = vpop.f32.mrb[0].mxu0
    %v1481 = vadd.f32 %v129, %v1480
    %v1482 = vpop.f32.mrb[0].mxu0
    %v1483 = vadd.f32 %v133, %v1482
    %1484 = vdwg.mxu0
    %s1485 = scalar_lea.vmem [#allocation2], 120
    %1486 = vst [vmem:[%s1485] sm:$0xff] %v1339
    %1487 = vst [vmem:[%s1485 + $0x8] sm:$0xff] %v1341
    %1488 = vst [vmem:[%s1485 + $0x10] sm:$0xff] %v1410
    %s1489 = scalar_lea.vmem [#allocation3], 120
    %1490 = vst [vmem:[%s1489] sm:$0xff] %v1412
    %1491 = vst [vmem:[%s1489 + $0x8] sm:$0xff] %v1481
    %1492 = vst [vmem:[%s1489 + $0x10] sm:$0xff] %v1483
    %s1493 = scalar_lea.vmem %s0, 48
    %v1494 = vld [vmem:[%s1493] sm:$0xff]
    %v1496 = vsel %vm140, %v1494, 0
    %1498 = vmatprep.subr.mxu0 %v69
    %1499 = vmatpush1.msra.mxu0 %v68
    %1500 = vmatprep.subr.mxu0 %v75
    %1501 = vmatpush1.msra.mxu0 %v74
    %1502 = vmatprep.subr.mxu0 0.0
    %1503 = vmatpush1.msra.mxu0 0.0
    %1504 = vmatprep.subr.mxu0 0.0
    %1505 = vmatpush1.msra.mxu0 0.0
    %1506 = vmatprep.subr.mxu0 0.0
    %1507 = vmatpush1.msra.mxu0 0.0
    %1508 = vmatprep.subr.mxu0 0.0
    %1509 = vmatpush1.msra.mxu0 0.0
    %1510 = vmatprep.subr.mxu0 0.0
    %1511 = vmatpush1.msra.mxu0 0.0
    %1512 = vmatprep.subr.mxu0 0.0
    %1513 = vmatpush1.msra.mxu0 0.0
    %1514 = vmatprep.subr.mxu0 0.0
    %1515 = vmatpush1.msra.mxu0 0.0
    %1516 = vmatprep.subr.mxu0 0.0
    %1517 = vmatpush1.msra.mxu0 0.0
    %1518 = vmatprep.subr.mxu0 0.0
    %1519 = vmatpush1.msra.mxu0 0.0
    %1520 = vmatprep.subr.mxu0 0.0
    %1521 = vmatpush1.msra.mxu0 0.0
    %1522 = vmatprep.subr.mxu0 0.0
    %1523 = vmatpush1.msra.mxu0 0.0
    %1524 = vmatprep.subr.mxu0 0.0
    %1525 = vmatpush1.msra.mxu0 0.0
    %1526 = vmatprep.subr.mxu0 0.0
    %1527 = vmatpush1.msra.mxu0 0.0
    %1528 = vmatprep.subr.mxu0 0.0
    %1529 = vmatpush1.msra.mxu0 0.0
    %1530 = vmatprep.subr.mxu0 0.0
    %1531 = vmatpush1.msra.mxu0 0.0
    %1532 = vmatprep.subr.mxu0 0.0
    %1533 = vmatpush1.msra.mxu0 0.0
    %1534 = vmatprep.subr.mxu0 0.0
    %1535 = vmatpush1.msra.mxu0 0.0
    %1536 = vmatprep.subr.mxu0 0.0
    %1537 = vmatpush1.msra.mxu0 0.0
    %1538 = vmatprep.subr.mxu0 0.0
    %1539 = vmatpush1.msra.mxu0 0.0
    %1540 = vmatprep.subr.mxu0 0.0
    %1541 = vmatpush1.msra.mxu0 0.0
    %1542 = vmatprep.subr.mxu0 0.0
    %1543 = vmatpush1.msra.mxu0 0.0
    %1544 = vmatprep.subr.mxu0 0.0
    %1545 = vmatpush1.msra.mxu0 0.0
    %1546 = vmatprep.subr.mxu0 0.0
    %1547 = vmatpush1.msra.mxu0 0.0
    %1548 = vmatprep.subr.mxu0 0.0
    %1549 = vmatpush1.msra.mxu0 0.0
    %1550 = vmatprep.subr.mxu0 0.0
    %1551 = vmatpush1.msra.mxu0 0.0
    %1552 = vmatprep.subr.mxu0 0.0
    %1553 = vmatpush1.msra.mxu0 0.0
    %1554 = vmatprep.subr.mxu0 0.0
    %1555 = vmatpush1.msra.mxu0 0.0
    %1556 = vmatprep.subr.mxu0 0.0
    %1557 = vmatpush1.msra.mxu0 0.0
    %1558 = vmatprep.subr.mxu0 0.0
    %1559 = vmatpush1.msra.mxu0 0.0
    %1560 = vmatprep.subr.mxu0 0.0
    %1561 = vmatpush1.msra.mxu0 0.0
    %1562 = vmatprep.mubr.f32.mxu0 0.0
    %1563 = vmatmul.mubr.f32.gmra.mrb[0].mxu0 %v1496
    %v1564 = vpop.f32.mrb[0].mxu0
    %v1565 = vadd.f32 %v113, %v1564
    %v1566 = vpop.f32.mrb[0].mxu0
    %v1567 = vadd.f32 %v117, %v1566
    %1568 = vdwg.mxu0
    %1569 = vmatprep.subr.mxu0 %v71
    %1570 = vmatpush1.msra.mxu0 %v70
    %1571 = vmatprep.subr.mxu0 %v77
    %1572 = vmatpush1.msra.mxu0 %v76
    %1573 = vmatprep.subr.mxu0 0.0
    %1574 = vmatpush1.msra.mxu0 0.0
    %1575 = vmatprep.subr.mxu0 0.0
    %1576 = vmatpush1.msra.mxu0 0.0
    %1577 = vmatprep.subr.mxu0 0.0
    %1578 = vmatpush1.msra.mxu0 0.0
    %1579 = vmatprep.subr.mxu0 0.0
    %1580 = vmatpush1.msra.mxu0 0.0
    %1581 = vmatprep.subr.mxu0 0.0
    %1582 = vmatpush1.msra.mxu0 0.0
    %1583 = vmatprep.subr.mxu0 0.0
    %1584 = vmatpush1.msra.mxu0 0.0
    %1585 = vmatprep.subr.mxu0 0.0
    %1586 = vmatpush1.msra.mxu0 0.0
    %1587 = vmatprep.subr.mxu0 0.0
    %1588 = vmatpush1.msra.mxu0 0.0
    %1589 = vmatprep.subr.mxu0 0.0
    %1590 = vmatpush1.msra.mxu0 0.0
    %1591 = vmatprep.subr.mxu0 0.0
    %1592 = vmatpush1.msra.mxu0 0.0
    %1593 = vmatprep.subr.mxu0 0.0
    %1594 = vmatpush1.msra.mxu0 0.0
    %1595 = vmatprep.subr.mxu0 0.0
    %1596 = vmatpush1.msra.mxu0 0.0
    %1597 = vmatprep.subr.mxu0 0.0
    %1598 = vmatpush1.msra.mxu0 0.0
    %1599 = vmatprep.subr.mxu0 0.0
    %1600 = vmatpush1.msra.mxu0 0.0
    %1601 = vmatprep.subr.mxu0 0.0
    %1602 = vmatpush1.msra.mxu0 0.0
    %1603 = vmatprep.subr.mxu0 0.0
    %1604 = vmatpush1.msra.mxu0 0.0
    %1605 = vmatprep.subr.mxu0 0.0
    %1606 = vmatpush1.msra.mxu0 0.0
    %1607 = vmatprep.subr.mxu0 0.0
    %1608 = vmatpush1.msra.mxu0 0.0
    %1609 = vmatprep.subr.mxu0 0.0
    %1610 = vmatpush1.msra.mxu0 0.0
    %1611 = vmatprep.subr.mxu0 0.0
    %1612 = vmatpush1.msra.mxu0 0.0
    %1613 = vmatprep.subr.mxu0 0.0
    %1614 = vmatpush1.msra.mxu0 0.0
    %1615 = vmatprep.subr.mxu0 0.0
    %1616 = vmatpush1.msra.mxu0 0.0
    %1617 = vmatprep.subr.mxu0 0.0
    %1618 = vmatpush1.msra.mxu0 0.0
    %1619 = vmatprep.subr.mxu0 0.0
    %1620 = vmatpush1.msra.mxu0 0.0
    %1621 = vmatprep.subr.mxu0 0.0
    %1622 = vmatpush1.msra.mxu0 0.0
    %1623 = vmatprep.subr.mxu0 0.0
    %1624 = vmatpush1.msra.mxu0 0.0
    %1625 = vmatprep.subr.mxu0 0.0
    %1626 = vmatpush1.msra.mxu0 0.0
    %1627 = vmatprep.subr.mxu0 0.0
    %1628 = vmatpush1.msra.mxu0 0.0
    %1629 = vmatprep.subr.mxu0 0.0
    %1630 = vmatpush1.msra.mxu0 0.0
    %1631 = vmatprep.subr.mxu0 0.0
    %1632 = vmatpush1.msra.mxu0 0.0
    %1633 = vmatprep.mubr.f32.mxu0 0.0
    %1634 = vmatmul.mubr.f32.gmra.mrb[0].mxu0 %v1496
    %v1635 = vpop.f32.mrb[0].mxu0
    %v1636 = vadd.f32 %v121, %v1635
    %v1637 = vpop.f32.mrb[0].mxu0
    %v1638 = vadd.f32 %v125, %v1637
    %1639 = vdwg.mxu0
    %1640 = vmatprep.subr.mxu0 %v73
    %1641 = vmatpush1.msra.mxu0 %v72
    %1642 = vmatprep.subr.mxu0 %v79
    %1643 = vmatpush1.msra.mxu0 %v78
    %1644 = vmatprep.subr.mxu0 0.0
    %1645 = vmatpush1.msra.mxu0 0.0
    %1646 = vmatprep.subr.mxu0 0.0
    %1647 = vmatpush1.msra.mxu0 0.0
    %1648 = vmatprep.subr.mxu0 0.0
    %1649 = vmatpush1.msra.mxu0 0.0
    %1650 = vmatprep.subr.mxu0 0.0
    %1651 = vmatpush1.msra.mxu0 0.0
    %1652 = vmatprep.subr.mxu0 0.0
    %1653 = vmatpush1.msra.mxu0 0.0
    %1654 = vmatprep.subr.mxu0 0.0
    %1655 = vmatpush1.msra.mxu0 0.0
    %1656 = vmatprep.subr.mxu0 0.0
    %1657 = vmatpush1.msra.mxu0 0.0
    %1658 = vmatprep.subr.mxu0 0.0
    %1659 = vmatpush1.msra.mxu0 0.0
    %1660 = vmatprep.subr.mxu0 0.0
    %1661 = vmatpush1.msra.mxu0 0.0
    %1662 = vmatprep.subr.mxu0 0.0
    %1663 = vmatpush1.msra.mxu0 0.0
    %1664 = vmatprep.subr.mxu0 0.0
    %1665 = vmatpush1.msra.mxu0 0.0
    %1666 = vmatprep.subr.mxu0 0.0
    %1667 = vmatpush1.msra.mxu0 0.0
    %1668 = vmatprep.subr.mxu0 0.0
    %1669 = vmatpush1.msra.mxu0 0.0
    %1670 = vmatprep.subr.mxu0 0.0
    %1671 = vmatpush1.msra.mxu0 0.0
    %1672 = vmatprep.subr.mxu0 0.0
    %1673 = vmatpush1.msra.mxu0 0.0
    %1674 = vmatprep.subr.mxu0 0.0
    %1675 = vmatpush1.msra.mxu0 0.0
    %1676 = vmatprep.subr.mxu0 0.0
    %1677 = vmatpush1.msra.mxu0 0.0
    %1678 = vmatprep.subr.mxu0 0.0
    %1679 = vmatpush1.msra.mxu0 0.0
    %1680 = vmatprep.subr.mxu0 0.0
    %1681 = vmatpush1.msra.mxu0 0.0
    %1682 = vmatprep.subr.mxu0 0.0
    %1683 = vmatpush1.msra.mxu0 0.0
    %1684 = vmatprep.subr.mxu0 0.0
    %1685 = vmatpush1.msra.mxu0 0.0
    %1686 = vmatprep.subr.mxu0 0.0
    %1687 = vmatpush1.msra.mxu0 0.0
    %1688 = vmatprep.subr.mxu0 0.0
    %1689 = vmatpush1.msra.mxu0 0.0
    %1690 = vmatprep.subr.mxu0 0.0
    %1691 = vmatpush1.msra.mxu0 0.0
    %1692 = vmatprep.subr.mxu0 0.0
    %1693 = vmatpush1.msra.mxu0 0.0
    %1694 = vmatprep.subr.mxu0 0.0
    %1695 = vmatpush1.msra.mxu0 0.0
    %1696 = vmatprep.subr.mxu0 0.0
    %1697 = vmatpush1.msra.mxu0 0.0
    %1698 = vmatprep.subr.mxu0 0.0
    %1699 = vmatpush1.msra.mxu0 0.0
    %1700 = vmatprep.subr.mxu0 0.0
    %1701 = vmatpush1.msra.mxu0 0.0
    %1702 = vmatprep.subr.mxu0 0.0
    %1703 = vmatpush1.msra.mxu0 0.0
    %1704 = vmatprep.mubr.f32.mxu0 0.0
    %1705 = vmatmul.mubr.f32.gmra.mrb[0].mxu0 %v1496
    %v1706 = vpop.f32.mrb[0].mxu0
    %v1707 = vadd.f32 %v129, %v1706
    %v1708 = vpop.f32.mrb[0].mxu0
    %v1709 = vadd.f32 %v133, %v1708
    %1710 = vdwg.mxu0
    %s1711 = scalar_lea.vmem [#allocation2], 144
    %1712 = vst [vmem:[%s1711] sm:$0xff] %v1565
    %1713 = vst [vmem:[%s1711 + $0x8] sm:$0xff] %v1567
    %1714 = vst [vmem:[%s1711 + $0x10] sm:$0xff] %v1636
    %s1715 = scalar_lea.vmem [#allocation3], 144
    %1716 = vst [vmem:[%s1715] sm:$0xff] %v1638
    %1717 = vst [vmem:[%s1715 + $0x8] sm:$0xff] %v1707
    %1718 = vst [vmem:[%s1715 + $0x10] sm:$0xff] %v1709
    %s1719 = scalar_lea.vmem %s0, 56
    %v1720 = vld [vmem:[%s1719] sm:$0xff]
    %v1722 = vsel %vm140, %v1720, 0
    %1724 = vmatprep.subr.mxu0 %v69
    %1725 = vmatpush1.msra.mxu0 %v68
    %1726 = vmatprep.subr.mxu0 %v75
    %1727 = vmatpush1.msra.mxu0 %v74
    %1728 = vmatprep.subr.mxu0 0.0
    %1729 = vmatpush1.msra.mxu0 0.0
    %1730 = vmatprep.subr.mxu0 0.0
    %1731 = vmatpush1.msra.mxu0 0.0
    %1732 = vmatprep.subr.mxu0 0.0
    %1733 = vmatpush1.msra.mxu0 0.0
    %1734 = vmatprep.subr.mxu0 0.0
    %1735 = vmatpush1.msra.mxu0 0.0
    %1736 = vmatprep.subr.mxu0 0.0
    %1737 = vmatpush1.msra.mxu0 0.0
    %1738 = vmatprep.subr.mxu0 0.0
    %1739 = vmatpush1.msra.mxu0 0.0
    %1740 = vmatprep.subr.mxu0 0.0
    %1741 = vmatpush1.msra.mxu0 0.0
    %1742 = vmatprep.subr.mxu0 0.0
    %1743 = vmatpush1.msra.mxu0 0.0
    %1744 = vmatprep.subr.mxu0 0.0
    %1745 = vmatpush1.msra.mxu0 0.0
    %1746 = vmatprep.subr.mxu0 0.0
    %1747 = vmatpush1.msra.mxu0 0.0
    %1748 = vmatprep.subr.mxu0 0.0
    %1749 = vmatpush1.msra.mxu0 0.0
    %1750 = vmatprep.subr.mxu0 0.0
    %1751 = vmatpush1.msra.mxu0 0.0
    %1752 = vmatprep.subr.mxu0 0.0
    %1753 = vmatpush1.msra.mxu0 0.0
    %1754 = vmatprep.subr.mxu0 0.0
    %1755 = vmatpush1.msra.mxu0 0.0
    %1756 = vmatprep.subr.mxu0 0.0
    %1757 = vmatpush1.msra.mxu0 0.0
    %1758 = vmatprep.subr.mxu0 0.0
    %1759 = vmatpush1.msra.mxu0 0.0
    %1760 = vmatprep.subr.mxu0 0.0
    %1761 = vmatpush1.msra.mxu0 0.0
    %1762 = vmatprep.subr.mxu0 0.0
    %1763 = vmatpush1.msra.mxu0 0.0
    %1764 = vmatprep.subr.mxu0 0.0
    %1765 = vmatpush1.msra.mxu0 0.0
    %1766 = vmatprep.subr.mxu0 0.0
    %1767 = vmatpush1.msra.mxu0 0.0
    %1768 = vmatprep.subr.mxu0 0.0
    %1769 = vmatpush1.msra.mxu0 0.0
    %1770 = vmatprep.subr.mxu0 0.0
    %1771 = vmatpush1.msra.mxu0 0.0
    %1772 = vmatprep.subr.mxu0 0.0
    %1773 = vmatpush1.msra.mxu0 0.0
    %1774 = vmatprep.subr.mxu0 0.0
    %1775 = vmatpush1.msra.mxu0 0.0
    %1776 = vmatprep.subr.mxu0 0.0
    %1777 = vmatpush1.msra.mxu0 0.0
    %1778 = vmatprep.subr.mxu0 0.0
    %1779 = vmatpush1.msra.mxu0 0.0
    %1780 = vmatprep.subr.mxu0 0.0
    %1781 = vmatpush1.msra.mxu0 0.0
    %1782 = vmatprep.subr.mxu0 0.0
    %1783 = vmatpush1.msra.mxu0 0.0
    %1784 = vmatprep.subr.mxu0 0.0
    %1785 = vmatpush1.msra.mxu0 0.0
    %1786 = vmatprep.subr.mxu0 0.0
    %1787 = vmatpush1.msra.mxu0 0.0
    %1788 = vmatprep.mubr.f32.mxu0 0.0
    %1789 = vmatmul.mubr.f32.gmra.mrb[0].mxu0 %v1722
    %v1790 = vpop.f32.mrb[0].mxu0
    %v1791 = vadd.f32 %v113, %v1790
    %v1792 = vpop.f32.mrb[0].mxu0
    %v1793 = vadd.f32 %v117, %v1792
    %1794 = vdwg.mxu0
    %1795 = vmatprep.subr.mxu0 %v71
    %1796 = vmatpush1.msra.mxu0 %v70
    %1797 = vmatprep.subr.mxu0 %v77
    %1798 = vmatpush1.msra.mxu0 %v76
    %1799 = vmatprep.subr.mxu0 0.0
    %1800 = vmatpush1.msra.mxu0 0.0
    %1801 = vmatprep.subr.mxu0 0.0
    %1802 = vmatpush1.msra.mxu0 0.0
    %1803 = vmatprep.subr.mxu0 0.0
    %1804 = vmatpush1.msra.mxu0 0.0
    %1805 = vmatprep.subr.mxu0 0.0
    %1806 = vmatpush1.msra.mxu0 0.0
    %1807 = vmatprep.subr.mxu0 0.0
    %1808 = vmatpush1.msra.mxu0 0.0
    %1809 = vmatprep.subr.mxu0 0.0
    %1810 = vmatpush1.msra.mxu0 0.0
    %1811 = vmatprep.subr.mxu0 0.0
    %1812 = vmatpush1.msra.mxu0 0.0
    %1813 = vmatprep.subr.mxu0 0.0
    %1814 = vmatpush1.msra.mxu0 0.0
    %1815 = vmatprep.subr.mxu0 0.0
    %1816 = vmatpush1.msra.mxu0 0.0
    %1817 = vmatprep.subr.mxu0 0.0
    %1818 = vmatpush1.msra.mxu0 0.0
    %1819 = vmatprep.subr.mxu0 0.0
    %1820 = vmatpush1.msra.mxu0 0.0
    %1821 = vmatprep.subr.mxu0 0.0
    %1822 = vmatpush1.msra.mxu0 0.0
    %1823 = vmatprep.subr.mxu0 0.0
    %1824 = vmatpush1.msra.mxu0 0.0
    %1825 = vmatprep.subr.mxu0 0.0
    %1826 = vmatpush1.msra.mxu0 0.0
    %1827 = vmatprep.subr.mxu0 0.0
    %1828 = vmatpush1.msra.mxu0 0.0
    %1829 = vmatprep.subr.mxu0 0.0
    %1830 = vmatpush1.msra.mxu0 0.0
    %1831 = vmatprep.subr.mxu0 0.0
    %1832 = vmatpush1.msra.mxu0 0.0
    %1833 = vmatprep.subr.mxu0 0.0
    %1834 = vmatpush1.msra.mxu0 0.0
    %1835 = vmatprep.subr.mxu0 0.0
    %1836 = vmatpush1.msra.mxu0 0.0
    %1837 = vmatprep.subr.mxu0 0.0
    %1838 = vmatpush1.msra.mxu0 0.0
    %1839 = vmatprep.subr.mxu0 0.0
    %1840 = vmatpush1.msra.mxu0 0.0
    %1841 = vmatprep.subr.mxu0 0.0
    %1842 = vmatpush1.msra.mxu0 0.0
    %1843 = vmatprep.subr.mxu0 0.0
    %1844 = vmatpush1.msra.mxu0 0.0
    %1845 = vmatprep.subr.mxu0 0.0
    %1846 = vmatpush1.msra.mxu0 0.0
    %1847 = vmatprep.subr.mxu0 0.0
    %1848 = vmatpush1.msra.mxu0 0.0
    %1849 = vmatprep.subr.mxu0 0.0
    %1850 = vmatpush1.msra.mxu0 0.0
    %1851 = vmatprep.subr.mxu0 0.0
    %1852 = vmatpush1.msra.mxu0 0.0
    %1853 = vmatprep.subr.mxu0 0.0
    %1854 = vmatpush1.msra.mxu0 0.0
    %1855 = vmatprep.subr.mxu0 0.0
    %1856 = vmatpush1.msra.mxu0 0.0
    %1857 = vmatprep.subr.mxu0 0.0
    %1858 = vmatpush1.msra.mxu0 0.0
    %1859 = vmatprep.mubr.f32.mxu0 0.0
    %1860 = vmatmul.mubr.f32.gmra.mrb[0].mxu0 %v1722
    %v1861 = vpop.f32.mrb[0].mxu0
    %v1862 = vadd.f32 %v121, %v1861
    %v1863 = vpop.f32.mrb[0].mxu0
    %v1864 = vadd.f32 %v125, %v1863
    %1865 = vdwg.mxu0
    %1866 = vmatprep.subr.mxu0 %v73
    %1867 = vmatpush1.msra.mxu0 %v72
    %1868 = vmatprep.subr.mxu0 %v79
    %1869 = vmatpush1.msra.mxu0 %v78
    %1870 = vmatprep.subr.mxu0 0.0
    %1871 = vmatpush1.msra.mxu0 0.0
    %1872 = vmatprep.subr.mxu0 0.0
    %1873 = vmatpush1.msra.mxu0 0.0
    %1874 = vmatprep.subr.mxu0 0.0
    %1875 = vmatpush1.msra.mxu0 0.0
    %1876 = vmatprep.subr.mxu0 0.0
    %1877 = vmatpush1.msra.mxu0 0.0
    %1878 = vmatprep.subr.mxu0 0.0
    %1879 = vmatpush1.msra.mxu0 0.0
    %1880 = vmatprep.subr.mxu0 0.0
    %1881 = vmatpush1.msra.mxu0 0.0
    %1882 = vmatprep.subr.mxu0 0.0
    %1883 = vmatpush1.msra.mxu0 0.0
    %1884 = vmatprep.subr.mxu0 0.0
    %1885 = vmatpush1.msra.mxu0 0.0
    %1886 = vmatprep.subr.mxu0 0.0
    %1887 = vmatpush1.msra.mxu0 0.0
    %1888 = vmatprep.subr.mxu0 0.0
    %1889 = vmatpush1.msra.mxu0 0.0
    %1890 = vmatprep.subr.mxu0 0.0
    %1891 = vmatpush1.msra.mxu0 0.0
    %1892 = vmatprep.subr.mxu0 0.0
    %1893 = vmatpush1.msra.mxu0 0.0
    %1894 = vmatprep.subr.mxu0 0.0
    %1895 = vmatpush1.msra.mxu0 0.0
    %1896 = vmatprep.subr.mxu0 0.0
    %1897 = vmatpush1.msra.mxu0 0.0
    %1898 = vmatprep.subr.mxu0 0.0
    %1899 = vmatpush1.msra.mxu0 0.0
    %1900 = vmatprep.subr.mxu0 0.0
    %1901 = vmatpush1.msra.mxu0 0.0
    %1902 = vmatprep.subr.mxu0 0.0
    %1903 = vmatpush1.msra.mxu0 0.0
    %1904 = vmatprep.subr.mxu0 0.0
    %1905 = vmatpush1.msra.mxu0 0.0
    %1906 = vmatprep.subr.mxu0 0.0
    %1907 = vmatpush1.msra.mxu0 0.0
    %1908 = vmatprep.subr.mxu0 0.0
    %1909 = vmatpush1.msra.mxu0 0.0
    %1910 = vmatprep.subr.mxu0 0.0
    %1911 = vmatpush1.msra.mxu0 0.0
    %1912 = vmatprep.subr.mxu0 0.0
    %1913 = vmatpush1.msra.mxu0 0.0
    %1914 = vmatprep.subr.mxu0 0.0
    %1915 = vmatpush1.msra.mxu0 0.0
    %1916 = vmatprep.subr.mxu0 0.0
    %1917 = vmatpush1.msra.mxu0 0.0
    %1918 = vmatprep.subr.mxu0 0.0
    %1919 = vmatpush1.msra.mxu0 0.0
    %1920 = vmatprep.subr.mxu0 0.0
    %1921 = vmatpush1.msra.mxu0 0.0
    %1922 = vmatprep.subr.mxu0 0.0
    %1923 = vmatpush1.msra.mxu0 0.0
    %1924 = vmatprep.subr.mxu0 0.0
    %1925 = vmatpush1.msra.mxu0 0.0
    %1926 = vmatprep.subr.mxu0 0.0
    %1927 = vmatpush1.msra.mxu0 0.0
    %1928 = vmatprep.subr.mxu0 0.0
    %1929 = vmatpush1.msra.mxu0 0.0
    %1930 = vmatprep.mubr.f32.mxu0 0.0
    %1931 = vmatmul.mubr.f32.gmra.mrb[0].mxu0 %v1722
    %v1932 = vpop.f32.mrb[0].mxu0
    %v1933 = vadd.f32 %v129, %v1932
    %v1934 = vpop.f32.mrb[0].mxu0
    %v1935 = vadd.f32 %v133, %v1934
    %1936 = vdwg.mxu0
    %s1937 = scalar_lea.vmem [#allocation2], 168
    %1938 = vst [vmem:[%s1937] sm:$0xff] %v1791
    %1939 = vst [vmem:[%s1937 + $0x8] sm:$0xff] %v1793
    %1940 = vst [vmem:[%s1937 + $0x10] sm:$0xff] %v1862
    %s1941 = scalar_lea.vmem [#allocation3], 168
    %1942 = vst [vmem:[%s1941] sm:$0xff] %v1864
    %1943 = vst [vmem:[%s1941 + $0x8] sm:$0xff] %v1933
    %1944 = vst [vmem:[%s1941 + $0x10] sm:$0xff] %v1935
    %v1945 = vld [vmem:[#allocation2] sm:$0xff]
    %v1946 = vld [vmem:[#allocation2 + $0x8] sm:$0xff]
    %v1947 = vld [vmem:[#allocation2 + $0x10] sm:$0xff]
    %v1949 = vlaneseq
    %v1950 = vshrl.u32 %v1949, 7
    %v1951 = vsub.s32 0, %v1950
    %v1952 = vrot.slane %v93, %v1951
    %v1953 = vlaneseq
    %v1954 = vshrl.u32 %v1953, 7
    %v1955 = vsub.s32 1, %v1954
    %v1956 = vrot.slane %v93, %v1955
    %v1957 = vlaneseq
    %v1958 = vshrl.u32 %v1957, 7
    %v1959 = vsub.s32 2, %v1958
    %v1960 = vrot.slane %v93, %v1959
    %vm1964 = vcmask 261120
    %v1966 = vsel %vm1964, 0.0, 0
    %1968 = vmatprep.subr.mxu0 %v82
    %1969 = vmatpush1.msra.mxu0 %v81
    %1970 = vmatprep.subr.mxu0 %v85
    %1971 = vmatpush1.msra.mxu0 %v84
    %1972 = vmatprep.subr.mxu0 %v88
    %1973 = vmatpush1.msra.mxu0 %v87
    %1974 = vmatprep.subr.mxu0 %v91
    %1975 = vmatpush1.msra.mxu0 %v90
    %1976 = vmatprep.subr.mxu0 0.0
    %1977 = vmatpush1.msra.mxu0 0.0
    %1978 = vmatprep.subr.mxu0 0.0
    %1979 = vmatpush1.msra.mxu0 0.0
    %1980 = vmatprep.subr.mxu0 0.0
    %1981 = vmatpush1.msra.mxu0 0.0
    %1982 = vmatprep.subr.mxu0 0.0
    %1983 = vmatpush1.msra.mxu0 0.0
    %1984 = vmatprep.subr.mxu0 0.0
    %1985 = vmatpush1.msra.mxu0 0.0
    %1986 = vmatprep.subr.mxu0 0.0
    %1987 = vmatpush1.msra.mxu0 0.0
    %1988 = vmatprep.subr.mxu0 0.0
    %1989 = vmatpush1.msra.mxu0 0.0
    %1990 = vmatprep.subr.mxu0 0.0
    %1991 = vmatpush1.msra.mxu0 0.0
    %1992 = vmatprep.subr.mxu0 0.0
    %1993 = vmatpush1.msra.mxu0 0.0
    %1994 = vmatprep.subr.mxu0 0.0
    %1995 = vmatpush1.msra.mxu0 0.0
    %1996 = vmatprep.subr.mxu0 0.0
    %1997 = vmatpush1.msra.mxu0 0.0
    %1998 = vmatprep.subr.mxu0 0.0
    %1999 = vmatpush1.msra.mxu0 0.0
    %2000 = vmatprep.subr.mxu0 0.0
    %2001 = vmatpush1.msra.mxu0 0.0
    %2002 = vmatprep.subr.mxu0 0.0
    %2003 = vmatpush1.msra.mxu0 0.0
    %2004 = vmatprep.subr.mxu0 0.0
    %2005 = vmatpush1.msra.mxu0 0.0
    %2006 = vmatprep.subr.mxu0 0.0
    %2007 = vmatpush1.msra.mxu0 0.0
    %2008 = vmatprep.subr.mxu0 0.0
    %2009 = vmatpush1.msra.mxu0 0.0
    %2010 = vmatprep.subr.mxu0 0.0
    %2011 = vmatpush1.msra.mxu0 0.0
    %2012 = vmatprep.subr.mxu0 0.0
    %2013 = vmatpush1.msra.mxu0 0.0
    %2014 = vmatprep.subr.mxu0 0.0
    %2015 = vmatpush1.msra.mxu0 0.0
    %2016 = vmatprep.subr.mxu0 0.0
    %2017 = vmatpush1.msra.mxu0 0.0
    %2018 = vmatprep.subr.mxu0 0.0
    %2019 = vmatpush1.msra.mxu0 0.0
    %2020 = vmatprep.subr.mxu0 0.0
    %2021 = vmatpush1.msra.mxu0 0.0
    %2022 = vmatprep.subr.mxu0 0.0
    %2023 = vmatpush1.msra.mxu0 0.0
    %2024 = vmatprep.subr.mxu0 0.0
    %2025 = vmatpush1.msra.mxu0 0.0
    %2026 = vmatprep.subr.mxu0 0.0
    %2027 = vmatpush1.msra.mxu0 0.0
    %2028 = vmatprep.subr.mxu0 0.0
    %2029 = vmatpush1.msra.mxu0 0.0
    %2030 = vmatprep.subr.mxu0 0.0
    %2031 = vmatpush1.msra.mxu0 0.0
    %2032 = vmatprep.mubr.f32.mxu0 0.0
    %2033 = vmatmul.mubr.f32.gmra.mrb[0].mxu0 %v1966
    %v2034 = vpop.f32.mrb[0].mxu0
    %v2035 = vadd.f32 %v1952, %v2034
    %v2036 = vpop.f32.mrb[0].mxu0
    %v2037 = vadd.f32 %v1956, %v2036
    %2038 = vdwg.mxu0
    %2039 = vmatprep.subr.mxu0 0.0
    %2040 = vmatpush1.msra.mxu0 %v83
    %2041 = vmatprep.subr.mxu0 0.0
    %2042 = vmatpush1.msra.mxu0 %v86
    %2043 = vmatprep.subr.mxu0 0.0
    %2044 = vmatpush1.msra.mxu0 %v89
    %2045 = vmatprep.subr.mxu0 0.0
    %2046 = vmatpush1.msra.mxu0 %v92
    %2047 = vmatprep.subr.mxu0 0.0
    %2048 = vmatpush1.msra.mxu0 0.0
    %2049 = vmatprep.subr.mxu0 0.0
    %2050 = vmatpush1.msra.mxu0 0.0
    %2051 = vmatprep.subr.mxu0 0.0
    %2052 = vmatpush1.msra.mxu0 0.0
    %2053 = vmatprep.subr.mxu0 0.0
    %2054 = vmatpush1.msra.mxu0 0.0
    %2055 = vmatprep.subr.mxu0 0.0
    %2056 = vmatpush1.msra.mxu0 0.0
    %2057 = vmatprep.subr.mxu0 0.0
    %2058 = vmatpush1.msra.mxu0 0.0
    %2059 = vmatprep.subr.mxu0 0.0
    %2060 = vmatpush1.msra.mxu0 0.0
    %2061 = vmatprep.subr.mxu0 0.0
    %2062 = vmatpush1.msra.mxu0 0.0
    %2063 = vmatprep.subr.mxu0 0.0
    %2064 = vmatpush1.msra.mxu0 0.0
    %2065 = vmatprep.subr.mxu0 0.0
    %2066 = vmatpush1.msra.mxu0 0.0
    %2067 = vmatprep.subr.mxu0 0.0
    %2068 = vmatpush1.msra.mxu0 0.0
    %2069 = vmatprep.subr.mxu0 0.0
    %2070 = vmatpush1.msra.mxu0 0.0
    %2071 = vmatprep.subr.mxu0 0.0
    %2072 = vmatpush1.msra.mxu0 0.0
    %2073 = vmatprep.subr.mxu0 0.0
    %2074 = vmatpush1.msra.mxu0 0.0
    %2075 = vmatprep.subr.mxu0 0.0
    %2076 = vmatpush1.msra.mxu0 0.0
    %2077 = vmatprep.subr.mxu0 0.0
    %2078 = vmatpush1.msra.mxu0 0.0
    %2079 = vmatprep.subr.mxu0 0.0
    %2080 = vmatpush1.msra.mxu0 0.0
    %2081 = vmatprep.subr.mxu0 0.0
    %2082 = vmatpush1.msra.mxu0 0.0
    %2083 = vmatprep.subr.mxu0 0.0
    %2084 = vmatpush1.msra.mxu0 0.0
    %2085 = vmatprep.subr.mxu0 0.0
    %2086 = vmatpush1.msra.mxu0 0.0
    %2087 = vmatprep.subr.mxu0 0.0
    %2088 = vmatpush1.msra.mxu0 0.0
    %2089 = vmatprep.subr.mxu0 0.0
    %2090 = vmatpush1.msra.mxu0 0.0
    %2091 = vmatprep.subr.mxu0 0.0
    %2092 = vmatpush1.msra.mxu0 0.0
    %2093 = vmatprep.subr.mxu0 0.0
    %2094 = vmatpush1.msra.mxu0 0.0
    %2095 = vmatprep.subr.mxu0 0.0
    %2096 = vmatpush1.msra.mxu0 0.0
    %2097 = vmatprep.subr.mxu0 0.0
    %2098 = vmatpush1.msra.mxu0 0.0
    %2099 = vmatprep.subr.mxu0 0.0
    %2100 = vmatpush1.msra.mxu0 0.0
    %2101 = vmatprep.subr.mxu0 0.0
    %2102 = vmatpush1.msra.mxu0 0.0
    %2103 = vmatprep.mubr.f32.mxu0 0.0
    %2104 = vmatmul.mubr.f32.gmra.mrb[0].mxu0 %v1966
    %v2105 = vpop.f32.mrb[0].mxu0
    %v2106 = vadd.f32 %v1960, %v2105
    %v2107 = vpop.f32.mrb[0].mxu0
    %2108 = vdwg.mxu0
    %v2109 = vadd.f32 %v1945, %v2035
    %v2110 = vsub.f32 0.0, %v2109
    %v2111 = vmul.f32 %v2110, 1.442695
    %v2112 = vpow.pop %v2111
    %v2113 = vadd.f32 %v2112, 1.0
    %v2114 = vrcp.pop %v2113
    %v2115 = vadd.f32 %v1946, %v2037
    %v2116 = vsub.f32 0.0, %v2115
    %v2117 = vmul.f32 %v2116, 1.442695
    %v2118 = vpow.pop %v2117
    %v2119 = vadd.f32 %v2118, 1.0
    %v2120 = vrcp.pop %v2119
    %v2121 = vmul.f32 %v2114, %v2106
    %v2122 = vadd.f32 %v1947, %v2121
    %v2123 = vtanh.pop %v2122
    %v2124 = vsub.f32 0.0, %v2123
    %v2125 = vmul.f32 %v2120, %v2124
    %v2126 = vadd.f32 %v2123, %v2125
    %v2127 = vld [vmem:[%s1941] sm:$0xff]
    %v2128 = vld [vmem:[%s1941 + $0x8] sm:$0xff]
    %v2129 = vld [vmem:[%s1941 + $0x10] sm:$0xff]
    %v2131 = vlaneseq
    %v2132 = vshrl.u32 %v2131, 7
    %v2133 = vsub.s32 0, %v2132
    %v2134 = vrot.slane %v106, %v2133
    %v2135 = vlaneseq
    %v2136 = vshrl.u32 %v2135, 7
    %v2137 = vsub.s32 1, %v2136
    %v2138 = vrot.slane %v106, %v2137
    %v2139 = vlaneseq
    %v2140 = vshrl.u32 %v2139, 7
    %v2141 = vsub.s32 2, %v2140
    %v2142 = vrot.slane %v106, %v2141
    %2146 = vmatprep.subr.mxu0 %v95
    %2147 = vmatpush1.msra.mxu0 %v94
    %2148 = vmatprep.subr.mxu0 %v98
    %2149 = vmatpush1.msra.mxu0 %v97
    %2150 = vmatprep.subr.mxu0 %v101
    %2151 = vmatpush1.msra.mxu0 %v100
    %2152 = vmatprep.subr.mxu0 %v104
    %2153 = vmatpush1.msra.mxu0 %v103
    %2154 = vmatprep.subr.mxu0 0.0
    %2155 = vmatpush1.msra.mxu0 0.0
    %2156 = vmatprep.subr.mxu0 0.0
    %2157 = vmatpush1.msra.mxu0 0.0
    %2158 = vmatprep.subr.mxu0 0.0
    %2159 = vmatpush1.msra.mxu0 0.0
    %2160 = vmatprep.subr.mxu0 0.0
    %2161 = vmatpush1.msra.mxu0 0.0
    %2162 = vmatprep.subr.mxu0 0.0
    %2163 = vmatpush1.msra.mxu0 0.0
    %2164 = vmatprep.subr.mxu0 0.0
    %2165 = vmatpush1.msra.mxu0 0.0
    %2166 = vmatprep.subr.mxu0 0.0
    %2167 = vmatpush1.msra.mxu0 0.0
    %2168 = vmatprep.subr.mxu0 0.0
    %2169 = vmatpush1.msra.mxu0 0.0
    %2170 = vmatprep.subr.mxu0 0.0
    %2171 = vmatpush1.msra.mxu0 0.0
    %2172 = vmatprep.subr.mxu0 0.0
    %2173 = vmatpush1.msra.mxu0 0.0
    %2174 = vmatprep.subr.mxu0 0.0
    %2175 = vmatpush1.msra.mxu0 0.0
    %2176 = vmatprep.subr.mxu0 0.0
    %2177 = vmatpush1.msra.mxu0 0.0
    %2178 = vmatprep.subr.mxu0 0.0
    %2179 = vmatpush1.msra.mxu0 0.0
    %2180 = vmatprep.subr.mxu0 0.0
    %2181 = vmatpush1.msra.mxu0 0.0
    %2182 = vmatprep.subr.mxu0 0.0
    %2183 = vmatpush1.msra.mxu0 0.0
    %2184 = vmatprep.subr.mxu0 0.0
    %2185 = vmatpush1.msra.mxu0 0.0
    %2186 = vmatprep.subr.mxu0 0.0
    %2187 = vmatpush1.msra.mxu0 0.0
    %2188 = vmatprep.subr.mxu0 0.0
    %2189 = vmatpush1.msra.mxu0 0.0
    %2190 = vmatprep.subr.mxu0 0.0
    %2191 = vmatpush1.msra.mxu0 0.0
    %2192 = vmatprep.subr.mxu0 0.0
    %2193 = vmatpush1.msra.mxu0 0.0
    %2194 = vmatprep.subr.mxu0 0.0
    %2195 = vmatpush1.msra.mxu0 0.0
    %2196 = vmatprep.subr.mxu0 0.0
    %2197 = vmatpush1.msra.mxu0 0.0
    %2198 = vmatprep.subr.mxu0 0.0
    %2199 = vmatpush1.msra.mxu0 0.0
    %2200 = vmatprep.subr.mxu0 0.0
    %2201 = vmatpush1.msra.mxu0 0.0
    %2202 = vmatprep.subr.mxu0 0.0
    %2203 = vmatpush1.msra.mxu0 0.0
    %2204 = vmatprep.subr.mxu0 0.0
    %2205 = vmatpush1.msra.mxu0 0.0
    %2206 = vmatprep.subr.mxu0 0.0
    %2207 = vmatpush1.msra.mxu0 0.0
    %2208 = vmatprep.subr.mxu0 0.0
    %2209 = vmatpush1.msra.mxu0 0.0
    %2210 = vmatprep.mubr.f32.mxu0 0.0
    %2211 = vmatmul.mubr.f32.gmra.mrb[0].mxu0 %v1966
    %v2212 = vpop.f32.mrb[0].mxu0
    %v2213 = vadd.f32 %v2134, %v2212
    %v2214 = vpop.f32.mrb[0].mxu0
    %v2215 = vadd.f32 %v2138, %v2214
    %2216 = vdwg.mxu0
    %2217 = vmatprep.subr.mxu0 0.0
    %2218 = vmatpush1.msra.mxu0 %v96
    %2219 = vmatprep.subr.mxu0 0.0
    %2220 = vmatpush1.msra.mxu0 %v99
    %2221 = vmatprep.subr.mxu0 0.0
    %2222 = vmatpush1.msra.mxu0 %v102
    %2223 = vmatprep.subr.mxu0 0.0
    %2224 = vmatpush1.msra.mxu0 %v105
    %2225 = vmatprep.subr.mxu0 0.0
    %2226 = vmatpush1.msra.mxu0 0.0
    %2227 = vmatprep.subr.mxu0 0.0
    %2228 = vmatpush1.msra.mxu0 0.0
    %2229 = vmatprep.subr.mxu0 0.0
    %2230 = vmatpush1.msra.mxu0 0.0
    %2231 = vmatprep.subr.mxu0 0.0
    %2232 = vmatpush1.msra.mxu0 0.0
    %2233 = vmatprep.subr.mxu0 0.0
    %2234 = vmatpush1.msra.mxu0 0.0
    %2235 = vmatprep.subr.mxu0 0.0
    %2236 = vmatpush1.msra.mxu0 0.0
    %2237 = vmatprep.subr.mxu0 0.0
    %2238 = vmatpush1.msra.mxu0 0.0
    %2239 = vmatprep.subr.mxu0 0.0
    %2240 = vmatpush1.msra.mxu0 0.0
    %2241 = vmatprep.subr.mxu0 0.0
    %2242 = vmatpush1.msra.mxu0 0.0
    %2243 = vmatprep.subr.mxu0 0.0
    %2244 = vmatpush1.msra.mxu0 0.0
    %2245 = vmatprep.subr.mxu0 0.0
    %2246 = vmatpush1.msra.mxu0 0.0
    %2247 = vmatprep.subr.mxu0 0.0
    %2248 = vmatpush1.msra.mxu0 0.0
    %2249 = vmatprep.subr.mxu0 0.0
    %2250 = vmatpush1.msra.mxu0 0.0
    %2251 = vmatprep.subr.mxu0 0.0
    %2252 = vmatpush1.msra.mxu0 0.0
    %2253 = vmatprep.subr.mxu0 0.0
    %2254 = vmatpush1.msra.mxu0 0.0
    %2255 = vmatprep.subr.mxu0 0.0
    %2256 = vmatpush1.msra.mxu0 0.0
    %2257 = vmatprep.subr.mxu0 0.0
    %2258 = vmatpush1.msra.mxu0 0.0
    %2259 = vmatprep.subr.mxu0 0.0
    %2260 = vmatpush1.msra.mxu0 0.0
    %2261 = vmatprep.subr.mxu0 0.0
    %2262 = vmatpush1.msra.mxu0 0.0
    %2263 = vmatprep.subr.mxu0 0.0
    %2264 = vmatpush1.msra.mxu0 0.0
    %2265 = vmatprep.subr.mxu0 0.0
    %2266 = vmatpush1.msra.mxu0 0.0
    %2267 = vmatprep.subr.mxu0 0.0
    %2268 = vmatpush1.msra.mxu0 0.0
    %2269 = vmatprep.subr.mxu0 0.0
    %2270 = vmatpush1.msra.mxu0 0.0
    %2271 = vmatprep.subr.mxu0 0.0
    %2272 = vmatpush1.msra.mxu0 0.0
    %2273 = vmatprep.subr.mxu0 0.0
    %2274 = vmatpush1.msra.mxu0 0.0
    %2275 = vmatprep.subr.mxu0 0.0
    %2276 = vmatpush1.msra.mxu0 0.0
    %2277 = vmatprep.subr.mxu0 0.0
    %2278 = vmatpush1.msra.mxu0 0.0
    %2279 = vmatprep.subr.mxu0 0.0
    %2280 = vmatpush1.msra.mxu0 0.0
    %2281 = vmatprep.mubr.f32.mxu0 0.0
    %2282 = vmatmul.mubr.f32.gmra.mrb[0].mxu0 %v1966
    %v2283 = vpop.f32.mrb[0].mxu0
    %v2284 = vadd.f32 %v2142, %v2283
    %v2285 = vpop.f32.mrb[0].mxu0
    %2286 = vdwg.mxu0
    %v2287 = vadd.f32 %v2127, %v2213
    %v2288 = vsub.f32 0.0, %v2287
    %v2289 = vmul.f32 %v2288, 1.442695
    %v2290 = vpow.pop %v2289
    %v2291 = vadd.f32 %v2290, 1.0
    %v2292 = vrcp.pop %v2291
    %v2293 = vadd.f32 %v2128, %v2215
    %v2294 = vsub.f32 0.0, %v2293
    %v2295 = vmul.f32 %v2294, 1.442695
    %v2296 = vpow.pop %v2295
    %v2297 = vadd.f32 %v2296, 1.0
    %v2298 = vrcp.pop %v2297
    %v2299 = vmul.f32 %v2292, %v2284
    %v2300 = vadd.f32 %v2129, %v2299
    %v2301 = vtanh.pop %v2300
    %v2302 = vsub.f32 0.0, %v2301
    %v2303 = vmul.f32 %v2298, %v2302
    %v2304 = vadd.f32 %v2301, %v2303
    %vm2305 = vcmp.gt.s32.totalorder %v107, 0
    %v2306 = vsel %vm2305, 1, 0
    %v2307 = vcvt.s32.f32 %v2306
    %vm2308 = vcmp.gt.s32.totalorder %v107, 7
    %v2309 = vsel %vm2308, 1, 0
    %v2310 = vcvt.s32.f32 %v2309
    %2312 = vset.pattern.permute.xlu0 0
    %2313 = vperm.xlu0 %2312, %v2307
    %v2314 = vpop.permute.xlu0 %2313
    %v2316 = vmul.f32 %v2314, %v2126
    %v2317 = vadd.f32 %v2316, 0.0
    %2319 = vset.pattern.permute.xlu0 0
    %2320 = vperm.xlu0 %2319, %v2310
    %v2321 = vpop.permute.xlu0 %2320
    %v2323 = vmul.f32 %v2321, %v2304
    %v2324 = vadd.f32 %v2323, 0.0
    %v2325 = vmul.f32 %v2317, %v2314
    %2326 = vst.msk [vmem:[#allocation4] sm:$0xff] %vm1964, %v2325
    %v2327 = vmul.f32 %v2324, %v2321
    %s2328 = scalar_lea.vmem [#allocation5], 56
    %2329 = vst.msk [vmem:[%s2328] sm:$0xff] %vm1964, %v2327
    %v2330 = vld [vmem:[%s581] sm:$0xff]
    %v2331 = vld [vmem:[%s581 + $0x8] sm:$0xff]
    %v2332 = vld [vmem:[%s581 + $0x10] sm:$0xff]
    %v2334 = vsel %vm1964, %v2317, 0
    %2336 = vmatprep.subr.mxu0 %v82
    %2337 = vmatpush1.msra.mxu0 %v81
    %2338 = vmatprep.subr.mxu0 %v85
    %2339 = vmatpush1.msra.mxu0 %v84
    %2340 = vmatprep.subr.mxu0 %v88
    %2341 = vmatpush1.msra.mxu0 %v87
    %2342 = vmatprep.subr.mxu0 %v91
    %2343 = vmatpush1.msra.mxu0 %v90
    %2344 = vmatprep.subr.mxu0 0.0
    %2345 = vmatpush1.msra.mxu0 0.0
    %2346 = vmatprep.subr.mxu0 0.0
    %2347 = vmatpush1.msra.mxu0 0.0
    %2348 = vmatprep.subr.mxu0 0.0
    %2349 = vmatpush1.msra.mxu0 0.0
    %2350 = vmatprep.subr.mxu0 0.0
    %2351 = vmatpush1.msra.mxu0 0.0
    %2352 = vmatprep.subr.mxu0 0.0
    %2353 = vmatpush1.msra.mxu0 0.0
    %2354 = vmatprep.subr.mxu0 0.0
    %2355 = vmatpush1.msra.mxu0 0.0
    %2356 = vmatprep.subr.mxu0 0.0
    %2357 = vmatpush1.msra.mxu0 0.0
    %2358 = vmatprep.subr.mxu0 0.0
    %2359 = vmatpush1.msra.mxu0 0.0
    %2360 = vmatprep.subr.mxu0 0.0
    %2361 = vmatpush1.msra.mxu0 0.0
    %2362 = vmatprep.subr.mxu0 0.0
    %2363 = vmatpush1.msra.mxu0 0.0
    %2364 = vmatprep.subr.mxu0 0.0
    %2365 = vmatpush1.msra.mxu0 0.0
    %2366 = vmatprep.subr.mxu0 0.0
    %2367 = vmatpush1.msra.mxu0 0.0
    %2368 = vmatprep.subr.mxu0 0.0
    %2369 = vmatpush1.msra.mxu0 0.0
    %2370 = vmatprep.subr.mxu0 0.0
    %2371 = vmatpush1.msra.mxu0 0.0
    %2372 = vmatprep.subr.mxu0 0.0
    %2373 = vmatpush1.msra.mxu0 0.0
    %2374 = vmatprep.subr.mxu0 0.0
    %2375 = vmatpush1.msra.mxu0 0.0
    %2376 = vmatprep.subr.mxu0 0.0
    %2377 = vmatpush1.msra.mxu0 0.0
    %2378 = vmatprep.subr.mxu0 0.0
    %2379 = vmatpush1.msra.mxu0 0.0
    %2380 = vmatprep.subr.mxu0 0.0
    %2381 = vmatpush1.msra.mxu0 0.0
    %2382 = vmatprep.subr.mxu0 0.0
    %2383 = vmatpush1.msra.mxu0 0.0
    %2384 = vmatprep.subr.mxu0 0.0
    %2385 = vmatpush1.msra.mxu0 0.0
    %2386 = vmatprep.subr.mxu0 0.0
    %2387 = vmatpush1.msra.mxu0 0.0
    %2388 = vmatprep.subr.mxu0 0.0
    %2389 = vmatpush1.msra.mxu0 0.0
    %2390 = vmatprep.subr.mxu0 0.0
    %2391 = vmatpush1.msra.mxu0 0.0
    %2392 = vmatprep.subr.mxu0 0.0
    %2393 = vmatpush1.msra.mxu0 0.0
    %2394 = vmatprep.subr.mxu0 0.0
    %2395 = vmatpush1.msra.mxu0 0.0
    %2396 = vmatprep.subr.mxu0 0.0
    %2397 = vmatpush1.msra.mxu0 0.0
    %2398 = vmatprep.subr.mxu0 0.0
    %2399 = vmatpush1.msra.mxu0 0.0
    %2400 = vmatprep.mubr.f32.mxu0 0.0
    %2401 = vmatmul.mubr.f32.gmra.mrb[0].mxu0 %v2334
    %v2402 = vpop.f32.mrb[0].mxu0
    %v2403 = vadd.f32 %v1952, %v2402
    %v2404 = vpop.f32.mrb[0].mxu0
    %v2405 = vadd.f32 %v1956, %v2404
    %2406 = vdwg.mxu0
    %2407 = vmatprep.subr.mxu0 0.0
    %2408 = vmatpush1.msra.mxu0 %v83
    %2409 = vmatprep.subr.mxu0 0.0
    %2410 = vmatpush1.msra.mxu0 %v86
    %2411 = vmatprep.subr.mxu0 0.0
    %2412 = vmatpush1.msra.mxu0 %v89
    %2413 = vmatprep.subr.mxu0 0.0
    %2414 = vmatpush1.msra.mxu0 %v92
    %2415 = vmatprep.subr.mxu0 0.0
    %2416 = vmatpush1.msra.mxu0 0.0
    %2417 = vmatprep.subr.mxu0 0.0
    %2418 = vmatpush1.msra.mxu0 0.0
    %2419 = vmatprep.subr.mxu0 0.0
    %2420 = vmatpush1.msra.mxu0 0.0
    %2421 = vmatprep.subr.mxu0 0.0
    %2422 = vmatpush1.msra.mxu0 0.0
    %2423 = vmatprep.subr.mxu0 0.0
    %2424 = vmatpush1.msra.mxu0 0.0
    %2425 = vmatprep.subr.mxu0 0.0
    %2426 = vmatpush1.msra.mxu0 0.0
    %2427 = vmatprep.subr.mxu0 0.0
    %2428 = vmatpush1.msra.mxu0 0.0
    %2429 = vmatprep.subr.mxu0 0.0
    %2430 = vmatpush1.msra.mxu0 0.0
    %2431 = vmatprep.subr.mxu0 0.0
    %2432 = vmatpush1.msra.mxu0 0.0
    %2433 = vmatprep.subr.mxu0 0.0
    %2434 = vmatpush1.msra.mxu0 0.0
    %2435 = vmatprep.subr.mxu0 0.0
    %2436 = vmatpush1.msra.mxu0 0.0
    %2437 = vmatprep.subr.mxu0 0.0
    %2438 = vmatpush1.msra.mxu0 0.0
    %2439 = vmatprep.subr.mxu0 0.0
    %2440 = vmatpush1.msra.mxu0 0.0
    %2441 = vmatprep.subr.mxu0 0.0
    %2442 = vmatpush1.msra.mxu0 0.0
    %2443 = vmatprep.subr.mxu0 0.0
    %2444 = vmatpush1.msra.mxu0 0.0
    %2445 = vmatprep.subr.mxu0 0.0
    %2446 = vmatpush1.msra.mxu0 0.0
    %2447 = vmatprep.subr.mxu0 0.0
    %2448 = vmatpush1.msra.mxu0 0.0
    %2449 = vmatprep.subr.mxu0 0.0
    %2450 = vmatpush1.msra.mxu0 0.0
    %2451 = vmatprep.subr.mxu0 0.0
    %2452 = vmatpush1.msra.mxu0 0.0
    %2453 = vmatprep.subr.mxu0 0.0
    %2454 = vmatpush1.msra.mxu0 0.0
    %2455 = vmatprep.subr.mxu0 0.0
    %2456 = vmatpush1.msra.mxu0 0.0
    %2457 = vmatprep.subr.mxu0 0.0
    %2458 = vmatpush1.msra.mxu0 0.0
    %2459 = vmatprep.subr.mxu0 0.0
    %2460 = vmatpush1.msra.mxu0 0.0
    %2461 = vmatprep.subr.mxu0 0.0
    %2462 = vmatpush1.msra.mxu0 0.0
    %2463 = vmatprep.subr.mxu0 0.0
    %2464 = vmatpush1.msra.mxu0 0.0
    %2465 = vmatprep.subr.mxu0 0.0
    %2466 = vmatpush1.msra.mxu0 0.0
    %2467 = vmatprep.subr.mxu0 0.0
    %2468 = vmatpush1.msra.mxu0 0.0
    %2469 = vmatprep.subr.mxu0 0.0
    %2470 = vmatpush1.msra.mxu0 0.0
    %2471 = vmatprep.mubr.f32.mxu0 0.0
    %2472 = vmatmul.mubr.f32.gmra.mrb[0].mxu0 %v2334
    %v2473 = vpop.f32.mrb[0].mxu0
    %v2474 = vadd.f32 %v1960, %v2473
    %v2475 = vpop.f32.mrb[0].mxu0
    %2476 = vdwg.mxu0
    %v2477 = vadd.f32 %v2330, %v2403
    %v2478 = vsub.f32 0.0, %v2477
    %v2479 = vmul.f32 %v2478, 1.442695
    %v2480 = vpow.pop %v2479
    %v2481 = vadd.f32 %v2480, 1.0
    %v2482 = vrcp.pop %v2481
    %v2483 = vadd.f32 %v2331, %v2405
    %v2484 = vsub.f32 0.0, %v2483
    %v2485 = vmul.f32 %v2484, 1.442695
    %v2486 = vpow.pop %v2485
    %v2487 = vadd.f32 %v2486, 1.0
    %v2488 = vrcp.pop %v2487
    %v2489 = vmul.f32 %v2482, %v2474
    %v2490 = vadd.f32 %v2332, %v2489
    %v2491 = vtanh.pop %v2490
    %v2492 = vsub.f32 %v2317, %v2491
    %v2493 = vmul.f32 %v2488, %v2492
    %v2494 = vadd.f32 %v2491, %v2493
    %v2495 = vld [vmem:[%s1715] sm:$0xff]
    %v2496 = vld [vmem:[%s1715 + $0x8] sm:$0xff]
    %v2497 = vld [vmem:[%s1715 + $0x10] sm:$0xff]
    %v2499 = vsel %vm1964, %v2324, 0
    %2501 = vmatprep.subr.mxu0 %v95
    %2502 = vmatpush1.msra.mxu0 %v94
    %2503 = vmatprep.subr.mxu0 %v98
    %2504 = vmatpush1.msra.mxu0 %v97
    %2505 = vmatprep.subr.mxu0 %v101
    %2506 = vmatpush1.msra.mxu0 %v100
    %2507 = vmatprep.subr.mxu0 %v104
    %2508 = vmatpush1.msra.mxu0 %v103
    %2509 = vmatprep.subr.mxu0 0.0
    %2510 = vmatpush1.msra.mxu0 0.0
    %2511 = vmatprep.subr.mxu0 0.0
    %2512 = vmatpush1.msra.mxu0 0.0
    %2513 = vmatprep.subr.mxu0 0.0
    %2514 = vmatpush1.msra.mxu0 0.0
    %2515 = vmatprep.subr.mxu0 0.0
    %2516 = vmatpush1.msra.mxu0 0.0
    %2517 = vmatprep.subr.mxu0 0.0
    %2518 = vmatpush1.msra.mxu0 0.0
    %2519 = vmatprep.subr.mxu0 0.0
    %2520 = vmatpush1.msra.mxu0 0.0
    %2521 = vmatprep.subr.mxu0 0.0
    %2522 = vmatpush1.msra.mxu0 0.0
    %2523 = vmatprep.subr.mxu0 0.0
    %2524 = vmatpush1.msra.mxu0 0.0
    %2525 = vmatprep.subr.mxu0 0.0
    %2526 = vmatpush1.msra.mxu0 0.0
    %2527 = vmatprep.subr.mxu0 0.0
    %2528 = vmatpush1.msra.mxu0 0.0
    %2529 = vmatprep.subr.mxu0 0.0
    %2530 = vmatpush1.msra.mxu0 0.0
    %2531 = vmatprep.subr.mxu0 0.0
    %2532 = vmatpush1.msra.mxu0 0.0
    %2533 = vmatprep.subr.mxu0 0.0
    %2534 = vmatpush1.msra.mxu0 0.0
    %2535 = vmatprep.subr.mxu0 0.0
    %2536 = vmatpush1.msra.mxu0 0.0
    %2537 = vmatprep.subr.mxu0 0.0
    %2538 = vmatpush1.msra.mxu0 0.0
    %2539 = vmatprep.subr.mxu0 0.0
    %2540 = vmatpush1.msra.mxu0 0.0
    %2541 = vmatprep.subr.mxu0 0.0
    %2542 = vmatpush1.msra.mxu0 0.0
    %2543 = vmatprep.subr.mxu0 0.0
    %2544 = vmatpush1.msra.mxu0 0.0
    %2545 = vmatprep.subr.mxu0 0.0
    %2546 = vmatpush1.msra.mxu0 0.0
    %2547 = vmatprep.subr.mxu0 0.0
    %2548 = vmatpush1.msra.mxu0 0.0
    %2549 = vmatprep.subr.mxu0 0.0
    %2550 = vmatpush1.msra.mxu0 0.0
    %2551 = vmatprep.subr.mxu0 0.0
    %2552 = vmatpush1.msra.mxu0 0.0
    %2553 = vmatprep.subr.mxu0 0.0
    %2554 = vmatpush1.msra.mxu0 0.0
    %2555 = vmatprep.subr.mxu0 0.0
    %2556 = vmatpush1.msra.mxu0 0.0
    %2557 = vmatprep.subr.mxu0 0.0
    %2558 = vmatpush1.msra.mxu0 0.0
    %2559 = vmatprep.subr.mxu0 0.0
    %2560 = vmatpush1.msra.mxu0 0.0
    %2561 = vmatprep.subr.mxu0 0.0
    %2562 = vmatpush1.msra.mxu0 0.0
    %2563 = vmatprep.subr.mxu0 0.0
    %2564 = vmatpush1.msra.mxu0 0.0
    %2565 = vmatprep.mubr.f32.mxu0 0.0
    %2566 = vmatmul.mubr.f32.gmra.mrb[0].mxu0 %v2499
    %v2567 = vpop.f32.mrb[0].mxu0
    %v2568 = vadd.f32 %v2134, %v2567
    %v2569 = vpop.f32.mrb[0].mxu0
    %v2570 = vadd.f32 %v2138, %v2569
    %2571 = vdwg.mxu0
    %2572 = vmatprep.subr.mxu0 0.0
    %2573 = vmatpush1.msra.mxu0 %v96
    %2574 = vmatprep.subr.mxu0 0.0
    %2575 = vmatpush1.msra.mxu0 %v99
    %2576 = vmatprep.subr.mxu0 0.0
    %2577 = vmatpush1.msra.mxu0 %v102
    %2578 = vmatprep.subr.mxu0 0.0
    %2579 = vmatpush1.msra.mxu0 %v105
    %2580 = vmatprep.subr.mxu0 0.0
    %2581 = vmatpush1.msra.mxu0 0.0
    %2582 = vmatprep.subr.mxu0 0.0
    %2583 = vmatpush1.msra.mxu0 0.0
    %2584 = vmatprep.subr.mxu0 0.0
    %2585 = vmatpush1.msra.mxu0 0.0
    %2586 = vmatprep.subr.mxu0 0.0
    %2587 = vmatpush1.msra.mxu0 0.0
    %2588 = vmatprep.subr.mxu0 0.0
    %2589 = vmatpush1.msra.mxu0 0.0
    %2590 = vmatprep.subr.mxu0 0.0
    %2591 = vmatpush1.msra.mxu0 0.0
    %2592 = vmatprep.subr.mxu0 0.0
    %2593 = vmatpush1.msra.mxu0 0.0
    %2594 = vmatprep.subr.mxu0 0.0
    %2595 = vmatpush1.msra.mxu0 0.0
    %2596 = vmatprep.subr.mxu0 0.0
    %2597 = vmatpush1.msra.mxu0 0.0
    %2598 = vmatprep.subr.mxu0 0.0
    %2599 = vmatpush1.msra.mxu0 0.0
    %2600 = vmatprep.subr.mxu0 0.0
    %2601 = vmatpush1.msra.mxu0 0.0
    %2602 = vmatprep.subr.mxu0 0.0
    %2603 = vmatpush1.msra.mxu0 0.0
    %2604 = vmatprep.subr.mxu0 0.0
    %2605 = vmatpush1.msra.mxu0 0.0
    %2606 = vmatprep.subr.mxu0 0.0
    %2607 = vmatpush1.msra.mxu0 0.0
    %2608 = vmatprep.subr.mxu0 0.0
    %2609 = vmatpush1.msra.mxu0 0.0
    %2610 = vmatprep.subr.mxu0 0.0
    %2611 = vmatpush1.msra.mxu0 0.0
    %2612 = vmatprep.subr.mxu0 0.0
    %2613 = vmatpush1.msra.mxu0 0.0
    %2614 = vmatprep.subr.mxu0 0.0
    %2615 = vmatpush1.msra.mxu0 0.0
    %2616 = vmatprep.subr.mxu0 0.0
    %2617 = vmatpush1.msra.mxu0 0.0
    %2618 = vmatprep.subr.mxu0 0.0
    %2619 = vmatpush1.msra.mxu0 0.0
    %2620 = vmatprep.subr.mxu0 0.0
    %2621 = vmatpush1.msra.mxu0 0.0
    %2622 = vmatprep.subr.mxu0 0.0
    %2623 = vmatpush1.msra.mxu0 0.0
    %2624 = vmatprep.subr.mxu0 0.0
    %2625 = vmatpush1.msra.mxu0 0.0
    %2626 = vmatprep.subr.mxu0 0.0
    %2627 = vmatpush1.msra.mxu0 0.0
    %2628 = vmatprep.subr.mxu0 0.0
    %2629 = vmatpush1.msra.mxu0 0.0
    %2630 = vmatprep.subr.mxu0 0.0
    %2631 = vmatpush1.msra.mxu0 0.0
    %2632 = vmatprep.subr.mxu0 0.0
    %2633 = vmatpush1.msra.mxu0 0.0
    %2634 = vmatprep.subr.mxu0 0.0
    %2635 = vmatpush1.msra.mxu0 0.0
    %2636 = vmatprep.mubr.f32.mxu0 0.0
    %2637 = vmatmul.mubr.f32.gmra.mrb[0].mxu0 %v2499
    %v2638 = vpop.f32.mrb[0].mxu0
    %v2639 = vadd.f32 %v2142, %v2638
    %v2640 = vpop.f32.mrb[0].mxu0
    %2641 = vdwg.mxu0
    %v2642 = vadd.f32 %v2495, %v2568
    %v2643 = vsub.f32 0.0, %v2642
    %v2644 = vmul.f32 %v2643, 1.442695
    %v2645 = vpow.pop %v2644
    %v2646 = vadd.f32 %v2645, 1.0
    %v2647 = vrcp.pop %v2646
    %v2648 = vadd.f32 %v2496, %v2570
    %v2649 = vsub.f32 0.0, %v2648
    %v2650 = vmul.f32 %v2649, 1.442695
    %v2651 = vpow.pop %v2650
    %v2652 = vadd.f32 %v2651, 1.0
    %v2653 = vrcp.pop %v2652
    %v2654 = vmul.f32 %v2647, %v2639
    %v2655 = vadd.f32 %v2497, %v2654
    %v2656 = vtanh.pop %v2655
    %v2657 = vsub.f32 %v2324, %v2656
    %v2658 = vmul.f32 %v2653, %v2657
    %v2659 = vadd.f32 %v2656, %v2658
    %vm2660 = vcmp.gt.s32.totalorder %v107, 1
    %v2661 = vsel %vm2660, 1, 0
    %v2662 = vcvt.s32.f32 %v2661
    %vm2663 = vcmp.gt.s32.totalorder %v107, 6
    %v2664 = vsel %vm2663, 1, 0
    %v2665 = vcvt.s32.f32 %v2664
    %v2666 = vsub.f32 %v2494, %v2317
    %2668 = vset.pattern.permute.xlu0 0
    %2669 = vperm.xlu0 %2668, %v2662
    %v2670 = vpop.permute.xlu0 %2669
    %v2672 = vmul.f32 %v2670, %v2666
    %v2673 = vadd.f32 %v2317, %v2672
    %v2674 = vsub.f32 %v2659, %v2324
    %2676 = vset.pattern.permute.xlu0 0
    %2677 = vperm.xlu0 %2676, %v2665
    %v2678 = vpop.permute.xlu0 %2677
    %v2680 = vmul.f32 %v2678, %v2674
    %v2681 = vadd.f32 %v2324, %v2680
    %v2682 = vmul.f32 %v2673, %v2670
    %s2683 = scalar_lea.vmem [#allocation4], 8
    %2684 = vst.msk [vmem:[%s2683] sm:$0xff] %vm1964, %v2682
    %v2685 = vmul.f32 %v2681, %v2678
    %s2686 = scalar_lea.vmem [#allocation5], 48
    %2687 = vst.msk [vmem:[%s2686] sm:$0xff] %vm1964, %v2685
    %v2688 = vld [vmem:[%s807] sm:$0xff]
    %v2689 = vld [vmem:[%s807 + $0x8] sm:$0xff]
    %v2690 = vld [vmem:[%s807 + $0x10] sm:$0xff]
    %v2692 = vsel %vm1964, %v2673, 0
    %2694 = vmatprep.subr.mxu0 %v82
    %2695 = vmatpush1.msra.mxu0 %v81
    %2696 = vmatprep.subr.mxu0 %v85
    %2697 = vmatpush1.msra.mxu0 %v84
    %2698 = vmatprep.subr.mxu0 %v88
    %2699 = vmatpush1.msra.mxu0 %v87
    %2700 = vmatprep.subr.mxu0 %v91
    %2701 = vmatpush1.msra.mxu0 %v90
    %2702 = vmatprep.subr.mxu0 0.0
    %2703 = vmatpush1.msra.mxu0 0.0
    %2704 = vmatprep.subr.mxu0 0.0
    %2705 = vmatpush1.msra.mxu0 0.0
    %2706 = vmatprep.subr.mxu0 0.0
    %2707 = vmatpush1.msra.mxu0 0.0
    %2708 = vmatprep.subr.mxu0 0.0
    %2709 = vmatpush1.msra.mxu0 0.0
    %2710 = vmatprep.subr.mxu0 0.0
    %2711 = vmatpush1.msra.mxu0 0.0
    %2712 = vmatprep.subr.mxu0 0.0
    %2713 = vmatpush1.msra.mxu0 0.0
    %2714 = vmatprep.subr.mxu0 0.0
    %2715 = vmatpush1.msra.mxu0 0.0
    %2716 = vmatprep.subr.mxu0 0.0
    %2717 = vmatpush1.msra.mxu0 0.0
    %2718 = vmatprep.subr.mxu0 0.0
    %2719 = vmatpush1.msra.mxu0 0.0
    %2720 = vmatprep.subr.mxu0 0.0
    %2721 = vmatpush1.msra.mxu0 0.0
    %2722 = vmatprep.subr.mxu0 0.0
    %2723 = vmatpush1.msra.mxu0 0.0
    %2724 = vmatprep.subr.mxu0 0.0
    %2725 = vmatpush1.msra.mxu0 0.0
    %2726 = vmatprep.subr.mxu0 0.0
    %2727 = vmatpush1.msra.mxu0 0.0
    %2728 = vmatprep.subr.mxu0 0.0
    %2729 = vmatpush1.msra.mxu0 0.0
    %2730 = vmatprep.subr.mxu0 0.0
    %2731 = vmatpush1.msra.mxu0 0.0
    %2732 = vmatprep.subr.mxu0 0.0
    %2733 = vmatpush1.msra.mxu0 0.0
    %2734 = vmatprep.subr.mxu0 0.0
    %2735 = vmatpush1.msra.mxu0 0.0
    %2736 = vmatprep.subr.mxu0 0.0
    %2737 = vmatpush1.msra.mxu0 0.0
    %2738 = vmatprep.subr.mxu0 0.0
    %2739 = vmatpush1.msra.mxu0 0.0
    %2740 = vmatprep.subr.mxu0 0.0
    %2741 = vmatpush1.msra.mxu0 0.0
    %2742 = vmatprep.subr.mxu0 0.0
    %2743 = vmatpush1.msra.mxu0 0.0
    %2744 = vmatprep.subr.mxu0 0.0
    %2745 = vmatpush1.msra.mxu0 0.0
    %2746 = vmatprep.subr.mxu0 0.0
    %2747 = vmatpush1.msra.mxu0 0.0
    %2748 = vmatprep.subr.mxu0 0.0
    %2749 = vmatpush1.msra.mxu0 0.0
    %2750 = vmatprep.subr.mxu0 0.0
    %2751 = vmatpush1.msra.mxu0 0.0
    %2752 = vmatprep.subr.mxu0 0.0
    %2753 = vmatpush1.msra.mxu0 0.0
    %2754 = vmatprep.subr.mxu0 0.0
    %2755 = vmatpush1.msra.mxu0 0.0
    %2756 = vmatprep.subr.mxu0 0.0
    %2757 = vmatpush1.msra.mxu0 0.0
    %2758 = vmatprep.mubr.f32.mxu0 0.0
    %2759 = vmatmul.mubr.f32.gmra.mrb[0].mxu0 %v2692
    %v2760 = vpop.f32.mrb[0].mxu0
    %v2761 = vadd.f32 %v1952, %v2760
    %v2762 = vpop.f32.mrb[0].mxu0
    %v2763 = vadd.f32 %v1956, %v2762
    %2764 = vdwg.mxu0
    %2765 = vmatprep.subr.mxu0 0.0
    %2766 = vmatpush1.msra.mxu0 %v83
    %2767 = vmatprep.subr.mxu0 0.0
    %2768 = vmatpush1.msra.mxu0 %v86
    %2769 = vmatprep.subr.mxu0 0.0
    %2770 = vmatpush1.msra.mxu0 %v89
    %2771 = vmatprep.subr.mxu0 0.0
    %2772 = vmatpush1.msra.mxu0 %v92
    %2773 = vmatprep.subr.mxu0 0.0
    %2774 = vmatpush1.msra.mxu0 0.0
    %2775 = vmatprep.subr.mxu0 0.0
    %2776 = vmatpush1.msra.mxu0 0.0
    %2777 = vmatprep.subr.mxu0 0.0
    %2778 = vmatpush1.msra.mxu0 0.0
    %2779 = vmatprep.subr.mxu0 0.0
    %2780 = vmatpush1.msra.mxu0 0.0
    %2781 = vmatprep.subr.mxu0 0.0
    %2782 = vmatpush1.msra.mxu0 0.0
    %2783 = vmatprep.subr.mxu0 0.0
    %2784 = vmatpush1.msra.mxu0 0.0
    %2785 = vmatprep.subr.mxu0 0.0
    %2786 = vmatpush1.msra.mxu0 0.0
    %2787 = vmatprep.subr.mxu0 0.0
    %2788 = vmatpush1.msra.mxu0 0.0
    %2789 = vmatprep.subr.mxu0 0.0
    %2790 = vmatpush1.msra.mxu0 0.0
    %2791 = vmatprep.subr.mxu0 0.0
    %2792 = vmatpush1.msra.mxu0 0.0
    %2793 = vmatprep.subr.mxu0 0.0
    %2794 = vmatpush1.msra.mxu0 0.0
    %2795 = vmatprep.subr.mxu0 0.0
    %2796 = vmatpush1.msra.mxu0 0.0
    %2797 = vmatprep.subr.mxu0 0.0
    %2798 = vmatpush1.msra.mxu0 0.0
    %2799 = vmatprep.subr.mxu0 0.0
    %2800 = vmatpush1.msra.mxu0 0.0
    %2801 = vmatprep.subr.mxu0 0.0
    %2802 = vmatpush1.msra.mxu0 0.0
    %2803 = vmatprep.subr.mxu0 0.0
    %2804 = vmatpush1.msra.mxu0 0.0
    %2805 = vmatprep.subr.mxu0 0.0
    %2806 = vmatpush1.msra.mxu0 0.0
    %2807 = vmatprep.subr.mxu0 0.0
    %2808 = vmatpush1.msra.mxu0 0.0
    %2809 = vmatprep.subr.mxu0 0.0
    %2810 = vmatpush1.msra.mxu0 0.0
    %2811 = vmatprep.subr.mxu0 0.0
    %2812 = vmatpush1.msra.mxu0 0.0
    %2813 = vmatprep.subr.mxu0 0.0
    %2814 = vmatpush1.msra.mxu0 0.0
    %2815 = vmatprep.subr.mxu0 0.0
    %2816 = vmatpush1.msra.mxu0 0.0
    %2817 = vmatprep.subr.mxu0 0.0
    %2818 = vmatpush1.msra.mxu0 0.0
    %2819 = vmatprep.subr.mxu0 0.0
    %2820 = vmatpush1.msra.mxu0 0.0
    %2821 = vmatprep.subr.mxu0 0.0
    %2822 = vmatpush1.msra.mxu0 0.0
    %2823 = vmatprep.subr.mxu0 0.0
    %2824 = vmatpush1.msra.mxu0 0.0
    %2825 = vmatprep.subr.mxu0 0.0
    %2826 = vmatpush1.msra.mxu0 0.0
    %2827 = vmatprep.subr.mxu0 0.0
    %2828 = vmatpush1.msra.mxu0 0.0
    %2829 = vmatprep.mubr.f32.mxu0 0.0
    %2830 = vmatmul.mubr.f32.gmra.mrb[0].mxu0 %v2692
    %v2831 = vpop.f32.mrb[0].mxu0
    %v2832 = vadd.f32 %v1960, %v2831
    %v2833 = vpop.f32.mrb[0].mxu0
    %2834 = vdwg.mxu0
    %v2835 = vadd.f32 %v2688, %v2761
    %v2836 = vsub.f32 0.0, %v2835
    %v2837 = vmul.f32 %v2836, 1.442695
    %v2838 = vpow.pop %v2837
    %v2839 = vadd.f32 %v2838, 1.0
    %v2840 = vrcp.pop %v2839
    %v2841 = vadd.f32 %v2689, %v2763
    %v2842 = vsub.f32 0.0, %v2841
    %v2843 = vmul.f32 %v2842, 1.442695
    %v2844 = vpow.pop %v2843
    %v2845 = vadd.f32 %v2844, 1.0
    %v2846 = vrcp.pop %v2845
    %v2847 = vmul.f32 %v2840, %v2832
    %v2848 = vadd.f32 %v2690, %v2847
    %v2849 = vtanh.pop %v2848
    %v2850 = vsub.f32 %v2673, %v2849
    %v2851 = vmul.f32 %v2846, %v2850
    %v2852 = vadd.f32 %v2849, %v2851
    %v2853 = vld [vmem:[%s1489] sm:$0xff]
    %v2854 = vld [vmem:[%s1489 + $0x8] sm:$0xff]
    %v2855 = vld [vmem:[%s1489 + $0x10] sm:$0xff]
    %v2857 = vsel %vm1964, %v2681, 0
    %2859 = vmatprep.subr.mxu0 %v95
    %2860 = vmatpush1.msra.mxu0 %v94
    %2861 = vmatprep.subr.mxu0 %v98
    %2862 = vmatpush1.msra.mxu0 %v97
    %2863 = vmatprep.subr.mxu0 %v101
    %2864 = vmatpush1.msra.mxu0 %v100
    %2865 = vmatprep.subr.mxu0 %v104
    %2866 = vmatpush1.msra.mxu0 %v103
    %2867 = vmatprep.subr.mxu0 0.0
    %2868 = vmatpush1.msra.mxu0 0.0
    %2869 = vmatprep.subr.mxu0 0.0
    %2870 = vmatpush1.msra.mxu0 0.0
    %2871 = vmatprep.subr.mxu0 0.0
    %2872 = vmatpush1.msra.mxu0 0.0
    %2873 = vmatprep.subr.mxu0 0.0
    %2874 = vmatpush1.msra.mxu0 0.0
    %2875 = vmatprep.subr.mxu0 0.0
    %2876 = vmatpush1.msra.mxu0 0.0
    %2877 = vmatprep.subr.mxu0 0.0
    %2878 = vmatpush1.msra.mxu0 0.0
    %2879 = vmatprep.subr.mxu0 0.0
    %2880 = vmatpush1.msra.mxu0 0.0
    %2881 = vmatprep.subr.mxu0 0.0
    %2882 = vmatpush1.msra.mxu0 0.0
    %2883 = vmatprep.subr.mxu0 0.0
    %2884 = vmatpush1.msra.mxu0 0.0
    %2885 = vmatprep.subr.mxu0 0.0
    %2886 = vmatpush1.msra.mxu0 0.0
    %2887 = vmatprep.subr.mxu0 0.0
    %2888 = vmatpush1.msra.mxu0 0.0
    %2889 = vmatprep.subr.mxu0 0.0
    %2890 = vmatpush1.msra.mxu0 0.0
    %2891 = vmatprep.subr.mxu0 0.0
    %2892 = vmatpush1.msra.mxu0 0.0
    %2893 = vmatprep.subr.mxu0 0.0
    %2894 = vmatpush1.msra.mxu0 0.0
    %2895 = vmatprep.subr.mxu0 0.0
    %2896 = vmatpush1.msra.mxu0 0.0
    %2897 = vmatprep.subr.mxu0 0.0
    %2898 = vmatpush1.msra.mxu0 0.0
    %2899 = vmatprep.subr.mxu0 0.0
    %2900 = vmatpush1.msra.mxu0 0.0
    %2901 = vmatprep.subr.mxu0 0.0
    %2902 = vmatpush1.msra.mxu0 0.0
    %2903 = vmatprep.subr.mxu0 0.0
    %2904 = vmatpush1.msra.mxu0 0.0
    %2905 = vmatprep.subr.mxu0 0.0
    %2906 = vmatpush1.msra.mxu0 0.0
    %2907 = vmatprep.subr.mxu0 0.0
    %2908 = vmatpush1.msra.mxu0 0.0
    %2909 = vmatprep.subr.mxu0 0.0
    %2910 = vmatpush1.msra.mxu0 0.0
    %2911 = vmatprep.subr.mxu0 0.0
    %2912 = vmatpush1.msra.mxu0 0.0
    %2913 = vmatprep.subr.mxu0 0.0
    %2914 = vmatpush1.msra.mxu0 0.0
    %2915 = vmatprep.subr.mxu0 0.0
    %2916 = vmatpush1.msra.mxu0 0.0
    %2917 = vmatprep.subr.mxu0 0.0
    %2918 = vmatpush1.msra.mxu0 0.0
    %2919 = vmatprep.subr.mxu0 0.0
    %2920 = vmatpush1.msra.mxu0 0.0
    %2921 = vmatprep.subr.mxu0 0.0
    %2922 = vmatpush1.msra.mxu0 0.0
    %2923 = vmatprep.mubr.f32.mxu0 0.0
    %2924 = vmatmul.mubr.f32.gmra.mrb[0].mxu0 %v2857
    %v2925 = vpop.f32.mrb[0].mxu0
    %v2926 = vadd.f32 %v2134, %v2925
    %v2927 = vpop.f32.mrb[0].mxu0
    %v2928 = vadd.f32 %v2138, %v2927
    %2929 = vdwg.mxu0
    %2930 = vmatprep.subr.mxu0 0.0
    %2931 = vmatpush1.msra.mxu0 %v96
    %2932 = vmatprep.subr.mxu0 0.0
    %2933 = vmatpush1.msra.mxu0 %v99
    %2934 = vmatprep.subr.mxu0 0.0
    %2935 = vmatpush1.msra.mxu0 %v102
    %2936 = vmatprep.subr.mxu0 0.0
    %2937 = vmatpush1.msra.mxu0 %v105
    %2938 = vmatprep.subr.mxu0 0.0
    %2939 = vmatpush1.msra.mxu0 0.0
    %2940 = vmatprep.subr.mxu0 0.0
    %2941 = vmatpush1.msra.mxu0 0.0
    %2942 = vmatprep.subr.mxu0 0.0
    %2943 = vmatpush1.msra.mxu0 0.0
    %2944 = vmatprep.subr.mxu0 0.0
    %2945 = vmatpush1.msra.mxu0 0.0
    %2946 = vmatprep.subr.mxu0 0.0
    %2947 = vmatpush1.msra.mxu0 0.0
    %2948 = vmatprep.subr.mxu0 0.0
    %2949 = vmatpush1.msra.mxu0 0.0
    %2950 = vmatprep.subr.mxu0 0.0
    %2951 = vmatpush1.msra.mxu0 0.0
    %2952 = vmatprep.subr.mxu0 0.0
    %2953 = vmatpush1.msra.mxu0 0.0
    %2954 = vmatprep.subr.mxu0 0.0
    %2955 = vmatpush1.msra.mxu0 0.0
    %2956 = vmatprep.subr.mxu0 0.0
    %2957 = vmatpush1.msra.mxu0 0.0
    %2958 = vmatprep.subr.mxu0 0.0
    %2959 = vmatpush1.msra.mxu0 0.0
    %2960 = vmatprep.subr.mxu0 0.0
    %2961 = vmatpush1.msra.mxu0 0.0
    %2962 = vmatprep.subr.mxu0 0.0
    %2963 = vmatpush1.msra.mxu0 0.0
    %2964 = vmatprep.subr.mxu0 0.0
    %2965 = vmatpush1.msra.mxu0 0.0
    %2966 = vmatprep.subr.mxu0 0.0
    %2967 = vmatpush1.msra.mxu0 0.0
    %2968 = vmatprep.subr.mxu0 0.0
    %2969 = vmatpush1.msra.mxu0 0.0
    %2970 = vmatprep.subr.mxu0 0.0
    %2971 = vmatpush1.msra.mxu0 0.0
    %2972 = vmatprep.subr.mxu0 0.0
    %2973 = vmatpush1.msra.mxu0 0.0
    %2974 = vmatprep.subr.mxu0 0.0
    %2975 = vmatpush1.msra.mxu0 0.0
    %2976 = vmatprep.subr.mxu0 0.0
    %2977 = vmatpush1.msra.mxu0 0.0
    %2978 = vmatprep.subr.mxu0 0.0
    %2979 = vmatpush1.msra.mxu0 0.0
    %2980 = vmatprep.subr.mxu0 0.0
    %2981 = vmatpush1.msra.mxu0 0.0
    %2982 = vmatprep.subr.mxu0 0.0
    %2983 = vmatpush1.msra.mxu0 0.0
    %2984 = vmatprep.subr.mxu0 0.0
    %2985 = vmatpush1.msra.mxu0 0.0
    %2986 = vmatprep.subr.mxu0 0.0
    %2987 = vmatpush1.msra.mxu0 0.0
    %2988 = vmatprep.subr.mxu0 0.0
    %2989 = vmatpush1.msra.mxu0 0.0
    %2990 = vmatprep.subr.mxu0 0.0
    %2991 = vmatpush1.msra.mxu0 0.0
    %2992 = vmatprep.subr.mxu0 0.0
    %2993 = vmatpush1.msra.mxu0 0.0
    %2994 = vmatprep.mubr.f32.mxu0 0.0
    %2995 = vmatmul.mubr.f32.gmra.mrb[0].mxu0 %v2857
    %v2996 = vpop.f32.mrb[0].mxu0
    %v2997 = vadd.f32 %v2142, %v2996
    %v2998 = vpop.f32.mrb[0].mxu0
    %2999 = vdwg.mxu0
    %v3000 = vadd.f32 %v2853, %v2926
    %v3001 = vsub.f32 0.0, %v3000
    %v3002 = vmul.f32 %v3001, 1.442695
    %v3003 = vpow.pop %v3002
    %v3004 = vadd.f32 %v3003, 1.0
    %v3005 = vrcp.pop %v3004
    %v3006 = vadd.f32 %v2854, %v2928
    %v3007 = vsub.f32 0.0, %v3006
    %v3008 = vmul.f32 %v3007, 1.442695
    %v3009 = vpow.pop %v3008
    %v3010 = vadd.f32 %v3009, 1.0
    %v3011 = vrcp.pop %v3010
    %v3012 = vmul.f32 %v3005, %v2997
    %v3013 = vadd.f32 %v2855, %v3012
    %v3014 = vtanh.pop %v3013
    %v3015 = vsub.f32 %v2681, %v3014
    %v3016 = vmul.f32 %v3011, %v3015
    %v3017 = vadd.f32 %v3014, %v3016
    %vm3018 = vcmp.gt.s32.totalorder %v107, 2
    %v3019 = vsel %vm3018, 1, 0
    %v3020 = vcvt.s32.f32 %v3019
    %vm3021 = vcmp.gt.s32.totalorder %v107, 5
    %v3022 = vsel %vm3021, 1, 0
    %v3023 = vcvt.s32.f32 %v3022
    %v3024 = vsub.f32 %v2852, %v2673
    %3026 = vset.pattern.permute.xlu0 0
    %3027 = vperm.xlu0 %3026, %v3020
    %v3028 = vpop.permute.xlu0 %3027
    %v3030 = vmul.f32 %v3028, %v3024
    %v3031 = vadd.f32 %v2673, %v3030
    %v3032 = vsub.f32 %v3017, %v2681
    %3034 = vset.pattern.permute.xlu0 0
    %3035 = vperm.xlu0 %3034, %v3023
    %v3036 = vpop.permute.xlu0 %3035
    %v3038 = vmul.f32 %v3036, %v3032
    %v3039 = vadd.f32 %v2681, %v3038
    %v3040 = vmul.f32 %v3031, %v3028
    %s3041 = scalar_lea.vmem [#allocation4], 16
    %3042 = vst.msk [vmem:[%s3041] sm:$0xff] %vm1964, %v3040
    %v3043 = vmul.f32 %v3039, %v3036
    %s3044 = scalar_lea.vmem [#allocation5], 40
    %3045 = vst.msk [vmem:[%s3044] sm:$0xff] %vm1964, %v3043
    %v3046 = vld [vmem:[%s1033] sm:$0xff]
    %v3047 = vld [vmem:[%s1033 + $0x8] sm:$0xff]
    %v3048 = vld [vmem:[%s1033 + $0x10] sm:$0xff]
    %v3050 = vsel %vm1964, %v3031, 0
    %3052 = vmatprep.subr.mxu0 %v82
    %3053 = vmatpush1.msra.mxu0 %v81
    %3054 = vmatprep.subr.mxu0 %v85
    %3055 = vmatpush1.msra.mxu0 %v84
    %3056 = vmatprep.subr.mxu0 %v88
    %3057 = vmatpush1.msra.mxu0 %v87
    %3058 = vmatprep.subr.mxu0 %v91
    %3059 = vmatpush1.msra.mxu0 %v90
    %3060 = vmatprep.subr.mxu0 0.0
    %3061 = vmatpush1.msra.mxu0 0.0
    %3062 = vmatprep.subr.mxu0 0.0
    %3063 = vmatpush1.msra.mxu0 0.0
    %3064 = vmatprep.subr.mxu0 0.0
    %3065 = vmatpush1.msra.mxu0 0.0
    %3066 = vmatprep.subr.mxu0 0.0
    %3067 = vmatpush1.msra.mxu0 0.0
    %3068 = vmatprep.subr.mxu0 0.0
    %3069 = vmatpush1.msra.mxu0 0.0
    %3070 = vmatprep.subr.mxu0 0.0
    %3071 = vmatpush1.msra.mxu0 0.0
    %3072 = vmatprep.subr.mxu0 0.0
    %3073 = vmatpush1.msra.mxu0 0.0
    %3074 = vmatprep.subr.mxu0 0.0
    %3075 = vmatpush1.msra.mxu0 0.0
    %3076 = vmatprep.subr.mxu0 0.0
    %3077 = vmatpush1.msra.mxu0 0.0
    %3078 = vmatprep.subr.mxu0 0.0
    %3079 = vmatpush1.msra.mxu0 0.0
    %3080 = vmatprep.subr.mxu0 0.0
    %3081 = vmatpush1.msra.mxu0 0.0
    %3082 = vmatprep.subr.mxu0 0.0
    %3083 = vmatpush1.msra.mxu0 0.0
    %3084 = vmatprep.subr.mxu0 0.0
    %3085 = vmatpush1.msra.mxu0 0.0
    %3086 = vmatprep.subr.mxu0 0.0
    %3087 = vmatpush1.msra.mxu0 0.0
    %3088 = vmatprep.subr.mxu0 0.0
    %3089 = vmatpush1.msra.mxu0 0.0
    %3090 = vmatprep.subr.mxu0 0.0
    %3091 = vmatpush1.msra.mxu0 0.0
    %3092 = vmatprep.subr.mxu0 0.0
    %3093 = vmatpush1.msra.mxu0 0.0
    %3094 = vmatprep.subr.mxu0 0.0
    %3095 = vmatpush1.msra.mxu0 0.0
    %3096 = vmatprep.subr.mxu0 0.0
    %3097 = vmatpush1.msra.mxu0 0.0
    %3098 = vmatprep.subr.mxu0 0.0
    %3099 = vmatpush1.msra.mxu0 0.0
    %3100 = vmatprep.subr.mxu0 0.0
    %3101 = vmatpush1.msra.mxu0 0.0
    %3102 = vmatprep.subr.mxu0 0.0
    %3103 = vmatpush1.msra.mxu0 0.0
    %3104 = vmatprep.subr.mxu0 0.0
    %3105 = vmatpush1.msra.mxu0 0.0
    %3106 = vmatprep.subr.mxu0 0.0
    %3107 = vmatpush1.msra.mxu0 0.0
    %3108 = vmatprep.subr.mxu0 0.0
    %3109 = vmatpush1.msra.mxu0 0.0
    %3110 = vmatprep.subr.mxu0 0.0
    %3111 = vmatpush1.msra.mxu0 0.0
    %3112 = vmatprep.subr.mxu0 0.0
    %3113 = vmatpush1.msra.mxu0 0.0
    %3114 = vmatprep.subr.mxu0 0.0
    %3115 = vmatpush1.msra.mxu0 0.0
    %3116 = vmatprep.mubr.f32.mxu0 0.0
    %3117 = vmatmul.mubr.f32.gmra.mrb[0].mxu0 %v3050
    %v3118 = vpop.f32.mrb[0].mxu0
    %v3119 = vadd.f32 %v1952, %v3118
    %v3120 = vpop.f32.mrb[0].mxu0
    %v3121 = vadd.f32 %v1956, %v3120
    %3122 = vdwg.mxu0
    %3123 = vmatprep.subr.mxu0 0.0
    %3124 = vmatpush1.msra.mxu0 %v83
    %3125 = vmatprep.subr.mxu0 0.0
    %3126 = vmatpush1.msra.mxu0 %v86
    %3127 = vmatprep.subr.mxu0 0.0
    %3128 = vmatpush1.msra.mxu0 %v89
    %3129 = vmatprep.subr.mxu0 0.0
    %3130 = vmatpush1.msra.mxu0 %v92
    %3131 = vmatprep.subr.mxu0 0.0
    %3132 = vmatpush1.msra.mxu0 0.0
    %3133 = vmatprep.subr.mxu0 0.0
    %3134 = vmatpush1.msra.mxu0 0.0
    %3135 = vmatprep.subr.mxu0 0.0
    %3136 = vmatpush1.msra.mxu0 0.0
    %3137 = vmatprep.subr.mxu0 0.0
    %3138 = vmatpush1.msra.mxu0 0.0
    %3139 = vmatprep.subr.mxu0 0.0
    %3140 = vmatpush1.msra.mxu0 0.0
    %3141 = vmatprep.subr.mxu0 0.0
    %3142 = vmatpush1.msra.mxu0 0.0
    %3143 = vmatprep.subr.mxu0 0.0
    %3144 = vmatpush1.msra.mxu0 0.0
    %3145 = vmatprep.subr.mxu0 0.0
    %3146 = vmatpush1.msra.mxu0 0.0
    %3147 = vmatprep.subr.mxu0 0.0
    %3148 = vmatpush1.msra.mxu0 0.0
    %3149 = vmatprep.subr.mxu0 0.0
    %3150 = vmatpush1.msra.mxu0 0.0
    %3151 = vmatprep.subr.mxu0 0.0
    %3152 = vmatpush1.msra.mxu0 0.0
    %3153 = vmatprep.subr.mxu0 0.0
    %3154 = vmatpush1.msra.mxu0 0.0
    %3155 = vmatprep.subr.mxu0 0.0
    %3156 = vmatpush1.msra.mxu0 0.0
    %3157 = vmatprep.subr.mxu0 0.0
    %3158 = vmatpush1.msra.mxu0 0.0
    %3159 = vmatprep.subr.mxu0 0.0
    %3160 = vmatpush1.msra.mxu0 0.0
    %3161 = vmatprep.subr.mxu0 0.0
    %3162 = vmatpush1.msra.mxu0 0.0
    %3163 = vmatprep.subr.mxu0 0.0
    %3164 = vmatpush1.msra.mxu0 0.0
    %3165 = vmatprep.subr.mxu0 0.0
    %3166 = vmatpush1.msra.mxu0 0.0
    %3167 = vmatprep.subr.mxu0 0.0
    %3168 = vmatpush1.msra.mxu0 0.0
    %3169 = vmatprep.subr.mxu0 0.0
    %3170 = vmatpush1.msra.mxu0 0.0
    %3171 = vmatprep.subr.mxu0 0.0
    %3172 = vmatpush1.msra.mxu0 0.0
    %3173 = vmatprep.subr.mxu0 0.0
    %3174 = vmatpush1.msra.mxu0 0.0
    %3175 = vmatprep.subr.mxu0 0.0
    %3176 = vmatpush1.msra.mxu0 0.0
    %3177 = vmatprep.subr.mxu0 0.0
    %3178 = vmatpush1.msra.mxu0 0.0
    %3179 = vmatprep.subr.mxu0 0.0
    %3180 = vmatpush1.msra.mxu0 0.0
    %3181 = vmatprep.subr.mxu0 0.0
    %3182 = vmatpush1.msra.mxu0 0.0
    %3183 = vmatprep.subr.mxu0 0.0
    %3184 = vmatpush1.msra.mxu0 0.0
    %3185 = vmatprep.subr.mxu0 0.0
    %3186 = vmatpush1.msra.mxu0 0.0
    %3187 = vmatprep.mubr.f32.mxu0 0.0
    %3188 = vmatmul.mubr.f32.gmra.mrb[0].mxu0 %v3050
    %v3189 = vpop.f32.mrb[0].mxu0
    %v3190 = vadd.f32 %v1960, %v3189
    %v3191 = vpop.f32.mrb[0].mxu0
    %3192 = vdwg.mxu0
    %v3193 = vadd.f32 %v3046, %v3119
    %v3194 = vsub.f32 0.0, %v3193
    %v3195 = vmul.f32 %v3194, 1.442695
    %v3196 = vpow.pop %v3195
    %v3197 = vadd.f32 %v3196, 1.0
    %v3198 = vrcp.pop %v3197
    %v3199 = vadd.f32 %v3047, %v3121
    %v3200 = vsub.f32 0.0, %v3199
    %v3201 = vmul.f32 %v3200, 1.442695
    %v3202 = vpow.pop %v3201
    %v3203 = vadd.f32 %v3202, 1.0
    %v3204 = vrcp.pop %v3203
    %v3205 = vmul.f32 %v3198, %v3190
    %v3206 = vadd.f32 %v3048, %v3205
    %v3207 = vtanh.pop %v3206
    %v3208 = vsub.f32 %v3031, %v3207
    %v3209 = vmul.f32 %v3204, %v3208
    %v3210 = vadd.f32 %v3207, %v3209
    %v3211 = vld [vmem:[%s1263] sm:$0xff]
    %v3212 = vld [vmem:[%s1263 + $0x8] sm:$0xff]
    %v3213 = vld [vmem:[%s1263 + $0x10] sm:$0xff]
    %v3215 = vsel %vm1964, %v3039, 0
    %3217 = vmatprep.subr.mxu0 %v95
    %3218 = vmatpush1.msra.mxu0 %v94
    %3219 = vmatprep.subr.mxu0 %v98
    %3220 = vmatpush1.msra.mxu0 %v97
    %3221 = vmatprep.subr.mxu0 %v101
    %3222 = vmatpush1.msra.mxu0 %v100
    %3223 = vmatprep.subr.mxu0 %v104
    %3224 = vmatpush1.msra.mxu0 %v103
    %3225 = vmatprep.subr.mxu0 0.0
    %3226 = vmatpush1.msra.mxu0 0.0
    %3227 = vmatprep.subr.mxu0 0.0
    %3228 = vmatpush1.msra.mxu0 0.0
    %3229 = vmatprep.subr.mxu0 0.0
    %3230 = vmatpush1.msra.mxu0 0.0
    %3231 = vmatprep.subr.mxu0 0.0
    %3232 = vmatpush1.msra.mxu0 0.0
    %3233 = vmatprep.subr.mxu0 0.0
    %3234 = vmatpush1.msra.mxu0 0.0
    %3235 = vmatprep.subr.mxu0 0.0
    %3236 = vmatpush1.msra.mxu0 0.0
    %3237 = vmatprep.subr.mxu0 0.0
    %3238 = vmatpush1.msra.mxu0 0.0
    %3239 = vmatprep.subr.mxu0 0.0
    %3240 = vmatpush1.msra.mxu0 0.0
    %3241 = vmatprep.subr.mxu0 0.0
    %3242 = vmatpush1.msra.mxu0 0.0
    %3243 = vmatprep.subr.mxu0 0.0
    %3244 = vmatpush1.msra.mxu0 0.0
    %3245 = vmatprep.subr.mxu0 0.0
    %3246 = vmatpush1.msra.mxu0 0.0
    %3247 = vmatprep.subr.mxu0 0.0
    %3248 = vmatpush1.msra.mxu0 0.0
    %3249 = vmatprep.subr.mxu0 0.0
    %3250 = vmatpush1.msra.mxu0 0.0
    %3251 = vmatprep.subr.mxu0 0.0
    %3252 = vmatpush1.msra.mxu0 0.0
    %3253 = vmatprep.subr.mxu0 0.0
    %3254 = vmatpush1.msra.mxu0 0.0
    %3255 = vmatprep.subr.mxu0 0.0
    %3256 = vmatpush1.msra.mxu0 0.0
    %3257 = vmatprep.subr.mxu0 0.0
    %3258 = vmatpush1.msra.mxu0 0.0
    %3259 = vmatprep.subr.mxu0 0.0
    %3260 = vmatpush1.msra.mxu0 0.0
    %3261 = vmatprep.subr.mxu0 0.0
    %3262 = vmatpush1.msra.mxu0 0.0
    %3263 = vmatprep.subr.mxu0 0.0
    %3264 = vmatpush1.msra.mxu0 0.0
    %3265 = vmatprep.subr.mxu0 0.0
    %3266 = vmatpush1.msra.mxu0 0.0
    %3267 = vmatprep.subr.mxu0 0.0
    %3268 = vmatpush1.msra.mxu0 0.0
    %3269 = vmatprep.subr.mxu0 0.0
    %3270 = vmatpush1.msra.mxu0 0.0
    %3271 = vmatprep.subr.mxu0 0.0
    %3272 = vmatpush1.msra.mxu0 0.0
    %3273 = vmatprep.subr.mxu0 0.0
    %3274 = vmatpush1.msra.mxu0 0.0
    %3275 = vmatprep.subr.mxu0 0.0
    %3276 = vmatpush1.msra.mxu0 0.0
    %3277 = vmatprep.subr.mxu0 0.0
    %3278 = vmatpush1.msra.mxu0 0.0
    %3279 = vmatprep.subr.mxu0 0.0
    %3280 = vmatpush1.msra.mxu0 0.0
    %3281 = vmatprep.mubr.f32.mxu0 0.0
    %3282 = vmatmul.mubr.f32.gmra.mrb[0].mxu0 %v3215
    %v3283 = vpop.f32.mrb[0].mxu0
    %v3284 = vadd.f32 %v2134, %v3283
    %v3285 = vpop.f32.mrb[0].mxu0
    %v3286 = vadd.f32 %v2138, %v3285
    %3287 = vdwg.mxu0
    %3288 = vmatprep.subr.mxu0 0.0
    %3289 = vmatpush1.msra.mxu0 %v96
    %3290 = vmatprep.subr.mxu0 0.0
    %3291 = vmatpush1.msra.mxu0 %v99
    %3292 = vmatprep.subr.mxu0 0.0
    %3293 = vmatpush1.msra.mxu0 %v102
    %3294 = vmatprep.subr.mxu0 0.0
    %3295 = vmatpush1.msra.mxu0 %v105
    %3296 = vmatprep.subr.mxu0 0.0
    %3297 = vmatpush1.msra.mxu0 0.0
    %3298 = vmatprep.subr.mxu0 0.0
    %3299 = vmatpush1.msra.mxu0 0.0
    %3300 = vmatprep.subr.mxu0 0.0
    %3301 = vmatpush1.msra.mxu0 0.0
    %3302 = vmatprep.subr.mxu0 0.0
    %3303 = vmatpush1.msra.mxu0 0.0
    %3304 = vmatprep.subr.mxu0 0.0
    %3305 = vmatpush1.msra.mxu0 0.0
    %3306 = vmatprep.subr.mxu0 0.0
    %3307 = vmatpush1.msra.mxu0 0.0
    %3308 = vmatprep.subr.mxu0 0.0
    %3309 = vmatpush1.msra.mxu0 0.0
    %3310 = vmatprep.subr.mxu0 0.0
    %3311 = vmatpush1.msra.mxu0 0.0
    %3312 = vmatprep.subr.mxu0 0.0
    %3313 = vmatpush1.msra.mxu0 0.0
    %3314 = vmatprep.subr.mxu0 0.0
    %3315 = vmatpush1.msra.mxu0 0.0
    %3316 = vmatprep.subr.mxu0 0.0
    %3317 = vmatpush1.msra.mxu0 0.0
    %3318 = vmatprep.subr.mxu0 0.0
    %3319 = vmatpush1.msra.mxu0 0.0
    %3320 = vmatprep.subr.mxu0 0.0
    %3321 = vmatpush1.msra.mxu0 0.0
    %3322 = vmatprep.subr.mxu0 0.0
    %3323 = vmatpush1.msra.mxu0 0.0
    %3324 = vmatprep.subr.mxu0 0.0
    %3325 = vmatpush1.msra.mxu0 0.0
    %3326 = vmatprep.subr.mxu0 0.0
    %3327 = vmatpush1.msra.mxu0 0.0
    %3328 = vmatprep.subr.mxu0 0.0
    %3329 = vmatpush1.msra.mxu0 0.0
    %3330 = vmatprep.subr.mxu0 0.0
    %3331 = vmatpush1.msra.mxu0 0.0
    %3332 = vmatprep.subr.mxu0 0.0
    %3333 = vmatpush1.msra.mxu0 0.0
    %3334 = vmatprep.subr.mxu0 0.0
    %3335 = vmatpush1.msra.mxu0 0.0
    %3336 = vmatprep.subr.mxu0 0.0
    %3337 = vmatpush1.msra.mxu0 0.0
    %3338 = vmatprep.subr.mxu0 0.0
    %3339 = vmatpush1.msra.mxu0 0.0
    %3340 = vmatprep.subr.mxu0 0.0
    %3341 = vmatpush1.msra.mxu0 0.0
    %3342 = vmatprep.subr.mxu0 0.0
    %3343 = vmatpush1.msra.mxu0 0.0
    %3344 = vmatprep.subr.mxu0 0.0
    %3345 = vmatpush1.msra.mxu0 0.0
    %3346 = vmatprep.subr.mxu0 0.0
    %3347 = vmatpush1.msra.mxu0 0.0
    %3348 = vmatprep.subr.mxu0 0.0
    %3349 = vmatpush1.msra.mxu0 0.0
    %3350 = vmatprep.subr.mxu0 0.0
    %3351 = vmatpush1.msra.mxu0 0.0
    %3352 = vmatprep.mubr.f32.mxu0 0.0
    %3353 = vmatmul.mubr.f32.gmra.mrb[0].mxu0 %v3215
    %v3354 = vpop.f32.mrb[0].mxu0
    %v3355 = vadd.f32 %v2142, %v3354
    %v3356 = vpop.f32.mrb[0].mxu0
    %3357 = vdwg.mxu0
    %v3358 = vadd.f32 %v3211, %v3284
    %v3359 = vsub.f32 0.0, %v3358
    %v3360 = vmul.f32 %v3359, 1.442695
    %v3361 = vpow.pop %v3360
    %v3362 = vadd.f32 %v3361, 1.0
    %v3363 = vrcp.pop %v3362
    %v3364 = vadd.f32 %v3212, %v3286
    %v3365 = vsub.f32 0.0, %v3364
    %v3366 = vmul.f32 %v3365, 1.442695
    %v3367 = vpow.pop %v3366
    %v3368 = vadd.f32 %v3367, 1.0
    %v3369 = vrcp.pop %v3368
    %v3370 = vmul.f32 %v3363, %v3355
    %v3371 = vadd.f32 %v3213, %v3370
    %v3372 = vtanh.pop %v3371
    %v3373 = vsub.f32 %v3039, %v3372
    %v3374 = vmul.f32 %v3369, %v3373
    %v3375 = vadd.f32 %v3372, %v3374
    %vm3376 = vcmp.gt.s32.totalorder %v107, 3
    %v3377 = vsel %vm3376, 1, 0
    %v3378 = vcvt.s32.f32 %v3377
    %vm3379 = vcmp.gt.s32.totalorder %v107, 4
    %v3380 = vsel %vm3379, 1, 0
    %v3381 = vcvt.s32.f32 %v3380
    %v3382 = vsub.f32 %v3210, %v3031
    %3384 = vset.pattern.permute.xlu0 0
    %3385 = vperm.xlu0 %3384, %v3378
    %v3386 = vpop.permute.xlu0 %3385
    %v3388 = vmul.f32 %v3386, %v3382
    %v3389 = vadd.f32 %v3031, %v3388
    %v3390 = vsub.f32 %v3375, %v3039
    %3392 = vset.pattern.permute.xlu0 0
    %3393 = vperm.xlu0 %3392, %v3381
    %v3394 = vpop.permute.xlu0 %3393
    %v3396 = vmul.f32 %v3394, %v3390
    %v3397 = vadd.f32 %v3039, %v3396
    %v3398 = vmul.f32 %v3389, %v3386
    %s3399 = scalar_lea.vmem [#allocation4], 24
    %3400 = vst.msk [vmem:[%s3399] sm:$0xff] %vm1964, %v3398
    %v3401 = vmul.f32 %v3397, %v3394
    %s3402 = scalar_lea.vmem [#allocation5], 32
    %3403 = vst.msk [vmem:[%s3402] sm:$0xff] %vm1964, %v3401
    %v3404 = vld [vmem:[%s1259] sm:$0xff]
    %v3405 = vld [vmem:[%s1259 + $0x8] sm:$0xff]
    %v3406 = vld [vmem:[%s1259 + $0x10] sm:$0xff]
    %v3408 = vsel %vm1964, %v3389, 0
    %3410 = vmatprep.subr.mxu0 %v82
    %3411 = vmatpush1.msra.mxu0 %v81
    %3412 = vmatprep.subr.mxu0 %v85
    %3413 = vmatpush1.msra.mxu0 %v84
    %3414 = vmatprep.subr.mxu0 %v88
    %3415 = vmatpush1.msra.mxu0 %v87
    %3416 = vmatprep.subr.mxu0 %v91
    %3417 = vmatpush1.msra.mxu0 %v90
    %3418 = vmatprep.subr.mxu0 0.0
    %3419 = vmatpush1.msra.mxu0 0.0
    %3420 = vmatprep.subr.mxu0 0.0
    %3421 = vmatpush1.msra.mxu0 0.0
    %3422 = vmatprep.subr.mxu0 0.0
    %3423 = vmatpush1.msra.mxu0 0.0
    %3424 = vmatprep.subr.mxu0 0.0
    %3425 = vmatpush1.msra.mxu0 0.0
    %3426 = vmatprep.subr.mxu0 0.0
    %3427 = vmatpush1.msra.mxu0 0.0
    %3428 = vmatprep.subr.mxu0 0.0
    %3429 = vmatpush1.msra.mxu0 0.0
    %3430 = vmatprep.subr.mxu0 0.0
    %3431 = vmatpush1.msra.mxu0 0.0
    %3432 = vmatprep.subr.mxu0 0.0
    %3433 = vmatpush1.msra.mxu0 0.0
    %3434 = vmatprep.subr.mxu0 0.0
    %3435 = vmatpush1.msra.mxu0 0.0
    %3436 = vmatprep.subr.mxu0 0.0
    %3437 = vmatpush1.msra.mxu0 0.0
    %3438 = vmatprep.subr.mxu0 0.0
    %3439 = vmatpush1.msra.mxu0 0.0
    %3440 = vmatprep.subr.mxu0 0.0
    %3441 = vmatpush1.msra.mxu0 0.0
    %3442 = vmatprep.subr.mxu0 0.0
    %3443 = vmatpush1.msra.mxu0 0.0
    %3444 = vmatprep.subr.mxu0 0.0
    %3445 = vmatpush1.msra.mxu0 0.0
    %3446 = vmatprep.subr.mxu0 0.0
    %3447 = vmatpush1.msra.mxu0 0.0
    %3448 = vmatprep.subr.mxu0 0.0
    %3449 = vmatpush1.msra.mxu0 0.0
    %3450 = vmatprep.subr.mxu0 0.0
    %3451 = vmatpush1.msra.mxu0 0.0
    %3452 = vmatprep.subr.mxu0 0.0
    %3453 = vmatpush1.msra.mxu0 0.0
    %3454 = vmatprep.subr.mxu0 0.0
    %3455 = vmatpush1.msra.mxu0 0.0
    %3456 = vmatprep.subr.mxu0 0.0
    %3457 = vmatpush1.msra.mxu0 0.0
    %3458 = vmatprep.subr.mxu0 0.0
    %3459 = vmatpush1.msra.mxu0 0.0
    %3460 = vmatprep.subr.mxu0 0.0
    %3461 = vmatpush1.msra.mxu0 0.0
    %3462 = vmatprep.subr.mxu0 0.0
    %3463 = vmatpush1.msra.mxu0 0.0
    %3464 = vmatprep.subr.mxu0 0.0
    %3465 = vmatpush1.msra.mxu0 0.0
    %3466 = vmatprep.subr.mxu0 0.0
    %3467 = vmatpush1.msra.mxu0 0.0
    %3468 = vmatprep.subr.mxu0 0.0
    %3469 = vmatpush1.msra.mxu0 0.0
    %3470 = vmatprep.subr.mxu0 0.0
    %3471 = vmatpush1.msra.mxu0 0.0
    %3472 = vmatprep.subr.mxu0 0.0
    %3473 = vmatpush1.msra.mxu0 0.0
    %3474 = vmatprep.mubr.f32.mxu0 0.0
    %3475 = vmatmul.mubr.f32.gmra.mrb[0].mxu0 %v3408
    %v3476 = vpop.f32.mrb[0].mxu0
    %v3477 = vadd.f32 %v1952, %v3476
    %v3478 = vpop.f32.mrb[0].mxu0
    %v3479 = vadd.f32 %v1956, %v3478
    %3480 = vdwg.mxu0
    %3481 = vmatprep.subr.mxu0 0.0
    %3482 = vmatpush1.msra.mxu0 %v83
    %3483 = vmatprep.subr.mxu0 0.0
    %3484 = vmatpush1.msra.mxu0 %v86
    %3485 = vmatprep.subr.mxu0 0.0
    %3486 = vmatpush1.msra.mxu0 %v89
    %3487 = vmatprep.subr.mxu0 0.0
    %3488 = vmatpush1.msra.mxu0 %v92
    %3489 = vmatprep.subr.mxu0 0.0
    %3490 = vmatpush1.msra.mxu0 0.0
    %3491 = vmatprep.subr.mxu0 0.0
    %3492 = vmatpush1.msra.mxu0 0.0
    %3493 = vmatprep.subr.mxu0 0.0
    %3494 = vmatpush1.msra.mxu0 0.0
    %3495 = vmatprep.subr.mxu0 0.0
    %3496 = vmatpush1.msra.mxu0 0.0
    %3497 = vmatprep.subr.mxu0 0.0
    %3498 = vmatpush1.msra.mxu0 0.0
    %3499 = vmatprep.subr.mxu0 0.0
    %3500 = vmatpush1.msra.mxu0 0.0
    %3501 = vmatprep.subr.mxu0 0.0
    %3502 = vmatpush1.msra.mxu0 0.0
    %3503 = vmatprep.subr.mxu0 0.0
    %3504 = vmatpush1.msra.mxu0 0.0
    %3505 = vmatprep.subr.mxu0 0.0
    %3506 = vmatpush1.msra.mxu0 0.0
    %3507 = vmatprep.subr.mxu0 0.0
    %3508 = vmatpush1.msra.mxu0 0.0
    %3509 = vmatprep.subr.mxu0 0.0
    %3510 = vmatpush1.msra.mxu0 0.0
    %3511 = vmatprep.subr.mxu0 0.0
    %3512 = vmatpush1.msra.mxu0 0.0
    %3513 = vmatprep.subr.mxu0 0.0
    %3514 = vmatpush1.msra.mxu0 0.0
    %3515 = vmatprep.subr.mxu0 0.0
    %3516 = vmatpush1.msra.mxu0 0.0
    %3517 = vmatprep.subr.mxu0 0.0
    %3518 = vmatpush1.msra.mxu0 0.0
    %3519 = vmatprep.subr.mxu0 0.0
    %3520 = vmatpush1.msra.mxu0 0.0
    %3521 = vmatprep.subr.mxu0 0.0
    %3522 = vmatpush1.msra.mxu0 0.0
    %3523 = vmatprep.subr.mxu0 0.0
    %3524 = vmatpush1.msra.mxu0 0.0
    %3525 = vmatprep.subr.mxu0 0.0
    %3526 = vmatpush1.msra.mxu0 0.0
    %3527 = vmatprep.subr.mxu0 0.0
    %3528 = vmatpush1.msra.mxu0 0.0
    %3529 = vmatprep.subr.mxu0 0.0
    %3530 = vmatpush1.msra.mxu0 0.0
    %3531 = vmatprep.subr.mxu0 0.0
    %3532 = vmatpush1.msra.mxu0 0.0
    %3533 = vmatprep.subr.mxu0 0.0
    %3534 = vmatpush1.msra.mxu0 0.0
    %3535 = vmatprep.subr.mxu0 0.0
    %3536 = vmatpush1.msra.mxu0 0.0
    %3537 = vmatprep.subr.mxu0 0.0
    %3538 = vmatpush1.msra.mxu0 0.0
    %3539 = vmatprep.subr.mxu0 0.0
    %3540 = vmatpush1.msra.mxu0 0.0
    %3541 = vmatprep.subr.mxu0 0.0
    %3542 = vmatpush1.msra.mxu0 0.0
    %3543 = vmatprep.subr.mxu0 0.0
    %3544 = vmatpush1.msra.mxu0 0.0
    %3545 = vmatprep.mubr.f32.mxu0 0.0
    %3546 = vmatmul.mubr.f32.gmra.mrb[0].mxu0 %v3408
    %v3547 = vpop.f32.mrb[0].mxu0
    %v3548 = vadd.f32 %v1960, %v3547
    %v3549 = vpop.f32.mrb[0].mxu0
    %3550 = vdwg.mxu0
    %v3551 = vadd.f32 %v3404, %v3477
    %v3552 = vsub.f32 0.0, %v3551
    %v3553 = vmul.f32 %v3552, 1.442695
    %v3554 = vpow.pop %v3553
    %v3555 = vadd.f32 %v3554, 1.0
    %v3556 = vrcp.pop %v3555
    %v3557 = vadd.f32 %v3405, %v3479
    %v3558 = vsub.f32 0.0, %v3557
    %v3559 = vmul.f32 %v3558, 1.442695
    %v3560 = vpow.pop %v3559
    %v3561 = vadd.f32 %v3560, 1.0
    %v3562 = vrcp.pop %v3561
    %v3563 = vmul.f32 %v3556, %v3548
    %v3564 = vadd.f32 %v3406, %v3563
    %v3565 = vtanh.pop %v3564
    %v3566 = vsub.f32 %v3389, %v3565
    %v3567 = vmul.f32 %v3562, %v3566
    %v3568 = vadd.f32 %v3565, %v3567
    %v3569 = vld [vmem:[%s1037] sm:$0xff]
    %v3570 = vld [vmem:[%s1037 + $0x8] sm:$0xff]
    %v3571 = vld [vmem:[%s1037 + $0x10] sm:$0xff]
    %v3573 = vsel %vm1964, %v3397, 0
    %3575 = vmatprep.subr.mxu0 %v95
    %3576 = vmatpush1.msra.mxu0 %v94
    %3577 = vmatprep.subr.mxu0 %v98
    %3578 = vmatpush1.msra.mxu0 %v97
    %3579 = vmatprep.subr.mxu0 %v101
    %3580 = vmatpush1.msra.mxu0 %v100
    %3581 = vmatprep.subr.mxu0 %v104
    %3582 = vmatpush1.msra.mxu0 %v103
    %3583 = vmatprep.subr.mxu0 0.0
    %3584 = vmatpush1.msra.mxu0 0.0
    %3585 = vmatprep.subr.mxu0 0.0
    %3586 = vmatpush1.msra.mxu0 0.0
    %3587 = vmatprep.subr.mxu0 0.0
    %3588 = vmatpush1.msra.mxu0 0.0
    %3589 = vmatprep.subr.mxu0 0.0
    %3590 = vmatpush1.msra.mxu0 0.0
    %3591 = vmatprep.subr.mxu0 0.0
    %3592 = vmatpush1.msra.mxu0 0.0
    %3593 = vmatprep.subr.mxu0 0.0
    %3594 = vmatpush1.msra.mxu0 0.0
    %3595 = vmatprep.subr.mxu0 0.0
    %3596 = vmatpush1.msra.mxu0 0.0
    %3597 = vmatprep.subr.mxu0 0.0
    %3598 = vmatpush1.msra.mxu0 0.0
    %3599 = vmatprep.subr.mxu0 0.0
    %3600 = vmatpush1.msra.mxu0 0.0
    %3601 = vmatprep.subr.mxu0 0.0
    %3602 = vmatpush1.msra.mxu0 0.0
    %3603 = vmatprep.subr.mxu0 0.0
    %3604 = vmatpush1.msra.mxu0 0.0
    %3605 = vmatprep.subr.mxu0 0.0
    %3606 = vmatpush1.msra.mxu0 0.0
    %3607 = vmatprep.subr.mxu0 0.0
    %3608 = vmatpush1.msra.mxu0 0.0
    %3609 = vmatprep.subr.mxu0 0.0
    %3610 = vmatpush1.msra.mxu0 0.0
    %3611 = vmatprep.subr.mxu0 0.0
    %3612 = vmatpush1.msra.mxu0 0.0
    %3613 = vmatprep.subr.mxu0 0.0
    %3614 = vmatpush1.msra.mxu0 0.0
    %3615 = vmatprep.subr.mxu0 0.0
    %3616 = vmatpush1.msra.mxu0 0.0
    %3617 = vmatprep.subr.mxu0 0.0
    %3618 = vmatpush1.msra.mxu0 0.0
    %3619 = vmatprep.subr.mxu0 0.0
    %3620 = vmatpush1.msra.mxu0 0.0
    %3621 = vmatprep.subr.mxu0 0.0
    %3622 = vmatpush1.msra.mxu0 0.0
    %3623 = vmatprep.subr.mxu0 0.0
    %3624 = vmatpush1.msra.mxu0 0.0
    %3625 = vmatprep.subr.mxu0 0.0
    %3626 = vmatpush1.msra.mxu0 0.0
    %3627 = vmatprep.subr.mxu0 0.0
    %3628 = vmatpush1.msra.mxu0 0.0
    %3629 = vmatprep.subr.mxu0 0.0
    %3630 = vmatpush1.msra.mxu0 0.0
    %3631 = vmatprep.subr.mxu0 0.0
    %3632 = vmatpush1.msra.mxu0 0.0
    %3633 = vmatprep.subr.mxu0 0.0
    %3634 = vmatpush1.msra.mxu0 0.0
    %3635 = vmatprep.subr.mxu0 0.0
    %3636 = vmatpush1.msra.mxu0 0.0
    %3637 = vmatprep.subr.mxu0 0.0
    %3638 = vmatpush1.msra.mxu0 0.0
    %3639 = vmatprep.mubr.f32.mxu0 0.0
    %3640 = vmatmul.mubr.f32.gmra.mrb[0].mxu0 %v3573
    %v3641 = vpop.f32.mrb[0].mxu0
    %v3642 = vadd.f32 %v2134, %v3641
    %v3643 = vpop.f32.mrb[0].mxu0
    %v3644 = vadd.f32 %v2138, %v3643
    %3645 = vdwg.mxu0
    %3646 = vmatprep.subr.mxu0 0.0
    %3647 = vmatpush1.msra.mxu0 %v96
    %3648 = vmatprep.subr.mxu0 0.0
    %3649 = vmatpush1.msra.mxu0 %v99
    %3650 = vmatprep.subr.mxu0 0.0
    %3651 = vmatpush1.msra.mxu0 %v102
    %3652 = vmatprep.subr.mxu0 0.0
    %3653 = vmatpush1.msra.mxu0 %v105
    %3654 = vmatprep.subr.mxu0 0.0
    %3655 = vmatpush1.msra.mxu0 0.0
    %3656 = vmatprep.subr.mxu0 0.0
    %3657 = vmatpush1.msra.mxu0 0.0
    %3658 = vmatprep.subr.mxu0 0.0
    %3659 = vmatpush1.msra.mxu0 0.0
    %3660 = vmatprep.subr.mxu0 0.0
    %3661 = vmatpush1.msra.mxu0 0.0
    %3662 = vmatprep.subr.mxu0 0.0
    %3663 = vmatpush1.msra.mxu0 0.0
    %3664 = vmatprep.subr.mxu0 0.0
    %3665 = vmatpush1.msra.mxu0 0.0
    %3666 = vmatprep.subr.mxu0 0.0
    %3667 = vmatpush1.msra.mxu0 0.0
    %3668 = vmatprep.subr.mxu0 0.0
    %3669 = vmatpush1.msra.mxu0 0.0
    %3670 = vmatprep.subr.mxu0 0.0
    %3671 = vmatpush1.msra.mxu0 0.0
    %3672 = vmatprep.subr.mxu0 0.0
    %3673 = vmatpush1.msra.mxu0 0.0
    %3674 = vmatprep.subr.mxu0 0.0
    %3675 = vmatpush1.msra.mxu0 0.0
    %3676 = vmatprep.subr.mxu0 0.0
    %3677 = vmatpush1.msra.mxu0 0.0
    %3678 = vmatprep.subr.mxu0 0.0
    %3679 = vmatpush1.msra.mxu0 0.0
    %3680 = vmatprep.subr.mxu0 0.0
    %3681 = vmatpush1.msra.mxu0 0.0
    %3682 = vmatprep.subr.mxu0 0.0
    %3683 = vmatpush1.msra.mxu0 0.0
    %3684 = vmatprep.subr.mxu0 0.0
    %3685 = vmatpush1.msra.mxu0 0.0
    %3686 = vmatprep.subr.mxu0 0.0
    %3687 = vmatpush1.msra.mxu0 0.0
    %3688 = vmatprep.subr.mxu0 0.0
    %3689 = vmatpush1.msra.mxu0 0.0
    %3690 = vmatprep.subr.mxu0 0.0
    %3691 = vmatpush1.msra.mxu0 0.0
    %3692 = vmatprep.subr.mxu0 0.0
    %3693 = vmatpush1.msra.mxu0 0.0
    %3694 = vmatprep.subr.mxu0 0.0
    %3695 = vmatpush1.msra.mxu0 0.0
    %3696 = vmatprep.subr.mxu0 0.0
    %3697 = vmatpush1.msra.mxu0 0.0
    %3698 = vmatprep.subr.mxu0 0.0
    %3699 = vmatpush1.msra.mxu0 0.0
    %3700 = vmatprep.subr.mxu0 0.0
    %3701 = vmatpush1.msra.mxu0 0.0
    %3702 = vmatprep.subr.mxu0 0.0
    %3703 = vmatpush1.msra.mxu0 0.0
    %3704 = vmatprep.subr.mxu0 0.0
    %3705 = vmatpush1.msra.mxu0 0.0
    %3706 = vmatprep.subr.mxu0 0.0
    %3707 = vmatpush1.msra.mxu0 0.0
    %3708 = vmatprep.subr.mxu0 0.0
    %3709 = vmatpush1.msra.mxu0 0.0
    %3710 = vmatprep.mubr.f32.mxu0 0.0
    %3711 = vmatmul.mubr.f32.gmra.mrb[0].mxu0 %v3573
    %v3712 = vpop.f32.mrb[0].mxu0
    %v3713 = vadd.f32 %v2142, %v3712
    %v3714 = vpop.f32.mrb[0].mxu0
    %3715 = vdwg.mxu0
    %v3716 = vadd.f32 %v3569, %v3642
    %v3717 = vsub.f32 0.0, %v3716
    %v3718 = vmul.f32 %v3717, 1.442695
    %v3719 = vpow.pop %v3718
    %v3720 = vadd.f32 %v3719, 1.0
    %v3721 = vrcp.pop %v3720
    %v3722 = vadd.f32 %v3570, %v3644
    %v3723 = vsub.f32 0.0, %v3722
    %v3724 = vmul.f32 %v3723, 1.442695
    %v3725 = vpow.pop %v3724
    %v3726 = vadd.f32 %v3725, 1.0
    %v3727 = vrcp.pop %v3726
    %v3728 = vmul.f32 %v3721, %v3713
    %v3729 = vadd.f32 %v3571, %v3728
    %v3730 = vtanh.pop %v3729
    %v3731 = vsub.f32 %v3397, %v3730
    %v3732 = vmul.f32 %v3727, %v3731
    %v3733 = vadd.f32 %v3730, %v3732
    %v3734 = vsub.f32 %v3568, %v3389
    %v3735 = vmul.f32 %v3394, %v3734
    %v3736 = vadd.f32 %v3389, %v3735
    %v3737 = vsub.f32 %v3733, %v3397
    %v3738 = vmul.f32 %v3386, %v3737
    %v3739 = vadd.f32 %v3397, %v3738
    %v3740 = vmul.f32 %v3736, %v3394
    %s3741 = scalar_lea.vmem [#allocation4], 32
    %3742 = vst.msk [vmem:[%s3741] sm:$0xff] %vm1964, %v3740
    %v3743 = vmul.f32 %v3739, %v3386
    %s3744 = scalar_lea.vmem [#allocation5], 24
    %3745 = vst.msk [vmem:[%s3744] sm:$0xff] %vm1964, %v3743
    %v3746 = vld [vmem:[%s1485] sm:$0xff]
    %v3747 = vld [vmem:[%s1485 + $0x8] sm:$0xff]
    %v3748 = vld [vmem:[%s1485 + $0x10] sm:$0xff]
    %v3750 = vsel %vm1964, %v3736, 0
    %3752 = vmatprep.subr.mxu0 %v82
    %3753 = vmatpush1.msra.mxu0 %v81
    %3754 = vmatprep.subr.mxu0 %v85
    %3755 = vmatpush1.msra.mxu0 %v84
    %3756 = vmatprep.subr.mxu0 %v88
    %3757 = vmatpush1.msra.mxu0 %v87
    %3758 = vmatprep.subr.mxu0 %v91
    %3759 = vmatpush1.msra.mxu0 %v90
    %3760 = vmatprep.subr.mxu0 0.0
    %3761 = vmatpush1.msra.mxu0 0.0
    %3762 = vmatprep.subr.mxu0 0.0
    %3763 = vmatpush1.msra.mxu0 0.0
    %3764 = vmatprep.subr.mxu0 0.0
    %3765 = vmatpush1.msra.mxu0 0.0
    %3766 = vmatprep.subr.mxu0 0.0
    %3767 = vmatpush1.msra.mxu0 0.0
    %3768 = vmatprep.subr.mxu0 0.0
    %3769 = vmatpush1.msra.mxu0 0.0
    %3770 = vmatprep.subr.mxu0 0.0
    %3771 = vmatpush1.msra.mxu0 0.0
    %3772 = vmatprep.subr.mxu0 0.0
    %3773 = vmatpush1.msra.mxu0 0.0
    %3774 = vmatprep.subr.mxu0 0.0
    %3775 = vmatpush1.msra.mxu0 0.0
    %3776 = vmatprep.subr.mxu0 0.0
    %3777 = vmatpush1.msra.mxu0 0.0
    %3778 = vmatprep.subr.mxu0 0.0
    %3779 = vmatpush1.msra.mxu0 0.0
    %3780 = vmatprep.subr.mxu0 0.0
    %3781 = vmatpush1.msra.mxu0 0.0
    %3782 = vmatprep.subr.mxu0 0.0
    %3783 = vmatpush1.msra.mxu0 0.0
    %3784 = vmatprep.subr.mxu0 0.0
    %3785 = vmatpush1.msra.mxu0 0.0
    %3786 = vmatprep.subr.mxu0 0.0
    %3787 = vmatpush1.msra.mxu0 0.0
    %3788 = vmatprep.subr.mxu0 0.0
    %3789 = vmatpush1.msra.mxu0 0.0
    %3790 = vmatprep.subr.mxu0 0.0
    %3791 = vmatpush1.msra.mxu0 0.0
    %3792 = vmatprep.subr.mxu0 0.0
    %3793 = vmatpush1.msra.mxu0 0.0
    %3794 = vmatprep.subr.mxu0 0.0
    %3795 = vmatpush1.msra.mxu0 0.0
    %3796 = vmatprep.subr.mxu0 0.0
    %3797 = vmatpush1.msra.mxu0 0.0
    %3798 = vmatprep.subr.mxu0 0.0
    %3799 = vmatpush1.msra.mxu0 0.0
    %3800 = vmatprep.subr.mxu0 0.0
    %3801 = vmatpush1.msra.mxu0 0.0
    %3802 = vmatprep.subr.mxu0 0.0
    %3803 = vmatpush1.msra.mxu0 0.0
    %3804 = vmatprep.subr.mxu0 0.0
    %3805 = vmatpush1.msra.mxu0 0.0
    %3806 = vmatprep.subr.mxu0 0.0
    %3807 = vmatpush1.msra.mxu0 0.0
    %3808 = vmatprep.subr.mxu0 0.0
    %3809 = vmatpush1.msra.mxu0 0.0
    %3810 = vmatprep.subr.mxu0 0.0
    %3811 = vmatpush1.msra.mxu0 0.0
    %3812 = vmatprep.subr.mxu0 0.0
    %3813 = vmatpush1.msra.mxu0 0.0
    %3814 = vmatprep.subr.mxu0 0.0
    %3815 = vmatpush1.msra.mxu0 0.0
    %3816 = vmatprep.mubr.f32.mxu0 0.0
    %3817 = vmatmul.mubr.f32.gmra.mrb[0].mxu0 %v3750
    %v3818 = vpop.f32.mrb[0].mxu0
    %v3819 = vadd.f32 %v1952, %v3818
    %v3820 = vpop.f32.mrb[0].mxu0
    %v3821 = vadd.f32 %v1956, %v3820
    %3822 = vdwg.mxu0
    %3823 = vmatprep.subr.mxu0 0.0
    %3824 = vmatpush1.msra.mxu0 %v83
    %3825 = vmatprep.subr.mxu0 0.0
    %3826 = vmatpush1.msra.mxu0 %v86
    %3827 = vmatprep.subr.mxu0 0.0
    %3828 = vmatpush1.msra.mxu0 %v89
    %3829 = vmatprep.subr.mxu0 0.0
    %3830 = vmatpush1.msra.mxu0 %v92
    %3831 = vmatprep.subr.mxu0 0.0
    %3832 = vmatpush1.msra.mxu0 0.0
    %3833 = vmatprep.subr.mxu0 0.0
    %3834 = vmatpush1.msra.mxu0 0.0
    %3835 = vmatprep.subr.mxu0 0.0
    %3836 = vmatpush1.msra.mxu0 0.0
    %3837 = vmatprep.subr.mxu0 0.0
    %3838 = vmatpush1.msra.mxu0 0.0
    %3839 = vmatprep.subr.mxu0 0.0
    %3840 = vmatpush1.msra.mxu0 0.0
    %3841 = vmatprep.subr.mxu0 0.0
    %3842 = vmatpush1.msra.mxu0 0.0
    %3843 = vmatprep.subr.mxu0 0.0
    %3844 = vmatpush1.msra.mxu0 0.0
    %3845 = vmatprep.subr.mxu0 0.0
    %3846 = vmatpush1.msra.mxu0 0.0
    %3847 = vmatprep.subr.mxu0 0.0
    %3848 = vmatpush1.msra.mxu0 0.0
    %3849 = vmatprep.subr.mxu0 0.0
    %3850 = vmatpush1.msra.mxu0 0.0
    %3851 = vmatprep.subr.mxu0 0.0
    %3852 = vmatpush1.msra.mxu0 0.0
    %3853 = vmatprep.subr.mxu0 0.0
    %3854 = vmatpush1.msra.mxu0 0.0
    %3855 = vmatprep.subr.mxu0 0.0
    %3856 = vmatpush1.msra.mxu0 0.0
    %3857 = vmatprep.subr.mxu0 0.0
    %3858 = vmatpush1.msra.mxu0 0.0
    %3859 = vmatprep.subr.mxu0 0.0
    %3860 = vmatpush1.msra.mxu0 0.0
    %3861 = vmatprep.subr.mxu0 0.0
    %3862 = vmatpush1.msra.mxu0 0.0
    %3863 = vmatprep.subr.mxu0 0.0
    %3864 = vmatpush1.msra.mxu0 0.0
    %3865 = vmatprep.subr.mxu0 0.0
    %3866 = vmatpush1.msra.mxu0 0.0
    %3867 = vmatprep.subr.mxu0 0.0
    %3868 = vmatpush1.msra.mxu0 0.0
    %3869 = vmatprep.subr.mxu0 0.0
    %3870 = vmatpush1.msra.mxu0 0.0
    %3871 = vmatprep.subr.mxu0 0.0
    %3872 = vmatpush1.msra.mxu0 0.0
    %3873 = vmatprep.subr.mxu0 0.0
    %3874 = vmatpush1.msra.mxu0 0.0
    %3875 = vmatprep.subr.mxu0 0.0
    %3876 = vmatpush1.msra.mxu0 0.0
    %3877 = vmatprep.subr.mxu0 0.0
    %3878 = vmatpush1.msra.mxu0 0.0
    %3879 = vmatprep.subr.mxu0 0.0
    %3880 = vmatpush1.msra.mxu0 0.0
    %3881 = vmatprep.subr.mxu0 0.0
    %3882 = vmatpush1.msra.mxu0 0.0
    %3883 = vmatprep.subr.mxu0 0.0
    %3884 = vmatpush1.msra.mxu0 0.0
    %3885 = vmatprep.subr.mxu0 0.0
    %3886 = vmatpush1.msra.mxu0 0.0
    %3887 = vmatprep.mubr.f32.mxu0 0.0
    %3888 = vmatmul.mubr.f32.gmra.mrb[0].mxu0 %v3750
    %v3889 = vpop.f32.mrb[0].mxu0
    %v3890 = vadd.f32 %v1960, %v3889
    %v3891 = vpop.f32.mrb[0].mxu0
    %3892 = vdwg.mxu0
    %v3893 = vadd.f32 %v3746, %v3819
    %v3894 = vsub.f32 0.0, %v3893
    %v3895 = vmul.f32 %v3894, 1.442695
    %v3896 = vpow.pop %v3895
    %v3897 = vadd.f32 %v3896, 1.0
    %v3898 = vrcp.pop %v3897
    %v3899 = vadd.f32 %v3747, %v3821
    %v3900 = vsub.f32 0.0, %v3899
    %v3901 = vmul.f32 %v3900, 1.442695
    %v3902 = vpow.pop %v3901
    %v3903 = vadd.f32 %v3902, 1.0
    %v3904 = vrcp.pop %v3903
    %v3905 = vmul.f32 %v3898, %v3890
    %v3906 = vadd.f32 %v3748, %v3905
    %v3907 = vtanh.pop %v3906
    %v3908 = vsub.f32 %v3736, %v3907
    %v3909 = vmul.f32 %v3904, %v3908
    %v3910 = vadd.f32 %v3907, %v3909
    %v3911 = vld [vmem:[%s811] sm:$0xff]
    %v3912 = vld [vmem:[%s811 + $0x8] sm:$0xff]
    %v3913 = vld [vmem:[%s811 + $0x10] sm:$0xff]
    %v3915 = vsel %vm1964, %v3739, 0
    %3917 = vmatprep.subr.mxu0 %v95
    %3918 = vmatpush1.msra.mxu0 %v94
    %3919 = vmatprep.subr.mxu0 %v98
    %3920 = vmatpush1.msra.mxu0 %v97
    %3921 = vmatprep.subr.mxu0 %v101
    %3922 = vmatpush1.msra.mxu0 %v100
    %3923 = vmatprep.subr.mxu0 %v104
    %3924 = vmatpush1.msra.mxu0 %v103
    %3925 = vmatprep.subr.mxu0 0.0
    %3926 = vmatpush1.msra.mxu0 0.0
    %3927 = vmatprep.subr.mxu0 0.0
    %3928 = vmatpush1.msra.mxu0 0.0
    %3929 = vmatprep.subr.mxu0 0.0
    %3930 = vmatpush1.msra.mxu0 0.0
    %3931 = vmatprep.subr.mxu0 0.0
    %3932 = vmatpush1.msra.mxu0 0.0
    %3933 = vmatprep.subr.mxu0 0.0
    %3934 = vmatpush1.msra.mxu0 0.0
    %3935 = vmatprep.subr.mxu0 0.0
    %3936 = vmatpush1.msra.mxu0 0.0
    %3937 = vmatprep.subr.mxu0 0.0
    %3938 = vmatpush1.msra.mxu0 0.0
    %3939 = vmatprep.subr.mxu0 0.0
    %3940 = vmatpush1.msra.mxu0 0.0
    %3941 = vmatprep.subr.mxu0 0.0
    %3942 = vmatpush1.msra.mxu0 0.0
    %3943 = vmatprep.subr.mxu0 0.0
    %3944 = vmatpush1.msra.mxu0 0.0
    %3945 = vmatprep.subr.mxu0 0.0
    %3946 = vmatpush1.msra.mxu0 0.0
    %3947 = vmatprep.subr.mxu0 0.0
    %3948 = vmatpush1.msra.mxu0 0.0
    %3949 = vmatprep.subr.mxu0 0.0
    %3950 = vmatpush1.msra.mxu0 0.0
    %3951 = vmatprep.subr.mxu0 0.0
    %3952 = vmatpush1.msra.mxu0 0.0
    %3953 = vmatprep.subr.mxu0 0.0
    %3954 = vmatpush1.msra.mxu0 0.0
    %3955 = vmatprep.subr.mxu0 0.0
    %3956 = vmatpush1.msra.mxu0 0.0
    %3957 = vmatprep.subr.mxu0 0.0
    %3958 = vmatpush1.msra.mxu0 0.0
    %3959 = vmatprep.subr.mxu0 0.0
    %3960 = vmatpush1.msra.mxu0 0.0
    %3961 = vmatprep.subr.mxu0 0.0
    %3962 = vmatpush1.msra.mxu0 0.0
    %3963 = vmatprep.subr.mxu0 0.0
    %3964 = vmatpush1.msra.mxu0 0.0
    %3965 = vmatprep.subr.mxu0 0.0
    %3966 = vmatpush1.msra.mxu0 0.0
    %3967 = vmatprep.subr.mxu0 0.0
    %3968 = vmatpush1.msra.mxu0 0.0
    %3969 = vmatprep.subr.mxu0 0.0
    %3970 = vmatpush1.msra.mxu0 0.0
    %3971 = vmatprep.subr.mxu0 0.0
    %3972 = vmatpush1.msra.mxu0 0.0
    %3973 = vmatprep.subr.mxu0 0.0
    %3974 = vmatpush1.msra.mxu0 0.0
    %3975 = vmatprep.subr.mxu0 0.0
    %3976 = vmatpush1.msra.mxu0 0.0
    %3977 = vmatprep.subr.mxu0 0.0
    %3978 = vmatpush1.msra.mxu0 0.0
    %3979 = vmatprep.subr.mxu0 0.0
    %3980 = vmatpush1.msra.mxu0 0.0
    %3981 = vmatprep.mubr.f32.mxu0 0.0
    %3982 = vmatmul.mubr.f32.gmra.mrb[0].mxu0 %v3915
    %v3983 = vpop.f32.mrb[0].mxu0
    %v3984 = vadd.f32 %v2134, %v3983
    %v3985 = vpop.f32.mrb[0].mxu0
    %v3986 = vadd.f32 %v2138, %v3985
    %3987 = vdwg.mxu0
    %3988 = vmatprep.subr.mxu0 0.0
    %3989 = vmatpush1.msra.mxu0 %v96
    %3990 = vmatprep.subr.mxu0 0.0
    %3991 = vmatpush1.msra.mxu0 %v99
    %3992 = vmatprep.subr.mxu0 0.0
    %3993 = vmatpush1.msra.mxu0 %v102
    %3994 = vmatprep.subr.mxu0 0.0
    %3995 = vmatpush1.msra.mxu0 %v105
    %3996 = vmatprep.subr.mxu0 0.0
    %3997 = vmatpush1.msra.mxu0 0.0
    %3998 = vmatprep.subr.mxu0 0.0
    %3999 = vmatpush1.msra.mxu0 0.0
    %4000 = vmatprep.subr.mxu0 0.0
    %4001 = vmatpush1.msra.mxu0 0.0
    %4002 = vmatprep.subr.mxu0 0.0
    %4003 = vmatpush1.msra.mxu0 0.0
    %4004 = vmatprep.subr.mxu0 0.0
    %4005 = vmatpush1.msra.mxu0 0.0
    %4006 = vmatprep.subr.mxu0 0.0
    %4007 = vmatpush1.msra.mxu0 0.0
    %4008 = vmatprep.subr.mxu0 0.0
    %4009 = vmatpush1.msra.mxu0 0.0
    %4010 = vmatprep.subr.mxu0 0.0
    %4011 = vmatpush1.msra.mxu0 0.0
    %4012 = vmatprep.subr.mxu0 0.0
    %4013 = vmatpush1.msra.mxu0 0.0
    %4014 = vmatprep.subr.mxu0 0.0
    %4015 = vmatpush1.msra.mxu0 0.0
    %4016 = vmatprep.subr.mxu0 0.0
    %4017 = vmatpush1.msra.mxu0 0.0
    %4018 = vmatprep.subr.mxu0 0.0
    %4019 = vmatpush1.msra.mxu0 0.0
    %4020 = vmatprep.subr.mxu0 0.0
    %4021 = vmatpush1.msra.mxu0 0.0
    %4022 = vmatprep.subr.mxu0 0.0
    %4023 = vmatpush1.msra.mxu0 0.0
    %4024 = vmatprep.subr.mxu0 0.0
    %4025 = vmatpush1.msra.mxu0 0.0
    %4026 = vmatprep.subr.mxu0 0.0
    %4027 = vmatpush1.msra.mxu0 0.0
    %4028 = vmatprep.subr.mxu0 0.0
    %4029 = vmatpush1.msra.mxu0 0.0
    %4030 = vmatprep.subr.mxu0 0.0
    %4031 = vmatpush1.msra.mxu0 0.0
    %4032 = vmatprep.subr.mxu0 0.0
    %4033 = vmatpush1.msra.mxu0 0.0
    %4034 = vmatprep.subr.mxu0 0.0
    %4035 = vmatpush1.msra.mxu0 0.0
    %4036 = vmatprep.subr.mxu0 0.0
    %4037 = vmatpush1.msra.mxu0 0.0
    %4038 = vmatprep.subr.mxu0 0.0
    %4039 = vmatpush1.msra.mxu0 0.0
    %4040 = vmatprep.subr.mxu0 0.0
    %4041 = vmatpush1.msra.mxu0 0.0
    %4042 = vmatprep.subr.mxu0 0.0
    %4043 = vmatpush1.msra.mxu0 0.0
    %4044 = vmatprep.subr.mxu0 0.0
    %4045 = vmatpush1.msra.mxu0 0.0
    %4046 = vmatprep.subr.mxu0 0.0
    %4047 = vmatpush1.msra.mxu0 0.0
    %4048 = vmatprep.subr.mxu0 0.0
    %4049 = vmatpush1.msra.mxu0 0.0
    %4050 = vmatprep.subr.mxu0 0.0
    %4051 = vmatpush1.msra.mxu0 0.0
    %4052 = vmatprep.mubr.f32.mxu0 0.0
    %4053 = vmatmul.mubr.f32.gmra.mrb[0].mxu0 %v3915
    %v4054 = vpop.f32.mrb[0].mxu0
    %v4055 = vadd.f32 %v2142, %v4054
    %v4056 = vpop.f32.mrb[0].mxu0
    %4057 = vdwg.mxu0
    %v4058 = vadd.f32 %v3911, %v3984
    %v4059 = vsub.f32 0.0, %v4058
    %v4060 = vmul.f32 %v4059, 1.442695
    %v4061 = vpow.pop %v4060
    %v4062 = vadd.f32 %v4061, 1.0
    %v4063 = vrcp.pop %v4062
    %v4064 = vadd.f32 %v3912, %v3986
    %v4065 = vsub.f32 0.0, %v4064
    %v4066 = vmul.f32 %v4065, 1.442695
    %v4067 = vpow.pop %v4066
    %v4068 = vadd.f32 %v4067, 1.0
    %v4069 = vrcp.pop %v4068
    %v4070 = vmul.f32 %v4063, %v4055
    %v4071 = vadd.f32 %v3913, %v4070
    %v4072 = vtanh.pop %v4071
    %v4073 = vsub.f32 %v3739, %v4072
    %v4074 = vmul.f32 %v4069, %v4073
    %v4075 = vadd.f32 %v4072, %v4074
    %v4076 = vsub.f32 %v3910, %v3736
    %v4077 = vmul.f32 %v3036, %v4076
    %v4078 = vadd.f32 %v3736, %v4077
    %v4079 = vsub.f32 %v4075, %v3739
    %v4080 = vmul.f32 %v3028, %v4079
    %v4081 = vadd.f32 %v3739, %v4080
    %v4082 = vmul.f32 %v4078, %v3036
    %s4083 = scalar_lea.vmem [#allocation4], 40
    %4084 = vst.msk [vmem:[%s4083] sm:$0xff] %vm1964, %v4082
    %v4085 = vmul.f32 %v4081, %v3028
    %s4086 = scalar_lea.vmem [#allocation5], 16
    %4087 = vst.msk [vmem:[%s4086] sm:$0xff] %vm1964, %v4085
    %v4088 = vld [vmem:[%s1711] sm:$0xff]
    %v4089 = vld [vmem:[%s1711 + $0x8] sm:$0xff]
    %v4090 = vld [vmem:[%s1711 + $0x10] sm:$0xff]
    %v4092 = vsel %vm1964, %v4078, 0
    %4094 = vmatprep.subr.mxu0 %v82
    %4095 = vmatpush1.msra.mxu0 %v81
    %4096 = vmatprep.subr.mxu0 %v85
    %4097 = vmatpush1.msra.mxu0 %v84
    %4098 = vmatprep.subr.mxu0 %v88
    %4099 = vmatpush1.msra.mxu0 %v87
    %4100 = vmatprep.subr.mxu0 %v91
    %4101 = vmatpush1.msra.mxu0 %v90
    %4102 = vmatprep.subr.mxu0 0.0
    %4103 = vmatpush1.msra.mxu0 0.0
    %4104 = vmatprep.subr.mxu0 0.0
    %4105 = vmatpush1.msra.mxu0 0.0
    %4106 = vmatprep.subr.mxu0 0.0
    %4107 = vmatpush1.msra.mxu0 0.0
    %4108 = vmatprep.subr.mxu0 0.0
    %4109 = vmatpush1.msra.mxu0 0.0
    %4110 = vmatprep.subr.mxu0 0.0
    %4111 = vmatpush1.msra.mxu0 0.0
    %4112 = vmatprep.subr.mxu0 0.0
    %4113 = vmatpush1.msra.mxu0 0.0
    %4114 = vmatprep.subr.mxu0 0.0
    %4115 = vmatpush1.msra.mxu0 0.0
    %4116 = vmatprep.subr.mxu0 0.0
    %4117 = vmatpush1.msra.mxu0 0.0
    %4118 = vmatprep.subr.mxu0 0.0
    %4119 = vmatpush1.msra.mxu0 0.0
    %4120 = vmatprep.subr.mxu0 0.0
    %4121 = vmatpush1.msra.mxu0 0.0
    %4122 = vmatprep.subr.mxu0 0.0
    %4123 = vmatpush1.msra.mxu0 0.0
    %4124 = vmatprep.subr.mxu0 0.0
    %4125 = vmatpush1.msra.mxu0 0.0
    %4126 = vmatprep.subr.mxu0 0.0
    %4127 = vmatpush1.msra.mxu0 0.0
    %4128 = vmatprep.subr.mxu0 0.0
    %4129 = vmatpush1.msra.mxu0 0.0
    %4130 = vmatprep.subr.mxu0 0.0
    %4131 = vmatpush1.msra.mxu0 0.0
    %4132 = vmatprep.subr.mxu0 0.0
    %4133 = vmatpush1.msra.mxu0 0.0
    %4134 = vmatprep.subr.mxu0 0.0
    %4135 = vmatpush1.msra.mxu0 0.0
    %4136 = vmatprep.subr.mxu0 0.0
    %4137 = vmatpush1.msra.mxu0 0.0
    %4138 = vmatprep.subr.mxu0 0.0
    %4139 = vmatpush1.msra.mxu0 0.0
    %4140 = vmatprep.subr.mxu0 0.0
    %4141 = vmatpush1.msra.mxu0 0.0
    %4142 = vmatprep.subr.mxu0 0.0
    %4143 = vmatpush1.msra.mxu0 0.0
    %4144 = vmatprep.subr.mxu0 0.0
    %4145 = vmatpush1.msra.mxu0 0.0
    %4146 = vmatprep.subr.mxu0 0.0
    %4147 = vmatpush1.msra.mxu0 0.0
    %4148 = vmatprep.subr.mxu0 0.0
    %4149 = vmatpush1.msra.mxu0 0.0
    %4150 = vmatprep.subr.mxu0 0.0
    %4151 = vmatpush1.msra.mxu0 0.0
    %4152 = vmatprep.subr.mxu0 0.0
    %4153 = vmatpush1.msra.mxu0 0.0
    %4154 = vmatprep.subr.mxu0 0.0
    %4155 = vmatpush1.msra.mxu0 0.0
    %4156 = vmatprep.subr.mxu0 0.0
    %4157 = vmatpush1.msra.mxu0 0.0
    %4158 = vmatprep.mubr.f32.mxu0 0.0
    %4159 = vmatmul.mubr.f32.gmra.mrb[0].mxu0 %v4092
    %v4160 = vpop.f32.mrb[0].mxu0
    %v4161 = vadd.f32 %v1952, %v4160
    %v4162 = vpop.f32.mrb[0].mxu0
    %v4163 = vadd.f32 %v1956, %v4162
    %4164 = vdwg.mxu0
    %4165 = vmatprep.subr.mxu0 0.0
    %4166 = vmatpush1.msra.mxu0 %v83
    %4167 = vmatprep.subr.mxu0 0.0
    %4168 = vmatpush1.msra.mxu0 %v86
    %4169 = vmatprep.subr.mxu0 0.0
    %4170 = vmatpush1.msra.mxu0 %v89
    %4171 = vmatprep.subr.mxu0 0.0
    %4172 = vmatpush1.msra.mxu0 %v92
    %4173 = vmatprep.subr.mxu0 0.0
    %4174 = vmatpush1.msra.mxu0 0.0
    %4175 = vmatprep.subr.mxu0 0.0
    %4176 = vmatpush1.msra.mxu0 0.0
    %4177 = vmatprep.subr.mxu0 0.0
    %4178 = vmatpush1.msra.mxu0 0.0
    %4179 = vmatprep.subr.mxu0 0.0
    %4180 = vmatpush1.msra.mxu0 0.0
    %4181 = vmatprep.subr.mxu0 0.0
    %4182 = vmatpush1.msra.mxu0 0.0
    %4183 = vmatprep.subr.mxu0 0.0
    %4184 = vmatpush1.msra.mxu0 0.0
    %4185 = vmatprep.subr.mxu0 0.0
    %4186 = vmatpush1.msra.mxu0 0.0
    %4187 = vmatprep.subr.mxu0 0.0
    %4188 = vmatpush1.msra.mxu0 0.0
    %4189 = vmatprep.subr.mxu0 0.0
    %4190 = vmatpush1.msra.mxu0 0.0
    %4191 = vmatprep.subr.mxu0 0.0
    %4192 = vmatpush1.msra.mxu0 0.0
    %4193 = vmatprep.subr.mxu0 0.0
    %4194 = vmatpush1.msra.mxu0 0.0
    %4195 = vmatprep.subr.mxu0 0.0
    %4196 = vmatpush1.msra.mxu0 0.0
    %4197 = vmatprep.subr.mxu0 0.0
    %4198 = vmatpush1.msra.mxu0 0.0
    %4199 = vmatprep.subr.mxu0 0.0
    %4200 = vmatpush1.msra.mxu0 0.0
    %4201 = vmatprep.subr.mxu0 0.0
    %4202 = vmatpush1.msra.mxu0 0.0
    %4203 = vmatprep.subr.mxu0 0.0
    %4204 = vmatpush1.msra.mxu0 0.0
    %4205 = vmatprep.subr.mxu0 0.0
    %4206 = vmatpush1.msra.mxu0 0.0
    %4207 = vmatprep.subr.mxu0 0.0
    %4208 = vmatpush1.msra.mxu0 0.0
    %4209 = vmatprep.subr.mxu0 0.0
    %4210 = vmatpush1.msra.mxu0 0.0
    %4211 = vmatprep.subr.mxu0 0.0
    %4212 = vmatpush1.msra.mxu0 0.0
    %4213 = vmatprep.subr.mxu0 0.0
    %4214 = vmatpush1.msra.mxu0 0.0
    %4215 = vmatprep.subr.mxu0 0.0
    %4216 = vmatpush1.msra.mxu0 0.0
    %4217 = vmatprep.subr.mxu0 0.0
    %4218 = vmatpush1.msra.mxu0 0.0
    %4219 = vmatprep.subr.mxu0 0.0
    %4220 = vmatpush1.msra.mxu0 0.0
    %4221 = vmatprep.subr.mxu0 0.0
    %4222 = vmatpush1.msra.mxu0 0.0
    %4223 = vmatprep.subr.mxu0 0.0
    %4224 = vmatpush1.msra.mxu0 0.0
    %4225 = vmatprep.subr.mxu0 0.0
    %4226 = vmatpush1.msra.mxu0 0.0
    %4227 = vmatprep.subr.mxu0 0.0
    %4228 = vmatpush1.msra.mxu0 0.0
    %4229 = vmatprep.mubr.f32.mxu0 0.0
    %4230 = vmatmul.mubr.f32.gmra.mrb[0].mxu0 %v4092
    %v4231 = vpop.f32.mrb[0].mxu0
    %v4232 = vadd.f32 %v1960, %v4231
    %v4233 = vpop.f32.mrb[0].mxu0
    %4234 = vdwg.mxu0
    %v4235 = vadd.f32 %v4088, %v4161
    %v4236 = vsub.f32 0.0, %v4235
    %v4237 = vmul.f32 %v4236, 1.442695
    %v4238 = vpow.pop %v4237
    %v4239 = vadd.f32 %v4238, 1.0
    %v4240 = vrcp.pop %v4239
    %v4241 = vadd.f32 %v4089, %v4163
    %v4242 = vsub.f32 0.0, %v4241
    %v4243 = vmul.f32 %v4242, 1.442695
    %v4244 = vpow.pop %v4243
    %v4245 = vadd.f32 %v4244, 1.0
    %v4246 = vrcp.pop %v4245
    %v4247 = vmul.f32 %v4240, %v4232
    %v4248 = vadd.f32 %v4090, %v4247
    %v4249 = vtanh.pop %v4248
    %v4250 = vsub.f32 %v4078, %v4249
    %v4251 = vmul.f32 %v4246, %v4250
    %v4252 = vadd.f32 %v4249, %v4251
    %v4253 = vld [vmem:[%s585] sm:$0xff]
    %v4254 = vld [vmem:[%s585 + $0x8] sm:$0xff]
    %v4255 = vld [vmem:[%s585 + $0x10] sm:$0xff]
    %v4257 = vsel %vm1964, %v4081, 0
    %4259 = vmatprep.subr.mxu0 %v95
    %4260 = vmatpush1.msra.mxu0 %v94
    %4261 = vmatprep.subr.mxu0 %v98
    %4262 = vmatpush1.msra.mxu0 %v97
    %4263 = vmatprep.subr.mxu0 %v101
    %4264 = vmatpush1.msra.mxu0 %v100
    %4265 = vmatprep.subr.mxu0 %v104
    %4266 = vmatpush1.msra.mxu0 %v103
    %4267 = vmatprep.subr.mxu0 0.0
    %4268 = vmatpush1.msra.mxu0 0.0
    %4269 = vmatprep.subr.mxu0 0.0
    %4270 = vmatpush1.msra.mxu0 0.0
    %4271 = vmatprep.subr.mxu0 0.0
    %4272 = vmatpush1.msra.mxu0 0.0
    %4273 = vmatprep.subr.mxu0 0.0
    %4274 = vmatpush1.msra.mxu0 0.0
    %4275 = vmatprep.subr.mxu0 0.0
    %4276 = vmatpush1.msra.mxu0 0.0
    %4277 = vmatprep.subr.mxu0 0.0
    %4278 = vmatpush1.msra.mxu0 0.0
    %4279 = vmatprep.subr.mxu0 0.0
    %4280 = vmatpush1.msra.mxu0 0.0
    %4281 = vmatprep.subr.mxu0 0.0
    %4282 = vmatpush1.msra.mxu0 0.0
    %4283 = vmatprep.subr.mxu0 0.0
    %4284 = vmatpush1.msra.mxu0 0.0
    %4285 = vmatprep.subr.mxu0 0.0
    %4286 = vmatpush1.msra.mxu0 0.0
    %4287 = vmatprep.subr.mxu0 0.0
    %4288 = vmatpush1.msra.mxu0 0.0
    %4289 = vmatprep.subr.mxu0 0.0
    %4290 = vmatpush1.msra.mxu0 0.0
    %4291 = vmatprep.subr.mxu0 0.0
    %4292 = vmatpush1.msra.mxu0 0.0
    %4293 = vmatprep.subr.mxu0 0.0
    %4294 = vmatpush1.msra.mxu0 0.0
    %4295 = vmatprep.subr.mxu0 0.0
    %4296 = vmatpush1.msra.mxu0 0.0
    %4297 = vmatprep.subr.mxu0 0.0
    %4298 = vmatpush1.msra.mxu0 0.0
    %4299 = vmatprep.subr.mxu0 0.0
    %4300 = vmatpush1.msra.mxu0 0.0
    %4301 = vmatprep.subr.mxu0 0.0
    %4302 = vmatpush1.msra.mxu0 0.0
    %4303 = vmatprep.subr.mxu0 0.0
    %4304 = vmatpush1.msra.mxu0 0.0
    %4305 = vmatprep.subr.mxu0 0.0
    %4306 = vmatpush1.msra.mxu0 0.0
    %4307 = vmatprep.subr.mxu0 0.0
    %4308 = vmatpush1.msra.mxu0 0.0
    %4309 = vmatprep.subr.mxu0 0.0
    %4310 = vmatpush1.msra.mxu0 0.0
    %4311 = vmatprep.subr.mxu0 0.0
    %4312 = vmatpush1.msra.mxu0 0.0
    %4313 = vmatprep.subr.mxu0 0.0
    %4314 = vmatpush1.msra.mxu0 0.0
    %4315 = vmatprep.subr.mxu0 0.0
    %4316 = vmatpush1.msra.mxu0 0.0
    %4317 = vmatprep.subr.mxu0 0.0
    %4318 = vmatpush1.msra.mxu0 0.0
    %4319 = vmatprep.subr.mxu0 0.0
    %4320 = vmatpush1.msra.mxu0 0.0
    %4321 = vmatprep.subr.mxu0 0.0
    %4322 = vmatpush1.msra.mxu0 0.0
    %4323 = vmatprep.mubr.f32.mxu0 0.0
    %4324 = vmatmul.mubr.f32.gmra.mrb[0].mxu0 %v4257
    %v4325 = vpop.f32.mrb[0].mxu0
    %v4326 = vadd.f32 %v2134, %v4325
    %v4327 = vpop.f32.mrb[0].mxu0
    %v4328 = vadd.f32 %v2138, %v4327
    %4329 = vdwg.mxu0
    %4330 = vmatprep.subr.mxu0 0.0
    %4331 = vmatpush1.msra.mxu0 %v96
    %4332 = vmatprep.subr.mxu0 0.0
    %4333 = vmatpush1.msra.mxu0 %v99
    %4334 = vmatprep.subr.mxu0 0.0
    %4335 = vmatpush1.msra.mxu0 %v102
    %4336 = vmatprep.subr.mxu0 0.0
    %4337 = vmatpush1.msra.mxu0 %v105
    %4338 = vmatprep.subr.mxu0 0.0
    %4339 = vmatpush1.msra.mxu0 0.0
    %4340 = vmatprep.subr.mxu0 0.0
    %4341 = vmatpush1.msra.mxu0 0.0
    %4342 = vmatprep.subr.mxu0 0.0
    %4343 = vmatpush1.msra.mxu0 0.0
    %4344 = vmatprep.subr.mxu0 0.0
    %4345 = vmatpush1.msra.mxu0 0.0
    %4346 = vmatprep.subr.mxu0 0.0
    %4347 = vmatpush1.msra.mxu0 0.0
    %4348 = vmatprep.subr.mxu0 0.0
    %4349 = vmatpush1.msra.mxu0 0.0
    %4350 = vmatprep.subr.mxu0 0.0
    %4351 = vmatpush1.msra.mxu0 0.0
    %4352 = vmatprep.subr.mxu0 0.0
    %4353 = vmatpush1.msra.mxu0 0.0
    %4354 = vmatprep.subr.mxu0 0.0
    %4355 = vmatpush1.msra.mxu0 0.0
    %4356 = vmatprep.subr.mxu0 0.0
    %4357 = vmatpush1.msra.mxu0 0.0
    %4358 = vmatprep.subr.mxu0 0.0
    %4359 = vmatpush1.msra.mxu0 0.0
    %4360 = vmatprep.subr.mxu0 0.0
    %4361 = vmatpush1.msra.mxu0 0.0
    %4362 = vmatprep.subr.mxu0 0.0
    %4363 = vmatpush1.msra.mxu0 0.0
    %4364 = vmatprep.subr.mxu0 0.0
    %4365 = vmatpush1.msra.mxu0 0.0
    %4366 = vmatprep.subr.mxu0 0.0
    %4367 = vmatpush1.msra.mxu0 0.0
    %4368 = vmatprep.subr.mxu0 0.0
    %4369 = vmatpush1.msra.mxu0 0.0
    %4370 = vmatprep.subr.mxu0 0.0
    %4371 = vmatpush1.msra.mxu0 0.0
    %4372 = vmatprep.subr.mxu0 0.0
    %4373 = vmatpush1.msra.mxu0 0.0
    %4374 = vmatprep.subr.mxu0 0.0
    %4375 = vmatpush1.msra.mxu0 0.0
    %4376 = vmatprep.subr.mxu0 0.0
    %4377 = vmatpush1.msra.mxu0 0.0
    %4378 = vmatprep.subr.mxu0 0.0
    %4379 = vmatpush1.msra.mxu0 0.0
    %4380 = vmatprep.subr.mxu0 0.0
    %4381 = vmatpush1.msra.mxu0 0.0
    %4382 = vmatprep.subr.mxu0 0.0
    %4383 = vmatpush1.msra.mxu0 0.0
    %4384 = vmatprep.subr.mxu0 0.0
    %4385 = vmatpush1.msra.mxu0 0.0
    %4386 = vmatprep.subr.mxu0 0.0
    %4387 = vmatpush1.msra.mxu0 0.0
    %4388 = vmatprep.subr.mxu0 0.0
    %4389 = vmatpush1.msra.mxu0 0.0
    %4390 = vmatprep.subr.mxu0 0.0
    %4391 = vmatpush1.msra.mxu0 0.0
    %4392 = vmatprep.subr.mxu0 0.0
    %4393 = vmatpush1.msra.mxu0 0.0
    %4394 = vmatprep.mubr.f32.mxu0 0.0
    %4395 = vmatmul.mubr.f32.gmra.mrb[0].mxu0 %v4257
    %v4396 = vpop.f32.mrb[0].mxu0
    %v4397 = vadd.f32 %v2142, %v4396
    %v4398 = vpop.f32.mrb[0].mxu0
    %4399 = vdwg.mxu0
    %v4400 = vadd.f32 %v4253, %v4326
    %v4401 = vsub.f32 0.0, %v4400
    %v4402 = vmul.f32 %v4401, 1.442695
    %v4403 = vpow.pop %v4402
    %v4404 = vadd.f32 %v4403, 1.0
    %v4405 = vrcp.pop %v4404
    %v4406 = vadd.f32 %v4254, %v4328
    %v4407 = vsub.f32 0.0, %v4406
    %v4408 = vmul.f32 %v4407, 1.442695
    %v4409 = vpow.pop %v4408
    %v4410 = vadd.f32 %v4409, 1.0
    %v4411 = vrcp.pop %v4410
    %v4412 = vmul.f32 %v4405, %v4397
    %v4413 = vadd.f32 %v4255, %v4412
    %v4414 = vtanh.pop %v4413
    %v4415 = vsub.f32 %v4081, %v4414
    %v4416 = vmul.f32 %v4411, %v4415
    %v4417 = vadd.f32 %v4414, %v4416
    %v4418 = vsub.f32 %v4252, %v4078
    %v4419 = vmul.f32 %v2678, %v4418
    %v4420 = vadd.f32 %v4078, %v4419
    %v4421 = vsub.f32 %v4417, %v4081
    %v4422 = vmul.f32 %v2670, %v4421
    %v4423 = vadd.f32 %v4081, %v4422
    %v4424 = vmul.f32 %v4420, %v2678
    %s4425 = scalar_lea.vmem [#allocation4], 48
    %4426 = vst.msk [vmem:[%s4425] sm:$0xff] %vm1964, %v4424
    %v4427 = vmul.f32 %v4423, %v2670
    %s4428 = scalar_lea.vmem [#allocation5], 8
    %4429 = vst.msk [vmem:[%s4428] sm:$0xff] %vm1964, %v4427
    %v4430 = vld [vmem:[%s1937] sm:$0xff]
    %v4431 = vld [vmem:[%s1937 + $0x8] sm:$0xff]
    %v4432 = vld [vmem:[%s1937 + $0x10] sm:$0xff]
    %v4434 = vsel %vm1964, %v4420, 0
    %4436 = vmatprep.subr.mxu0 %v82
    %4437 = vmatpush1.msra.mxu0 %v81
    %4438 = vmatprep.subr.mxu0 %v85
    %4439 = vmatpush1.msra.mxu0 %v84
    %4440 = vmatprep.subr.mxu0 %v88
    %4441 = vmatpush1.msra.mxu0 %v87
    %4442 = vmatprep.subr.mxu0 %v91
    %4443 = vmatpush1.msra.mxu0 %v90
    %4444 = vmatprep.subr.mxu0 0.0
    %4445 = vmatpush1.msra.mxu0 0.0
    %4446 = vmatprep.subr.mxu0 0.0
    %4447 = vmatpush1.msra.mxu0 0.0
    %4448 = vmatprep.subr.mxu0 0.0
    %4449 = vmatpush1.msra.mxu0 0.0
    %4450 = vmatprep.subr.mxu0 0.0
    %4451 = vmatpush1.msra.mxu0 0.0
    %4452 = vmatprep.subr.mxu0 0.0
    %4453 = vmatpush1.msra.mxu0 0.0
    %4454 = vmatprep.subr.mxu0 0.0
    %4455 = vmatpush1.msra.mxu0 0.0
    %4456 = vmatprep.subr.mxu0 0.0
    %4457 = vmatpush1.msra.mxu0 0.0
    %4458 = vmatprep.subr.mxu0 0.0
    %4459 = vmatpush1.msra.mxu0 0.0
    %4460 = vmatprep.subr.mxu0 0.0
    %4461 = vmatpush1.msra.mxu0 0.0
    %4462 = vmatprep.subr.mxu0 0.0
    %4463 = vmatpush1.msra.mxu0 0.0
    %4464 = vmatprep.subr.mxu0 0.0
    %4465 = vmatpush1.msra.mxu0 0.0
    %4466 = vmatprep.subr.mxu0 0.0
    %4467 = vmatpush1.msra.mxu0 0.0
    %4468 = vmatprep.subr.mxu0 0.0
    %4469 = vmatpush1.msra.mxu0 0.0
    %4470 = vmatprep.subr.mxu0 0.0
    %4471 = vmatpush1.msra.mxu0 0.0
    %4472 = vmatprep.subr.mxu0 0.0
    %4473 = vmatpush1.msra.mxu0 0.0
    %4474 = vmatprep.subr.mxu0 0.0
    %4475 = vmatpush1.msra.mxu0 0.0
    %4476 = vmatprep.subr.mxu0 0.0
    %4477 = vmatpush1.msra.mxu0 0.0
    %4478 = vmatprep.subr.mxu0 0.0
    %4479 = vmatpush1.msra.mxu0 0.0
    %4480 = vmatprep.subr.mxu0 0.0
    %4481 = vmatpush1.msra.mxu0 0.0
    %4482 = vmatprep.subr.mxu0 0.0
    %4483 = vmatpush1.msra.mxu0 0.0
    %4484 = vmatprep.subr.mxu0 0.0
    %4485 = vmatpush1.msra.mxu0 0.0
    %4486 = vmatprep.subr.mxu0 0.0
    %4487 = vmatpush1.msra.mxu0 0.0
    %4488 = vmatprep.subr.mxu0 0.0
    %4489 = vmatpush1.msra.mxu0 0.0
    %4490 = vmatprep.subr.mxu0 0.0
    %4491 = vmatpush1.msra.mxu0 0.0
    %4492 = vmatprep.subr.mxu0 0.0
    %4493 = vmatpush1.msra.mxu0 0.0
    %4494 = vmatprep.subr.mxu0 0.0
    %4495 = vmatpush1.msra.mxu0 0.0
    %4496 = vmatprep.subr.mxu0 0.0
    %4497 = vmatpush1.msra.mxu0 0.0
    %4498 = vmatprep.subr.mxu0 0.0
    %4499 = vmatpush1.msra.mxu0 0.0
    %4500 = vmatprep.mubr.f32.mxu0 0.0
    %4501 = vmatmul.mubr.f32.gmra.mrb[0].mxu0 %v4434
    %v4502 = vpop.f32.mrb[0].mxu0
    %v4503 = vadd.f32 %v1952, %v4502
    %v4504 = vpop.f32.mrb[0].mxu0
    %v4505 = vadd.f32 %v1956, %v4504
    %4506 = vdwg.mxu0
    %4507 = vmatprep.subr.mxu0 0.0
    %4508 = vmatpush1.msra.mxu0 %v83
    %4509 = vmatprep.subr.mxu0 0.0
    %4510 = vmatpush1.msra.mxu0 %v86
    %4511 = vmatprep.subr.mxu0 0.0
    %4512 = vmatpush1.msra.mxu0 %v89
    %4513 = vmatprep.subr.mxu0 0.0
    %4514 = vmatpush1.msra.mxu0 %v92
    %4515 = vmatprep.subr.mxu0 0.0
    %4516 = vmatpush1.msra.mxu0 0.0
    %4517 = vmatprep.subr.mxu0 0.0
    %4518 = vmatpush1.msra.mxu0 0.0
    %4519 = vmatprep.subr.mxu0 0.0
    %4520 = vmatpush1.msra.mxu0 0.0
    %4521 = vmatprep.subr.mxu0 0.0
    %4522 = vmatpush1.msra.mxu0 0.0
    %4523 = vmatprep.subr.mxu0 0.0
    %4524 = vmatpush1.msra.mxu0 0.0
    %4525 = vmatprep.subr.mxu0 0.0
    %4526 = vmatpush1.msra.mxu0 0.0
    %4527 = vmatprep.subr.mxu0 0.0
    %4528 = vmatpush1.msra.mxu0 0.0
    %4529 = vmatprep.subr.mxu0 0.0
    %4530 = vmatpush1.msra.mxu0 0.0
    %4531 = vmatprep.subr.mxu0 0.0
    %4532 = vmatpush1.msra.mxu0 0.0
    %4533 = vmatprep.subr.mxu0 0.0
    %4534 = vmatpush1.msra.mxu0 0.0
    %4535 = vmatprep.subr.mxu0 0.0
    %4536 = vmatpush1.msra.mxu0 0.0
    %4537 = vmatprep.subr.mxu0 0.0
    %4538 = vmatpush1.msra.mxu0 0.0
    %4539 = vmatprep.subr.mxu0 0.0
    %4540 = vmatpush1.msra.mxu0 0.0
    %4541 = vmatprep.subr.mxu0 0.0
    %4542 = vmatpush1.msra.mxu0 0.0
    %4543 = vmatprep.subr.mxu0 0.0
    %4544 = vmatpush1.msra.mxu0 0.0
    %4545 = vmatprep.subr.mxu0 0.0
    %4546 = vmatpush1.msra.mxu0 0.0
    %4547 = vmatprep.subr.mxu0 0.0
    %4548 = vmatpush1.msra.mxu0 0.0
    %4549 = vmatprep.subr.mxu0 0.0
    %4550 = vmatpush1.msra.mxu0 0.0
    %4551 = vmatprep.subr.mxu0 0.0
    %4552 = vmatpush1.msra.mxu0 0.0
    %4553 = vmatprep.subr.mxu0 0.0
    %4554 = vmatpush1.msra.mxu0 0.0
    %4555 = vmatprep.subr.mxu0 0.0
    %4556 = vmatpush1.msra.mxu0 0.0
    %4557 = vmatprep.subr.mxu0 0.0
    %4558 = vmatpush1.msra.mxu0 0.0
    %4559 = vmatprep.subr.mxu0 0.0
    %4560 = vmatpush1.msra.mxu0 0.0
    %4561 = vmatprep.subr.mxu0 0.0
    %4562 = vmatpush1.msra.mxu0 0.0
    %4563 = vmatprep.subr.mxu0 0.0
    %4564 = vmatpush1.msra.mxu0 0.0
    %4565 = vmatprep.subr.mxu0 0.0
    %4566 = vmatpush1.msra.mxu0 0.0
    %4567 = vmatprep.subr.mxu0 0.0
    %4568 = vmatpush1.msra.mxu0 0.0
    %4569 = vmatprep.subr.mxu0 0.0
    %4570 = vmatpush1.msra.mxu0 0.0
    %4571 = vmatprep.mubr.f32.mxu0 0.0
    %4572 = vmatmul.mubr.f32.gmra.mrb[0].mxu0 %v4434
    %v4573 = vpop.f32.mrb[0].mxu0
    %v4574 = vadd.f32 %v1960, %v4573
    %v4575 = vpop.f32.mrb[0].mxu0
    %4576 = vdwg.mxu0
    %v4577 = vadd.f32 %v4430, %v4503
    %v4578 = vsub.f32 0.0, %v4577
    %v4579 = vmul.f32 %v4578, 1.442695
    %v4580 = vpow.pop %v4579
    %v4581 = vadd.f32 %v4580, 1.0
    %v4582 = vrcp.pop %v4581
    %v4583 = vadd.f32 %v4431, %v4505
    %v4584 = vsub.f32 0.0, %v4583
    %v4585 = vmul.f32 %v4584, 1.442695
    %v4586 = vpow.pop %v4585
    %v4587 = vadd.f32 %v4586, 1.0
    %v4588 = vrcp.pop %v4587
    %v4589 = vmul.f32 %v4582, %v4574
    %v4590 = vadd.f32 %v4432, %v4589
    %v4591 = vtanh.pop %v4590
    %v4592 = vsub.f32 %v4420, %v4591
    %v4593 = vmul.f32 %v4588, %v4592
    %v4594 = vadd.f32 %v4591, %v4593
    %v4595 = vld [vmem:[#allocation3] sm:$0xff]
    %v4596 = vld [vmem:[#allocation3 + $0x8] sm:$0xff]
    %v4597 = vld [vmem:[#allocation3 + $0x10] sm:$0xff]
    %v4599 = vsel %vm1964, %v4423, 0
    %4601 = vmatprep.subr.mxu0 %v95
    %4602 = vmatpush1.msra.mxu0 %v94
    %4603 = vmatprep.subr.mxu0 %v98
    %4604 = vmatpush1.msra.mxu0 %v97
    %4605 = vmatprep.subr.mxu0 %v101
    %4606 = vmatpush1.msra.mxu0 %v100
    %4607 = vmatprep.subr.mxu0 %v104
    %4608 = vmatpush1.msra.mxu0 %v103
    %4609 = vmatprep.subr.mxu0 0.0
    %4610 = vmatpush1.msra.mxu0 0.0
    %4611 = vmatprep.subr.mxu0 0.0
    %4612 = vmatpush1.msra.mxu0 0.0
    %4613 = vmatprep.subr.mxu0 0.0
    %4614 = vmatpush1.msra.mxu0 0.0
    %4615 = vmatprep.subr.mxu0 0.0
    %4616 = vmatpush1.msra.mxu0 0.0
    %4617 = vmatprep.subr.mxu0 0.0
    %4618 = vmatpush1.msra.mxu0 0.0
    %4619 = vmatprep.subr.mxu0 0.0
    %4620 = vmatpush1.msra.mxu0 0.0
    %4621 = vmatprep.subr.mxu0 0.0
    %4622 = vmatpush1.msra.mxu0 0.0
    %4623 = vmatprep.subr.mxu0 0.0
    %4624 = vmatpush1.msra.mxu0 0.0
    %4625 = vmatprep.subr.mxu0 0.0
    %4626 = vmatpush1.msra.mxu0 0.0
    %4627 = vmatprep.subr.mxu0 0.0
    %4628 = vmatpush1.msra.mxu0 0.0
    %4629 = vmatprep.subr.mxu0 0.0
    %4630 = vmatpush1.msra.mxu0 0.0
    %4631 = vmatprep.subr.mxu0 0.0
    %4632 = vmatpush1.msra.mxu0 0.0
    %4633 = vmatprep.subr.mxu0 0.0
    %4634 = vmatpush1.msra.mxu0 0.0
    %4635 = vmatprep.subr.mxu0 0.0
    %4636 = vmatpush1.msra.mxu0 0.0
    %4637 = vmatprep.subr.mxu0 0.0
    %4638 = vmatpush1.msra.mxu0 0.0
    %4639 = vmatprep.subr.mxu0 0.0
    %4640 = vmatpush1.msra.mxu0 0.0
    %4641 = vmatprep.subr.mxu0 0.0
    %4642 = vmatpush1.msra.mxu0 0.0
    %4643 = vmatprep.subr.mxu0 0.0
    %4644 = vmatpush1.msra.mxu0 0.0
    %4645 = vmatprep.subr.mxu0 0.0
    %4646 = vmatpush1.msra.mxu0 0.0
    %4647 = vmatprep.subr.mxu0 0.0
    %4648 = vmatpush1.msra.mxu0 0.0
    %4649 = vmatprep.subr.mxu0 0.0
    %4650 = vmatpush1.msra.mxu0 0.0
    %4651 = vmatprep.subr.mxu0 0.0
    %4652 = vmatpush1.msra.mxu0 0.0
    %4653 = vmatprep.subr.mxu0 0.0
    %4654 = vmatpush1.msra.mxu0 0.0
    %4655 = vmatprep.subr.mxu0 0.0
    %4656 = vmatpush1.msra.mxu0 0.0
    %4657 = vmatprep.subr.mxu0 0.0
    %4658 = vmatpush1.msra.mxu0 0.0
    %4659 = vmatprep.subr.mxu0 0.0
    %4660 = vmatpush1.msra.mxu0 0.0
    %4661 = vmatprep.subr.mxu0 0.0
    %4662 = vmatpush1.msra.mxu0 0.0
    %4663 = vmatprep.subr.mxu0 0.0
    %4664 = vmatpush1.msra.mxu0 0.0
    %4665 = vmatprep.mubr.f32.mxu0 0.0
    %4666 = vmatmul.mubr.f32.gmra.mrb[0].mxu0 %v4599
    %v4667 = vpop.f32.mrb[0].mxu0
    %v4668 = vadd.f32 %v2134, %v4667
    %v4669 = vpop.f32.mrb[0].mxu0
    %v4670 = vadd.f32 %v2138, %v4669
    %4671 = vdwg.mxu0
    %4672 = vmatprep.subr.mxu0 0.0
    %4673 = vmatpush1.msra.mxu0 %v96
    %4674 = vmatprep.subr.mxu0 0.0
    %4675 = vmatpush1.msra.mxu0 %v99
    %4676 = vmatprep.subr.mxu0 0.0
    %4677 = vmatpush1.msra.mxu0 %v102
    %4678 = vmatprep.subr.mxu0 0.0
    %4679 = vmatpush1.msra.mxu0 %v105
    %4680 = vmatprep.subr.mxu0 0.0
    %4681 = vmatpush1.msra.mxu0 0.0
    %4682 = vmatprep.subr.mxu0 0.0
    %4683 = vmatpush1.msra.mxu0 0.0
    %4684 = vmatprep.subr.mxu0 0.0
    %4685 = vmatpush1.msra.mxu0 0.0
    %4686 = vmatprep.subr.mxu0 0.0
    %4687 = vmatpush1.msra.mxu0 0.0
    %4688 = vmatprep.subr.mxu0 0.0
    %4689 = vmatpush1.msra.mxu0 0.0
    %4690 = vmatprep.subr.mxu0 0.0
    %4691 = vmatpush1.msra.mxu0 0.0
    %4692 = vmatprep.subr.mxu0 0.0
    %4693 = vmatpush1.msra.mxu0 0.0
    %4694 = vmatprep.subr.mxu0 0.0
    %4695 = vmatpush1.msra.mxu0 0.0
    %4696 = vmatprep.subr.mxu0 0.0
    %4697 = vmatpush1.msra.mxu0 0.0
    %4698 = vmatprep.subr.mxu0 0.0
    %4699 = vmatpush1.msra.mxu0 0.0
    %4700 = vmatprep.subr.mxu0 0.0
    %4701 = vmatpush1.msra.mxu0 0.0
    %4702 = vmatprep.subr.mxu0 0.0
    %4703 = vmatpush1.msra.mxu0 0.0
    %4704 = vmatprep.subr.mxu0 0.0
    %4705 = vmatpush1.msra.mxu0 0.0
    %4706 = vmatprep.subr.mxu0 0.0
    %4707 = vmatpush1.msra.mxu0 0.0
    %4708 = vmatprep.subr.mxu0 0.0
    %4709 = vmatpush1.msra.mxu0 0.0
    %4710 = vmatprep.subr.mxu0 0.0
    %4711 = vmatpush1.msra.mxu0 0.0
    %4712 = vmatprep.subr.mxu0 0.0
    %4713 = vmatpush1.msra.mxu0 0.0
    %4714 = vmatprep.subr.mxu0 0.0
    %4715 = vmatpush1.msra.mxu0 0.0
    %4716 = vmatprep.subr.mxu0 0.0
    %4717 = vmatpush1.msra.mxu0 0.0
    %4718 = vmatprep.subr.mxu0 0.0
    %4719 = vmatpush1.msra.mxu0 0.0
    %4720 = vmatprep.subr.mxu0 0.0
    %4721 = vmatpush1.msra.mxu0 0.0
    %4722 = vmatprep.subr.mxu0 0.0
    %4723 = vmatpush1.msra.mxu0 0.0
    %4724 = vmatprep.subr.mxu0 0.0
    %4725 = vmatpush1.msra.mxu0 0.0
    %4726 = vmatprep.subr.mxu0 0.0
    %4727 = vmatpush1.msra.mxu0 0.0
    %4728 = vmatprep.subr.mxu0 0.0
    %4729 = vmatpush1.msra.mxu0 0.0
    %4730 = vmatprep.subr.mxu0 0.0
    %4731 = vmatpush1.msra.mxu0 0.0
    %4732 = vmatprep.subr.mxu0 0.0
    %4733 = vmatpush1.msra.mxu0 0.0
    %4734 = vmatprep.subr.mxu0 0.0
    %4735 = vmatpush1.msra.mxu0 0.0
    %4736 = vmatprep.mubr.f32.mxu0 0.0
    %4737 = vmatmul.mubr.f32.gmra.mrb[0].mxu0 %v4599
    %v4738 = vpop.f32.mrb[0].mxu0
    %v4739 = vadd.f32 %v2142, %v4738
    %v4740 = vpop.f32.mrb[0].mxu0
    %4741 = vdwg.mxu0
    %v4742 = vadd.f32 %v4595, %v4668
    %v4743 = vsub.f32 0.0, %v4742
    %v4744 = vmul.f32 %v4743, 1.442695
    %v4745 = vpow.pop %v4744
    %v4746 = vadd.f32 %v4745, 1.0
    %v4747 = vrcp.pop %v4746
    %v4748 = vadd.f32 %v4596, %v4670
    %v4749 = vsub.f32 0.0, %v4748
    %v4750 = vmul.f32 %v4749, 1.442695
    %v4751 = vpow.pop %v4750
    %v4752 = vadd.f32 %v4751, 1.0
    %v4753 = vrcp.pop %v4752
    %v4754 = vmul.f32 %v4747, %v4739
    %v4755 = vadd.f32 %v4597, %v4754
    %v4756 = vtanh.pop %v4755
    %v4757 = vsub.f32 %v4423, %v4756
    %v4758 = vmul.f32 %v4753, %v4757
    %v4759 = vadd.f32 %v4756, %v4758
    %v4760 = vsub.f32 %v4594, %v4420
    %v4761 = vmul.f32 %v2321, %v4760
    %v4762 = vadd.f32 %v4420, %v4761
    %v4763 = vsub.f32 %v4759, %v4423
    %v4764 = vmul.f32 %v2314, %v4763
    %v4765 = vadd.f32 %v4423, %v4764
    %v4766 = vmul.f32 %v4762, %v2321
    %s4767 = scalar_lea.vmem [#allocation4], 56
    %4768 = vst.msk [vmem:[%s4767] sm:$0xff] %vm1964, %v4766
    %v4769 = vmul.f32 %v4765, %v2314
    %4770 = vst.msk [vmem:[#allocation5] sm:$0xff] %vm1964, %v4769
    %v4771 = vld [vmem:[#allocation4] sm:$0xff]
    %v4772 = vld [vmem:[#allocation4 + $0x8] sm:$0xff]
    %v4773 = vld [vmem:[#allocation4 + $0x10] sm:$0xff]
    %v4774 = vld [vmem:[#allocation4 + $0x18] sm:$0xff]
    %v4775 = vld [vmem:[#allocation4 + $0x20] sm:$0xff]
    %v4776 = vld [vmem:[#allocation4 + $0x28] sm:$0xff]
    %v4777 = vld [vmem:[#allocation4 + $0x30] sm:$0xff]
    %v4778 = vld [vmem:[#allocation4 + $0x38] sm:$0xff]
    %v4779 = vld [vmem:[#allocation5] sm:$0xff]
    %v4780 = vld [vmem:[#allocation5 + $0x8] sm:$0xff]
    %v4781 = vld [vmem:[#allocation5 + $0x10] sm:$0xff]
    %v4782 = vld [vmem:[#allocation5 + $0x18] sm:$0xff]
    %v4783 = vld [vmem:[#allocation5 + $0x20] sm:$0xff]
    %v4784 = vld [vmem:[#allocation5 + $0x28] sm:$0xff]
    %v4785 = vld [vmem:[#allocation5 + $0x30] sm:$0xff]
    %v4786 = vld [vmem:[#allocation5 + $0x38] sm:$0xff]
    %4795 = vrot.lane.b32.xlu0 %v4779, 32
    %v4796 = vpop.permute.xlu0 %4795
    %4797 = vrot.lane.b32.xlu0 %v4780, 32
    %v4798 = vpop.permute.xlu0 %4797
    %4799 = vrot.lane.b32.xlu0 %v4781, 32
    %v4800 = vpop.permute.xlu0 %4799
    %4801 = vrot.lane.b32.xlu0 %v4782, 32
    %v4802 = vpop.permute.xlu0 %4801
    %4803 = vrot.lane.b32.xlu0 %v4783, 32
    %v4804 = vpop.permute.xlu0 %4803
    %4805 = vrot.lane.b32.xlu0 %v4784, 32
    %v4806 = vpop.permute.xlu0 %4805
    %4807 = vrot.lane.b32.xlu0 %v4785, 32
    %v4808 = vpop.permute.xlu0 %4807
    %4809 = vrot.lane.b32.xlu0 %v4786, 32
    %v4810 = vpop.permute.xlu0 %4809
    %v4819 = vsel %vm1964, %v4771, %v4796
    %v4820 = vsel %vm1964, %v4772, %v4798
    %v4821 = vsel %vm1964, %v4773, %v4800
    %v4822 = vsel %vm1964, %v4774, %v4802
    %v4823 = vsel %vm1964, %v4775, %v4804
    %v4824 = vsel %vm1964, %v4776, %v4806
    %v4825 = vsel %vm1964, %v4777, %v4808
    %v4826 = vsel %vm1964, %v4778, %v4810
    %vm4827 = vcmask 523264
    %4828 = vst.msk [vmem:[%s8] sm:$0xff] %vm4827, %v4819
    %4829 = vst.msk [vmem:[%s8 + $0x8] sm:$0xff] %vm4827, %v4820
    %4830 = vst.msk [vmem:[%s8 + $0x10] sm:$0xff] %vm4827, %v4821
    %4831 = vst.msk [vmem:[%s8 + $0x18] sm:$0xff] %vm4827, %v4822
    %4832 = vst.msk [vmem:[%s8 + $0x20] sm:$0xff] %vm4827, %v4823
    %4833 = vst.msk [vmem:[%s8 + $0x28] sm:$0xff] %vm4827, %v4824
    %4834 = vst.msk [vmem:[%s8 + $0x30] sm:$0xff] %vm4827, %v4825
    %4835 = vst.msk [vmem:[%s8 + $0x38] sm:$0xff] %vm4827, %v4826
    %4837 = vrot.lane.b32.xlu0 %v4765, 32
    %v4838 = vpop.permute.xlu0 %4837
    %v4840 = vsel %vm1964, %v4762, %v4838
    %4841 = vst.msk [vmem:[%s9] sm:$0xff] %vm4827, %v4840
    // Predicated region
    $region46: #{hierarchical_encoder_forward.2} parent=1 // pred_check
      _
    $region47: #{hierarchical_encoder_forward.2} parent=1 // pred_check_branch
      %4843 = sbr.rel (0) target = $region49
    $region48: #{hierarchical_encoder_forward.2} parent=1 // pred_region
      _
    $region49: #{hierarchical_encoder_forward.2} parent=1 // pred_fallthru
      _
    // Predicated region
    $region50: #{hierarchical_encoder_forward.2} parent=1 // pred_check
      _
    $region51: #{hierarchical_encoder_forward.2} parent=1 // pred_check_branch
      %4845 = sbr.rel (0) target = $region53
    $region52: #{hierarchical_encoder_forward.2} parent=1 // pred_region
      _
    $region53: #{hierarchical_encoder_forward.2} parent=1 // pred_fallthru
      _
    // Predicated region
    $region54: #{hierarchical_encoder_forward.2} parent=1 // pred_check
      _
    $region55: #{hierarchical_encoder_forward.2} parent=1 // pred_check_branch
      %4847 = sbr.rel (0) target = $region57
    $region56: #{hierarchical_encoder_forward.2} parent=1 // pred_region
      _
    $region57: #{hierarchical_encoder_forward.2} parent=1 // pred_fallthru
      _
    // Predicated region
    $region58: #{hierarchical_encoder_forward.2} parent=1 // pred_check
      _
    $region59: #{hierarchical_encoder_forward.2} parent=1 // pred_check_branch
      %4849 = sbr.rel (0) target = $region61
    $region60: #{hierarchical_encoder_forward.2} parent=1 // pred_region
      _
    $region61: #{hierarchical_encoder_forward.2} parent=1 // pred_fallthru
      _
    %4850 = vsyncpa [#allocation7], 1
    %4851 = vsyncpa [#allocation9], 1

</llo_original>
